<compile_context>
chip_gen: v7x
topology: tpu7x:2x2x1
jax: 0.10.0
libtpu: 0.0.40
codegen_flags: <defaults>
</compile_context>

<pallas_src>
import functools

import numpy as np

import jax
import jax.numpy as jnp
from jax.experimental import pallas as pl
from jax.experimental.pallas import tpu as pltpu


# ----------------------------------------------------------------------------
# Host-side: generic conv / convT -> (gather spec, fused R, bias row) builder
# ----------------------------------------------------------------------------
# Layout descriptor: (rows_per_mrow, width, channels).  A spatial row h lives
# at M-row h // rpm, lane offset (h % rpm) * (width*channels) + w*channels + ch.
def _build_conv(w, b, *, transposed, stride, pad, in_desc, out_desc):
    w = np.asarray(w, np.float32)
    b = np.asarray(b, np.float32)
    if transposed:
        cin, cout, kh, kw = w.shape
    else:
        cout, cin, kh, kw = w.shape
    rpm_i, wi, ci_ = in_desc
    rpm_o, wo, co_ = out_desc
    assert ci_ == cin and co_ == cout
    in_block = wi * cin                 # lanes per packed input row
    out_lanes = rpm_o * wo * cout

    contrib = {}                        # shift -> [(p_in, lane_in_off, lane_out, val)]
    for p_out in range(rpm_o):
        for dv in range(kh):
            if transposed:
                num = p_out + pad - dv
                if num % stride:
                    continue
                ih = num // stride
            else:
                ih = p_out * stride + dv - pad
            m_rel = ih // rpm_i         # floor div (correct for negatives)
            p_in = ih - m_rel * rpm_i
            shift = -m_rel              # gathered block holds input M-row (m - shift)
            lst = contrib.setdefault(shift, [])
            for dh in range(kw):
                wmat = w[:, :, dv, dh]  # conv: (cout,cin); convT: (cin,cout)
                for ow in range(wo):
                    if transposed:
                        numw = ow + pad - dh
                        if numw % stride:
                            continue
                        iw = numw // stride
                    else:
                        iw = ow * stride + dh - pad
                    if iw < 0 or iw >= wi:
                        continue
                    for co in range(cout):
                        lane_out = p_out * (wo * cout) + ow * cout + co
                        for ci in range(cin):
                            val = wmat[ci, co] if transposed else wmat[co, ci]
                            lst.append((p_in, iw * cin + ci, lane_out, val))

    gather, blocks = [], []
    for shift in sorted(contrib):
        entries = contrib[shift]
        pmin = min(e[0] for e in entries)
        pmax = max(e[0] for e in entries)
        lo, hi = pmin * in_block, (pmax + 1) * in_block
        blk = np.zeros((hi - lo, out_lanes), np.float32)
        for p_in, off, lane_out, val in entries:
            blk[p_in * in_block + off - lo, lane_out] += val
        gather.append((int(shift), int(lo), int(hi)))
        blocks.append(blk)
    R = np.concatenate(blocks, axis=0)
    bias = np.tile(b, rpm_o * wo).reshape(1, out_lanes)
    return gather, R, bias


# ----------------------------------------------------------------------------
# Synthetic (deterministic) parameter init -- same structure as before
# ----------------------------------------------------------------------------
def _conv_p(key, cout, cin, kh, kw):
    k1, k2 = jax.random.split(key)
    fan_in = cin * kh * kw
    w = jax.random.normal(k1, (cout, cin, kh, kw), jnp.float32) / jnp.sqrt(fan_in)
    b = 0.01 * jax.random.normal(k2, (cout,), jnp.float32)
    return {"w": w, "b": b}


def _convT_p(key, cin, cout, kh, kw):
    k1, k2 = jax.random.split(key)
    fan_in = cin * kh * kw
    w = jax.random.normal(k1, (cin, cout, kh, kw), jnp.float32) / jnp.sqrt(fan_in)
    b = 0.01 * jax.random.normal(k2, (cout,), jnp.float32)
    return {"w": w, "b": b}


def init_params(key, input_channels, n_embed=512, embedding_dim=64):
    c = input_channels
    n_hid = c // 4                      # encoder output channels = 2*n_hid = c // 2
    keys = jax.random.split(key, 16)
    return {
        "e1": _conv_p(keys[0], n_hid, c, 4, 4),
        "e2": _conv_p(keys[1], 2 * n_hid, n_hid, 4, 4),
        "e3": _conv_p(keys[2], 2 * n_hid, 2 * n_hid, 3, 3),
        "e_res1": {"c1": _conv_p(keys[3], 2 * n_hid // 4, 2 * n_hid, 3, 3),
                   "c2": _conv_p(keys[4], 2 * n_hid, 2 * n_hid // 4, 1, 1)},
        "e_res2": {"c1": _conv_p(keys[5], 2 * n_hid // 4, 2 * n_hid, 3, 3),
                   "c2": _conv_p(keys[6], 2 * n_hid, 2 * n_hid // 4, 1, 1)},
        "proj": _conv_p(keys[7], embedding_dim, c // 2, 1, 1),
        "embed": jax.random.normal(keys[8], (n_embed, embedding_dim), jnp.float32),
        "d1": _conv_p(keys[9], 2 * n_hid, embedding_dim, 3, 3),
        "d_res1": {"c1": _conv_p(keys[10], 2 * n_hid // 4, 2 * n_hid, 3, 3),
                   "c2": _conv_p(keys[11], 2 * n_hid, 2 * n_hid // 4, 1, 1)},
        "d_res2": {"c1": _conv_p(keys[12], 2 * n_hid // 4, 2 * n_hid, 3, 3),
                   "c2": _conv_p(keys[13], 2 * n_hid, 2 * n_hid // 4, 1, 1)},
        "dT1": _convT_p(keys[14], 2 * n_hid, n_hid, 4, 4),
        "dT2": _convT_p(keys[15], n_hid, c, 4, 4),
    }


def prepare_params(params, height, width):
    """One-time host-side prep: fused R / bias matrices + VQ constants."""
    c = int(np.asarray(params["e1"]["w"]).shape[1])
    h, w = int(height), int(width)
    assert h % 4 == 0 and w % 4 == 0 and c % 8 == 0
    n_hid = c // 4
    h1, w1, h2, w2 = h // 2, w // 2, h // 4, w // 4
    hq = h2
    embed = np.asarray(params["embed"], np.float32)
    n_embed, d_emb = embed.shape

    FULL = (4, w, c)                       # quad layout (full resolution)
    HALF = (2, w1, n_hid)                  # pair layout (half resolution)
    QTR = (1, w2, 2 * n_hid)               # quarter resolution
    QTRB = (1, w2, 2 * n_hid // 4)         # resblock bottleneck
    QTRD = (1, w2, d_emb)                  # z_e / z_q rows

    layer_defs = [
        ("e1",     params["e1"],           False, 2, 1, FULL, HALF, True),
        ("e2",     params["e2"],           False, 2, 1, HALF, QTR,  True),
        ("e3",     params["e3"],           False, 1, 1, QTR,  QTR,  True),
        ("eres1a", params["e_res1"]["c1"], False, 1, 1, QTR,  QTRB, True),
        ("eres1b", params["e_res1"]["c2"], False, 1, 0, QTRB, QTR,  False),
        ("eres2a", params["e_res2"]["c1"], False, 1, 1, QTR,  QTRB, True),
        ("eres2b", params["e_res2"]["c2"], False, 1, 0, QTRB, QTR,  False),
        ("proj",   params["proj"],         False, 1, 0, QTR,  QTRD, False),
        ("d1",     params["d1"],           False, 1, 1, QTRD, QTR,  True),
        ("dres1a", params["d_res1"]["c1"], False, 1, 1, QTR,  QTRB, True),
        ("dres1b", params["d_res1"]["c2"], False, 1, 0, QTRB, QTR,  False),
        ("dres2a", params["d_res2"]["c1"], False, 1, 1, QTR,  QTRB, True),
        ("dres2b", params["d_res2"]["c2"], False, 1, 0, QTRB, QTR,  False),
        ("dT1",    params["dT1"],          True,  2, 1, QTR,  HALF, True),
        ("dT2",    params["dT2"],          True,  2, 1, HALF, FULL, False),
    ]

    arrays, plan = [], {}
    for name, lp, transposed, stride, pad, ind, outd, relu in layer_defs:
        gather, R, bias = _build_conv(lp["w"], lp["b"], transposed=transposed,
                                      stride=stride, pad=pad,
                                      in_desc=ind, out_desc=outd)
        r_idx = len(arrays); arrays.append(jnp.asarray(R, jnp.bfloat16))
        b_idx = len(arrays); arrays.append(jnp.asarray(bias, jnp.float32))
        plan[name] = dict(r=r_idx, b=b_idx, gather=gather, relu=relu)

    cbT_idx = len(arrays)
    arrays.append(jnp.asarray(np.ascontiguousarray(embed.T), jnp.bfloat16))
    cb_idx = len(arrays)
    arrays.append(jnp.asarray(embed, jnp.float32))
    e2_idx = len(arrays)
    arrays.append(jnp.asarray(np.sum(embed * embed, axis=1).reshape(1, n_embed),
                              jnp.float32))

    meta = dict(H=h, W=w, C=c, Hq=hq, Wq=w2, D=d_emb, ncode=n_embed,
                lanes_full=4 * w * c, cbT=cbT_idx, cb=cb_idx, e2=e2_idx)
    return arrays, plan, meta


# ----------------------------------------------------------------------------
# The fused Pallas kernel: whole VQVAE forward for Bt batch elements per step
# ----------------------------------------------------------------------------
def _sum_all(v):
    return jnp.sum(jnp.sum(v, axis=1, keepdims=True), axis=0, keepdims=True)


def _vqvae_kernel(*refs, plan, meta, n_const):
    x_ref = refs[0]
    const = refs[1:1 + n_const]
    xh_ref, ind_ref, loss_ref = refs[1 + n_const:]

    f32, bf16 = jnp.float32, jnp.bfloat16
    hq, wq, d, ncode = meta["Hq"], meta["Wq"], meta["D"], meta["ncode"]

    def shift_rows(x, s):
        # Per-batch one-row shift with zero padding (input rows live in blocks
        # of hq rows per batch element stacked along the M axis).
        m, l = x.shape
        if s == 0:
            return x
        z = jnp.zeros((abs(s), l), x.dtype)
        if s > 0:
            y = jnp.concatenate([z, x[:m - s]], axis=0)
        else:
            y = jnp.concatenate([x[-s:], z], axis=0)
        if m != hq:                       # >1 batch element stacked: mask edges
            r = jax.lax.broadcasted_iota(jnp.int32, (m, 1), 0) % hq
            ok = (r >= s) if s > 0 else (r < hq + s)
            y = jnp.where(ok, y, jnp.zeros_like(y))
        return y

    def layer(x, name):
        sp = plan[name]
        xb = x.astype(bf16)
        parts = [shift_rows(xb[:, lo:hi], s) for (s, lo, hi) in sp["gather"]]
        g = parts[0] if len(parts) == 1 else jnp.concatenate(parts, axis=1)
        y = jnp.dot(g, const[sp["r"]][...], preferred_element_type=f32)
        y = y + const[sp["b"]][...]
        if sp["relu"]:
            y = jnp.maximum(y, 0.0)
        return y

    def resblock(h, name_a, name_b):
        t = layer(jnp.maximum(h, 0.0), name_a)   # ReLU -> conv3x3 -> ReLU
        t = layer(t, name_b)                     # conv1x1
        return h + t

    # ---------------- encoder ----------------
    x0 = x_ref[0]                                # (M, 4*W*C) f32, quad layout
    h = layer(x0, "e1")
    h = layer(h, "e2")
    h = layer(h, "e3")
    h = resblock(h, "eres1a", "eres1b")
    h = resblock(h, "eres2a", "eres2b")
    z_e = layer(h, "proj")                       # (M, Wq*D) f32

    # ---------------- vector quantizer ----------------
    cbT = const[meta["cbT"]][...]                # (D, ncode) bf16
    cb = const[meta["cb"]][...]                  # (ncode, D) f32
    e2n = const[meta["e2"]][...]                 # (1, ncode) f32

    commit = jnp.zeros((1, 1), f32)
    zq_parts, ind_parts = [], []
    for wpos in range(wq):
        zf = z_e[:, wpos * d:(wpos + 1) * d]                       # (M, D) f32
        cross = jnp.dot(zf.astype(bf16), cbT, preferred_element_type=f32)
        f2 = jnp.sum(zf * zf, axis=1, keepdims=True)
        dist = f2 - 2.0 * cross + e2n                              # (M, ncode)
        lane = jax.lax.broadcasted_iota(jnp.int32, dist.shape, 1)
        mind = jnp.min(dist, axis=1, keepdims=True)
        # first index achieving the min (matches torch argmax-of-neg-dist)
        ind_w = jnp.min(jnp.where(dist == mind, lane, ncode),
                        axis=1, keepdims=True)
        onehot = (lane == ind_w).astype(f32)
        zq_w = jnp.dot(onehot, cb, preferred_element_type=f32)     # exact gather
        dd = zq_w - zf
        commit = commit + _sum_all(dd * dd)
        zq_parts.append(zq_w)
        ind_parts.append(ind_w)
    zq_rows = jnp.concatenate(zq_parts, axis=1)                    # (M, Wq*D)
    ind_ref[0] = jnp.concatenate(ind_parts, axis=1)                # (M, Wq) i32

    # ---------------- decoder (straight-through fwd == z_q) ----------------
    h = layer(zq_rows, "d1")
    h = resblock(h, "dres1a", "dres1b")
    h = resblock(h, "dres2a", "dres2b")
    h = layer(h, "dT1")
    xh = layer(h, "dT2")                         # (M, 4*W*C) f32, quad layout

    xh_ref[0] = xh
    dr = xh - x0
    recon = _sum_all(dr * dr)
    loss_ref[0] = jnp.concatenate([commit, recon], axis=1)         # (1, 2)


# ----------------------------------------------------------------------------
# Public forward: NCHW in, (x_hat NCHW, total loss, indices) out
# ----------------------------------------------------------------------------
def vqvae_forward(prep, x_nchw):
    arrays, plan, meta = prep
    b, c, hh, ww = x_nchw.shape
    hq, wq, d = meta["Hq"], meta["Wq"], meta["D"]
    lanes_full = meta["lanes_full"]
    assert hh == meta["H"] and ww == meta["W"] and c == meta["C"]

    # Batch elements stacked along M per grid step (cap M ~ 32 rows); keep the
    # grid >= 2 steps when possible so both v7x TensorCores get work.
    max_bt = max(1, 32 // hq)
    bt = 1
    for cand in range(min(b // 2 if b >= 2 else 1, max_bt), 0, -1):
        if b % cand == 0:
            bt = cand
            break
    n_steps = b // bt
    m = bt * hq

    # NCHW -> (n_steps, M, 4*W*C) quad layout (4 image rows per M-row).
    xr = jnp.transpose(x_nchw.astype(jnp.float32), (0, 2, 3, 1))   # (B,H,W,C)
    xr = xr.reshape(b, hq, 4, ww, c).reshape(b, hq, lanes_full)
    xr = xr.reshape(n_steps, m, lanes_full)

    kernel = functools.partial(_vqvae_kernel, plan=plan, meta=meta,
                               n_const=len(arrays))

    in_specs = [pl.BlockSpec((1, m, lanes_full), lambda i: (i, 0, 0))]
    for a in arrays:
        in_specs.append(pl.BlockSpec(a.shape, lambda i, nd=a.ndim: (0,) * nd))

    out_shape = (
        jax.ShapeDtypeStruct((n_steps, m, lanes_full), jnp.float32),  # x_hat
        jax.ShapeDtypeStruct((n_steps, m, wq), jnp.int32),            # indices
        jax.ShapeDtypeStruct((n_steps, 1, 2), jnp.float32),           # loss sums
    )
    out_specs = (
        pl.BlockSpec((1, m, lanes_full), lambda i: (i, 0, 0)),
        pl.BlockSpec((1, m, wq), lambda i: (i, 0, 0)),
        pl.BlockSpec((1, 1, 2), lambda i: (i, 0, 0)),
    )

    xh, ind, losses = pl.pallas_call(
        kernel,
        grid=(n_steps,),
        in_specs=in_specs,
        out_specs=out_specs,
        out_shape=out_shape,
        compiler_params=pltpu.CompilerParams(
            dimension_semantics=("parallel",),
            vmem_limit_bytes=32 * 1024 * 1024,
        ),
    )(xr, *arrays)

    # losses (F.mse_loss means); detach() is a forward-value no-op
    kld_scale, commitment_cost = 10.0, 0.25
    commit_sq = jnp.sum(losses[:, 0, 0])
    recon_sq = jnp.sum(losses[:, 0, 1])
    mse_commit = commit_sq / (b * hq * wq * d)
    latent_loss = kld_scale * (commitment_cost * mse_commit + mse_commit)
    recon_loss = recon_sq / x_nchw.size
    total_loss = latent_loss + recon_loss

    # quad layout -> NCHW
    xh = xh.reshape(b, hq, 4, ww, c).reshape(b, hh, ww, c)
    x_hat = jnp.transpose(xh, (0, 3, 1, 2))
    ind_out = ind.reshape(b, hq, wq)
    return x_hat, total_loss, ind_out


# ----------------------------------------------------------------------------
if __name__ == "__main__":
    input_channels = 16
    height = width = 16
    batch = 2

    x = jax.random.normal(jax.random.PRNGKey(0),
                          (batch, input_channels, height, width), jnp.float32)
    params = init_params(jax.random.PRNGKey(1), input_channels)
    prep = prepare_params(params, height, width)

    fwd = jax.jit(functools.partial(vqvae_forward, prep))
    x_hat, loss, ind = fwd(x)
    jax.block_until_ready((x_hat, loss, ind))

    assert x_hat.shape == x.shape
    assert ind.shape == (batch, height // 4, width // 4)
    assert loss.shape == ()
    assert bool(jnp.isfinite(loss))
    print("KERNEL_OK")
</pallas_src>

<mosaic_0001>
module attributes {stable_mosaic.version = 11 : i64} {
  func.func @_vqvae_kernel(%arg0: i32, %arg1: memref<1x4x1024xf32, #tpu.memory_space<vmem>>, %arg2: memref<1536x64xbf16, #tpu.memory_space<vmem>>, %arg3: memref<1x64xf32, #tpu.memory_space<vmem>>, %arg4: memref<128x32xbf16, #tpu.memory_space<vmem>>, %arg5: memref<1x32xf32, #tpu.memory_space<vmem>>, %arg6: memref<96x32xbf16, #tpu.memory_space<vmem>>, %arg7: memref<1x32xf32, #tpu.memory_space<vmem>>, %arg8: memref<96x8xbf16, #tpu.memory_space<vmem>>, %arg9: memref<1x8xf32, #tpu.memory_space<vmem>>, %arg10: memref<8x32xbf16, #tpu.memory_space<vmem>>, %arg11: memref<1x32xf32, #tpu.memory_space<vmem>>, %arg12: memref<96x8xbf16, #tpu.memory_space<vmem>>, %arg13: memref<1x8xf32, #tpu.memory_space<vmem>>, %arg14: memref<8x32xbf16, #tpu.memory_space<vmem>>, %arg15: memref<1x32xf32, #tpu.memory_space<vmem>>, %arg16: memref<32x256xbf16, #tpu.memory_space<vmem>>, %arg17: memref<1x256xf32, #tpu.memory_space<vmem>>, %arg18: memref<768x32xbf16, #tpu.memory_space<vmem>>, %arg19: memref<1x32xf32, #tpu.memory_space<vmem>>, %arg20: memref<96x8xbf16, #tpu.memory_space<vmem>>, %arg21: memref<1x8xf32, #tpu.memory_space<vmem>>, %arg22: memref<8x32xbf16, #tpu.memory_space<vmem>>, %arg23: memref<1x32xf32, #tpu.memory_space<vmem>>, %arg24: memref<96x8xbf16, #tpu.memory_space<vmem>>, %arg25: memref<1x8xf32, #tpu.memory_space<vmem>>, %arg26: memref<8x32xbf16, #tpu.memory_space<vmem>>, %arg27: memref<1x32xf32, #tpu.memory_space<vmem>>, %arg28: memref<96x64xbf16, #tpu.memory_space<vmem>>, %arg29: memref<1x64xf32, #tpu.memory_space<vmem>>, %arg30: memref<128x1024xbf16, #tpu.memory_space<vmem>>, %arg31: memref<1x1024xf32, #tpu.memory_space<vmem>>, %arg32: memref<64x512xbf16, #tpu.memory_space<vmem>>, %arg33: memref<512x64xf32, #tpu.memory_space<vmem>>, %arg34: memref<1x512xf32, #tpu.memory_space<vmem>>, %arg35: memref<1x4x1024xf32, #tpu.memory_space<vmem>>, %arg36: memref<1x4x4xi32, #tpu.memory_space<vmem>>, %arg37: memref<1x1x2xf32, #tpu.memory_space<vmem>>) attributes {dimension_semantics = [#tpu.dimension_semantics<parallel>], iteration_bounds = array<i64: 2>, scalar_prefetch = 0 : i64, scratch_operands = 0 : i64, tpu.core_type = #tpu.core_type<tc>, window_params = [{transform_indices = @transform_0, window_bounds = array<i64: 1, 4, 1024>}, {pipeline_mode = #tpu.pipeline_mode<synchronous>, transform_indices = @transform_1, window_bounds = array<i64: 1536, 64>}, {pipeline_mode = #tpu.pipeline_mode<synchronous>, transform_indices = @transform_2, window_bounds = array<i64: 1, 64>}, {pipeline_mode = #tpu.pipeline_mode<synchronous>, transform_indices = @transform_3, window_bounds = array<i64: 128, 32>}, {pipeline_mode = #tpu.pipeline_mode<synchronous>, transform_indices = @transform_4, window_bounds = array<i64: 1, 32>}, {pipeline_mode = #tpu.pipeline_mode<synchronous>, transform_indices = @transform_5, window_bounds = array<i64: 96, 32>}, {pipeline_mode = #tpu.pipeline_mode<synchronous>, transform_indices = @transform_6, window_bounds = array<i64: 1, 32>}, {pipeline_mode = #tpu.pipeline_mode<synchronous>, transform_indices = @transform_7, window_bounds = array<i64: 96, 8>}, {pipeline_mode = #tpu.pipeline_mode<synchronous>, transform_indices = @transform_8, window_bounds = array<i64: 1, 8>}, {pipeline_mode = #tpu.pipeline_mode<synchronous>, transform_indices = @transform_9, window_bounds = array<i64: 8, 32>}, {pipeline_mode = #tpu.pipeline_mode<synchronous>, transform_indices = @transform_10, window_bounds = array<i64: 1, 32>}, {pipeline_mode = #tpu.pipeline_mode<synchronous>, transform_indices = @transform_11, window_bounds = array<i64: 96, 8>}, {pipeline_mode = #tpu.pipeline_mode<synchronous>, transform_indices = @transform_12, window_bounds = array<i64: 1, 8>}, {pipeline_mode = #tpu.pipeline_mode<synchronous>, transform_indices = @transform_13, window_bounds = array<i64: 8, 32>}, {pipeline_mode = #tpu.pipeline_mode<synchronous>, transform_indices = @transform_14, window_bounds = array<i64: 1, 32>}, {pipeline_mode = #tpu.pipeline_mode<synchronous>, transform_indices = @transform_15, window_bounds = array<i64: 32, 256>}, {pipeline_mode = #tpu.pipeline_mode<synchronous>, transform_indices = @transform_16, window_bounds = array<i64: 1, 256>}, {pipeline_mode = #tpu.pipeline_mode<synchronous>, transform_indices = @transform_17, window_bounds = array<i64: 768, 32>}, {pipeline_mode = #tpu.pipeline_mode<synchronous>, transform_indices = @transform_18, window_bounds = array<i64: 1, 32>}, {pipeline_mode = #tpu.pipeline_mode<synchronous>, transform_indices = @transform_19, window_bounds = array<i64: 96, 8>}, {pipeline_mode = #tpu.pipeline_mode<synchronous>, transform_indices = @transform_20, window_bounds = array<i64: 1, 8>}, {pipeline_mode = #tpu.pipeline_mode<synchronous>, transform_indices = @transform_21, window_bounds = array<i64: 8, 32>}, {pipeline_mode = #tpu.pipeline_mode<synchronous>, transform_indices = @transform_22, window_bounds = array<i64: 1, 32>}, {pipeline_mode = #tpu.pipeline_mode<synchronous>, transform_indices = @transform_23, window_bounds = array<i64: 96, 8>}, {pipeline_mode = #tpu.pipeline_mode<synchronous>, transform_indices = @transform_24, window_bounds = array<i64: 1, 8>}, {pipeline_mode = #tpu.pipeline_mode<synchronous>, transform_indices = @transform_25, window_bounds = array<i64: 8, 32>}, {pipeline_mode = #tpu.pipeline_mode<synchronous>, transform_indices = @transform_26, window_bounds = array<i64: 1, 32>}, {pipeline_mode = #tpu.pipeline_mode<synchronous>, transform_indices = @transform_27, window_bounds = array<i64: 96, 64>}, {pipeline_mode = #tpu.pipeline_mode<synchronous>, transform_indices = @transform_28, window_bounds = array<i64: 1, 64>}, {pipeline_mode = #tpu.pipeline_mode<synchronous>, transform_indices = @transform_29, window_bounds = array<i64: 128, 1024>}, {pipeline_mode = #tpu.pipeline_mode<synchronous>, transform_indices = @transform_30, window_bounds = array<i64: 1, 1024>}, {pipeline_mode = #tpu.pipeline_mode<synchronous>, transform_indices = @transform_31, window_bounds = array<i64: 64, 512>}, {pipeline_mode = #tpu.pipeline_mode<synchronous>, transform_indices = @transform_32, window_bounds = array<i64: 512, 64>}, {pipeline_mode = #tpu.pipeline_mode<synchronous>, transform_indices = @transform_33, window_bounds = array<i64: 1, 512>}, {transform_indices = @transform_34, window_bounds = array<i64: 1, 4, 1024>}, {transform_indices = @transform_35, window_bounds = array<i64: 1, 4, 4>}, {transform_indices = @transform_36, window_bounds = array<i64: 1, 1, 2>}]} {
    %c0 = arith.constant 0 : index
    %c0_0 = arith.constant 0 : index
    %c0_1 = arith.constant 0 : index
    %0 = vector.load %arg1[%c0, %c0_0, %c0_1] : memref<1x4x1024xf32, #tpu.memory_space<vmem>>, vector<1x4x1024xf32>
    %1 = vector.shape_cast %0 : vector<1x4x1024xf32> to vector<4x1024xf32>
    %2 = arith.truncf %1 : vector<4x1024xf32> to vector<4x1024xbf16>
    %3 = vector.extract_strided_slice %2 {offsets = [0, 0], sizes = [4, 256], strides = [1, 1]} : vector<4x1024xbf16> to vector<4x256xbf16>
    %cst = arith.constant 0.000000e+00 : bf16
    %4 = vector.broadcast %cst : bf16 to vector<1x256xbf16>
    %5 = vector.extract_strided_slice %3 {offsets = [1, 0], sizes = [3, 256], strides = [1, 1]} : vector<4x256xbf16> to vector<3x256xbf16>
    %6 = tpu.concatenate %5, %4 in 0 : vector<3x256xbf16>, vector<1x256xbf16> -> vector<4x256xbf16>
    %7 = vector.extract_strided_slice %2 {offsets = [0, 768], sizes = [4, 256], strides = [1, 1]} : vector<4x1024xbf16> to vector<4x256xbf16>
    %cst_2 = arith.constant 0.000000e+00 : bf16
    %8 = vector.broadcast %cst_2 : bf16 to vector<1x256xbf16>
    %9 = vector.extract_strided_slice %7 {offsets = [0, 0], sizes = [3, 256], strides = [1, 1]} : vector<4x256xbf16> to vector<3x256xbf16>
    %10 = tpu.concatenate %8, %9 in 0 : vector<1x256xbf16>, vector<3x256xbf16> -> vector<4x256xbf16>
    %11 = tpu.concatenate %6, %2, %10 in 1 : vector<4x256xbf16>, vector<4x1024xbf16>, vector<4x256xbf16> -> vector<4x1536xbf16>
    %c0_3 = arith.constant 0 : index
    %c0_4 = arith.constant 0 : index
    %12 = vector.load %arg2[%c0_3, %c0_4] : memref<1536x64xbf16, #tpu.memory_space<vmem>>, vector<1536x64xbf16>
    %cst_5 = arith.constant dense<0.000000e+00> : vector<4x64xf32>
    %13 = tpu.matmul %11, %12, %cst_5 {dimension_numbers = #tpu.dot_dimension_numbers<[1], [0], [0], [1], [0, 0, 1, 1], [], []>} : vector<4x1536xbf16>, vector<1536x64xbf16>, vector<4x64xf32> -> vector<4x64xf32>
    %c0_6 = arith.constant 0 : index
    %c0_7 = arith.constant 0 : index
    %14 = vector.load %arg3[%c0_6, %c0_7] : memref<1x64xf32, #tpu.memory_space<vmem>>, vector<1x64xf32>
    %15 = vector.broadcast %14 : vector<1x64xf32> to vector<4x64xf32>
    %16 = arith.addf %13, %15 : vector<4x64xf32>
    %cst_8 = arith.constant 0.000000e+00 : f32
    %17 = vector.broadcast %cst_8 : f32 to vector<4x64xf32>
    %18 = arith.maximumf %16, %17 : vector<4x64xf32>
    %19 = arith.truncf %18 : vector<4x64xf32> to vector<4x64xbf16>
    %20 = vector.extract_strided_slice %19 {offsets = [0, 0], sizes = [4, 32], strides = [1, 1]} : vector<4x64xbf16> to vector<4x32xbf16>
    %cst_9 = arith.constant 0.000000e+00 : bf16
    %21 = vector.broadcast %cst_9 : bf16 to vector<1x32xbf16>
    %22 = vector.extract_strided_slice %20 {offsets = [1, 0], sizes = [3, 32], strides = [1, 1]} : vector<4x32xbf16> to vector<3x32xbf16>
    %23 = tpu.concatenate %22, %21 in 0 : vector<3x32xbf16>, vector<1x32xbf16> -> vector<4x32xbf16>
    %24 = vector.extract_strided_slice %19 {offsets = [0, 32], sizes = [4, 32], strides = [1, 1]} : vector<4x64xbf16> to vector<4x32xbf16>
    %cst_10 = arith.constant 0.000000e+00 : bf16
    %25 = vector.broadcast %cst_10 : bf16 to vector<1x32xbf16>
    %26 = vector.extract_strided_slice %24 {offsets = [0, 0], sizes = [3, 32], strides = [1, 1]} : vector<4x32xbf16> to vector<3x32xbf16>
    %27 = tpu.concatenate %25, %26 in 0 : vector<1x32xbf16>, vector<3x32xbf16> -> vector<4x32xbf16>
    %28 = tpu.concatenate %23, %19, %27 in 1 : vector<4x32xbf16>, vector<4x64xbf16>, vector<4x32xbf16> -> vector<4x128xbf16>
    %c0_11 = arith.constant 0 : index
    %c0_12 = arith.constant 0 : index
    %29 = vector.load %arg4[%c0_11, %c0_12] : memref<128x32xbf16, #tpu.memory_space<vmem>>, vector<128x32xbf16>
    %cst_13 = arith.constant dense<0.000000e+00> : vector<4x32xf32>
    %30 = tpu.matmul %28, %29, %cst_13 {dimension_numbers = #tpu.dot_dimension_numbers<[1], [0], [0], [1], [0, 0, 1, 1], [], []>} : vector<4x128xbf16>, vector<128x32xbf16>, vector<4x32xf32> -> vector<4x32xf32>
    %c0_14 = arith.constant 0 : index
    %c0_15 = arith.constant 0 : index
    %31 = vector.load %arg5[%c0_14, %c0_15] : memref<1x32xf32, #tpu.memory_space<vmem>>, vector<1x32xf32>
    %32 = vector.broadcast %31 : vector<1x32xf32> to vector<4x32xf32>
    %33 = arith.addf %30, %32 : vector<4x32xf32>
    %cst_16 = arith.constant 0.000000e+00 : f32
    %34 = vector.broadcast %cst_16 : f32 to vector<4x32xf32>
    %35 = arith.maximumf %33, %34 : vector<4x32xf32>
    %36 = arith.truncf %35 : vector<4x32xf32> to vector<4x32xbf16>
    %cst_17 = arith.constant 0.000000e+00 : bf16
    %37 = vector.broadcast %cst_17 : bf16 to vector<1x32xbf16>
    %38 = vector.extract_strided_slice %36 {offsets = [1, 0], sizes = [3, 32], strides = [1, 1]} : vector<4x32xbf16> to vector<3x32xbf16>
    %39 = tpu.concatenate %38, %37 in 0 : vector<3x32xbf16>, vector<1x32xbf16> -> vector<4x32xbf16>
    %cst_18 = arith.constant 0.000000e+00 : bf16
    %40 = vector.broadcast %cst_18 : bf16 to vector<1x32xbf16>
    %41 = vector.extract_strided_slice %36 {offsets = [0, 0], sizes = [3, 32], strides = [1, 1]} : vector<4x32xbf16> to vector<3x32xbf16>
    %42 = tpu.concatenate %40, %41 in 0 : vector<1x32xbf16>, vector<3x32xbf16> -> vector<4x32xbf16>
    %43 = tpu.concatenate %39, %36, %42 in 1 : vector<4x32xbf16>, vector<4x32xbf16>, vector<4x32xbf16> -> vector<4x96xbf16>
    %c0_19 = arith.constant 0 : index
    %c0_20 = arith.constant 0 : index
    %44 = vector.load %arg6[%c0_19, %c0_20] : memref<96x32xbf16, #tpu.memory_space<vmem>>, vector<96x32xbf16>
    %cst_21 = arith.constant dense<0.000000e+00> : vector<4x32xf32>
    %45 = tpu.matmul %43, %44, %cst_21 {dimension_numbers = #tpu.dot_dimension_numbers<[1], [0], [0], [1], [0, 0, 1, 1], [], []>} : vector<4x96xbf16>, vector<96x32xbf16>, vector<4x32xf32> -> vector<4x32xf32>
    %c0_22 = arith.constant 0 : index
    %c0_23 = arith.constant 0 : index
    %46 = vector.load %arg7[%c0_22, %c0_23] : memref<1x32xf32, #tpu.memory_space<vmem>>, vector<1x32xf32>
    %47 = vector.broadcast %46 : vector<1x32xf32> to vector<4x32xf32>
    %48 = arith.addf %45, %47 : vector<4x32xf32>
    %cst_24 = arith.constant 0.000000e+00 : f32
    %49 = vector.broadcast %cst_24 : f32 to vector<4x32xf32>
    %50 = arith.maximumf %48, %49 : vector<4x32xf32>
    %cst_25 = arith.constant 0.000000e+00 : f32
    %51 = vector.broadcast %cst_25 : f32 to vector<4x32xf32>
    %52 = arith.maximumf %50, %51 : vector<4x32xf32>
    %53 = arith.truncf %52 : vector<4x32xf32> to vector<4x32xbf16>
    %cst_26 = arith.constant 0.000000e+00 : bf16
    %54 = vector.broadcast %cst_26 : bf16 to vector<1x32xbf16>
    %55 = vector.extract_strided_slice %53 {offsets = [1, 0], sizes = [3, 32], strides = [1, 1]} : vector<4x32xbf16> to vector<3x32xbf16>
    %56 = tpu.concatenate %55, %54 in 0 : vector<3x32xbf16>, vector<1x32xbf16> -> vector<4x32xbf16>
    %cst_27 = arith.constant 0.000000e+00 : bf16
    %57 = vector.broadcast %cst_27 : bf16 to vector<1x32xbf16>
    %58 = vector.extract_strided_slice %53 {offsets = [0, 0], sizes = [3, 32], strides = [1, 1]} : vector<4x32xbf16> to vector<3x32xbf16>
    %59 = tpu.concatenate %57, %58 in 0 : vector<1x32xbf16>, vector<3x32xbf16> -> vector<4x32xbf16>
    %60 = tpu.concatenate %56, %53, %59 in 1 : vector<4x32xbf16>, vector<4x32xbf16>, vector<4x32xbf16> -> vector<4x96xbf16>
    %c0_28 = arith.constant 0 : index
    %c0_29 = arith.constant 0 : index
    %61 = vector.load %arg8[%c0_28, %c0_29] : memref<96x8xbf16, #tpu.memory_space<vmem>>, vector<96x8xbf16>
    %cst_30 = arith.constant dense<0.000000e+00> : vector<4x8xf32>
    %62 = tpu.matmul %60, %61, %cst_30 {dimension_numbers = #tpu.dot_dimension_numbers<[1], [0], [0], [1], [0, 0, 1, 1], [], []>} : vector<4x96xbf16>, vector<96x8xbf16>, vector<4x8xf32> -> vector<4x8xf32>
    %c0_31 = arith.constant 0 : index
    %c0_32 = arith.constant 0 : index
    %63 = vector.load %arg9[%c0_31, %c0_32] : memref<1x8xf32, #tpu.memory_space<vmem>>, vector<1x8xf32>
    %64 = vector.broadcast %63 : vector<1x8xf32> to vector<4x8xf32>
    %65 = arith.addf %62, %64 : vector<4x8xf32>
    %cst_33 = arith.constant 0.000000e+00 : f32
    %66 = vector.broadcast %cst_33 : f32 to vector<4x8xf32>
    %67 = arith.maximumf %65, %66 : vector<4x8xf32>
    %68 = arith.truncf %67 : vector<4x8xf32> to vector<4x8xbf16>
    %c0_34 = arith.constant 0 : index
    %c0_35 = arith.constant 0 : index
    %69 = vector.load %arg10[%c0_34, %c0_35] : memref<8x32xbf16, #tpu.memory_space<vmem>>, vector<8x32xbf16>
    %cst_36 = arith.constant dense<0.000000e+00> : vector<4x32xf32>
    %70 = tpu.matmul %68, %69, %cst_36 {dimension_numbers = #tpu.dot_dimension_numbers<[1], [0], [0], [1], [0, 0, 1, 1], [], []>} : vector<4x8xbf16>, vector<8x32xbf16>, vector<4x32xf32> -> vector<4x32xf32>
    %c0_37 = arith.constant 0 : index
    %c0_38 = arith.constant 0 : index
    %71 = vector.load %arg11[%c0_37, %c0_38] : memref<1x32xf32, #tpu.memory_space<vmem>>, vector<1x32xf32>
    %72 = vector.broadcast %71 : vector<1x32xf32> to vector<4x32xf32>
    %73 = arith.addf %70, %72 : vector<4x32xf32>
    %74 = arith.addf %50, %73 : vector<4x32xf32>
    %cst_39 = arith.constant 0.000000e+00 : f32
    %75 = vector.broadcast %cst_39 : f32 to vector<4x32xf32>
    %76 = arith.maximumf %74, %75 : vector<4x32xf32>
    %77 = arith.truncf %76 : vector<4x32xf32> to vector<4x32xbf16>
    %cst_40 = arith.constant 0.000000e+00 : bf16
    %78 = vector.broadcast %cst_40 : bf16 to vector<1x32xbf16>
    %79 = vector.extract_strided_slice %77 {offsets = [1, 0], sizes = [3, 32], strides = [1, 1]} : vector<4x32xbf16> to vector<3x32xbf16>
    %80 = tpu.concatenate %79, %78 in 0 : vector<3x32xbf16>, vector<1x32xbf16> -> vector<4x32xbf16>
    %cst_41 = arith.constant 0.000000e+00 : bf16
    %81 = vector.broadcast %cst_41 : bf16 to vector<1x32xbf16>
    %82 = vector.extract_strided_slice %77 {offsets = [0, 0], sizes = [3, 32], strides = [1, 1]} : vector<4x32xbf16> to vector<3x32xbf16>
    %83 = tpu.concatenate %81, %82 in 0 : vector<1x32xbf16>, vector<3x32xbf16> -> vector<4x32xbf16>
    %84 = tpu.concatenate %80, %77, %83 in 1 : vector<4x32xbf16>, vector<4x32xbf16>, vector<4x32xbf16> -> vector<4x96xbf16>
    %c0_42 = arith.constant 0 : index
    %c0_43 = arith.constant 0 : index
    %85 = vector.load %arg12[%c0_42, %c0_43] : memref<96x8xbf16, #tpu.memory_space<vmem>>, vector<96x8xbf16>
    %cst_44 = arith.constant dense<0.000000e+00> : vector<4x8xf32>
    %86 = tpu.matmul %84, %85, %cst_44 {dimension_numbers = #tpu.dot_dimension_numbers<[1], [0], [0], [1], [0, 0, 1, 1], [], []>} : vector<4x96xbf16>, vector<96x8xbf16>, vector<4x8xf32> -> vector<4x8xf32>
    %c0_45 = arith.constant 0 : index
    %c0_46 = arith.constant 0 : index
    %87 = vector.load %arg13[%c0_45, %c0_46] : memref<1x8xf32, #tpu.memory_space<vmem>>, vector<1x8xf32>
    %88 = vector.broadcast %87 : vector<1x8xf32> to vector<4x8xf32>
    %89 = arith.addf %86, %88 : vector<4x8xf32>
    %cst_47 = arith.constant 0.000000e+00 : f32
    %90 = vector.broadcast %cst_47 : f32 to vector<4x8xf32>
    %91 = arith.maximumf %89, %90 : vector<4x8xf32>
    %92 = arith.truncf %91 : vector<4x8xf32> to vector<4x8xbf16>
    %c0_48 = arith.constant 0 : index
    %c0_49 = arith.constant 0 : index
    %93 = vector.load %arg14[%c0_48, %c0_49] : memref<8x32xbf16, #tpu.memory_space<vmem>>, vector<8x32xbf16>
    %cst_50 = arith.constant dense<0.000000e+00> : vector<4x32xf32>
    %94 = tpu.matmul %92, %93, %cst_50 {dimension_numbers = #tpu.dot_dimension_numbers<[1], [0], [0], [1], [0, 0, 1, 1], [], []>} : vector<4x8xbf16>, vector<8x32xbf16>, vector<4x32xf32> -> vector<4x32xf32>
    %c0_51 = arith.constant 0 : index
    %c0_52 = arith.constant 0 : index
    %95 = vector.load %arg15[%c0_51, %c0_52] : memref<1x32xf32, #tpu.memory_space<vmem>>, vector<1x32xf32>
    %96 = vector.broadcast %95 : vector<1x32xf32> to vector<4x32xf32>
    %97 = arith.addf %94, %96 : vector<4x32xf32>
    %98 = arith.addf %74, %97 : vector<4x32xf32>
    %99 = arith.truncf %98 : vector<4x32xf32> to vector<4x32xbf16>
    %c0_53 = arith.constant 0 : index
    %c0_54 = arith.constant 0 : index
    %100 = vector.load %arg16[%c0_53, %c0_54] : memref<32x256xbf16, #tpu.memory_space<vmem>>, vector<32x256xbf16>
    %cst_55 = arith.constant dense<0.000000e+00> : vector<4x256xf32>
    %101 = tpu.matmul %99, %100, %cst_55 {dimension_numbers = #tpu.dot_dimension_numbers<[1], [0], [0], [1], [0, 0, 1, 1], [], []>} : vector<4x32xbf16>, vector<32x256xbf16>, vector<4x256xf32> -> vector<4x256xf32>
    %c0_56 = arith.constant 0 : index
    %c0_57 = arith.constant 0 : index
    %102 = vector.load %arg17[%c0_56, %c0_57] : memref<1x256xf32, #tpu.memory_space<vmem>>, vector<1x256xf32>
    %103 = vector.broadcast %102 : vector<1x256xf32> to vector<4x256xf32>
    %104 = arith.addf %101, %103 : vector<4x256xf32>
    %c0_58 = arith.constant 0 : index
    %c0_59 = arith.constant 0 : index
    %105 = vector.load %arg32[%c0_58, %c0_59] : memref<64x512xbf16, #tpu.memory_space<vmem>>, vector<64x512xbf16>
    %c0_60 = arith.constant 0 : index
    %c0_61 = arith.constant 0 : index
    %106 = vector.load %arg33[%c0_60, %c0_61] : memref<512x64xf32, #tpu.memory_space<vmem>>, vector<512x64xf32>
    %c0_62 = arith.constant 0 : index
    %c0_63 = arith.constant 0 : index
    %107 = vector.load %arg34[%c0_62, %c0_63] : memref<1x512xf32, #tpu.memory_space<vmem>>, vector<1x512xf32>
    %cst_64 = arith.constant 0.000000e+00 : f32
    %108 = vector.broadcast %cst_64 : f32 to vector<1x1xf32>
    %109 = vector.extract_strided_slice %104 {offsets = [0, 0], sizes = [4, 64], strides = [1, 1]} : vector<4x256xf32> to vector<4x64xf32>
    %110 = arith.truncf %109 : vector<4x64xf32> to vector<4x64xbf16>
    %cst_65 = arith.constant dense<0.000000e+00> : vector<4x512xf32>
    %111 = tpu.matmul %110, %105, %cst_65 {dimension_numbers = #tpu.dot_dimension_numbers<[1], [0], [0], [1], [0, 0, 1, 1], [], []>} : vector<4x64xbf16>, vector<64x512xbf16>, vector<4x512xf32> -> vector<4x512xf32>
    %112 = arith.mulf %109, %109 : vector<4x64xf32>
    %cst_66 = arith.constant dense<0.000000e+00> : vector<4xf32>
    %113 = vector.multi_reduction <add>, %112, %cst_66 [1] : vector<4x64xf32> to vector<4xf32>
    %114 = vector.shape_cast %113 : vector<4xf32> to vector<4x1xf32>
    %cst_67 = arith.constant 2.000000e+00 : f32
    %115 = vector.broadcast %cst_67 : f32 to vector<4x512xf32>
    %116 = arith.mulf %115, %111 : vector<4x512xf32>
    %117 = vector.broadcast %114 : vector<4x1xf32> to vector<4x512xf32>
    %118 = arith.subf %117, %116 : vector<4x512xf32>
    %119 = vector.broadcast %107 : vector<1x512xf32> to vector<4x512xf32>
    %120 = arith.addf %118, %119 : vector<4x512xf32>
    %121 = tpu.iota {dimensions = array<i32: 1>} : vector<4x512xi32>
    %cst_68 = arith.constant dense<0x7F800000> : vector<4xf32>
    %122 = vector.multi_reduction <minimumf>, %120, %cst_68 [1] : vector<4x512xf32> to vector<4xf32>
    %123 = vector.shape_cast %122 : vector<4xf32> to vector<4x1xf32>
    %124 = vector.broadcast %123 : vector<4x1xf32> to vector<4x512xf32>
    %125 = arith.cmpf oeq, %120, %124 : vector<4x512xf32>
    %c512_i32 = arith.constant 512 : i32
    %126 = vector.broadcast %c512_i32 : i32 to vector<4x512xi32>
    %127 = arith.select %125, %121, %126 : vector<4x512xi1>, vector<4x512xi32>
    %cst_69 = arith.constant dense<2147483647> : vector<4xi32>
    %128 = vector.multi_reduction <minsi>, %127, %cst_69 [1] : vector<4x512xi32> to vector<4xi32>
    %129 = vector.shape_cast %128 : vector<4xi32> to vector<4x1xi32>
    %130 = vector.broadcast %129 : vector<4x1xi32> to vector<4x512xi32>
    %131 = arith.cmpi eq, %121, %130 : vector<4x512xi32>
    %132 = arith.extui %131 : vector<4x512xi1> to vector<4x512xi32>
    %133 = arith.sitofp %132 : vector<4x512xi32> to vector<4x512xf32>
    %cst_70 = arith.constant dense<0.000000e+00> : vector<4x64xf32>
    %134 = tpu.matmul %133, %106, %cst_70 {dimension_numbers = #tpu.dot_dimension_numbers<[1], [0], [0], [1], [0, 0, 1, 1], [], []>} : vector<4x512xf32>, vector<512x64xf32>, vector<4x64xf32> -> vector<4x64xf32>
    %135 = arith.subf %134, %109 : vector<4x64xf32>
    %136 = arith.mulf %135, %135 : vector<4x64xf32>
    %cst_71 = arith.constant dense<0.000000e+00> : vector<4xf32>
    %137 = vector.multi_reduction <add>, %136, %cst_71 [1] : vector<4x64xf32> to vector<4xf32>
    %138 = vector.shape_cast %137 : vector<4xf32> to vector<4x1xf32>
    %cst_72 = arith.constant dense<0.000000e+00> : vector<1xf32>
    %139 = vector.multi_reduction <add>, %138, %cst_72 [0] : vector<4x1xf32> to vector<1xf32>
    %140 = vector.shape_cast %139 : vector<1xf32> to vector<1x1xf32>
    %141 = arith.addf %108, %140 : vector<1x1xf32>
    %142 = vector.extract_strided_slice %104 {offsets = [0, 64], sizes = [4, 64], strides = [1, 1]} : vector<4x256xf32> to vector<4x64xf32>
    %143 = arith.truncf %142 : vector<4x64xf32> to vector<4x64xbf16>
    %cst_73 = arith.constant dense<0.000000e+00> : vector<4x512xf32>
    %144 = tpu.matmul %143, %105, %cst_73 {dimension_numbers = #tpu.dot_dimension_numbers<[1], [0], [0], [1], [0, 0, 1, 1], [], []>} : vector<4x64xbf16>, vector<64x512xbf16>, vector<4x512xf32> -> vector<4x512xf32>
    %145 = arith.mulf %142, %142 : vector<4x64xf32>
    %cst_74 = arith.constant dense<0.000000e+00> : vector<4xf32>
    %146 = vector.multi_reduction <add>, %145, %cst_74 [1] : vector<4x64xf32> to vector<4xf32>
    %147 = vector.shape_cast %146 : vector<4xf32> to vector<4x1xf32>
    %cst_75 = arith.constant 2.000000e+00 : f32
    %148 = vector.broadcast %cst_75 : f32 to vector<4x512xf32>
    %149 = arith.mulf %148, %144 : vector<4x512xf32>
    %150 = vector.broadcast %147 : vector<4x1xf32> to vector<4x512xf32>
    %151 = arith.subf %150, %149 : vector<4x512xf32>
    %152 = vector.broadcast %107 : vector<1x512xf32> to vector<4x512xf32>
    %153 = arith.addf %151, %152 : vector<4x512xf32>
    %154 = tpu.iota {dimensions = array<i32: 1>} : vector<4x512xi32>
    %cst_76 = arith.constant dense<0x7F800000> : vector<4xf32>
    %155 = vector.multi_reduction <minimumf>, %153, %cst_76 [1] : vector<4x512xf32> to vector<4xf32>
    %156 = vector.shape_cast %155 : vector<4xf32> to vector<4x1xf32>
    %157 = vector.broadcast %156 : vector<4x1xf32> to vector<4x512xf32>
    %158 = arith.cmpf oeq, %153, %157 : vector<4x512xf32>
    %c512_i32_77 = arith.constant 512 : i32
    %159 = vector.broadcast %c512_i32_77 : i32 to vector<4x512xi32>
    %160 = arith.select %158, %154, %159 : vector<4x512xi1>, vector<4x512xi32>
    %cst_78 = arith.constant dense<2147483647> : vector<4xi32>
    %161 = vector.multi_reduction <minsi>, %160, %cst_78 [1] : vector<4x512xi32> to vector<4xi32>
    %162 = vector.shape_cast %161 : vector<4xi32> to vector<4x1xi32>
    %163 = vector.broadcast %162 : vector<4x1xi32> to vector<4x512xi32>
    %164 = arith.cmpi eq, %154, %163 : vector<4x512xi32>
    %165 = arith.extui %164 : vector<4x512xi1> to vector<4x512xi32>
    %166 = arith.sitofp %165 : vector<4x512xi32> to vector<4x512xf32>
    %cst_79 = arith.constant dense<0.000000e+00> : vector<4x64xf32>
    %167 = tpu.matmul %166, %106, %cst_79 {dimension_numbers = #tpu.dot_dimension_numbers<[1], [0], [0], [1], [0, 0, 1, 1], [], []>} : vector<4x512xf32>, vector<512x64xf32>, vector<4x64xf32> -> vector<4x64xf32>
    %168 = arith.subf %167, %142 : vector<4x64xf32>
    %169 = arith.mulf %168, %168 : vector<4x64xf32>
    %cst_80 = arith.constant dense<0.000000e+00> : vector<4xf32>
    %170 = vector.multi_reduction <add>, %169, %cst_80 [1] : vector<4x64xf32> to vector<4xf32>
    %171 = vector.shape_cast %170 : vector<4xf32> to vector<4x1xf32>
    %cst_81 = arith.constant dense<0.000000e+00> : vector<1xf32>
    %172 = vector.multi_reduction <add>, %171, %cst_81 [0] : vector<4x1xf32> to vector<1xf32>
    %173 = vector.shape_cast %172 : vector<1xf32> to vector<1x1xf32>
    %174 = arith.addf %141, %173 : vector<1x1xf32>
    %175 = vector.extract_strided_slice %104 {offsets = [0, 128], sizes = [4, 64], strides = [1, 1]} : vector<4x256xf32> to vector<4x64xf32>
    %176 = arith.truncf %175 : vector<4x64xf32> to vector<4x64xbf16>
    %cst_82 = arith.constant dense<0.000000e+00> : vector<4x512xf32>
    %177 = tpu.matmul %176, %105, %cst_82 {dimension_numbers = #tpu.dot_dimension_numbers<[1], [0], [0], [1], [0, 0, 1, 1], [], []>} : vector<4x64xbf16>, vector<64x512xbf16>, vector<4x512xf32> -> vector<4x512xf32>
    %178 = arith.mulf %175, %175 : vector<4x64xf32>
    %cst_83 = arith.constant dense<0.000000e+00> : vector<4xf32>
    %179 = vector.multi_reduction <add>, %178, %cst_83 [1] : vector<4x64xf32> to vector<4xf32>
    %180 = vector.shape_cast %179 : vector<4xf32> to vector<4x1xf32>
    %cst_84 = arith.constant 2.000000e+00 : f32
    %181 = vector.broadcast %cst_84 : f32 to vector<4x512xf32>
    %182 = arith.mulf %181, %177 : vector<4x512xf32>
    %183 = vector.broadcast %180 : vector<4x1xf32> to vector<4x512xf32>
    %184 = arith.subf %183, %182 : vector<4x512xf32>
    %185 = vector.broadcast %107 : vector<1x512xf32> to vector<4x512xf32>
    %186 = arith.addf %184, %185 : vector<4x512xf32>
    %187 = tpu.iota {dimensions = array<i32: 1>} : vector<4x512xi32>
    %cst_85 = arith.constant dense<0x7F800000> : vector<4xf32>
    %188 = vector.multi_reduction <minimumf>, %186, %cst_85 [1] : vector<4x512xf32> to vector<4xf32>
    %189 = vector.shape_cast %188 : vector<4xf32> to vector<4x1xf32>
    %190 = vector.broadcast %189 : vector<4x1xf32> to vector<4x512xf32>
    %191 = arith.cmpf oeq, %186, %190 : vector<4x512xf32>
    %c512_i32_86 = arith.constant 512 : i32
    %192 = vector.broadcast %c512_i32_86 : i32 to vector<4x512xi32>
    %193 = arith.select %191, %187, %192 : vector<4x512xi1>, vector<4x512xi32>
    %cst_87 = arith.constant dense<2147483647> : vector<4xi32>
    %194 = vector.multi_reduction <minsi>, %193, %cst_87 [1] : vector<4x512xi32> to vector<4xi32>
    %195 = vector.shape_cast %194 : vector<4xi32> to vector<4x1xi32>
    %196 = vector.broadcast %195 : vector<4x1xi32> to vector<4x512xi32>
    %197 = arith.cmpi eq, %187, %196 : vector<4x512xi32>
    %198 = arith.extui %197 : vector<4x512xi1> to vector<4x512xi32>
    %199 = arith.sitofp %198 : vector<4x512xi32> to vector<4x512xf32>
    %cst_88 = arith.constant dense<0.000000e+00> : vector<4x64xf32>
    %200 = tpu.matmul %199, %106, %cst_88 {dimension_numbers = #tpu.dot_dimension_numbers<[1], [0], [0], [1], [0, 0, 1, 1], [], []>} : vector<4x512xf32>, vector<512x64xf32>, vector<4x64xf32> -> vector<4x64xf32>
    %201 = arith.subf %200, %175 : vector<4x64xf32>
    %202 = arith.mulf %201, %201 : vector<4x64xf32>
    %cst_89 = arith.constant dense<0.000000e+00> : vector<4xf32>
    %203 = vector.multi_reduction <add>, %202, %cst_89 [1] : vector<4x64xf32> to vector<4xf32>
    %204 = vector.shape_cast %203 : vector<4xf32> to vector<4x1xf32>
    %cst_90 = arith.constant dense<0.000000e+00> : vector<1xf32>
    %205 = vector.multi_reduction <add>, %204, %cst_90 [0] : vector<4x1xf32> to vector<1xf32>
    %206 = vector.shape_cast %205 : vector<1xf32> to vector<1x1xf32>
    %207 = arith.addf %174, %206 : vector<1x1xf32>
    %208 = vector.extract_strided_slice %104 {offsets = [0, 192], sizes = [4, 64], strides = [1, 1]} : vector<4x256xf32> to vector<4x64xf32>
    %209 = arith.truncf %208 : vector<4x64xf32> to vector<4x64xbf16>
    %cst_91 = arith.constant dense<0.000000e+00> : vector<4x512xf32>
    %210 = tpu.matmul %209, %105, %cst_91 {dimension_numbers = #tpu.dot_dimension_numbers<[1], [0], [0], [1], [0, 0, 1, 1], [], []>} : vector<4x64xbf16>, vector<64x512xbf16>, vector<4x512xf32> -> vector<4x512xf32>
    %211 = arith.mulf %208, %208 : vector<4x64xf32>
    %cst_92 = arith.constant dense<0.000000e+00> : vector<4xf32>
    %212 = vector.multi_reduction <add>, %211, %cst_92 [1] : vector<4x64xf32> to vector<4xf32>
    %213 = vector.shape_cast %212 : vector<4xf32> to vector<4x1xf32>
    %cst_93 = arith.constant 2.000000e+00 : f32
    %214 = vector.broadcast %cst_93 : f32 to vector<4x512xf32>
    %215 = arith.mulf %214, %210 : vector<4x512xf32>
    %216 = vector.broadcast %213 : vector<4x1xf32> to vector<4x512xf32>
    %217 = arith.subf %216, %215 : vector<4x512xf32>
    %218 = vector.broadcast %107 : vector<1x512xf32> to vector<4x512xf32>
    %219 = arith.addf %217, %218 : vector<4x512xf32>
    %220 = tpu.iota {dimensions = array<i32: 1>} : vector<4x512xi32>
    %cst_94 = arith.constant dense<0x7F800000> : vector<4xf32>
    %221 = vector.multi_reduction <minimumf>, %219, %cst_94 [1] : vector<4x512xf32> to vector<4xf32>
    %222 = vector.shape_cast %221 : vector<4xf32> to vector<4x1xf32>
    %223 = vector.broadcast %222 : vector<4x1xf32> to vector<4x512xf32>
    %224 = arith.cmpf oeq, %219, %223 : vector<4x512xf32>
    %c512_i32_95 = arith.constant 512 : i32
    %225 = vector.broadcast %c512_i32_95 : i32 to vector<4x512xi32>
    %226 = arith.select %224, %220, %225 : vector<4x512xi1>, vector<4x512xi32>
    %cst_96 = arith.constant dense<2147483647> : vector<4xi32>
    %227 = vector.multi_reduction <minsi>, %226, %cst_96 [1] : vector<4x512xi32> to vector<4xi32>
    %228 = vector.shape_cast %227 : vector<4xi32> to vector<4x1xi32>
    %229 = vector.broadcast %228 : vector<4x1xi32> to vector<4x512xi32>
    %230 = arith.cmpi eq, %220, %229 : vector<4x512xi32>
    %231 = arith.extui %230 : vector<4x512xi1> to vector<4x512xi32>
    %232 = arith.sitofp %231 : vector<4x512xi32> to vector<4x512xf32>
    %cst_97 = arith.constant dense<0.000000e+00> : vector<4x64xf32>
    %233 = tpu.matmul %232, %106, %cst_97 {dimension_numbers = #tpu.dot_dimension_numbers<[1], [0], [0], [1], [0, 0, 1, 1], [], []>} : vector<4x512xf32>, vector<512x64xf32>, vector<4x64xf32> -> vector<4x64xf32>
    %234 = arith.subf %233, %208 : vector<4x64xf32>
    %235 = arith.mulf %234, %234 : vector<4x64xf32>
    %cst_98 = arith.constant dense<0.000000e+00> : vector<4xf32>
    %236 = vector.multi_reduction <add>, %235, %cst_98 [1] : vector<4x64xf32> to vector<4xf32>
    %237 = vector.shape_cast %236 : vector<4xf32> to vector<4x1xf32>
    %cst_99 = arith.constant dense<0.000000e+00> : vector<1xf32>
    %238 = vector.multi_reduction <add>, %237, %cst_99 [0] : vector<4x1xf32> to vector<1xf32>
    %239 = vector.shape_cast %238 : vector<1xf32> to vector<1x1xf32>
    %240 = arith.addf %207, %239 : vector<1x1xf32>
    %241 = tpu.concatenate %134, %167, %200, %233 in 1 : vector<4x64xf32>, vector<4x64xf32>, vector<4x64xf32>, vector<4x64xf32> -> vector<4x256xf32>
    %242 = tpu.concatenate %129, %162, %195, %228 in 1 : vector<4x1xi32>, vector<4x1xi32>, vector<4x1xi32>, vector<4x1xi32> -> vector<4x4xi32>
    %c0_100 = arith.constant 0 : index
    %c0_101 = arith.constant 0 : index
    %c0_102 = arith.constant 0 : index
    %243 = vector.load %arg36[%c0_100, %c0_101, %c0_102] : memref<1x4x4xi32, #tpu.memory_space<vmem>>, vector<1x4x4xi32>
    %244 = vector.shape_cast %243 : vector<1x4x4xi32> to vector<4x4xi32>
    %245 = vector.shape_cast %242 : vector<4x4xi32> to vector<1x4x4xi32>
    tpu.vector_store %arg36[%c0_100, %c0_101, %c0_102], %245 {strides = array<i32>} : memref<1x4x4xi32, #tpu.memory_space<vmem>>, vector<1x4x4xi32>,
    %246 = arith.truncf %241 : vector<4x256xf32> to vector<4x256xbf16>
    %cst_103 = arith.constant 0.000000e+00 : bf16
    %247 = vector.broadcast %cst_103 : bf16 to vector<1x256xbf16>
    %248 = vector.extract_strided_slice %246 {offsets = [1, 0], sizes = [3, 256], strides = [1, 1]} : vector<4x256xbf16> to vector<3x256xbf16>
    %249 = tpu.concatenate %248, %247 in 0 : vector<3x256xbf16>, vector<1x256xbf16> -> vector<4x256xbf16>
    %cst_104 = arith.constant 0.000000e+00 : bf16
    %250 = vector.broadcast %cst_104 : bf16 to vector<1x256xbf16>
    %251 = vector.extract_strided_slice %246 {offsets = [0, 0], sizes = [3, 256], strides = [1, 1]} : vector<4x256xbf16> to vector<3x256xbf16>
    %252 = tpu.concatenate %250, %251 in 0 : vector<1x256xbf16>, vector<3x256xbf16> -> vector<4x256xbf16>
    %253 = tpu.concatenate %249, %246, %252 in 1 : vector<4x256xbf16>, vector<4x256xbf16>, vector<4x256xbf16> -> vector<4x768xbf16>
    %c0_105 = arith.constant 0 : index
    %c0_106 = arith.constant 0 : index
    %254 = vector.load %arg18[%c0_105, %c0_106] : memref<768x32xbf16, #tpu.memory_space<vmem>>, vector<768x32xbf16>
    %cst_107 = arith.constant dense<0.000000e+00> : vector<4x32xf32>
    %255 = tpu.matmul %253, %254, %cst_107 {dimension_numbers = #tpu.dot_dimension_numbers<[1], [0], [0], [1], [0, 0, 1, 1], [], []>} : vector<4x768xbf16>, vector<768x32xbf16>, vector<4x32xf32> -> vector<4x32xf32>
    %c0_108 = arith.constant 0 : index
    %c0_109 = arith.constant 0 : index
    %256 = vector.load %arg19[%c0_108, %c0_109] : memref<1x32xf32, #tpu.memory_space<vmem>>, vector<1x32xf32>
    %257 = vector.broadcast %256 : vector<1x32xf32> to vector<4x32xf32>
    %258 = arith.addf %255, %257 : vector<4x32xf32>
    %cst_110 = arith.constant 0.000000e+00 : f32
    %259 = vector.broadcast %cst_110 : f32 to vector<4x32xf32>
    %260 = arith.maximumf %258, %259 : vector<4x32xf32>
    %cst_111 = arith.constant 0.000000e+00 : f32
    %261 = vector.broadcast %cst_111 : f32 to vector<4x32xf32>
    %262 = arith.maximumf %260, %261 : vector<4x32xf32>
    %263 = arith.truncf %262 : vector<4x32xf32> to vector<4x32xbf16>
    %cst_112 = arith.constant 0.000000e+00 : bf16
    %264 = vector.broadcast %cst_112 : bf16 to vector<1x32xbf16>
    %265 = vector.extract_strided_slice %263 {offsets = [1, 0], sizes = [3, 32], strides = [1, 1]} : vector<4x32xbf16> to vector<3x32xbf16>
    %266 = tpu.concatenate %265, %264 in 0 : vector<3x32xbf16>, vector<1x32xbf16> -> vector<4x32xbf16>
    %cst_113 = arith.constant 0.000000e+00 : bf16
    %267 = vector.broadcast %cst_113 : bf16 to vector<1x32xbf16>
    %268 = vector.extract_strided_slice %263 {offsets = [0, 0], sizes = [3, 32], strides = [1, 1]} : vector<4x32xbf16> to vector<3x32xbf16>
    %269 = tpu.concatenate %267, %268 in 0 : vector<1x32xbf16>, vector<3x32xbf16> -> vector<4x32xbf16>
    %270 = tpu.concatenate %266, %263, %269 in 1 : vector<4x32xbf16>, vector<4x32xbf16>, vector<4x32xbf16> -> vector<4x96xbf16>
    %c0_114 = arith.constant 0 : index
    %c0_115 = arith.constant 0 : index
    %271 = vector.load %arg20[%c0_114, %c0_115] : memref<96x8xbf16, #tpu.memory_space<vmem>>, vector<96x8xbf16>
    %cst_116 = arith.constant dense<0.000000e+00> : vector<4x8xf32>
    %272 = tpu.matmul %270, %271, %cst_116 {dimension_numbers = #tpu.dot_dimension_numbers<[1], [0], [0], [1], [0, 0, 1, 1], [], []>} : vector<4x96xbf16>, vector<96x8xbf16>, vector<4x8xf32> -> vector<4x8xf32>
    %c0_117 = arith.constant 0 : index
    %c0_118 = arith.constant 0 : index
    %273 = vector.load %arg21[%c0_117, %c0_118] : memref<1x8xf32, #tpu.memory_space<vmem>>, vector<1x8xf32>
    %274 = vector.broadcast %273 : vector<1x8xf32> to vector<4x8xf32>
    %275 = arith.addf %272, %274 : vector<4x8xf32>
    %cst_119 = arith.constant 0.000000e+00 : f32
    %276 = vector.broadcast %cst_119 : f32 to vector<4x8xf32>
    %277 = arith.maximumf %275, %276 : vector<4x8xf32>
    %278 = arith.truncf %277 : vector<4x8xf32> to vector<4x8xbf16>
    %c0_120 = arith.constant 0 : index
    %c0_121 = arith.constant 0 : index
    %279 = vector.load %arg22[%c0_120, %c0_121] : memref<8x32xbf16, #tpu.memory_space<vmem>>, vector<8x32xbf16>
    %cst_122 = arith.constant dense<0.000000e+00> : vector<4x32xf32>
    %280 = tpu.matmul %278, %279, %cst_122 {dimension_numbers = #tpu.dot_dimension_numbers<[1], [0], [0], [1], [0, 0, 1, 1], [], []>} : vector<4x8xbf16>, vector<8x32xbf16>, vector<4x32xf32> -> vector<4x32xf32>
    %c0_123 = arith.constant 0 : index
    %c0_124 = arith.constant 0 : index
    %281 = vector.load %arg23[%c0_123, %c0_124] : memref<1x32xf32, #tpu.memory_space<vmem>>, vector<1x32xf32>
    %282 = vector.broadcast %281 : vector<1x32xf32> to vector<4x32xf32>
    %283 = arith.addf %280, %282 : vector<4x32xf32>
    %284 = arith.addf %260, %283 : vector<4x32xf32>
    %cst_125 = arith.constant 0.000000e+00 : f32
    %285 = vector.broadcast %cst_125 : f32 to vector<4x32xf32>
    %286 = arith.maximumf %284, %285 : vector<4x32xf32>
    %287 = arith.truncf %286 : vector<4x32xf32> to vector<4x32xbf16>
    %cst_126 = arith.constant 0.000000e+00 : bf16
    %288 = vector.broadcast %cst_126 : bf16 to vector<1x32xbf16>
    %289 = vector.extract_strided_slice %287 {offsets = [1, 0], sizes = [3, 32], strides = [1, 1]} : vector<4x32xbf16> to vector<3x32xbf16>
    %290 = tpu.concatenate %289, %288 in 0 : vector<3x32xbf16>, vector<1x32xbf16> -> vector<4x32xbf16>
    %cst_127 = arith.constant 0.000000e+00 : bf16
    %291 = vector.broadcast %cst_127 : bf16 to vector<1x32xbf16>
    %292 = vector.extract_strided_slice %287 {offsets = [0, 0], sizes = [3, 32], strides = [1, 1]} : vector<4x32xbf16> to vector<3x32xbf16>
    %293 = tpu.concatenate %291, %292 in 0 : vector<1x32xbf16>, vector<3x32xbf16> -> vector<4x32xbf16>
    %294 = tpu.concatenate %290, %287, %293 in 1 : vector<4x32xbf16>, vector<4x32xbf16>, vector<4x32xbf16> -> vector<4x96xbf16>
    %c0_128 = arith.constant 0 : index
    %c0_129 = arith.constant 0 : index
    %295 = vector.load %arg24[%c0_128, %c0_129] : memref<96x8xbf16, #tpu.memory_space<vmem>>, vector<96x8xbf16>
    %cst_130 = arith.constant dense<0.000000e+00> : vector<4x8xf32>
    %296 = tpu.matmul %294, %295, %cst_130 {dimension_numbers = #tpu.dot_dimension_numbers<[1], [0], [0], [1], [0, 0, 1, 1], [], []>} : vector<4x96xbf16>, vector<96x8xbf16>, vector<4x8xf32> -> vector<4x8xf32>
    %c0_131 = arith.constant 0 : index
    %c0_132 = arith.constant 0 : index
    %297 = vector.load %arg25[%c0_131, %c0_132] : memref<1x8xf32, #tpu.memory_space<vmem>>, vector<1x8xf32>
    %298 = vector.broadcast %297 : vector<1x8xf32> to vector<4x8xf32>
    %299 = arith.addf %296, %298 : vector<4x8xf32>
    %cst_133 = arith.constant 0.000000e+00 : f32
    %300 = vector.broadcast %cst_133 : f32 to vector<4x8xf32>
    %301 = arith.maximumf %299, %300 : vector<4x8xf32>
    %302 = arith.truncf %301 : vector<4x8xf32> to vector<4x8xbf16>
    %c0_134 = arith.constant 0 : index
    %c0_135 = arith.constant 0 : index
    %303 = vector.load %arg26[%c0_134, %c0_135] : memref<8x32xbf16, #tpu.memory_space<vmem>>, vector<8x32xbf16>
    %cst_136 = arith.constant dense<0.000000e+00> : vector<4x32xf32>
    %304 = tpu.matmul %302, %303, %cst_136 {dimension_numbers = #tpu.dot_dimension_numbers<[1], [0], [0], [1], [0, 0, 1, 1], [], []>} : vector<4x8xbf16>, vector<8x32xbf16>, vector<4x32xf32> -> vector<4x32xf32>
    %c0_137 = arith.constant 0 : index
    %c0_138 = arith.constant 0 : index
    %305 = vector.load %arg27[%c0_137, %c0_138] : memref<1x32xf32, #tpu.memory_space<vmem>>, vector<1x32xf32>
    %306 = vector.broadcast %305 : vector<1x32xf32> to vector<4x32xf32>
    %307 = arith.addf %304, %306 : vector<4x32xf32>
    %308 = arith.addf %284, %307 : vector<4x32xf32>
    %309 = arith.truncf %308 : vector<4x32xf32> to vector<4x32xbf16>
    %cst_139 = arith.constant 0.000000e+00 : bf16
    %310 = vector.broadcast %cst_139 : bf16 to vector<1x32xbf16>
    %311 = vector.extract_strided_slice %309 {offsets = [1, 0], sizes = [3, 32], strides = [1, 1]} : vector<4x32xbf16> to vector<3x32xbf16>
    %312 = tpu.concatenate %311, %310 in 0 : vector<3x32xbf16>, vector<1x32xbf16> -> vector<4x32xbf16>
    %cst_140 = arith.constant 0.000000e+00 : bf16
    %313 = vector.broadcast %cst_140 : bf16 to vector<1x32xbf16>
    %314 = vector.extract_strided_slice %309 {offsets = [0, 0], sizes = [3, 32], strides = [1, 1]} : vector<4x32xbf16> to vector<3x32xbf16>
    %315 = tpu.concatenate %313, %314 in 0 : vector<1x32xbf16>, vector<3x32xbf16> -> vector<4x32xbf16>
    %316 = tpu.concatenate %312, %309, %315 in 1 : vector<4x32xbf16>, vector<4x32xbf16>, vector<4x32xbf16> -> vector<4x96xbf16>
    %c0_141 = arith.constant 0 : index
    %c0_142 = arith.constant 0 : index
    %317 = vector.load %arg28[%c0_141, %c0_142] : memref<96x64xbf16, #tpu.memory_space<vmem>>, vector<96x64xbf16>
    %cst_143 = arith.constant dense<0.000000e+00> : vector<4x64xf32>
    %318 = tpu.matmul %316, %317, %cst_143 {dimension_numbers = #tpu.dot_dimension_numbers<[1], [0], [0], [1], [0, 0, 1, 1], [], []>} : vector<4x96xbf16>, vector<96x64xbf16>, vector<4x64xf32> -> vector<4x64xf32>
    %c0_144 = arith.constant 0 : index
    %c0_145 = arith.constant 0 : index
    %319 = vector.load %arg29[%c0_144, %c0_145] : memref<1x64xf32, #tpu.memory_space<vmem>>, vector<1x64xf32>
    %320 = vector.broadcast %319 : vector<1x64xf32> to vector<4x64xf32>
    %321 = arith.addf %318, %320 : vector<4x64xf32>
    %cst_146 = arith.constant 0.000000e+00 : f32
    %322 = vector.broadcast %cst_146 : f32 to vector<4x64xf32>
    %323 = arith.maximumf %321, %322 : vector<4x64xf32>
    %324 = arith.truncf %323 : vector<4x64xf32> to vector<4x64xbf16>
    %325 = vector.extract_strided_slice %324 {offsets = [0, 0], sizes = [4, 32], strides = [1, 1]} : vector<4x64xbf16> to vector<4x32xbf16>
    %cst_147 = arith.constant 0.000000e+00 : bf16
    %326 = vector.broadcast %cst_147 : bf16 to vector<1x32xbf16>
    %327 = vector.extract_strided_slice %325 {offsets = [1, 0], sizes = [3, 32], strides = [1, 1]} : vector<4x32xbf16> to vector<3x32xbf16>
    %328 = tpu.concatenate %327, %326 in 0 : vector<3x32xbf16>, vector<1x32xbf16> -> vector<4x32xbf16>
    %329 = vector.extract_strided_slice %324 {offsets = [0, 32], sizes = [4, 32], strides = [1, 1]} : vector<4x64xbf16> to vector<4x32xbf16>
    %cst_148 = arith.constant 0.000000e+00 : bf16
    %330 = vector.broadcast %cst_148 : bf16 to vector<1x32xbf16>
    %331 = vector.extract_strided_slice %329 {offsets = [0, 0], sizes = [3, 32], strides = [1, 1]} : vector<4x32xbf16> to vector<3x32xbf16>
    %332 = tpu.concatenate %330, %331 in 0 : vector<1x32xbf16>, vector<3x32xbf16> -> vector<4x32xbf16>
    %333 = tpu.concatenate %328, %324, %332 in 1 : vector<4x32xbf16>, vector<4x64xbf16>, vector<4x32xbf16> -> vector<4x128xbf16>
    %c0_149 = arith.constant 0 : index
    %c0_150 = arith.constant 0 : index
    %334 = vector.load %arg30[%c0_149, %c0_150] : memref<128x1024xbf16, #tpu.memory_space<vmem>>, vector<128x1024xbf16>
    %cst_151 = arith.constant dense<0.000000e+00> : vector<4x1024xf32>
    %335 = tpu.matmul %333, %334, %cst_151 {dimension_numbers = #tpu.dot_dimension_numbers<[1], [0], [0], [1], [0, 0, 1, 1], [], []>} : vector<4x128xbf16>, vector<128x1024xbf16>, vector<4x1024xf32> -> vector<4x1024xf32>
    %c0_152 = arith.constant 0 : index
    %c0_153 = arith.constant 0 : index
    %336 = vector.load %arg31[%c0_152, %c0_153] : memref<1x1024xf32, #tpu.memory_space<vmem>>, vector<1x1024xf32>
    %337 = vector.broadcast %336 : vector<1x1024xf32> to vector<4x1024xf32>
    %338 = arith.addf %335, %337 : vector<4x1024xf32>
    %c0_154 = arith.constant 0 : index
    %c0_155 = arith.constant 0 : index
    %c0_156 = arith.constant 0 : index
    %339 = vector.load %arg35[%c0_154, %c0_155, %c0_156] : memref<1x4x1024xf32, #tpu.memory_space<vmem>>, vector<1x4x1024xf32>
    %340 = vector.shape_cast %339 : vector<1x4x1024xf32> to vector<4x1024xf32>
    %341 = vector.shape_cast %338 : vector<4x1024xf32> to vector<1x4x1024xf32>
    tpu.vector_store %arg35[%c0_154, %c0_155, %c0_156], %341 {strides = array<i32>} : memref<1x4x1024xf32, #tpu.memory_space<vmem>>, vector<1x4x1024xf32>,
    %342 = arith.subf %338, %1 : vector<4x1024xf32>
    %343 = arith.mulf %342, %342 : vector<4x1024xf32>
    %cst_157 = arith.constant dense<0.000000e+00> : vector<4xf32>
    %344 = vector.multi_reduction <add>, %343, %cst_157 [1] : vector<4x1024xf32> to vector<4xf32>
    %345 = vector.shape_cast %344 : vector<4xf32> to vector<4x1xf32>
    %cst_158 = arith.constant dense<0.000000e+00> : vector<1xf32>
    %346 = vector.multi_reduction <add>, %345, %cst_158 [0] : vector<4x1xf32> to vector<1xf32>
    %347 = vector.shape_cast %346 : vector<1xf32> to vector<1x1xf32>
    %348 = tpu.concatenate %240, %347 in 1 : vector<1x1xf32>, vector<1x1xf32> -> vector<1x2xf32>
    %c0_159 = arith.constant 0 : index
    %c0_160 = arith.constant 0 : index
    %c0_161 = arith.constant 0 : index
    %349 = vector.load %arg37[%c0_159, %c0_160, %c0_161] : memref<1x1x2xf32, #tpu.memory_space<vmem>>, vector<1x1x2xf32>
    %350 = vector.shape_cast %349 : vector<1x1x2xf32> to vector<1x2xf32>
    %351 = vector.shape_cast %348 : vector<1x2xf32> to vector<1x1x2xf32>
    tpu.vector_store %arg37[%c0_159, %c0_160, %c0_161], %351 {strides = array<i32>} : memref<1x1x2xf32, #tpu.memory_space<vmem>>, vector<1x1x2xf32>,
    return
  }
  func.func @transform_0(%arg0: i32) -> (i32, i32, i32) {
    %c0_i32 = arith.constant 0 : i32
    %c0_i32_0 = arith.constant 0 : i32
    %c0_i32_1 = arith.constant 0 : i32
    return %arg0, %c0_i32, %c0_i32_0 : i32, i32, i32
  }
  func.func @transform_1(%arg0: i32) -> (i32, i32) {
    %c0_i32 = arith.constant 0 : i32
    %c0_i32_0 = arith.constant 0 : i32
    %c0_i32_1 = arith.constant 0 : i32
    return %c0_i32, %c0_i32_0 : i32, i32
  }
  func.func @transform_2(%arg0: i32) -> (i32, i32) {
    %c0_i32 = arith.constant 0 : i32
    %c0_i32_0 = arith.constant 0 : i32
    %c0_i32_1 = arith.constant 0 : i32
    return %c0_i32, %c0_i32_0 : i32, i32
  }
  func.func @transform_3(%arg0: i32) -> (i32, i32) {
    %c0_i32 = arith.constant 0 : i32
    %c0_i32_0 = arith.constant 0 : i32
    %c0_i32_1 = arith.constant 0 : i32
    return %c0_i32, %c0_i32_0 : i32, i32
  }
  func.func @transform_4(%arg0: i32) -> (i32, i32) {
    %c0_i32 = arith.constant 0 : i32
    %c0_i32_0 = arith.constant 0 : i32
    %c0_i32_1 = arith.constant 0 : i32
    return %c0_i32, %c0_i32_0 : i32, i32
  }
  func.func @transform_5(%arg0: i32) -> (i32, i32) {
    %c0_i32 = arith.constant 0 : i32
    %c0_i32_0 = arith.constant 0 : i32
    %c0_i32_1 = arith.constant 0 : i32
    return %c0_i32, %c0_i32_0 : i32, i32
  }
  func.func @transform_6(%arg0: i32) -> (i32, i32) {
    %c0_i32 = arith.constant 0 : i32
    %c0_i32_0 = arith.constant 0 : i32
    %c0_i32_1 = arith.constant 0 : i32
    return %c0_i32, %c0_i32_0 : i32, i32
  }
  func.func @transform_7(%arg0: i32) -> (i32, i32) {
    %c0_i32 = arith.constant 0 : i32
    %c0_i32_0 = arith.constant 0 : i32
    %c0_i32_1 = arith.constant 0 : i32
    return %c0_i32, %c0_i32_0 : i32, i32
  }
  func.func @transform_8(%arg0: i32) -> (i32, i32) {
    %c0_i32 = arith.constant 0 : i32
    %c0_i32_0 = arith.constant 0 : i32
    %c0_i32_1 = arith.constant 0 : i32
    return %c0_i32, %c0_i32_0 : i32, i32
  }
  func.func @transform_9(%arg0: i32) -> (i32, i32) {
    %c0_i32 = arith.constant 0 : i32
    %c0_i32_0 = arith.constant 0 : i32
    %c0_i32_1 = arith.constant 0 : i32
    return %c0_i32, %c0_i32_0 : i32, i32
  }
  func.func @transform_10(%arg0: i32) -> (i32, i32) {
    %c0_i32 = arith.constant 0 : i32
    %c0_i32_0 = arith.constant 0 : i32
    %c0_i32_1 = arith.constant 0 : i32
    return %c0_i32, %c0_i32_0 : i32, i32
  }
  func.func @transform_11(%arg0: i32) -> (i32, i32) {
    %c0_i32 = arith.constant 0 : i32
    %c0_i32_0 = arith.constant 0 : i32
    %c0_i32_1 = arith.constant 0 : i32
    return %c0_i32, %c0_i32_0 : i32, i32
  }
  func.func @transform_12(%arg0: i32) -> (i32, i32) {
    %c0_i32 = arith.constant 0 : i32
    %c0_i32_0 = arith.constant 0 : i32
    %c0_i32_1 = arith.constant 0 : i32
    return %c0_i32, %c0_i32_0 : i32, i32
  }
  func.func @transform_13(%arg0: i32) -> (i32, i32) {
    %c0_i32 = arith.constant 0 : i32
    %c0_i32_0 = arith.constant 0 : i32
    %c0_i32_1 = arith.constant 0 : i32
    return %c0_i32, %c0_i32_0 : i32, i32
  }
  func.func @transform_14(%arg0: i32) -> (i32, i32) {
    %c0_i32 = arith.constant 0 : i32
    %c0_i32_0 = arith.constant 0 : i32
    %c0_i32_1 = arith.constant 0 : i32
    return %c0_i32, %c0_i32_0 : i32, i32
  }
  func.func @transform_15(%arg0: i32) -> (i32, i32) {
    %c0_i32 = arith.constant 0 : i32
    %c0_i32_0 = arith.constant 0 : i32
    %c0_i32_1 = arith.constant 0 : i32
    return %c0_i32, %c0_i32_0 : i32, i32
  }
  func.func @transform_16(%arg0: i32) -> (i32, i32) {
    %c0_i32 = arith.constant 0 : i32
    %c0_i32_0 = arith.constant 0 : i32
    %c0_i32_1 = arith.constant 0 : i32
    return %c0_i32, %c0_i32_0 : i32, i32
  }
  func.func @transform_17(%arg0: i32) -> (i32, i32) {
    %c0_i32 = arith.constant 0 : i32
    %c0_i32_0 = arith.constant 0 : i32
    %c0_i32_1 = arith.constant 0 : i32
    return %c0_i32, %c0_i32_0 : i32, i32
  }
  func.func @transform_18(%arg0: i32) -> (i32, i32) {
    %c0_i32 = arith.constant 0 : i32
    %c0_i32_0 = arith.constant 0 : i32
    %c0_i32_1 = arith.constant 0 : i32
    return %c0_i32, %c0_i32_0 : i32, i32
  }
  func.func @transform_19(%arg0: i32) -> (i32, i32) {
    %c0_i32 = arith.constant 0 : i32
    %c0_i32_0 = arith.constant 0 : i32
    %c0_i32_1 = arith.constant 0 : i32
    return %c0_i32, %c0_i32_0 : i32, i32
  }
  func.func @transform_20(%arg0: i32) -> (i32, i32) {
    %c0_i32 = arith.constant 0 : i32
    %c0_i32_0 = arith.constant 0 : i32
    %c0_i32_1 = arith.constant 0 : i32
    return %c0_i32, %c0_i32_0 : i32, i32
  }
  func.func @transform_21(%arg0: i32) -> (i32, i32) {
    %c0_i32 = arith.constant 0 : i32
    %c0_i32_0 = arith.constant 0 : i32
    %c0_i32_1 = arith.constant 0 : i32
    return %c0_i32, %c0_i32_0 : i32, i32
  }
  func.func @transform_22(%arg0: i32) -> (i32, i32) {
    %c0_i32 = arith.constant 0 : i32
    %c0_i32_0 = arith.constant 0 : i32
    %c0_i32_1 = arith.constant 0 : i32
    return %c0_i32, %c0_i32_0 : i32, i32
  }
  func.func @transform_23(%arg0: i32) -> (i32, i32) {
    %c0_i32 = arith.constant 0 : i32
    %c0_i32_0 = arith.constant 0 : i32
    %c0_i32_1 = arith.constant 0 : i32
    return %c0_i32, %c0_i32_0 : i32, i32
  }
  func.func @transform_24(%arg0: i32) -> (i32, i32) {
    %c0_i32 = arith.constant 0 : i32
    %c0_i32_0 = arith.constant 0 : i32
    %c0_i32_1 = arith.constant 0 : i32
    return %c0_i32, %c0_i32_0 : i32, i32
  }
  func.func @transform_25(%arg0: i32) -> (i32, i32) {
    %c0_i32 = arith.constant 0 : i32
    %c0_i32_0 = arith.constant 0 : i32
    %c0_i32_1 = arith.constant 0 : i32
    return %c0_i32, %c0_i32_0 : i32, i32
  }
  func.func @transform_26(%arg0: i32) -> (i32, i32) {
    %c0_i32 = arith.constant 0 : i32
    %c0_i32_0 = arith.constant 0 : i32
    %c0_i32_1 = arith.constant 0 : i32
    return %c0_i32, %c0_i32_0 : i32, i32
  }
  func.func @transform_27(%arg0: i32) -> (i32, i32) {
    %c0_i32 = arith.constant 0 : i32
    %c0_i32_0 = arith.constant 0 : i32
    %c0_i32_1 = arith.constant 0 : i32
    return %c0_i32, %c0_i32_0 : i32, i32
  }
  func.func @transform_28(%arg0: i32) -> (i32, i32) {
    %c0_i32 = arith.constant 0 : i32
    %c0_i32_0 = arith.constant 0 : i32
    %c0_i32_1 = arith.constant 0 : i32
    return %c0_i32, %c0_i32_0 : i32, i32
  }
  func.func @transform_29(%arg0: i32) -> (i32, i32) {
    %c0_i32 = arith.constant 0 : i32
    %c0_i32_0 = arith.constant 0 : i32
    %c0_i32_1 = arith.constant 0 : i32
    return %c0_i32, %c0_i32_0 : i32, i32
  }
  func.func @transform_30(%arg0: i32) -> (i32, i32) {
    %c0_i32 = arith.constant 0 : i32
    %c0_i32_0 = arith.constant 0 : i32
    %c0_i32_1 = arith.constant 0 : i32
    return %c0_i32, %c0_i32_0 : i32, i32
  }
  func.func @transform_31(%arg0: i32) -> (i32, i32) {
    %c0_i32 = arith.constant 0 : i32
    %c0_i32_0 = arith.constant 0 : i32
    %c0_i32_1 = arith.constant 0 : i32
    return %c0_i32, %c0_i32_0 : i32, i32
  }
  func.func @transform_32(%arg0: i32) -> (i32, i32) {
    %c0_i32 = arith.constant 0 : i32
    %c0_i32_0 = arith.constant 0 : i32
    %c0_i32_1 = arith.constant 0 : i32
    return %c0_i32, %c0_i32_0 : i32, i32
  }
  func.func @transform_33(%arg0: i32) -> (i32, i32) {
    %c0_i32 = arith.constant 0 : i32
    %c0_i32_0 = arith.constant 0 : i32
    %c0_i32_1 = arith.constant 0 : i32
    return %c0_i32, %c0_i32_0 : i32, i32
  }
  func.func @transform_34(%arg0: i32) -> (i32, i32, i32) {
    %c0_i32 = arith.constant 0 : i32
    %c0_i32_0 = arith.constant 0 : i32
    %c0_i32_1 = arith.constant 0 : i32
    return %arg0, %c0_i32, %c0_i32_0 : i32, i32, i32
  }
  func.func @transform_35(%arg0: i32) -> (i32, i32, i32) {
    %c0_i32 = arith.constant 0 : i32
    %c0_i32_0 = arith.constant 0 : i32
    %c0_i32_1 = arith.constant 0 : i32
    return %arg0, %c0_i32, %c0_i32_0 : i32, i32, i32
  }
  func.func @transform_36(%arg0: i32) -> (i32, i32, i32) {
    %c0_i32 = arith.constant 0 : i32
    %c0_i32_0 = arith.constant 0 : i32
    %c0_i32_1 = arith.constant 0 : i32
    return %arg0, %c0_i32, %c0_i32_0 : i32, i32, i32
  }
}

</mosaic_0001>

<llo_original>
// kernel: vqvae_forward.1
$region0: #{vqvae_forward.1}
  #allocation0 [shape = 'u32[]', space=smem, size = 0x4, offset = 0x4, fixed_abs, tag = 'smem constant byte address 0x4 - core index']
  #allocation1 [shape = 'u32[144,128]{1,0:T(1,128)}', space=vmem, size = 0x12000, scoped, tag = 'internal scratch']
  %s0 = inlined_call_operand.smem [shape: u32[37], index: -1, kind: input, shape index: {}]
  %s1 = sld [smem:[%s0]]
  %s2 = scalar_lea.smem %s0, 1
  %s3 = sld [smem:[%s2]]
  %s4 = scalar_lea.smem %s0, 2
  %s5 = sld [smem:[%s4]]
  %s6 = scalar_lea.smem %s0, 3
  %s7 = sld [smem:[%s6]]
  %s8 = scalar_lea.smem %s0, 4
  %s9 = sld [smem:[%s8]]
  %s10 = scalar_lea.smem %s0, 5
  %s11 = sld [smem:[%s10]]
  %s12 = scalar_lea.smem %s0, 6
  %s13 = sld [smem:[%s12]]
  %s14 = scalar_lea.smem %s0, 7
  %s15 = sld [smem:[%s14]]
  %s16 = scalar_lea.smem %s0, 8
  %s17 = sld [smem:[%s16]]
  %s18 = scalar_lea.smem %s0, 9
  %s19 = sld [smem:[%s18]]
  %s20 = scalar_lea.smem %s0, 10
  %s21 = sld [smem:[%s20]]
  %s22 = scalar_lea.smem %s0, 11
  %s23 = sld [smem:[%s22]]
  %s24 = scalar_lea.smem %s0, 12
  %s25 = sld [smem:[%s24]]
  %s26 = scalar_lea.smem %s0, 13
  %s27 = sld [smem:[%s26]]
  %s28 = scalar_lea.smem %s0, 14
  %s29 = sld [smem:[%s28]]
  %s30 = scalar_lea.smem %s0, 15
  %s31 = sld [smem:[%s30]]
  %s32 = scalar_lea.smem %s0, 16
  %s33 = sld [smem:[%s32]]
  %s34 = scalar_lea.smem %s0, 17
  %s35 = sld [smem:[%s34]]
  %s36 = scalar_lea.smem %s0, 18
  %s37 = sld [smem:[%s36]]
  %s38 = scalar_lea.smem %s0, 19
  %s39 = sld [smem:[%s38]]
  %s40 = scalar_lea.smem %s0, 20
  %s41 = sld [smem:[%s40]]
  %s42 = scalar_lea.smem %s0, 21
  %s43 = sld [smem:[%s42]]
  %s44 = scalar_lea.smem %s0, 22
  %s45 = sld [smem:[%s44]]
  %s46 = scalar_lea.smem %s0, 23
  %s47 = sld [smem:[%s46]]
  %s48 = scalar_lea.smem %s0, 24
  %s49 = sld [smem:[%s48]]
  %s50 = scalar_lea.smem %s0, 25
  %s51 = sld [smem:[%s50]]
  %s52 = scalar_lea.smem %s0, 26
  %s53 = sld [smem:[%s52]]
  %s54 = scalar_lea.smem %s0, 27
  %s55 = sld [smem:[%s54]]
  %s56 = scalar_lea.smem %s0, 28
  %s57 = sld [smem:[%s56]]
  %s58 = scalar_lea.smem %s0, 29
  %s59 = sld [smem:[%s58]]
  %s60 = scalar_lea.smem %s0, 30
  %s61 = sld [smem:[%s60]]
  %s62 = scalar_lea.smem %s0, 31
  %s63 = sld [smem:[%s62]]
  %s64 = scalar_lea.smem %s0, 32
  %s65 = sld [smem:[%s64]]
  %s66 = scalar_lea.smem %s0, 33
  %s67 = sld [smem:[%s66]]
  %s68 = scalar_lea.smem %s0, 34
  %s69 = sld [smem:[%s68]]
  %s70 = scalar_lea.smem %s0, 35
  %s71 = sld [smem:[%s70]]
  %s72 = scalar_lea.smem %s0, 36
  %s73 = sld [smem:[%s72]]
  %74 = xla_tuple %s69, %s71, %s73
  %s75 = sld [smem:[#allocation0]]
  $region185: #{vqvae_forward.1} parent=0
    _
  %s77 = ssub.s32 1, %s75
  %s78 = scalar_select 0, %s77, %s75
  $region1: #{vqvae_forward.1} parent=0
    #allocation2 [shape = 'u8[4096]{0}', space=vmem, size = 0x1000, scoped, tag = 'output window, operand 1']
    #allocation3 [shape = 's32[2]{0}', space=sflag, size = 0x8, scoped, tag = 'scoped memory for vqvae_forward.1']
    %79 = vsyncpa [#allocation3], 0
    %s80 = scalar_lea.sflag [#allocation3], 1
    %81 = vsyncpa %s80, 0
    loop: start=0, step=1, limit=4
    $region2: #{vqvae_forward.1} parent=1 // loop_pre_header
      _
    $region3: #{vqvae_forward.1} parent=1 // loop_header
      %s83 = sphi 0, %s87
      %p84 = scmp.ge.s32.totalorder %s83, 4
      %s93 = sphi 0, %s95
      %s96 = sphi 0, %s93
      %s97 = sphi 0, %s96
      %s113 = sphi 0, %s97
      %s117 = sphi 0, %s117
      %s119 = sphi 0, %s117
      %s120 = sphi 0, %s119
      %s134 = sphi 0, %s120
      %s138 = sphi 0, %s138
      %s140 = sphi 0, %s138
      %s141 = sphi 0, %s140
      %s155 = sphi 0, %s141
      %s159 = sphi 0, %s159
      %s161 = sphi 0, %s159
      %s162 = sphi 0, %s161
      %s176 = sphi 0, %s162
      %s180 = sphi 0, %s180
      %s182 = sphi 0, %s180
      %s183 = sphi 0, %s182
      %s197 = sphi 0, %s183
      %s201 = sphi 0, %s201
      %s203 = sphi 0, %s201
      %s204 = sphi 0, %s203
      %s218 = sphi 0, %s204
      %s222 = sphi 0, %s222
      %s224 = sphi 0, %s222
      %s225 = sphi 0, %s224
      %s239 = sphi 0, %s225
      %s243 = sphi 0, %s243
      %s245 = sphi 0, %s243
      %s246 = sphi 0, %s245
      %s260 = sphi 0, %s246
      %s264 = sphi 0, %s264
      %s266 = sphi 0, %s264
      %s267 = sphi 0, %s266
      %s281 = sphi 0, %s267
      %s285 = sphi 0, %s285
      %s287 = sphi 0, %s285
      %s288 = sphi 0, %s287
      %s302 = sphi 0, %s288
      %s306 = sphi 0, %s306
      %s308 = sphi 0, %s306
      %s309 = sphi 0, %s308
      %s323 = sphi 0, %s309
      %s327 = sphi 0, %s327
      %s329 = sphi 0, %s327
      %s330 = sphi 0, %s329
      %s344 = sphi 0, %s330
      %s348 = sphi 0, %s348
      %s350 = sphi 0, %s348
      %s351 = sphi 0, %s350
      %s365 = sphi 0, %s351
      %s369 = sphi 0, %s369
      %s371 = sphi 0, %s369
      %s372 = sphi 0, %s371
      %s386 = sphi 0, %s372
      %s390 = sphi 0, %s390
      %s392 = sphi 0, %s390
      %s393 = sphi 0, %s392
      %s407 = sphi 0, %s393
      %s411 = sphi 0, %s411
      %s413 = sphi 0, %s411
      %s414 = sphi 0, %s413
      %s428 = sphi 0, %s414
      %s432 = sphi 0, %s432
      %s434 = sphi 0, %s432
      %s435 = sphi 0, %s434
      %s449 = sphi 0, %s435
      %s453 = sphi 0, %s453
      %s455 = sphi 0, %s453
      %s456 = sphi 0, %s455
      %s470 = sphi 0, %s456
      %s474 = sphi 0, %s474
      %s476 = sphi 0, %s474
      %s477 = sphi 0, %s476
      %s491 = sphi 0, %s477
      %s495 = sphi 0, %s495
      %s497 = sphi 0, %s495
      %s498 = sphi 0, %s497
      %s512 = sphi 0, %s498
      %s516 = sphi 0, %s516
      %s518 = sphi 0, %s516
      %s519 = sphi 0, %s518
      %s533 = sphi 0, %s519
      %s537 = sphi 0, %s537
      %s539 = sphi 0, %s537
      %s540 = sphi 0, %s539
      %s554 = sphi 0, %s540
      %s558 = sphi 0, %s558
      %s560 = sphi 0, %s558
      %s561 = sphi 0, %s560
      %s575 = sphi 0, %s561
      %s579 = sphi 0, %s579
      %s581 = sphi 0, %s579
      %s582 = sphi 0, %s581
      %s596 = sphi 0, %s582
      %s600 = sphi 0, %s600
      %s602 = sphi 0, %s600
      %s603 = sphi 0, %s602
      %s617 = sphi 0, %s603
      %s621 = sphi 0, %s621
      %s623 = sphi 0, %s621
      %s624 = sphi 0, %s623
      %s638 = sphi 0, %s624
      %s642 = sphi 0, %s642
      %s644 = sphi 0, %s642
      %s645 = sphi 0, %s644
      %s659 = sphi 0, %s645
      %s663 = sphi 0, %s663
      %s665 = sphi 0, %s663
      %s666 = sphi 0, %s665
      %s680 = sphi 0, %s666
      %s684 = sphi 0, %s684
      %s686 = sphi 0, %s684
      %s687 = sphi 0, %s686
      %s701 = sphi 0, %s687
      %s705 = sphi 0, %s705
      %s707 = sphi 0, %s705
      %s708 = sphi 0, %s707
      %s722 = sphi 0, %s708
      %s726 = sphi 0, %s726
      %s728 = sphi 0, %s726
      %s729 = sphi 0, %s728
      %s743 = sphi 0, %s729
      %s747 = sphi 0, %s747
      %s749 = sphi 0, %s747
      %s750 = sphi 0, %s749
      %s764 = sphi 0, %s750
      %s768 = sphi 0, %s768
      %s770 = sphi 0, %s768
      %s771 = sphi 0, %s770
      %s785 = sphi 0, %s771
      %s789 = sphi 0, %s789
      %s791 = sphi 0, %s789
      %s792 = sphi 0, %s791
      %s806 = sphi 0, %s792
      %s812 = sphi 0, %s814
      %s815 = sphi 0, %s812
      %s816 = sphi 0, %s815
      %s832 = sphi 0, %s816
      %s838 = sphi 0, %s840
      %s841 = sphi 0, %s838
      %s842 = sphi 0, %s841
      %s858 = sphi 0, %s842
      %s864 = sphi 0, %s866
      %s867 = sphi 0, %s864
      %s868 = sphi 0, %s867
      %s884 = sphi 0, %s868
    $region4: #{vqvae_forward.1} parent=1 // loop_header_branch
      %86 = sbr.rel (%p84) target = $region8
    $region5: #{vqvae_forward.1} parent=1 // loop_body
      %s88 = ssub.s32 %s83, 1
      %s89 = ssub.s32 %s83, 2
      %s90 = sadd.s32 %s83, 1
      %s91 = ssub.s32 %s83, %s90
      %p92 = scmp.eq.s32.totalorder %s91, 0
      %s94 = sadd.s32 %s93, 1
      %s95 = scalar_select %p92, %s93, %s94
      %p98 = pneg %p92
      %p99 = scmp.eq.s32.totalorder %s83, 1
      %p100 = por %p98, %p99
      %p101 = scmp.ne.s32.totalorder %s93, %s96
      %p102 = scmp.eq.s32.totalorder %s83, 0
      %p103 = por %p101, %p102
      %p104 = scmp.ne.s32.totalorder %s93, %s96
      %p105 = scmp.eq.s32.totalorder %s88, 1
      %p106 = por %p104, %p105
      %p107 = scmp.ne.s32.totalorder %s96, %s97
      %p108 = scmp.eq.s32.totalorder %s88, 0
      %p109 = por %p107, %p108
      %p110 = scmp.ne.s32.totalorder %s96, %s97
      %p111 = scmp.eq.s32.totalorder %s89, 1
      %p112 = por %p110, %p111
      %p114 = scmp.ne.s32.totalorder %s97, %s113
      %p115 = scmp.eq.s32.totalorder %s89, 0
      %p116 = por %p114, %p115
      %s118 = sadd.s32 %s117, 1
      %p121 = scmp.eq.s32.totalorder %s83, 1
      %p122 = scmp.ne.s32.totalorder %s117, %s119
      %p123 = scmp.eq.s32.totalorder %s83, 0
      %p124 = por %p122, %p123
      %p125 = scmp.ne.s32.totalorder %s117, %s119
      %p126 = scmp.eq.s32.totalorder %s88, 1
      %p127 = por %p125, %p126
      %p128 = scmp.ne.s32.totalorder %s119, %s120
      %p129 = scmp.eq.s32.totalorder %s88, 0
      %p130 = por %p128, %p129
      %p131 = scmp.ne.s32.totalorder %s119, %s120
      %p132 = scmp.eq.s32.totalorder %s89, 1
      %p133 = por %p131, %p132
      %p135 = scmp.ne.s32.totalorder %s120, %s134
      %p136 = scmp.eq.s32.totalorder %s89, 0
      %p137 = por %p135, %p136
      %s139 = sadd.s32 %s138, 1
      %p142 = scmp.eq.s32.totalorder %s83, 1
      %p143 = scmp.ne.s32.totalorder %s138, %s140
      %p144 = scmp.eq.s32.totalorder %s83, 0
      %p145 = por %p143, %p144
      %p146 = scmp.ne.s32.totalorder %s138, %s140
      %p147 = scmp.eq.s32.totalorder %s88, 1
      %p148 = por %p146, %p147
      %p149 = scmp.ne.s32.totalorder %s140, %s141
      %p150 = scmp.eq.s32.totalorder %s88, 0
      %p151 = por %p149, %p150
      %p152 = scmp.ne.s32.totalorder %s140, %s141
      %p153 = scmp.eq.s32.totalorder %s89, 1
      %p154 = por %p152, %p153
      %p156 = scmp.ne.s32.totalorder %s141, %s155
      %p157 = scmp.eq.s32.totalorder %s89, 0
      %p158 = por %p156, %p157
      %s160 = sadd.s32 %s159, 1
      %p163 = scmp.eq.s32.totalorder %s83, 1
      %p164 = scmp.ne.s32.totalorder %s159, %s161
      %p165 = scmp.eq.s32.totalorder %s83, 0
      %p166 = por %p164, %p165
      %p167 = scmp.ne.s32.totalorder %s159, %s161
      %p168 = scmp.eq.s32.totalorder %s88, 1
      %p169 = por %p167, %p168
      %p170 = scmp.ne.s32.totalorder %s161, %s162
      %p171 = scmp.eq.s32.totalorder %s88, 0
      %p172 = por %p170, %p171
      %p173 = scmp.ne.s32.totalorder %s161, %s162
      %p174 = scmp.eq.s32.totalorder %s89, 1
      %p175 = por %p173, %p174
      %p177 = scmp.ne.s32.totalorder %s162, %s176
      %p178 = scmp.eq.s32.totalorder %s89, 0
      %p179 = por %p177, %p178
      %s181 = sadd.s32 %s180, 1
      %p184 = scmp.eq.s32.totalorder %s83, 1
      %p185 = scmp.ne.s32.totalorder %s180, %s182
      %p186 = scmp.eq.s32.totalorder %s83, 0
      %p187 = por %p185, %p186
      %p188 = scmp.ne.s32.totalorder %s180, %s182
      %p189 = scmp.eq.s32.totalorder %s88, 1
      %p190 = por %p188, %p189
      %p191 = scmp.ne.s32.totalorder %s182, %s183
      %p192 = scmp.eq.s32.totalorder %s88, 0
      %p193 = por %p191, %p192
      %p194 = scmp.ne.s32.totalorder %s182, %s183
      %p195 = scmp.eq.s32.totalorder %s89, 1
      %p196 = por %p194, %p195
      %p198 = scmp.ne.s32.totalorder %s183, %s197
      %p199 = scmp.eq.s32.totalorder %s89, 0
      %p200 = por %p198, %p199
      %s202 = sadd.s32 %s201, 1
      %p205 = scmp.eq.s32.totalorder %s83, 1
      %p206 = scmp.ne.s32.totalorder %s201, %s203
      %p207 = scmp.eq.s32.totalorder %s83, 0
      %p208 = por %p206, %p207
      %p209 = scmp.ne.s32.totalorder %s201, %s203
      %p210 = scmp.eq.s32.totalorder %s88, 1
      %p211 = por %p209, %p210
      %p212 = scmp.ne.s32.totalorder %s203, %s204
      %p213 = scmp.eq.s32.totalorder %s88, 0
      %p214 = por %p212, %p213
      %p215 = scmp.ne.s32.totalorder %s203, %s204
      %p216 = scmp.eq.s32.totalorder %s89, 1
      %p217 = por %p215, %p216
      %p219 = scmp.ne.s32.totalorder %s204, %s218
      %p220 = scmp.eq.s32.totalorder %s89, 0
      %p221 = por %p219, %p220
      %s223 = sadd.s32 %s222, 1
      %p226 = scmp.eq.s32.totalorder %s83, 1
      %p227 = scmp.ne.s32.totalorder %s222, %s224
      %p228 = scmp.eq.s32.totalorder %s83, 0
      %p229 = por %p227, %p228
      %p230 = scmp.ne.s32.totalorder %s222, %s224
      %p231 = scmp.eq.s32.totalorder %s88, 1
      %p232 = por %p230, %p231
      %p233 = scmp.ne.s32.totalorder %s224, %s225
      %p234 = scmp.eq.s32.totalorder %s88, 0
      %p235 = por %p233, %p234
      %p236 = scmp.ne.s32.totalorder %s224, %s225
      %p237 = scmp.eq.s32.totalorder %s89, 1
      %p238 = por %p236, %p237
      %p240 = scmp.ne.s32.totalorder %s225, %s239
      %p241 = scmp.eq.s32.totalorder %s89, 0
      %p242 = por %p240, %p241
      %s244 = sadd.s32 %s243, 1
      %p247 = scmp.eq.s32.totalorder %s83, 1
      %p248 = scmp.ne.s32.totalorder %s243, %s245
      %p249 = scmp.eq.s32.totalorder %s83, 0
      %p250 = por %p248, %p249
      %p251 = scmp.ne.s32.totalorder %s243, %s245
      %p252 = scmp.eq.s32.totalorder %s88, 1
      %p253 = por %p251, %p252
      %p254 = scmp.ne.s32.totalorder %s245, %s246
      %p255 = scmp.eq.s32.totalorder %s88, 0
      %p256 = por %p254, %p255
      %p257 = scmp.ne.s32.totalorder %s245, %s246
      %p258 = scmp.eq.s32.totalorder %s89, 1
      %p259 = por %p257, %p258
      %p261 = scmp.ne.s32.totalorder %s246, %s260
      %p262 = scmp.eq.s32.totalorder %s89, 0
      %p263 = por %p261, %p262
      %s265 = sadd.s32 %s264, 1
      %p268 = scmp.eq.s32.totalorder %s83, 1
      %p269 = scmp.ne.s32.totalorder %s264, %s266
      %p270 = scmp.eq.s32.totalorder %s83, 0
      %p271 = por %p269, %p270
      %p272 = scmp.ne.s32.totalorder %s264, %s266
      %p273 = scmp.eq.s32.totalorder %s88, 1
      %p274 = por %p272, %p273
      %p275 = scmp.ne.s32.totalorder %s266, %s267
      %p276 = scmp.eq.s32.totalorder %s88, 0
      %p277 = por %p275, %p276
      %p278 = scmp.ne.s32.totalorder %s266, %s267
      %p279 = scmp.eq.s32.totalorder %s89, 1
      %p280 = por %p278, %p279
      %p282 = scmp.ne.s32.totalorder %s267, %s281
      %p283 = scmp.eq.s32.totalorder %s89, 0
      %p284 = por %p282, %p283
      %s286 = sadd.s32 %s285, 1
      %p289 = scmp.eq.s32.totalorder %s83, 1
      %p290 = scmp.ne.s32.totalorder %s285, %s287
      %p291 = scmp.eq.s32.totalorder %s83, 0
      %p292 = por %p290, %p291
      %p293 = scmp.ne.s32.totalorder %s285, %s287
      %p294 = scmp.eq.s32.totalorder %s88, 1
      %p295 = por %p293, %p294
      %p296 = scmp.ne.s32.totalorder %s287, %s288
      %p297 = scmp.eq.s32.totalorder %s88, 0
      %p298 = por %p296, %p297
      %p299 = scmp.ne.s32.totalorder %s287, %s288
      %p300 = scmp.eq.s32.totalorder %s89, 1
      %p301 = por %p299, %p300
      %p303 = scmp.ne.s32.totalorder %s288, %s302
      %p304 = scmp.eq.s32.totalorder %s89, 0
      %p305 = por %p303, %p304
      %s307 = sadd.s32 %s306, 1
      %p310 = scmp.eq.s32.totalorder %s83, 1
      %p311 = scmp.ne.s32.totalorder %s306, %s308
      %p312 = scmp.eq.s32.totalorder %s83, 0
      %p313 = por %p311, %p312
      %p314 = scmp.ne.s32.totalorder %s306, %s308
      %p315 = scmp.eq.s32.totalorder %s88, 1
      %p316 = por %p314, %p315
      %p317 = scmp.ne.s32.totalorder %s308, %s309
      %p318 = scmp.eq.s32.totalorder %s88, 0
      %p319 = por %p317, %p318
      %p320 = scmp.ne.s32.totalorder %s308, %s309
      %p321 = scmp.eq.s32.totalorder %s89, 1
      %p322 = por %p320, %p321
      %p324 = scmp.ne.s32.totalorder %s309, %s323
      %p325 = scmp.eq.s32.totalorder %s89, 0
      %p326 = por %p324, %p325
      %s328 = sadd.s32 %s327, 1
      %p331 = scmp.eq.s32.totalorder %s83, 1
      %p332 = scmp.ne.s32.totalorder %s327, %s329
      %p333 = scmp.eq.s32.totalorder %s83, 0
      %p334 = por %p332, %p333
      %p335 = scmp.ne.s32.totalorder %s327, %s329
      %p336 = scmp.eq.s32.totalorder %s88, 1
      %p337 = por %p335, %p336
      %p338 = scmp.ne.s32.totalorder %s329, %s330
      %p339 = scmp.eq.s32.totalorder %s88, 0
      %p340 = por %p338, %p339
      %p341 = scmp.ne.s32.totalorder %s329, %s330
      %p342 = scmp.eq.s32.totalorder %s89, 1
      %p343 = por %p341, %p342
      %p345 = scmp.ne.s32.totalorder %s330, %s344
      %p346 = scmp.eq.s32.totalorder %s89, 0
      %p347 = por %p345, %p346
      %s349 = sadd.s32 %s348, 1
      %p352 = scmp.eq.s32.totalorder %s83, 1
      %p353 = scmp.ne.s32.totalorder %s348, %s350
      %p354 = scmp.eq.s32.totalorder %s83, 0
      %p355 = por %p353, %p354
      %p356 = scmp.ne.s32.totalorder %s348, %s350
      %p357 = scmp.eq.s32.totalorder %s88, 1
      %p358 = por %p356, %p357
      %p359 = scmp.ne.s32.totalorder %s350, %s351
      %p360 = scmp.eq.s32.totalorder %s88, 0
      %p361 = por %p359, %p360
      %p362 = scmp.ne.s32.totalorder %s350, %s351
      %p363 = scmp.eq.s32.totalorder %s89, 1
      %p364 = por %p362, %p363
      %p366 = scmp.ne.s32.totalorder %s351, %s365
      %p367 = scmp.eq.s32.totalorder %s89, 0
      %p368 = por %p366, %p367
      %s370 = sadd.s32 %s369, 1
      %p373 = scmp.eq.s32.totalorder %s83, 1
      %p374 = scmp.ne.s32.totalorder %s369, %s371
      %p375 = scmp.eq.s32.totalorder %s83, 0
      %p376 = por %p374, %p375
      %p377 = scmp.ne.s32.totalorder %s369, %s371
      %p378 = scmp.eq.s32.totalorder %s88, 1
      %p379 = por %p377, %p378
      %p380 = scmp.ne.s32.totalorder %s371, %s372
      %p381 = scmp.eq.s32.totalorder %s88, 0
      %p382 = por %p380, %p381
      %p383 = scmp.ne.s32.totalorder %s371, %s372
      %p384 = scmp.eq.s32.totalorder %s89, 1
      %p385 = por %p383, %p384
      %p387 = scmp.ne.s32.totalorder %s372, %s386
      %p388 = scmp.eq.s32.totalorder %s89, 0
      %p389 = por %p387, %p388
      %s391 = sadd.s32 %s390, 1
      %p394 = scmp.eq.s32.totalorder %s83, 1
      %p395 = scmp.ne.s32.totalorder %s390, %s392
      %p396 = scmp.eq.s32.totalorder %s83, 0
      %p397 = por %p395, %p396
      %p398 = scmp.ne.s32.totalorder %s390, %s392
      %p399 = scmp.eq.s32.totalorder %s88, 1
      %p400 = por %p398, %p399
      %p401 = scmp.ne.s32.totalorder %s392, %s393
      %p402 = scmp.eq.s32.totalorder %s88, 0
      %p403 = por %p401, %p402
      %p404 = scmp.ne.s32.totalorder %s392, %s393
      %p405 = scmp.eq.s32.totalorder %s89, 1
      %p406 = por %p404, %p405
      %p408 = scmp.ne.s32.totalorder %s393, %s407
      %p409 = scmp.eq.s32.totalorder %s89, 0
      %p410 = por %p408, %p409
      %s412 = sadd.s32 %s411, 1
      %p415 = scmp.eq.s32.totalorder %s83, 1
      %p416 = scmp.ne.s32.totalorder %s411, %s413
      %p417 = scmp.eq.s32.totalorder %s83, 0
      %p418 = por %p416, %p417
      %p419 = scmp.ne.s32.totalorder %s411, %s413
      %p420 = scmp.eq.s32.totalorder %s88, 1
      %p421 = por %p419, %p420
      %p422 = scmp.ne.s32.totalorder %s413, %s414
      %p423 = scmp.eq.s32.totalorder %s88, 0
      %p424 = por %p422, %p423
      %p425 = scmp.ne.s32.totalorder %s413, %s414
      %p426 = scmp.eq.s32.totalorder %s89, 1
      %p427 = por %p425, %p426
      %p429 = scmp.ne.s32.totalorder %s414, %s428
      %p430 = scmp.eq.s32.totalorder %s89, 0
      %p431 = por %p429, %p430
      %s433 = sadd.s32 %s432, 1
      %p436 = scmp.eq.s32.totalorder %s83, 1
      %p437 = scmp.ne.s32.totalorder %s432, %s434
      %p438 = scmp.eq.s32.totalorder %s83, 0
      %p439 = por %p437, %p438
      %p440 = scmp.ne.s32.totalorder %s432, %s434
      %p441 = scmp.eq.s32.totalorder %s88, 1
      %p442 = por %p440, %p441
      %p443 = scmp.ne.s32.totalorder %s434, %s435
      %p444 = scmp.eq.s32.totalorder %s88, 0
      %p445 = por %p443, %p444
      %p446 = scmp.ne.s32.totalorder %s434, %s435
      %p447 = scmp.eq.s32.totalorder %s89, 1
      %p448 = por %p446, %p447
      %p450 = scmp.ne.s32.totalorder %s435, %s449
      %p451 = scmp.eq.s32.totalorder %s89, 0
      %p452 = por %p450, %p451
      %s454 = sadd.s32 %s453, 1
      %p457 = scmp.eq.s32.totalorder %s83, 1
      %p458 = scmp.ne.s32.totalorder %s453, %s455
      %p459 = scmp.eq.s32.totalorder %s83, 0
      %p460 = por %p458, %p459
      %p461 = scmp.ne.s32.totalorder %s453, %s455
      %p462 = scmp.eq.s32.totalorder %s88, 1
      %p463 = por %p461, %p462
      %p464 = scmp.ne.s32.totalorder %s455, %s456
      %p465 = scmp.eq.s32.totalorder %s88, 0
      %p466 = por %p464, %p465
      %p467 = scmp.ne.s32.totalorder %s455, %s456
      %p468 = scmp.eq.s32.totalorder %s89, 1
      %p469 = por %p467, %p468
      %p471 = scmp.ne.s32.totalorder %s456, %s470
      %p472 = scmp.eq.s32.totalorder %s89, 0
      %p473 = por %p471, %p472
      %s475 = sadd.s32 %s474, 1
      %p478 = scmp.eq.s32.totalorder %s83, 1
      %p479 = scmp.ne.s32.totalorder %s474, %s476
      %p480 = scmp.eq.s32.totalorder %s83, 0
      %p481 = por %p479, %p480
      %p482 = scmp.ne.s32.totalorder %s474, %s476
      %p483 = scmp.eq.s32.totalorder %s88, 1
      %p484 = por %p482, %p483
      %p485 = scmp.ne.s32.totalorder %s476, %s477
      %p486 = scmp.eq.s32.totalorder %s88, 0
      %p487 = por %p485, %p486
      %p488 = scmp.ne.s32.totalorder %s476, %s477
      %p489 = scmp.eq.s32.totalorder %s89, 1
      %p490 = por %p488, %p489
      %p492 = scmp.ne.s32.totalorder %s477, %s491
      %p493 = scmp.eq.s32.totalorder %s89, 0
      %p494 = por %p492, %p493
      %s496 = sadd.s32 %s495, 1
      %p499 = scmp.eq.s32.totalorder %s83, 1
      %p500 = scmp.ne.s32.totalorder %s495, %s497
      %p501 = scmp.eq.s32.totalorder %s83, 0
      %p502 = por %p500, %p501
      %p503 = scmp.ne.s32.totalorder %s495, %s497
      %p504 = scmp.eq.s32.totalorder %s88, 1
      %p505 = por %p503, %p504
      %p506 = scmp.ne.s32.totalorder %s497, %s498
      %p507 = scmp.eq.s32.totalorder %s88, 0
      %p508 = por %p506, %p507
      %p509 = scmp.ne.s32.totalorder %s497, %s498
      %p510 = scmp.eq.s32.totalorder %s89, 1
      %p511 = por %p509, %p510
      %p513 = scmp.ne.s32.totalorder %s498, %s512
      %p514 = scmp.eq.s32.totalorder %s89, 0
      %p515 = por %p513, %p514
      %s517 = sadd.s32 %s516, 1
      %p520 = scmp.eq.s32.totalorder %s83, 1
      %p521 = scmp.ne.s32.totalorder %s516, %s518
      %p522 = scmp.eq.s32.totalorder %s83, 0
      %p523 = por %p521, %p522
      %p524 = scmp.ne.s32.totalorder %s516, %s518
      %p525 = scmp.eq.s32.totalorder %s88, 1
      %p526 = por %p524, %p525
      %p527 = scmp.ne.s32.totalorder %s518, %s519
      %p528 = scmp.eq.s32.totalorder %s88, 0
      %p529 = por %p527, %p528
      %p530 = scmp.ne.s32.totalorder %s518, %s519
      %p531 = scmp.eq.s32.totalorder %s89, 1
      %p532 = por %p530, %p531
      %p534 = scmp.ne.s32.totalorder %s519, %s533
      %p535 = scmp.eq.s32.totalorder %s89, 0
      %p536 = por %p534, %p535
      %s538 = sadd.s32 %s537, 1
      %p541 = scmp.eq.s32.totalorder %s83, 1
      %p542 = scmp.ne.s32.totalorder %s537, %s539
      %p543 = scmp.eq.s32.totalorder %s83, 0
      %p544 = por %p542, %p543
      %p545 = scmp.ne.s32.totalorder %s537, %s539
      %p546 = scmp.eq.s32.totalorder %s88, 1
      %p547 = por %p545, %p546
      %p548 = scmp.ne.s32.totalorder %s539, %s540
      %p549 = scmp.eq.s32.totalorder %s88, 0
      %p550 = por %p548, %p549
      %p551 = scmp.ne.s32.totalorder %s539, %s540
      %p552 = scmp.eq.s32.totalorder %s89, 1
      %p553 = por %p551, %p552
      %p555 = scmp.ne.s32.totalorder %s540, %s554
      %p556 = scmp.eq.s32.totalorder %s89, 0
      %p557 = por %p555, %p556
      %s559 = sadd.s32 %s558, 1
      %p562 = scmp.eq.s32.totalorder %s83, 1
      %p563 = scmp.ne.s32.totalorder %s558, %s560
      %p564 = scmp.eq.s32.totalorder %s83, 0
      %p565 = por %p563, %p564
      %p566 = scmp.ne.s32.totalorder %s558, %s560
      %p567 = scmp.eq.s32.totalorder %s88, 1
      %p568 = por %p566, %p567
      %p569 = scmp.ne.s32.totalorder %s560, %s561
      %p570 = scmp.eq.s32.totalorder %s88, 0
      %p571 = por %p569, %p570
      %p572 = scmp.ne.s32.totalorder %s560, %s561
      %p573 = scmp.eq.s32.totalorder %s89, 1
      %p574 = por %p572, %p573
      %p576 = scmp.ne.s32.totalorder %s561, %s575
      %p577 = scmp.eq.s32.totalorder %s89, 0
      %p578 = por %p576, %p577
      %s580 = sadd.s32 %s579, 1
      %p583 = scmp.eq.s32.totalorder %s83, 1
      %p584 = scmp.ne.s32.totalorder %s579, %s581
      %p585 = scmp.eq.s32.totalorder %s83, 0
      %p586 = por %p584, %p585
      %p587 = scmp.ne.s32.totalorder %s579, %s581
      %p588 = scmp.eq.s32.totalorder %s88, 1
      %p589 = por %p587, %p588
      %p590 = scmp.ne.s32.totalorder %s581, %s582
      %p591 = scmp.eq.s32.totalorder %s88, 0
      %p592 = por %p590, %p591
      %p593 = scmp.ne.s32.totalorder %s581, %s582
      %p594 = scmp.eq.s32.totalorder %s89, 1
      %p595 = por %p593, %p594
      %p597 = scmp.ne.s32.totalorder %s582, %s596
      %p598 = scmp.eq.s32.totalorder %s89, 0
      %p599 = por %p597, %p598
      %s601 = sadd.s32 %s600, 1
      %p604 = scmp.eq.s32.totalorder %s83, 1
      %p605 = scmp.ne.s32.totalorder %s600, %s602
      %p606 = scmp.eq.s32.totalorder %s83, 0
      %p607 = por %p605, %p606
      %p608 = scmp.ne.s32.totalorder %s600, %s602
      %p609 = scmp.eq.s32.totalorder %s88, 1
      %p610 = por %p608, %p609
      %p611 = scmp.ne.s32.totalorder %s602, %s603
      %p612 = scmp.eq.s32.totalorder %s88, 0
      %p613 = por %p611, %p612
      %p614 = scmp.ne.s32.totalorder %s602, %s603
      %p615 = scmp.eq.s32.totalorder %s89, 1
      %p616 = por %p614, %p615
      %p618 = scmp.ne.s32.totalorder %s603, %s617
      %p619 = scmp.eq.s32.totalorder %s89, 0
      %p620 = por %p618, %p619
      %s622 = sadd.s32 %s621, 1
      %p625 = scmp.eq.s32.totalorder %s83, 1
      %p626 = scmp.ne.s32.totalorder %s621, %s623
      %p627 = scmp.eq.s32.totalorder %s83, 0
      %p628 = por %p626, %p627
      %p629 = scmp.ne.s32.totalorder %s621, %s623
      %p630 = scmp.eq.s32.totalorder %s88, 1
      %p631 = por %p629, %p630
      %p632 = scmp.ne.s32.totalorder %s623, %s624
      %p633 = scmp.eq.s32.totalorder %s88, 0
      %p634 = por %p632, %p633
      %p635 = scmp.ne.s32.totalorder %s623, %s624
      %p636 = scmp.eq.s32.totalorder %s89, 1
      %p637 = por %p635, %p636
      %p639 = scmp.ne.s32.totalorder %s624, %s638
      %p640 = scmp.eq.s32.totalorder %s89, 0
      %p641 = por %p639, %p640
      %s643 = sadd.s32 %s642, 1
      %p646 = scmp.eq.s32.totalorder %s83, 1
      %p647 = scmp.ne.s32.totalorder %s642, %s644
      %p648 = scmp.eq.s32.totalorder %s83, 0
      %p649 = por %p647, %p648
      %p650 = scmp.ne.s32.totalorder %s642, %s644
      %p651 = scmp.eq.s32.totalorder %s88, 1
      %p652 = por %p650, %p651
      %p653 = scmp.ne.s32.totalorder %s644, %s645
      %p654 = scmp.eq.s32.totalorder %s88, 0
      %p655 = por %p653, %p654
      %p656 = scmp.ne.s32.totalorder %s644, %s645
      %p657 = scmp.eq.s32.totalorder %s89, 1
      %p658 = por %p656, %p657
      %p660 = scmp.ne.s32.totalorder %s645, %s659
      %p661 = scmp.eq.s32.totalorder %s89, 0
      %p662 = por %p660, %p661
      %s664 = sadd.s32 %s663, 1
      %p667 = scmp.eq.s32.totalorder %s83, 1
      %p668 = scmp.ne.s32.totalorder %s663, %s665
      %p669 = scmp.eq.s32.totalorder %s83, 0
      %p670 = por %p668, %p669
      %p671 = scmp.ne.s32.totalorder %s663, %s665
      %p672 = scmp.eq.s32.totalorder %s88, 1
      %p673 = por %p671, %p672
      %p674 = scmp.ne.s32.totalorder %s665, %s666
      %p675 = scmp.eq.s32.totalorder %s88, 0
      %p676 = por %p674, %p675
      %p677 = scmp.ne.s32.totalorder %s665, %s666
      %p678 = scmp.eq.s32.totalorder %s89, 1
      %p679 = por %p677, %p678
      %p681 = scmp.ne.s32.totalorder %s666, %s680
      %p682 = scmp.eq.s32.totalorder %s89, 0
      %p683 = por %p681, %p682
      %s685 = sadd.s32 %s684, 1
      %p688 = scmp.eq.s32.totalorder %s83, 1
      %p689 = scmp.ne.s32.totalorder %s684, %s686
      %p690 = scmp.eq.s32.totalorder %s83, 0
      %p691 = por %p689, %p690
      %p692 = scmp.ne.s32.totalorder %s684, %s686
      %p693 = scmp.eq.s32.totalorder %s88, 1
      %p694 = por %p692, %p693
      %p695 = scmp.ne.s32.totalorder %s686, %s687
      %p696 = scmp.eq.s32.totalorder %s88, 0
      %p697 = por %p695, %p696
      %p698 = scmp.ne.s32.totalorder %s686, %s687
      %p699 = scmp.eq.s32.totalorder %s89, 1
      %p700 = por %p698, %p699
      %p702 = scmp.ne.s32.totalorder %s687, %s701
      %p703 = scmp.eq.s32.totalorder %s89, 0
      %p704 = por %p702, %p703
      %s706 = sadd.s32 %s705, 1
      %p709 = scmp.eq.s32.totalorder %s83, 1
      %p710 = scmp.ne.s32.totalorder %s705, %s707
      %p711 = scmp.eq.s32.totalorder %s83, 0
      %p712 = por %p710, %p711
      %p713 = scmp.ne.s32.totalorder %s705, %s707
      %p714 = scmp.eq.s32.totalorder %s88, 1
      %p715 = por %p713, %p714
      %p716 = scmp.ne.s32.totalorder %s707, %s708
      %p717 = scmp.eq.s32.totalorder %s88, 0
      %p718 = por %p716, %p717
      %p719 = scmp.ne.s32.totalorder %s707, %s708
      %p720 = scmp.eq.s32.totalorder %s89, 1
      %p721 = por %p719, %p720
      %p723 = scmp.ne.s32.totalorder %s708, %s722
      %p724 = scmp.eq.s32.totalorder %s89, 0
      %p725 = por %p723, %p724
      %s727 = sadd.s32 %s726, 1
      %p730 = scmp.eq.s32.totalorder %s83, 1
      %p731 = scmp.ne.s32.totalorder %s726, %s728
      %p732 = scmp.eq.s32.totalorder %s83, 0
      %p733 = por %p731, %p732
      %p734 = scmp.ne.s32.totalorder %s726, %s728
      %p735 = scmp.eq.s32.totalorder %s88, 1
      %p736 = por %p734, %p735
      %p737 = scmp.ne.s32.totalorder %s728, %s729
      %p738 = scmp.eq.s32.totalorder %s88, 0
      %p739 = por %p737, %p738
      %p740 = scmp.ne.s32.totalorder %s728, %s729
      %p741 = scmp.eq.s32.totalorder %s89, 1
      %p742 = por %p740, %p741
      %p744 = scmp.ne.s32.totalorder %s729, %s743
      %p745 = scmp.eq.s32.totalorder %s89, 0
      %p746 = por %p744, %p745
      %s748 = sadd.s32 %s747, 1
      %p751 = scmp.eq.s32.totalorder %s83, 1
      %p752 = scmp.ne.s32.totalorder %s747, %s749
      %p753 = scmp.eq.s32.totalorder %s83, 0
      %p754 = por %p752, %p753
      %p755 = scmp.ne.s32.totalorder %s747, %s749
      %p756 = scmp.eq.s32.totalorder %s88, 1
      %p757 = por %p755, %p756
      %p758 = scmp.ne.s32.totalorder %s749, %s750
      %p759 = scmp.eq.s32.totalorder %s88, 0
      %p760 = por %p758, %p759
      %p761 = scmp.ne.s32.totalorder %s749, %s750
      %p762 = scmp.eq.s32.totalorder %s89, 1
      %p763 = por %p761, %p762
      %p765 = scmp.ne.s32.totalorder %s750, %s764
      %p766 = scmp.eq.s32.totalorder %s89, 0
      %p767 = por %p765, %p766
      %s769 = sadd.s32 %s768, 1
      %p772 = scmp.eq.s32.totalorder %s83, 1
      %p773 = scmp.ne.s32.totalorder %s768, %s770
      %p774 = scmp.eq.s32.totalorder %s83, 0
      %p775 = por %p773, %p774
      %p776 = scmp.ne.s32.totalorder %s768, %s770
      %p777 = scmp.eq.s32.totalorder %s88, 1
      %p778 = por %p776, %p777
      %p779 = scmp.ne.s32.totalorder %s770, %s771
      %p780 = scmp.eq.s32.totalorder %s88, 0
      %p781 = por %p779, %p780
      %p782 = scmp.ne.s32.totalorder %s770, %s771
      %p783 = scmp.eq.s32.totalorder %s89, 1
      %p784 = por %p782, %p783
      %p786 = scmp.ne.s32.totalorder %s771, %s785
      %p787 = scmp.eq.s32.totalorder %s89, 0
      %p788 = por %p786, %p787
      %s790 = sadd.s32 %s789, 1
      %p793 = scmp.eq.s32.totalorder %s83, 1
      %p794 = scmp.ne.s32.totalorder %s789, %s791
      %p795 = scmp.eq.s32.totalorder %s83, 0
      %p796 = por %p794, %p795
      %p797 = scmp.ne.s32.totalorder %s789, %s791
      %p798 = scmp.eq.s32.totalorder %s88, 1
      %p799 = por %p797, %p798
      %p800 = scmp.ne.s32.totalorder %s791, %s792
      %p801 = scmp.eq.s32.totalorder %s88, 0
      %p802 = por %p800, %p801
      %p803 = scmp.ne.s32.totalorder %s791, %s792
      %p804 = scmp.eq.s32.totalorder %s89, 1
      %p805 = por %p803, %p804
      %p807 = scmp.ne.s32.totalorder %s792, %s806
      %p808 = scmp.eq.s32.totalorder %s89, 0
      %p809 = por %p807, %p808
      %s810 = ssub.s32 %s83, %s90
      %p811 = scmp.eq.s32.totalorder %s810, 0
      %s813 = sadd.s32 %s812, 1
      %s814 = scalar_select %p811, %s812, %s813
      %p817 = pneg %p811
      %p818 = scmp.eq.s32.totalorder %s83, 1
      %p819 = por %p817, %p818
      %p820 = scmp.ne.s32.totalorder %s812, %s815
      %p821 = scmp.eq.s32.totalorder %s83, 0
      %p822 = por %p820, %p821
      %p823 = scmp.ne.s32.totalorder %s812, %s815
      %p824 = scmp.eq.s32.totalorder %s88, 1
      %p825 = por %p823, %p824
      %p826 = scmp.ne.s32.totalorder %s815, %s816
      %p827 = scmp.eq.s32.totalorder %s88, 0
      %p828 = por %p826, %p827
      %p829 = scmp.ne.s32.totalorder %s815, %s816
      %p830 = scmp.eq.s32.totalorder %s89, 1
      %p831 = por %p829, %p830
      %p833 = scmp.ne.s32.totalorder %s816, %s832
      %p834 = scmp.eq.s32.totalorder %s89, 0
      %p835 = por %p833, %p834
      %s836 = ssub.s32 %s83, %s90
      %p837 = scmp.eq.s32.totalorder %s836, 0
      %s839 = sadd.s32 %s838, 1
      %s840 = scalar_select %p837, %s838, %s839
      %p843 = pneg %p837
      %p844 = scmp.eq.s32.totalorder %s83, 1
      %p845 = por %p843, %p844
      %p846 = scmp.ne.s32.totalorder %s838, %s841
      %p847 = scmp.eq.s32.totalorder %s83, 0
      %p848 = por %p846, %p847
      %p849 = scmp.ne.s32.totalorder %s838, %s841
      %p850 = scmp.eq.s32.totalorder %s88, 1
      %p851 = por %p849, %p850
      %p852 = scmp.ne.s32.totalorder %s841, %s842
      %p853 = scmp.eq.s32.totalorder %s88, 0
      %p854 = por %p852, %p853
      %p855 = scmp.ne.s32.totalorder %s841, %s842
      %p856 = scmp.eq.s32.totalorder %s89, 1
      %p857 = por %p855, %p856
      %p859 = scmp.ne.s32.totalorder %s842, %s858
      %p860 = scmp.eq.s32.totalorder %s89, 0
      %p861 = por %p859, %p860
      %s862 = ssub.s32 %s83, %s90
      %p863 = scmp.eq.s32.totalorder %s862, 0
      %s865 = sadd.s32 %s864, 1
      %s866 = scalar_select %p863, %s864, %s865
      %p869 = pneg %p863
      %p870 = scmp.eq.s32.totalorder %s83, 1
      %p871 = por %p869, %p870
      %p872 = scmp.ne.s32.totalorder %s864, %s867
      %p873 = scmp.eq.s32.totalorder %s83, 0
      %p874 = por %p872, %p873
      %p875 = scmp.ne.s32.totalorder %s864, %s867
      %p876 = scmp.eq.s32.totalorder %s88, 1
      %p877 = por %p875, %p876
      %p878 = scmp.ne.s32.totalorder %s867, %s868
      %p879 = scmp.eq.s32.totalorder %s88, 0
      %p880 = por %p878, %p879
      %p881 = scmp.ne.s32.totalorder %s867, %s868
      %p882 = scmp.eq.s32.totalorder %s89, 1
      %p883 = por %p881, %p882
      %p885 = scmp.ne.s32.totalorder %s868, %s884
      %p886 = scmp.eq.s32.totalorder %s89, 0
      %p887 = por %p885, %p886
      %p888 = scmp.le.s32.totalorder 1, %s83
      %p889 = scmp.lt.s32.totalorder %s83, 3
      %p890 = pnand %p888, %p889
      %p891 = pneg %p890
      // Predicated region
      $region9: #{vqvae_forward.1} parent=5 // pred_check
        _
      $region10: #{vqvae_forward.1} parent=5 // pred_check_branch
        %893 = sbr.rel (%p890) target = $region12
      $region11: #{vqvae_forward.1} parent=5 // pred_region
        %s894 = ssub.s32 %s83, 1
        // Predicated region
        $region13: #{vqvae_forward.1} parent=11 // pred_check
          %p895 = pneg %p130
        $region14: #{vqvae_forward.1} parent=11 // pred_check_branch
          %897 = sbr.rel (%p895) target = $region16
        $region15: #{vqvae_forward.1} parent=11 // pred_region
          _
        $region16: #{vqvae_forward.1} parent=11 // pred_fallthru
          _
        // Predicated region
        $region17: #{vqvae_forward.1} parent=11 // pred_check
          %p898 = pneg %p151
        $region18: #{vqvae_forward.1} parent=11 // pred_check_branch
          %900 = sbr.rel (%p898) target = $region20
        $region19: #{vqvae_forward.1} parent=11 // pred_region
          _
        $region20: #{vqvae_forward.1} parent=11 // pred_fallthru
          _
        // Predicated region
        $region21: #{vqvae_forward.1} parent=11 // pred_check
          %p901 = pneg %p172
        $region22: #{vqvae_forward.1} parent=11 // pred_check_branch
          %903 = sbr.rel (%p901) target = $region24
        $region23: #{vqvae_forward.1} parent=11 // pred_region
          _
        $region24: #{vqvae_forward.1} parent=11 // pred_fallthru
          _
        // Predicated region
        $region25: #{vqvae_forward.1} parent=11 // pred_check
          %p904 = pneg %p193
        $region26: #{vqvae_forward.1} parent=11 // pred_check_branch
          %906 = sbr.rel (%p904) target = $region28
        $region27: #{vqvae_forward.1} parent=11 // pred_region
          _
        $region28: #{vqvae_forward.1} parent=11 // pred_fallthru
          _
        // Predicated region
        $region29: #{vqvae_forward.1} parent=11 // pred_check
          %p907 = pneg %p214
        $region30: #{vqvae_forward.1} parent=11 // pred_check_branch
          %909 = sbr.rel (%p907) target = $region32
        $region31: #{vqvae_forward.1} parent=11 // pred_region
          _
        $region32: #{vqvae_forward.1} parent=11 // pred_fallthru
          _
        // Predicated region
        $region33: #{vqvae_forward.1} parent=11 // pred_check
          %p910 = pneg %p235
        $region34: #{vqvae_forward.1} parent=11 // pred_check_branch
          %912 = sbr.rel (%p910) target = $region36
        $region35: #{vqvae_forward.1} parent=11 // pred_region
          _
        $region36: #{vqvae_forward.1} parent=11 // pred_fallthru
          _
        // Predicated region
        $region37: #{vqvae_forward.1} parent=11 // pred_check
          %p913 = pneg %p256
        $region38: #{vqvae_forward.1} parent=11 // pred_check_branch
          %915 = sbr.rel (%p913) target = $region40
        $region39: #{vqvae_forward.1} parent=11 // pred_region
          _
        $region40: #{vqvae_forward.1} parent=11 // pred_fallthru
          _
        // Predicated region
        $region41: #{vqvae_forward.1} parent=11 // pred_check
          %p916 = pneg %p277
        $region42: #{vqvae_forward.1} parent=11 // pred_check_branch
          %918 = sbr.rel (%p916) target = $region44
        $region43: #{vqvae_forward.1} parent=11 // pred_region
          _
        $region44: #{vqvae_forward.1} parent=11 // pred_fallthru
          _
        // Predicated region
        $region45: #{vqvae_forward.1} parent=11 // pred_check
          %p919 = pneg %p298
        $region46: #{vqvae_forward.1} parent=11 // pred_check_branch
          %921 = sbr.rel (%p919) target = $region48
        $region47: #{vqvae_forward.1} parent=11 // pred_region
          _
        $region48: #{vqvae_forward.1} parent=11 // pred_fallthru
          _
        // Predicated region
        $region49: #{vqvae_forward.1} parent=11 // pred_check
          %p922 = pneg %p319
        $region50: #{vqvae_forward.1} parent=11 // pred_check_branch
          %924 = sbr.rel (%p922) target = $region52
        $region51: #{vqvae_forward.1} parent=11 // pred_region
          _
        $region52: #{vqvae_forward.1} parent=11 // pred_fallthru
          _
        // Predicated region
        $region53: #{vqvae_forward.1} parent=11 // pred_check
          %p925 = pneg %p340
        $region54: #{vqvae_forward.1} parent=11 // pred_check_branch
          %927 = sbr.rel (%p925) target = $region56
        $region55: #{vqvae_forward.1} parent=11 // pred_region
          _
        $region56: #{vqvae_forward.1} parent=11 // pred_fallthru
          _
        // Predicated region
        $region57: #{vqvae_forward.1} parent=11 // pred_check
          %p928 = pneg %p361
        $region58: #{vqvae_forward.1} parent=11 // pred_check_branch
          %930 = sbr.rel (%p928) target = $region60
        $region59: #{vqvae_forward.1} parent=11 // pred_region
          _
        $region60: #{vqvae_forward.1} parent=11 // pred_fallthru
          _
        // Predicated region
        $region61: #{vqvae_forward.1} parent=11 // pred_check
          %p931 = pneg %p382
        $region62: #{vqvae_forward.1} parent=11 // pred_check_branch
          %933 = sbr.rel (%p931) target = $region64
        $region63: #{vqvae_forward.1} parent=11 // pred_region
          _
        $region64: #{vqvae_forward.1} parent=11 // pred_fallthru
          _
        // Predicated region
        $region65: #{vqvae_forward.1} parent=11 // pred_check
          %p934 = pneg %p403
        $region66: #{vqvae_forward.1} parent=11 // pred_check_branch
          %936 = sbr.rel (%p934) target = $region68
        $region67: #{vqvae_forward.1} parent=11 // pred_region
          _
        $region68: #{vqvae_forward.1} parent=11 // pred_fallthru
          _
        // Predicated region
        $region69: #{vqvae_forward.1} parent=11 // pred_check
          %p937 = pneg %p424
        $region70: #{vqvae_forward.1} parent=11 // pred_check_branch
          %939 = sbr.rel (%p937) target = $region72
        $region71: #{vqvae_forward.1} parent=11 // pred_region
          _
        $region72: #{vqvae_forward.1} parent=11 // pred_fallthru
          _
        // Predicated region
        $region73: #{vqvae_forward.1} parent=11 // pred_check
          %p940 = pneg %p445
        $region74: #{vqvae_forward.1} parent=11 // pred_check_branch
          %942 = sbr.rel (%p940) target = $region76
        $region75: #{vqvae_forward.1} parent=11 // pred_region
          _
        $region76: #{vqvae_forward.1} parent=11 // pred_fallthru
          _
        // Predicated region
        $region77: #{vqvae_forward.1} parent=11 // pred_check
          %p943 = pneg %p466
        $region78: #{vqvae_forward.1} parent=11 // pred_check_branch
          %945 = sbr.rel (%p943) target = $region80
        $region79: #{vqvae_forward.1} parent=11 // pred_region
          _
        $region80: #{vqvae_forward.1} parent=11 // pred_fallthru
          _
        // Predicated region
        $region81: #{vqvae_forward.1} parent=11 // pred_check
          %p946 = pneg %p487
        $region82: #{vqvae_forward.1} parent=11 // pred_check_branch
          %948 = sbr.rel (%p946) target = $region84
        $region83: #{vqvae_forward.1} parent=11 // pred_region
          _
        $region84: #{vqvae_forward.1} parent=11 // pred_fallthru
          _
        // Predicated region
        $region85: #{vqvae_forward.1} parent=11 // pred_check
          %p949 = pneg %p508
        $region86: #{vqvae_forward.1} parent=11 // pred_check_branch
          %951 = sbr.rel (%p949) target = $region88
        $region87: #{vqvae_forward.1} parent=11 // pred_region
          _
        $region88: #{vqvae_forward.1} parent=11 // pred_fallthru
          _
        // Predicated region
        $region89: #{vqvae_forward.1} parent=11 // pred_check
          %p952 = pneg %p529
        $region90: #{vqvae_forward.1} parent=11 // pred_check_branch
          %954 = sbr.rel (%p952) target = $region92
        $region91: #{vqvae_forward.1} parent=11 // pred_region
          _
        $region92: #{vqvae_forward.1} parent=11 // pred_fallthru
          _
        // Predicated region
        $region93: #{vqvae_forward.1} parent=11 // pred_check
          %p955 = pneg %p550
        $region94: #{vqvae_forward.1} parent=11 // pred_check_branch
          %957 = sbr.rel (%p955) target = $region96
        $region95: #{vqvae_forward.1} parent=11 // pred_region
          _
        $region96: #{vqvae_forward.1} parent=11 // pred_fallthru
          _
        // Predicated region
        $region97: #{vqvae_forward.1} parent=11 // pred_check
          %p958 = pneg %p571
        $region98: #{vqvae_forward.1} parent=11 // pred_check_branch
          %960 = sbr.rel (%p958) target = $region100
        $region99: #{vqvae_forward.1} parent=11 // pred_region
          _
        $region100: #{vqvae_forward.1} parent=11 // pred_fallthru
          _
        // Predicated region
        $region101: #{vqvae_forward.1} parent=11 // pred_check
          %p961 = pneg %p592
        $region102: #{vqvae_forward.1} parent=11 // pred_check_branch
          %963 = sbr.rel (%p961) target = $region104
        $region103: #{vqvae_forward.1} parent=11 // pred_region
          _
        $region104: #{vqvae_forward.1} parent=11 // pred_fallthru
          _
        // Predicated region
        $region105: #{vqvae_forward.1} parent=11 // pred_check
          %p964 = pneg %p613
        $region106: #{vqvae_forward.1} parent=11 // pred_check_branch
          %966 = sbr.rel (%p964) target = $region108
        $region107: #{vqvae_forward.1} parent=11 // pred_region
          _
        $region108: #{vqvae_forward.1} parent=11 // pred_fallthru
          _
        // Predicated region
        $region109: #{vqvae_forward.1} parent=11 // pred_check
          %p967 = pneg %p634
        $region110: #{vqvae_forward.1} parent=11 // pred_check_branch
          %969 = sbr.rel (%p967) target = $region112
        $region111: #{vqvae_forward.1} parent=11 // pred_region
          _
        $region112: #{vqvae_forward.1} parent=11 // pred_fallthru
          _
        // Predicated region
        $region113: #{vqvae_forward.1} parent=11 // pred_check
          %p970 = pneg %p655
        $region114: #{vqvae_forward.1} parent=11 // pred_check_branch
          %972 = sbr.rel (%p970) target = $region116
        $region115: #{vqvae_forward.1} parent=11 // pred_region
          _
        $region116: #{vqvae_forward.1} parent=11 // pred_fallthru
          _
        // Predicated region
        $region117: #{vqvae_forward.1} parent=11 // pred_check
          %p973 = pneg %p676
        $region118: #{vqvae_forward.1} parent=11 // pred_check_branch
          %975 = sbr.rel (%p973) target = $region120
        $region119: #{vqvae_forward.1} parent=11 // pred_region
          _
        $region120: #{vqvae_forward.1} parent=11 // pred_fallthru
          _
        // Predicated region
        $region121: #{vqvae_forward.1} parent=11 // pred_check
          %p976 = pneg %p697
        $region122: #{vqvae_forward.1} parent=11 // pred_check_branch
          %978 = sbr.rel (%p976) target = $region124
        $region123: #{vqvae_forward.1} parent=11 // pred_region
          _
        $region124: #{vqvae_forward.1} parent=11 // pred_fallthru
          _
        // Predicated region
        $region125: #{vqvae_forward.1} parent=11 // pred_check
          %p979 = pneg %p718
        $region126: #{vqvae_forward.1} parent=11 // pred_check_branch
          %981 = sbr.rel (%p979) target = $region128
        $region127: #{vqvae_forward.1} parent=11 // pred_region
          _
        $region128: #{vqvae_forward.1} parent=11 // pred_fallthru
          _
        // Predicated region
        $region129: #{vqvae_forward.1} parent=11 // pred_check
          %p982 = pneg %p739
        $region130: #{vqvae_forward.1} parent=11 // pred_check_branch
          %984 = sbr.rel (%p982) target = $region132
        $region131: #{vqvae_forward.1} parent=11 // pred_region
          _
        $region132: #{vqvae_forward.1} parent=11 // pred_fallthru
          _
        // Predicated region
        $region133: #{vqvae_forward.1} parent=11 // pred_check
          %p985 = pneg %p760
        $region134: #{vqvae_forward.1} parent=11 // pred_check_branch
          %987 = sbr.rel (%p985) target = $region136
        $region135: #{vqvae_forward.1} parent=11 // pred_region
          _
        $region136: #{vqvae_forward.1} parent=11 // pred_fallthru
          _
        // Predicated region
        $region137: #{vqvae_forward.1} parent=11 // pred_check
          %p988 = pneg %p781
        $region138: #{vqvae_forward.1} parent=11 // pred_check_branch
          %990 = sbr.rel (%p988) target = $region140
        $region139: #{vqvae_forward.1} parent=11 // pred_region
          _
        $region140: #{vqvae_forward.1} parent=11 // pred_fallthru
          _
        // Predicated region
        $region141: #{vqvae_forward.1} parent=11 // pred_check
          %p991 = pneg %p802
        $region142: #{vqvae_forward.1} parent=11 // pred_check_branch
          %993 = sbr.rel (%p991) target = $region144
        $region143: #{vqvae_forward.1} parent=11 // pred_region
          _
        $region144: #{vqvae_forward.1} parent=11 // pred_fallthru
          _
      $region12: #{vqvae_forward.1} parent=5 // pred_fallthru
        _
      %p994 = scmp.lt.s32.totalorder %s83, 2
      // Predicated region
      $region145: #{vqvae_forward.1} parent=5 // pred_check
        %p995 = pneg %p994
      $region146: #{vqvae_forward.1} parent=5 // pred_check_branch
        %997 = sbr.rel (%p995) target = $region148
      $region147: #{vqvae_forward.1} parent=5 // pred_region
        // Predicated region
        $region149: #{vqvae_forward.1} parent=147 // pred_check
          %p998 = pneg %p103
        $region150: #{vqvae_forward.1} parent=147 // pred_check_branch
          %1000 = sbr.rel (%p998) target = $region152
        $region151: #{vqvae_forward.1} parent=147 // pred_region
          %p1001 = scmp.lt.s32.totalorder %s83, 1
          %s1002 = scalar_select %p1001, %s83, 1
          %s1003 = smul.addr %s1002, 8
          %s1004 = smul.addr %s1003, 4
          %s1005 = scalar_lea.vmem %s1, %s1004
        $region152: #{vqvae_forward.1} parent=147 // pred_fallthru
          _
      $region148: #{vqvae_forward.1} parent=5 // pred_fallthru
        _
      %p1006 = scmp.le.s32.totalorder 1, %s83
      %p1007 = scmp.lt.s32.totalorder %s83, 3
      %p1008 = pnand %p1006, %p1007
      %p1009 = pneg %p1008
      // Predicated region
      $region153: #{vqvae_forward.1} parent=5 // pred_check
        _
      $region154: #{vqvae_forward.1} parent=5 // pred_check_branch
        %1011 = sbr.rel (%p1008) target = $region156
      $region155: #{vqvae_forward.1} parent=5 // pred_region
        %s1012 = ssub.s32 %s83, 1
        %p1013 = scmp.lt.s32.totalorder %s88, 1
        %s1014 = scalar_select %p1013, %s88, 1
        %s1015 = smul.addr %s1014, 8
        %s1016 = smul.addr %s1015, 4
        %s1017 = scalar_lea.vmem %s1, %s1016
        %p1018 = pneg %p109
        %p1019 = pneg %p106
        %p1020 = pneg %p130
        %p1021 = pneg %p127
        %p1022 = pneg %p151
        %p1023 = pneg %p148
        %p1024 = pneg %p172
        %p1025 = pneg %p169
        %p1026 = pneg %p193
        %p1027 = pneg %p190
        %p1028 = pneg %p214
        %p1029 = pneg %p211
        %p1030 = pneg %p235
        %p1031 = pneg %p232
        %p1032 = pneg %p256
        %p1033 = pneg %p253
        %p1034 = pneg %p277
        %p1035 = pneg %p274
        %p1036 = pneg %p298
        %p1037 = pneg %p295
        %p1038 = pneg %p319
        %p1039 = pneg %p316
        %p1040 = pneg %p340
        %p1041 = pneg %p337
        %p1042 = pneg %p361
        %p1043 = pneg %p358
        %p1044 = pneg %p382
        %p1045 = pneg %p379
        %p1046 = pneg %p403
        %p1047 = pneg %p400
        %p1048 = pneg %p424
        %p1049 = pneg %p421
        %p1050 = pneg %p445
        %p1051 = pneg %p442
        %p1052 = pneg %p466
        %p1053 = pneg %p463
        %p1054 = pneg %p487
        %p1055 = pneg %p484
        %p1056 = pneg %p508
        %p1057 = pneg %p505
        %p1058 = pneg %p529
        %p1059 = pneg %p526
        %p1060 = pneg %p550
        %p1061 = pneg %p547
        %p1062 = pneg %p571
        %p1063 = pneg %p568
        %p1064 = pneg %p592
        %p1065 = pneg %p589
        %p1066 = pneg %p613
        %p1067 = pneg %p610
        %p1068 = pneg %p634
        %p1069 = pneg %p631
        %p1070 = pneg %p655
        %p1071 = pneg %p652
        %p1072 = pneg %p676
        %p1073 = pneg %p673
        %p1074 = pneg %p697
        %p1075 = pneg %p694
        %p1076 = pneg %p718
        %p1077 = pneg %p715
        %p1078 = pneg %p739
        %p1079 = pneg %p736
        %p1080 = pneg %p760
        %p1081 = pneg %p757
        %p1082 = pneg %p781
        %p1083 = pneg %p778
        %p1084 = pneg %p802
        %p1085 = pneg %p799
        %p1086 = pneg %p828
        %p1087 = pneg %p825
        %p1088 = scmp.lt.s32.totalorder %s88, 1
        %s1089 = scalar_select %p1088, %s88, 1
        %s1090 = smul.addr %s1089, 8
        %s1091 = smul.addr %s1090, 4
        %s1092 = scalar_lea.vmem %s69, %s1091
        %p1093 = pneg %p854
        %p1094 = pneg %p851
        %s1095 = sand.u32 %s841, 1
        %s1096 = scalar_lea.sflag [#allocation3], %s1095
        %s1097 = sand.u32 %s841, 1
        %s1098 = smul.addr %s1097, 4
        %s1099 = scalar_lea.vmem [#allocation2], %s1098
        %p1100 = pneg %p880
        %p1101 = pneg %p877
        %p1102 = scmp.lt.s32.totalorder %s88, 1
        %s1103 = scalar_select %p1102, %s88, 1
        %s1104 = scalar_lea.vmem %s73, %s1103
        %p1105 = scmp.lt.s32.totalorder %s88, 1
        %s1106 = scalar_select %p1105, %s88, 1
        %s1107 = smul.addr %s1106, 8
        %s1108 = smul.addr %s1107, 4
        %s1109 = scalar_lea.vmem %s1, %s1108
        %p1110 = scmp.lt.s32.totalorder %s88, 1
        %s1111 = scalar_select %p1110, %s88, 1
        %s1112 = smul.addr %s1111, 8
        %s1113 = smul.addr %s1112, 4
        %s1114 = scalar_lea.vmem %s69, %s1113
        %p1115 = scmp.lt.s32.totalorder %s88, 1
        %s1116 = scalar_select %p1115, %s88, 1
        %s1117 = scalar_lea.vmem %s73, %s1116
        %v1119 = vld [vmem:[%s1109] sm:$0xff]
        %v1120 = vld [vmem:[%s1109 + $0x8] sm:$0xff]
        %v1121 = vld [vmem:[%s1109 + $0x10] sm:$0xff]
        %v1122 = vld [vmem:[%s1109 + $0x18] sm:$0xff]
        %v1127 = vcombine.high %v1119, %v1119
        %v1128 = vcombine.high %v1120, %v1120
        %v1129 = vcombine.high %v1121, %v1121
        %v1130 = vcombine.high %v1122, %v1122
        %v1135 = vpack.c.bf16 %v1119, %v1119
        %v1136 = vpack.c.bf16 %v1127, %v1127
        %v1137 = vpack.c.bf16 %v1120, %v1120
        %v1138 = vpack.c.bf16 %v1128, %v1128
        %v1139 = vpack.c.bf16 %v1121, %v1121
        %v1140 = vpack.c.bf16 %v1129, %v1129
        %v1141 = vpack.c.bf16 %v1122, %v1122
        %v1142 = vpack.c.bf16 %v1130, %v1130
        %v1144 = vshrl.u32 %v1135, 16
        %v1146 = vshll.u32 %v1135, 16
        %v1148 = vrot.slane %v1146, 1
        %v1149 = vor.u32 %v1144, %v1148
        %v1151 = vshrl.u32 %v1136, 16
        %v1153 = vshll.u32 %v1136, 16
        %v1155 = vrot.slane %v1153, 1
        %v1156 = vor.u32 %v1151, %v1155
        %vm1159 = vcmask 1041408
        %vm1160 = vsmask.f32 1280
        %vm1161 = vmand %vm1159, %vm1160
        %v1162 = vsel %vm1161, %v1149, 0
        %v1163 = vsel %vm1161, %v1156, 0
        %v1165 = vshrl.u32 %v1141, 16
        %v1167 = vrot.slane %v1165, 7
        %v1168 = vshll.u32 %v1141, 16
        %v1170 = vor.u32 %v1167, %v1168
        %v1172 = vshrl.u32 %v1142, 16
        %v1174 = vrot.slane %v1172, 7
        %v1175 = vshll.u32 %v1142, 16
        %v1177 = vor.u32 %v1174, %v1175
        %vm1180 = vcmask 1040384
        %vm1181 = vsmask.f32 256
        %vm1182 = vmand %vm1180, %vm1181
        %v1183 = vsel %vm1182, 0, %v1170
        %v1184 = vsel %vm1182, 0, %v1177
        %v1185 = vld [vmem:[%s3] sm:$0xf]
        %v1186 = vld [vmem:[%s3 + $0x4] sm:$0xf]
        %v1187 = vld [vmem:[%s3 + $0x8] sm:$0xf]
        %v1188 = vld [vmem:[%s3 + $0xc] sm:$0xf]
        %v1189 = vld [vmem:[%s3 + $0x10] sm:$0xf]
        %v1190 = vld [vmem:[%s3 + $0x14] sm:$0xf]
        %v1191 = vld [vmem:[%s3 + $0x18] sm:$0xf]
        %v1192 = vld [vmem:[%s3 + $0x1c] sm:$0xf]
        %v1193 = vld [vmem:[%s3 + $0x20] sm:$0xf]
        %v1194 = vld [vmem:[%s3 + $0x24] sm:$0xf]
        %v1195 = vld [vmem:[%s3 + $0x28] sm:$0xf]
        %v1196 = vld [vmem:[%s3 + $0x2c] sm:$0xf]
        %v1197 = vld [vmem:[%s3 + $0x30] sm:$0xf]
        %v1198 = vld [vmem:[%s3 + $0x34] sm:$0xf]
        %v1199 = vld [vmem:[%s3 + $0x38] sm:$0xf]
        %v1200 = vld [vmem:[%s3 + $0x3c] sm:$0xf]
        %v1201 = vld [vmem:[%s3 + $0x40] sm:$0xf]
        %v1202 = vld [vmem:[%s3 + $0x44] sm:$0xf]
        %v1203 = vld [vmem:[%s3 + $0x48] sm:$0xf]
        %v1204 = vld [vmem:[%s3 + $0x4c] sm:$0xf]
        %v1205 = vld [vmem:[%s3 + $0x50] sm:$0xf]
        %v1206 = vld [vmem:[%s3 + $0x54] sm:$0xf]
        %v1207 = vld [vmem:[%s3 + $0x58] sm:$0xf]
        %v1208 = vld [vmem:[%s3 + $0x5c] sm:$0xf]
        %v1209 = vld [vmem:[%s3 + $0x60] sm:$0xf]
        %v1210 = vld [vmem:[%s3 + $0x64] sm:$0xf]
        %v1211 = vld [vmem:[%s3 + $0x68] sm:$0xf]
        %v1212 = vld [vmem:[%s3 + $0x6c] sm:$0xf]
        %v1213 = vld [vmem:[%s3 + $0x70] sm:$0xf]
        %v1214 = vld [vmem:[%s3 + $0x74] sm:$0xf]
        %v1215 = vld [vmem:[%s3 + $0x78] sm:$0xf]
        %v1216 = vld [vmem:[%s3 + $0x7c] sm:$0xf]
        %v1217 = vld [vmem:[%s3 + $0x80] sm:$0xf]
        %v1218 = vld [vmem:[%s3 + $0x84] sm:$0xf]
        %v1219 = vld [vmem:[%s3 + $0x88] sm:$0xf]
        %v1220 = vld [vmem:[%s3 + $0x8c] sm:$0xf]
        %v1221 = vld [vmem:[%s3 + $0x90] sm:$0xf]
        %v1222 = vld [vmem:[%s3 + $0x94] sm:$0xf]
        %v1223 = vld [vmem:[%s3 + $0x98] sm:$0xf]
        %v1224 = vld [vmem:[%s3 + $0x9c] sm:$0xf]
        %v1225 = vld [vmem:[%s3 + $0xa0] sm:$0xf]
        %v1226 = vld [vmem:[%s3 + $0xa4] sm:$0xf]
        %v1227 = vld [vmem:[%s3 + $0xa8] sm:$0xf]
        %v1228 = vld [vmem:[%s3 + $0xac] sm:$0xf]
        %v1229 = vld [vmem:[%s3 + $0xb0] sm:$0xf]
        %v1230 = vld [vmem:[%s3 + $0xb4] sm:$0xf]
        %v1231 = vld [vmem:[%s3 + $0xb8] sm:$0xf]
        %v1232 = vld [vmem:[%s3 + $0xbc] sm:$0xf]
        %v1233 = vld [vmem:[%s3 + $0xc0] sm:$0xf]
        %v1234 = vld [vmem:[%s3 + $0xc4] sm:$0xf]
        %v1235 = vld [vmem:[%s3 + $0xc8] sm:$0xf]
        %v1236 = vld [vmem:[%s3 + $0xcc] sm:$0xf]
        %v1237 = vld [vmem:[%s3 + $0xd0] sm:$0xf]
        %v1238 = vld [vmem:[%s3 + $0xd4] sm:$0xf]
        %v1239 = vld [vmem:[%s3 + $0xd8] sm:$0xf]
        %v1240 = vld [vmem:[%s3 + $0xdc] sm:$0xf]
        %v1241 = vld [vmem:[%s3 + $0xe0] sm:$0xf]
        %v1242 = vld [vmem:[%s3 + $0xe4] sm:$0xf]
        %v1243 = vld [vmem:[%s3 + $0xe8] sm:$0xf]
        %v1244 = vld [vmem:[%s3 + $0xec] sm:$0xf]
        %v1245 = vld [vmem:[%s3 + $0xf0] sm:$0xf]
        %v1246 = vld [vmem:[%s3 + $0xf4] sm:$0xf]
        %v1247 = vld [vmem:[%s3 + $0xf8] sm:$0xf]
        %v1248 = vld [vmem:[%s3 + $0xfc] sm:$0xf]
        %v1249 = vld [vmem:[%s3 + $0x100] sm:$0xf]
        %v1250 = vld [vmem:[%s3 + $0x104] sm:$0xf]
        %v1251 = vld [vmem:[%s3 + $0x108] sm:$0xf]
        %v1252 = vld [vmem:[%s3 + $0x10c] sm:$0xf]
        %v1253 = vld [vmem:[%s3 + $0x110] sm:$0xf]
        %v1254 = vld [vmem:[%s3 + $0x114] sm:$0xf]
        %v1255 = vld [vmem:[%s3 + $0x118] sm:$0xf]
        %v1256 = vld [vmem:[%s3 + $0x11c] sm:$0xf]
        %v1257 = vld [vmem:[%s3 + $0x120] sm:$0xf]
        %v1258 = vld [vmem:[%s3 + $0x124] sm:$0xf]
        %v1259 = vld [vmem:[%s3 + $0x128] sm:$0xf]
        %v1260 = vld [vmem:[%s3 + $0x12c] sm:$0xf]
        %v1261 = vld [vmem:[%s3 + $0x130] sm:$0xf]
        %v1262 = vld [vmem:[%s3 + $0x134] sm:$0xf]
        %v1263 = vld [vmem:[%s3 + $0x138] sm:$0xf]
        %v1264 = vld [vmem:[%s3 + $0x13c] sm:$0xf]
        %v1265 = vld [vmem:[%s3 + $0x140] sm:$0xf]
        %v1266 = vld [vmem:[%s3 + $0x144] sm:$0xf]
        %v1267 = vld [vmem:[%s3 + $0x148] sm:$0xf]
        %v1268 = vld [vmem:[%s3 + $0x14c] sm:$0xf]
        %v1269 = vld [vmem:[%s3 + $0x150] sm:$0xf]
        %v1270 = vld [vmem:[%s3 + $0x154] sm:$0xf]
        %v1271 = vld [vmem:[%s3 + $0x158] sm:$0xf]
        %v1272 = vld [vmem:[%s3 + $0x15c] sm:$0xf]
        %v1273 = vld [vmem:[%s3 + $0x160] sm:$0xf]
        %v1274 = vld [vmem:[%s3 + $0x164] sm:$0xf]
        %v1275 = vld [vmem:[%s3 + $0x168] sm:$0xf]
        %v1276 = vld [vmem:[%s3 + $0x16c] sm:$0xf]
        %v1277 = vld [vmem:[%s3 + $0x170] sm:$0xf]
        %v1278 = vld [vmem:[%s3 + $0x174] sm:$0xf]
        %v1279 = vld [vmem:[%s3 + $0x178] sm:$0xf]
        %v1280 = vld [vmem:[%s3 + $0x17c] sm:$0xf]
        %v1281 = vld [vmem:[%s3 + $0x180] sm:$0xf]
        %v1282 = vld [vmem:[%s3 + $0x184] sm:$0xf]
        %v1283 = vld [vmem:[%s3 + $0x188] sm:$0xf]
        %v1284 = vld [vmem:[%s3 + $0x18c] sm:$0xf]
        %v1285 = vld [vmem:[%s3 + $0x190] sm:$0xf]
        %v1286 = vld [vmem:[%s3 + $0x194] sm:$0xf]
        %v1287 = vld [vmem:[%s3 + $0x198] sm:$0xf]
        %v1288 = vld [vmem:[%s3 + $0x19c] sm:$0xf]
        %v1289 = vld [vmem:[%s3 + $0x1a0] sm:$0xf]
        %v1290 = vld [vmem:[%s3 + $0x1a4] sm:$0xf]
        %v1291 = vld [vmem:[%s3 + $0x1a8] sm:$0xf]
        %v1292 = vld [vmem:[%s3 + $0x1ac] sm:$0xf]
        %v1293 = vld [vmem:[%s3 + $0x1b0] sm:$0xf]
        %v1294 = vld [vmem:[%s3 + $0x1b4] sm:$0xf]
        %v1295 = vld [vmem:[%s3 + $0x1b8] sm:$0xf]
        %v1296 = vld [vmem:[%s3 + $0x1bc] sm:$0xf]
        %v1297 = vld [vmem:[%s3 + $0x1c0] sm:$0xf]
        %v1298 = vld [vmem:[%s3 + $0x1c4] sm:$0xf]
        %v1299 = vld [vmem:[%s3 + $0x1c8] sm:$0xf]
        %v1300 = vld [vmem:[%s3 + $0x1cc] sm:$0xf]
        %v1301 = vld [vmem:[%s3 + $0x1d0] sm:$0xf]
        %v1302 = vld [vmem:[%s3 + $0x1d4] sm:$0xf]
        %v1303 = vld [vmem:[%s3 + $0x1d8] sm:$0xf]
        %v1304 = vld [vmem:[%s3 + $0x1dc] sm:$0xf]
        %v1305 = vld [vmem:[%s3 + $0x1e0] sm:$0xf]
        %v1306 = vld [vmem:[%s3 + $0x1e4] sm:$0xf]
        %v1307 = vld [vmem:[%s3 + $0x1e8] sm:$0xf]
        %v1308 = vld [vmem:[%s3 + $0x1ec] sm:$0xf]
        %v1309 = vld [vmem:[%s3 + $0x1f0] sm:$0xf]
        %v1310 = vld [vmem:[%s3 + $0x1f4] sm:$0xf]
        %v1311 = vld [vmem:[%s3 + $0x1f8] sm:$0xf]
        %v1312 = vld [vmem:[%s3 + $0x1fc] sm:$0xf]
        %v1313 = vld [vmem:[%s3 + $0x200] sm:$0xf]
        %v1314 = vld [vmem:[%s3 + $0x204] sm:$0xf]
        %v1315 = vld [vmem:[%s3 + $0x208] sm:$0xf]
        %v1316 = vld [vmem:[%s3 + $0x20c] sm:$0xf]
        %v1317 = vld [vmem:[%s3 + $0x210] sm:$0xf]
        %v1318 = vld [vmem:[%s3 + $0x214] sm:$0xf]
        %v1319 = vld [vmem:[%s3 + $0x218] sm:$0xf]
        %v1320 = vld [vmem:[%s3 + $0x21c] sm:$0xf]
        %v1321 = vld [vmem:[%s3 + $0x220] sm:$0xf]
        %v1322 = vld [vmem:[%s3 + $0x224] sm:$0xf]
        %v1323 = vld [vmem:[%s3 + $0x228] sm:$0xf]
        %v1324 = vld [vmem:[%s3 + $0x22c] sm:$0xf]
        %v1325 = vld [vmem:[%s3 + $0x230] sm:$0xf]
        %v1326 = vld [vmem:[%s3 + $0x234] sm:$0xf]
        %v1327 = vld [vmem:[%s3 + $0x238] sm:$0xf]
        %v1328 = vld [vmem:[%s3 + $0x23c] sm:$0xf]
        %v1329 = vld [vmem:[%s3 + $0x240] sm:$0xf]
        %v1330 = vld [vmem:[%s3 + $0x244] sm:$0xf]
        %v1331 = vld [vmem:[%s3 + $0x248] sm:$0xf]
        %v1332 = vld [vmem:[%s3 + $0x24c] sm:$0xf]
        %v1333 = vld [vmem:[%s3 + $0x250] sm:$0xf]
        %v1334 = vld [vmem:[%s3 + $0x254] sm:$0xf]
        %v1335 = vld [vmem:[%s3 + $0x258] sm:$0xf]
        %v1336 = vld [vmem:[%s3 + $0x25c] sm:$0xf]
        %v1337 = vld [vmem:[%s3 + $0x260] sm:$0xf]
        %v1338 = vld [vmem:[%s3 + $0x264] sm:$0xf]
        %v1339 = vld [vmem:[%s3 + $0x268] sm:$0xf]
        %v1340 = vld [vmem:[%s3 + $0x26c] sm:$0xf]
        %v1341 = vld [vmem:[%s3 + $0x270] sm:$0xf]
        %v1342 = vld [vmem:[%s3 + $0x274] sm:$0xf]
        %v1343 = vld [vmem:[%s3 + $0x278] sm:$0xf]
        %v1344 = vld [vmem:[%s3 + $0x27c] sm:$0xf]
        %v1345 = vld [vmem:[%s3 + $0x280] sm:$0xf]
        %v1346 = vld [vmem:[%s3 + $0x284] sm:$0xf]
        %v1347 = vld [vmem:[%s3 + $0x288] sm:$0xf]
        %v1348 = vld [vmem:[%s3 + $0x28c] sm:$0xf]
        %v1349 = vld [vmem:[%s3 + $0x290] sm:$0xf]
        %v1350 = vld [vmem:[%s3 + $0x294] sm:$0xf]
        %v1351 = vld [vmem:[%s3 + $0x298] sm:$0xf]
        %v1352 = vld [vmem:[%s3 + $0x29c] sm:$0xf]
        %v1353 = vld [vmem:[%s3 + $0x2a0] sm:$0xf]
        %v1354 = vld [vmem:[%s3 + $0x2a4] sm:$0xf]
        %v1355 = vld [vmem:[%s3 + $0x2a8] sm:$0xf]
        %v1356 = vld [vmem:[%s3 + $0x2ac] sm:$0xf]
        %v1357 = vld [vmem:[%s3 + $0x2b0] sm:$0xf]
        %v1358 = vld [vmem:[%s3 + $0x2b4] sm:$0xf]
        %v1359 = vld [vmem:[%s3 + $0x2b8] sm:$0xf]
        %v1360 = vld [vmem:[%s3 + $0x2bc] sm:$0xf]
        %v1361 = vld [vmem:[%s3 + $0x2c0] sm:$0xf]
        %v1362 = vld [vmem:[%s3 + $0x2c4] sm:$0xf]
        %v1363 = vld [vmem:[%s3 + $0x2c8] sm:$0xf]
        %v1364 = vld [vmem:[%s3 + $0x2cc] sm:$0xf]
        %v1365 = vld [vmem:[%s3 + $0x2d0] sm:$0xf]
        %v1366 = vld [vmem:[%s3 + $0x2d4] sm:$0xf]
        %v1367 = vld [vmem:[%s3 + $0x2d8] sm:$0xf]
        %v1368 = vld [vmem:[%s3 + $0x2dc] sm:$0xf]
        %v1369 = vld [vmem:[%s3 + $0x2e0] sm:$0xf]
        %v1370 = vld [vmem:[%s3 + $0x2e4] sm:$0xf]
        %v1371 = vld [vmem:[%s3 + $0x2e8] sm:$0xf]
        %v1372 = vld [vmem:[%s3 + $0x2ec] sm:$0xf]
        %v1373 = vld [vmem:[%s3 + $0x2f0] sm:$0xf]
        %v1374 = vld [vmem:[%s3 + $0x2f4] sm:$0xf]
        %v1375 = vld [vmem:[%s3 + $0x2f8] sm:$0xf]
        %v1376 = vld [vmem:[%s3 + $0x2fc] sm:$0xf]
        %v1377 = vld [vmem:[%s5] sm:$0x1]
        %v1379 = vlaneseq
        %v1380 = vshrl.u32 %v1379, 7
        %v1381 = vsub.s32 0, %v1380
        %v1382 = vrot.slane %v1377, %v1381
        %v1576 = vunpack.c.l.b16 %v1185
        %v1577 = vunpack.c.l.b16 %v1186
        %v1578 = vunpack.c.l.b16 %v1187
        %v1579 = vunpack.c.l.b16 %v1188
        %v1580 = vunpack.c.l.b16 %v1189
        %v1581 = vunpack.c.l.b16 %v1190
        %v1582 = vunpack.c.l.b16 %v1191
        %v1583 = vunpack.c.l.b16 %v1192
        %v1584 = vunpack.c.l.b16 %v1193
        %v1585 = vunpack.c.l.b16 %v1194
        %v1586 = vunpack.c.l.b16 %v1195
        %v1587 = vunpack.c.l.b16 %v1196
        %v1588 = vunpack.c.l.b16 %v1197
        %v1589 = vunpack.c.l.b16 %v1198
        %v1590 = vunpack.c.l.b16 %v1199
        %v1591 = vunpack.c.l.b16 %v1200
        %v1592 = vunpack.c.l.b16 %v1201
        %v1593 = vunpack.c.l.b16 %v1202
        %v1594 = vunpack.c.l.b16 %v1203
        %v1595 = vunpack.c.l.b16 %v1204
        %v1596 = vunpack.c.l.b16 %v1205
        %v1597 = vunpack.c.l.b16 %v1206
        %v1598 = vunpack.c.l.b16 %v1207
        %v1599 = vunpack.c.l.b16 %v1208
        %v1600 = vunpack.c.l.b16 %v1209
        %v1601 = vunpack.c.l.b16 %v1210
        %v1602 = vunpack.c.l.b16 %v1211
        %v1603 = vunpack.c.l.b16 %v1212
        %v1604 = vunpack.c.l.b16 %v1213
        %v1605 = vunpack.c.l.b16 %v1214
        %v1606 = vunpack.c.l.b16 %v1215
        %v1607 = vunpack.c.l.b16 %v1216
        %v1608 = vunpack.c.l.b16 %v1217
        %v1609 = vunpack.c.l.b16 %v1218
        %v1610 = vunpack.c.l.b16 %v1219
        %v1611 = vunpack.c.l.b16 %v1220
        %v1612 = vunpack.c.l.b16 %v1221
        %v1613 = vunpack.c.l.b16 %v1222
        %v1614 = vunpack.c.l.b16 %v1223
        %v1615 = vunpack.c.l.b16 %v1224
        %v1616 = vunpack.c.l.b16 %v1225
        %v1617 = vunpack.c.l.b16 %v1226
        %v1618 = vunpack.c.l.b16 %v1227
        %v1619 = vunpack.c.l.b16 %v1228
        %v1620 = vunpack.c.l.b16 %v1229
        %v1621 = vunpack.c.l.b16 %v1230
        %v1622 = vunpack.c.l.b16 %v1231
        %v1623 = vunpack.c.l.b16 %v1232
        %v1624 = vunpack.c.l.b16 %v1233
        %v1625 = vunpack.c.l.b16 %v1234
        %v1626 = vunpack.c.l.b16 %v1235
        %v1627 = vunpack.c.l.b16 %v1236
        %v1628 = vunpack.c.l.b16 %v1237
        %v1629 = vunpack.c.l.b16 %v1238
        %v1630 = vunpack.c.l.b16 %v1239
        %v1631 = vunpack.c.l.b16 %v1240
        %v1632 = vunpack.c.l.b16 %v1241
        %v1633 = vunpack.c.l.b16 %v1242
        %v1634 = vunpack.c.l.b16 %v1243
        %v1635 = vunpack.c.l.b16 %v1244
        %v1636 = vunpack.c.l.b16 %v1245
        %v1637 = vunpack.c.l.b16 %v1246
        %v1638 = vunpack.c.l.b16 %v1247
        %v1639 = vunpack.c.l.b16 %v1248
        %v1640 = vunpack.c.l.b16 %v1249
        %v1641 = vunpack.c.l.b16 %v1250
        %v1642 = vunpack.c.l.b16 %v1251
        %v1643 = vunpack.c.l.b16 %v1252
        %v1644 = vunpack.c.l.b16 %v1253
        %v1645 = vunpack.c.l.b16 %v1254
        %v1646 = vunpack.c.l.b16 %v1255
        %v1647 = vunpack.c.l.b16 %v1256
        %v1648 = vunpack.c.l.b16 %v1257
        %v1649 = vunpack.c.l.b16 %v1258
        %v1650 = vunpack.c.l.b16 %v1259
        %v1651 = vunpack.c.l.b16 %v1260
        %v1652 = vunpack.c.l.b16 %v1261
        %v1653 = vunpack.c.l.b16 %v1262
        %v1654 = vunpack.c.l.b16 %v1263
        %v1655 = vunpack.c.l.b16 %v1264
        %v1656 = vunpack.c.l.b16 %v1265
        %v1657 = vunpack.c.l.b16 %v1266
        %v1658 = vunpack.c.l.b16 %v1267
        %v1659 = vunpack.c.l.b16 %v1268
        %v1660 = vunpack.c.l.b16 %v1269
        %v1661 = vunpack.c.l.b16 %v1270
        %v1662 = vunpack.c.l.b16 %v1271
        %v1663 = vunpack.c.l.b16 %v1272
        %v1664 = vunpack.c.l.b16 %v1273
        %v1665 = vunpack.c.l.b16 %v1274
        %v1666 = vunpack.c.l.b16 %v1275
        %v1667 = vunpack.c.l.b16 %v1276
        %v1668 = vunpack.c.l.b16 %v1277
        %v1669 = vunpack.c.l.b16 %v1278
        %v1670 = vunpack.c.l.b16 %v1279
        %v1671 = vunpack.c.l.b16 %v1280
        %v1672 = vunpack.c.l.b16 %v1281
        %v1673 = vunpack.c.l.b16 %v1282
        %v1674 = vunpack.c.l.b16 %v1283
        %v1675 = vunpack.c.l.b16 %v1284
        %v1676 = vunpack.c.l.b16 %v1285
        %v1677 = vunpack.c.l.b16 %v1286
        %v1678 = vunpack.c.l.b16 %v1287
        %v1679 = vunpack.c.l.b16 %v1288
        %v1680 = vunpack.c.l.b16 %v1289
        %v1681 = vunpack.c.l.b16 %v1290
        %v1682 = vunpack.c.l.b16 %v1291
        %v1683 = vunpack.c.l.b16 %v1292
        %v1684 = vunpack.c.l.b16 %v1293
        %v1685 = vunpack.c.l.b16 %v1294
        %v1686 = vunpack.c.l.b16 %v1295
        %v1687 = vunpack.c.l.b16 %v1296
        %v1688 = vunpack.c.l.b16 %v1297
        %v1689 = vunpack.c.l.b16 %v1298
        %v1690 = vunpack.c.l.b16 %v1299
        %v1691 = vunpack.c.l.b16 %v1300
        %v1692 = vunpack.c.l.b16 %v1301
        %v1693 = vunpack.c.l.b16 %v1302
        %v1694 = vunpack.c.l.b16 %v1303
        %v1695 = vunpack.c.l.b16 %v1304
        %v1696 = vunpack.c.l.b16 %v1305
        %v1697 = vunpack.c.l.b16 %v1306
        %v1698 = vunpack.c.l.b16 %v1307
        %v1699 = vunpack.c.l.b16 %v1308
        %v1700 = vunpack.c.l.b16 %v1309
        %v1701 = vunpack.c.l.b16 %v1310
        %v1702 = vunpack.c.l.b16 %v1311
        %v1703 = vunpack.c.l.b16 %v1312
        %v1704 = vunpack.c.l.b16 %v1313
        %v1705 = vunpack.c.l.b16 %v1314
        %v1706 = vunpack.c.l.b16 %v1315
        %v1707 = vunpack.c.l.b16 %v1316
        %v1708 = vunpack.c.l.b16 %v1317
        %v1709 = vunpack.c.l.b16 %v1318
        %v1710 = vunpack.c.l.b16 %v1319
        %v1711 = vunpack.c.l.b16 %v1320
        %v1712 = vunpack.c.l.b16 %v1321
        %v1713 = vunpack.c.l.b16 %v1322
        %v1714 = vunpack.c.l.b16 %v1323
        %v1715 = vunpack.c.l.b16 %v1324
        %v1716 = vunpack.c.l.b16 %v1325
        %v1717 = vunpack.c.l.b16 %v1326
        %v1718 = vunpack.c.l.b16 %v1327
        %v1719 = vunpack.c.l.b16 %v1328
        %v1720 = vunpack.c.l.b16 %v1329
        %v1721 = vunpack.c.l.b16 %v1330
        %v1722 = vunpack.c.l.b16 %v1331
        %v1723 = vunpack.c.l.b16 %v1332
        %v1724 = vunpack.c.l.b16 %v1333
        %v1725 = vunpack.c.l.b16 %v1334
        %v1726 = vunpack.c.l.b16 %v1335
        %v1727 = vunpack.c.l.b16 %v1336
        %v1728 = vunpack.c.l.b16 %v1337
        %v1729 = vunpack.c.l.b16 %v1338
        %v1730 = vunpack.c.l.b16 %v1339
        %v1731 = vunpack.c.l.b16 %v1340
        %v1732 = vunpack.c.l.b16 %v1341
        %v1733 = vunpack.c.l.b16 %v1342
        %v1734 = vunpack.c.l.b16 %v1343
        %v1735 = vunpack.c.l.b16 %v1344
        %v1736 = vunpack.c.l.b16 %v1345
        %v1737 = vunpack.c.l.b16 %v1346
        %v1738 = vunpack.c.l.b16 %v1347
        %v1739 = vunpack.c.l.b16 %v1348
        %v1740 = vunpack.c.l.b16 %v1349
        %v1741 = vunpack.c.l.b16 %v1350
        %v1742 = vunpack.c.l.b16 %v1351
        %v1743 = vunpack.c.l.b16 %v1352
        %v1744 = vunpack.c.l.b16 %v1353
        %v1745 = vunpack.c.l.b16 %v1354
        %v1746 = vunpack.c.l.b16 %v1355
        %v1747 = vunpack.c.l.b16 %v1356
        %v1748 = vunpack.c.l.b16 %v1357
        %v1749 = vunpack.c.l.b16 %v1358
        %v1750 = vunpack.c.l.b16 %v1359
        %v1751 = vunpack.c.l.b16 %v1360
        %v1752 = vunpack.c.l.b16 %v1361
        %v1753 = vunpack.c.l.b16 %v1362
        %v1754 = vunpack.c.l.b16 %v1363
        %v1755 = vunpack.c.l.b16 %v1364
        %v1756 = vunpack.c.l.b16 %v1365
        %v1757 = vunpack.c.l.b16 %v1366
        %v1758 = vunpack.c.l.b16 %v1367
        %v1759 = vunpack.c.l.b16 %v1368
        %v1760 = vunpack.c.l.b16 %v1369
        %v1761 = vunpack.c.l.b16 %v1370
        %v1762 = vunpack.c.l.b16 %v1371
        %v1763 = vunpack.c.l.b16 %v1372
        %v1764 = vunpack.c.l.b16 %v1373
        %v1765 = vunpack.c.l.b16 %v1374
        %v1766 = vunpack.c.l.b16 %v1375
        %v1767 = vunpack.c.l.b16 %v1376
        %v1768 = vpack.c.b16 %v1577, %v1576
        %v1769 = vpack.c.b16 %v1579, %v1578
        %v1770 = vpack.c.b16 %v1581, %v1580
        %v1771 = vpack.c.b16 %v1583, %v1582
        %v1772 = vpack.c.b16 %v1585, %v1584
        %v1773 = vpack.c.b16 %v1587, %v1586
        %v1774 = vpack.c.b16 %v1589, %v1588
        %v1775 = vpack.c.b16 %v1591, %v1590
        %v1776 = vpack.c.b16 %v1593, %v1592
        %v1777 = vpack.c.b16 %v1595, %v1594
        %v1778 = vpack.c.b16 %v1597, %v1596
        %v1779 = vpack.c.b16 %v1599, %v1598
        %v1780 = vpack.c.b16 %v1601, %v1600
        %v1781 = vpack.c.b16 %v1603, %v1602
        %v1782 = vpack.c.b16 %v1605, %v1604
        %v1783 = vpack.c.b16 %v1607, %v1606
        %v1784 = vpack.c.b16 %v1609, %v1608
        %v1785 = vpack.c.b16 %v1611, %v1610
        %v1786 = vpack.c.b16 %v1613, %v1612
        %v1787 = vpack.c.b16 %v1615, %v1614
        %v1788 = vpack.c.b16 %v1617, %v1616
        %v1789 = vpack.c.b16 %v1619, %v1618
        %v1790 = vpack.c.b16 %v1621, %v1620
        %v1791 = vpack.c.b16 %v1623, %v1622
        %v1792 = vpack.c.b16 %v1625, %v1624
        %v1793 = vpack.c.b16 %v1627, %v1626
        %v1794 = vpack.c.b16 %v1629, %v1628
        %v1795 = vpack.c.b16 %v1631, %v1630
        %v1796 = vpack.c.b16 %v1633, %v1632
        %v1797 = vpack.c.b16 %v1635, %v1634
        %v1798 = vpack.c.b16 %v1637, %v1636
        %v1799 = vpack.c.b16 %v1639, %v1638
        %v1800 = vpack.c.b16 %v1641, %v1640
        %v1801 = vpack.c.b16 %v1643, %v1642
        %v1802 = vpack.c.b16 %v1645, %v1644
        %v1803 = vpack.c.b16 %v1647, %v1646
        %v1804 = vpack.c.b16 %v1649, %v1648
        %v1805 = vpack.c.b16 %v1651, %v1650
        %v1806 = vpack.c.b16 %v1653, %v1652
        %v1807 = vpack.c.b16 %v1655, %v1654
        %v1808 = vpack.c.b16 %v1657, %v1656
        %v1809 = vpack.c.b16 %v1659, %v1658
        %v1810 = vpack.c.b16 %v1661, %v1660
        %v1811 = vpack.c.b16 %v1663, %v1662
        %v1812 = vpack.c.b16 %v1665, %v1664
        %v1813 = vpack.c.b16 %v1667, %v1666
        %v1814 = vpack.c.b16 %v1669, %v1668
        %v1815 = vpack.c.b16 %v1671, %v1670
        %v1816 = vpack.c.b16 %v1673, %v1672
        %v1817 = vpack.c.b16 %v1675, %v1674
        %v1818 = vpack.c.b16 %v1677, %v1676
        %v1819 = vpack.c.b16 %v1679, %v1678
        %v1820 = vpack.c.b16 %v1681, %v1680
        %v1821 = vpack.c.b16 %v1683, %v1682
        %v1822 = vpack.c.b16 %v1685, %v1684
        %v1823 = vpack.c.b16 %v1687, %v1686
        %v1824 = vpack.c.b16 %v1689, %v1688
        %v1825 = vpack.c.b16 %v1691, %v1690
        %v1826 = vpack.c.b16 %v1693, %v1692
        %v1827 = vpack.c.b16 %v1695, %v1694
        %v1828 = vpack.c.b16 %v1697, %v1696
        %v1829 = vpack.c.b16 %v1699, %v1698
        %v1830 = vpack.c.b16 %v1701, %v1700
        %v1831 = vpack.c.b16 %v1703, %v1702
        %v1832 = vpack.c.b16 %v1705, %v1704
        %v1833 = vpack.c.b16 %v1707, %v1706
        %v1834 = vpack.c.b16 %v1709, %v1708
        %v1835 = vpack.c.b16 %v1711, %v1710
        %v1836 = vpack.c.b16 %v1713, %v1712
        %v1837 = vpack.c.b16 %v1715, %v1714
        %v1838 = vpack.c.b16 %v1717, %v1716
        %v1839 = vpack.c.b16 %v1719, %v1718
        %v1840 = vpack.c.b16 %v1721, %v1720
        %v1841 = vpack.c.b16 %v1723, %v1722
        %v1842 = vpack.c.b16 %v1725, %v1724
        %v1843 = vpack.c.b16 %v1727, %v1726
        %v1844 = vpack.c.b16 %v1729, %v1728
        %v1845 = vpack.c.b16 %v1731, %v1730
        %v1846 = vpack.c.b16 %v1733, %v1732
        %v1847 = vpack.c.b16 %v1735, %v1734
        %v1848 = vpack.c.b16 %v1737, %v1736
        %v1849 = vpack.c.b16 %v1739, %v1738
        %v1850 = vpack.c.b16 %v1741, %v1740
        %v1851 = vpack.c.b16 %v1743, %v1742
        %v1852 = vpack.c.b16 %v1745, %v1744
        %v1853 = vpack.c.b16 %v1747, %v1746
        %v1854 = vpack.c.b16 %v1749, %v1748
        %v1855 = vpack.c.b16 %v1751, %v1750
        %v1856 = vpack.c.b16 %v1753, %v1752
        %v1857 = vpack.c.b16 %v1755, %v1754
        %v1858 = vpack.c.b16 %v1757, %v1756
        %v1859 = vpack.c.b16 %v1759, %v1758
        %v1860 = vpack.c.b16 %v1761, %v1760
        %v1861 = vpack.c.b16 %v1763, %v1762
        %v1862 = vpack.c.b16 %v1765, %v1764
        %v1863 = vpack.c.b16 %v1767, %v1766
        %1960 = vmatprep.subr.bf16.mxu0 0
        %1961 = vmatpush1.bf16.msra.mxu0 %v1768
        %1962 = vmatprep.subr.bf16.mxu0 0
        %1963 = vmatpush1.bf16.msra.mxu0 %v1769
        %1964 = vmatprep.subr.bf16.mxu0 0
        %1965 = vmatpush1.bf16.msra.mxu0 %v1770
        %1966 = vmatprep.subr.bf16.mxu0 0
        %1967 = vmatpush1.bf16.msra.mxu0 %v1771
        %1968 = vmatprep.subr.bf16.mxu0 0
        %1969 = vmatpush1.bf16.msra.mxu0 %v1772
        %1970 = vmatprep.subr.bf16.mxu0 0
        %1971 = vmatpush1.bf16.msra.mxu0 %v1773
        %1972 = vmatprep.subr.bf16.mxu0 0
        %1973 = vmatpush1.bf16.msra.mxu0 %v1774
        %1974 = vmatprep.subr.bf16.mxu0 0
        %1975 = vmatpush1.bf16.msra.mxu0 %v1775
        %1976 = vmatprep.subr.bf16.mxu0 0
        %1977 = vmatpush1.bf16.msra.mxu0 %v1776
        %1978 = vmatprep.subr.bf16.mxu0 0
        %1979 = vmatpush1.bf16.msra.mxu0 %v1777
        %1980 = vmatprep.subr.bf16.mxu0 0
        %1981 = vmatpush1.bf16.msra.mxu0 %v1778
        %1982 = vmatprep.subr.bf16.mxu0 0
        %1983 = vmatpush1.bf16.msra.mxu0 %v1779
        %1984 = vmatprep.subr.bf16.mxu0 0
        %1985 = vmatpush1.bf16.msra.mxu0 %v1780
        %1986 = vmatprep.subr.bf16.mxu0 0
        %1987 = vmatpush1.bf16.msra.mxu0 %v1781
        %1988 = vmatprep.subr.bf16.mxu0 0
        %1989 = vmatpush1.bf16.msra.mxu0 %v1782
        %1990 = vmatprep.subr.bf16.mxu0 0
        %1991 = vmatpush1.bf16.msra.mxu0 %v1783
        %1992 = vmatprep.mubr.bf16.mxu0 %v1163
        %1993 = vmatmul.mubr.bf16.gmra.mrb[0].mxu0 %v1162
        %v1994 = vpop.f32.mrb[0].mxu0
        %v1995 = vadd.f32 %v1382, %v1994
        %v1996 = vpop.f32.mrb[0].mxu0
        %v1997 = vpop.f32.mrb[0].mxu0
        %v1998 = vpop.f32.mrb[0].mxu0
        %1999 = vdwg.mxu0
        %2000 = vmatprep.subr.bf16.mxu0 0
        %2001 = vmatpush1.bf16.msra.mxu0 %v1784
        %2002 = vmatprep.subr.bf16.mxu0 0
        %2003 = vmatpush1.bf16.msra.mxu0 %v1785
        %2004 = vmatprep.subr.bf16.mxu0 0
        %2005 = vmatpush1.bf16.msra.mxu0 %v1786
        %2006 = vmatprep.subr.bf16.mxu0 0
        %2007 = vmatpush1.bf16.msra.mxu0 %v1787
        %2008 = vmatprep.subr.bf16.mxu0 0
        %2009 = vmatpush1.bf16.msra.mxu0 %v1788
        %2010 = vmatprep.subr.bf16.mxu0 0
        %2011 = vmatpush1.bf16.msra.mxu0 %v1789
        %2012 = vmatprep.subr.bf16.mxu0 0
        %2013 = vmatpush1.bf16.msra.mxu0 %v1790
        %2014 = vmatprep.subr.bf16.mxu0 0
        %2015 = vmatpush1.bf16.msra.mxu0 %v1791
        %2016 = vmatprep.subr.bf16.mxu0 0
        %2017 = vmatpush1.bf16.msra.mxu0 %v1792
        %2018 = vmatprep.subr.bf16.mxu0 0
        %2019 = vmatpush1.bf16.msra.mxu0 %v1793
        %2020 = vmatprep.subr.bf16.mxu0 0
        %2021 = vmatpush1.bf16.msra.mxu0 %v1794
        %2022 = vmatprep.subr.bf16.mxu0 0
        %2023 = vmatpush1.bf16.msra.mxu0 %v1795
        %2024 = vmatprep.subr.bf16.mxu0 0
        %2025 = vmatpush1.bf16.msra.mxu0 %v1796
        %2026 = vmatprep.subr.bf16.mxu0 0
        %2027 = vmatpush1.bf16.msra.mxu0 %v1797
        %2028 = vmatprep.subr.bf16.mxu0 0
        %2029 = vmatpush1.bf16.msra.mxu0 %v1798
        %2030 = vmatprep.subr.bf16.mxu0 0
        %2031 = vmatpush1.bf16.msra.mxu0 %v1799
        %2032 = vmatprep.mubr.bf16.mxu0 %v1136
        %2033 = vmatmul.mubr.bf16.gmra.mrb[0].mxu0 %v1135
        %v2034 = vpop.f32.mrb[0].mxu0
        %v2035 = vadd.f32 %v1995, %v2034
        %v2036 = vpop.f32.mrb[0].mxu0
        %v2037 = vpop.f32.mrb[0].mxu0
        %v2038 = vpop.f32.mrb[0].mxu0
        %2039 = vdwg.mxu0
        %2040 = vmatprep.subr.bf16.mxu0 0
        %2041 = vmatpush1.bf16.msra.mxu0 %v1800
        %2042 = vmatprep.subr.bf16.mxu0 0
        %2043 = vmatpush1.bf16.msra.mxu0 %v1801
        %2044 = vmatprep.subr.bf16.mxu0 0
        %2045 = vmatpush1.bf16.msra.mxu0 %v1802
        %2046 = vmatprep.subr.bf16.mxu0 0
        %2047 = vmatpush1.bf16.msra.mxu0 %v1803
        %2048 = vmatprep.subr.bf16.mxu0 0
        %2049 = vmatpush1.bf16.msra.mxu0 %v1804
        %2050 = vmatprep.subr.bf16.mxu0 0
        %2051 = vmatpush1.bf16.msra.mxu0 %v1805
        %2052 = vmatprep.subr.bf16.mxu0 0
        %2053 = vmatpush1.bf16.msra.mxu0 %v1806
        %2054 = vmatprep.subr.bf16.mxu0 0
        %2055 = vmatpush1.bf16.msra.mxu0 %v1807
        %2056 = vmatprep.subr.bf16.mxu0 0
        %2057 = vmatpush1.bf16.msra.mxu0 %v1808
        %2058 = vmatprep.subr.bf16.mxu0 0
        %2059 = vmatpush1.bf16.msra.mxu0 %v1809
        %2060 = vmatprep.subr.bf16.mxu0 0
        %2061 = vmatpush1.bf16.msra.mxu0 %v1810
        %2062 = vmatprep.subr.bf16.mxu0 0
        %2063 = vmatpush1.bf16.msra.mxu0 %v1811
        %2064 = vmatprep.subr.bf16.mxu0 0
        %2065 = vmatpush1.bf16.msra.mxu0 %v1812
        %2066 = vmatprep.subr.bf16.mxu0 0
        %2067 = vmatpush1.bf16.msra.mxu0 %v1813
        %2068 = vmatprep.subr.bf16.mxu0 0
        %2069 = vmatpush1.bf16.msra.mxu0 %v1814
        %2070 = vmatprep.subr.bf16.mxu0 0
        %2071 = vmatpush1.bf16.msra.mxu0 %v1815
        %2072 = vmatprep.mubr.bf16.mxu0 %v1138
        %2073 = vmatmul.mubr.bf16.gmra.mrb[0].mxu0 %v1137
        %v2074 = vpop.f32.mrb[0].mxu0
        %v2075 = vadd.f32 %v2035, %v2074
        %v2076 = vpop.f32.mrb[0].mxu0
        %v2077 = vpop.f32.mrb[0].mxu0
        %v2078 = vpop.f32.mrb[0].mxu0
        %2079 = vdwg.mxu0
        %2080 = vmatprep.subr.bf16.mxu0 0
        %2081 = vmatpush1.bf16.msra.mxu0 %v1816
        %2082 = vmatprep.subr.bf16.mxu0 0
        %2083 = vmatpush1.bf16.msra.mxu0 %v1817
        %2084 = vmatprep.subr.bf16.mxu0 0
        %2085 = vmatpush1.bf16.msra.mxu0 %v1818
        %2086 = vmatprep.subr.bf16.mxu0 0
        %2087 = vmatpush1.bf16.msra.mxu0 %v1819
        %2088 = vmatprep.subr.bf16.mxu0 0
        %2089 = vmatpush1.bf16.msra.mxu0 %v1820
        %2090 = vmatprep.subr.bf16.mxu0 0
        %2091 = vmatpush1.bf16.msra.mxu0 %v1821
        %2092 = vmatprep.subr.bf16.mxu0 0
        %2093 = vmatpush1.bf16.msra.mxu0 %v1822
        %2094 = vmatprep.subr.bf16.mxu0 0
        %2095 = vmatpush1.bf16.msra.mxu0 %v1823
        %2096 = vmatprep.subr.bf16.mxu0 0
        %2097 = vmatpush1.bf16.msra.mxu0 %v1824
        %2098 = vmatprep.subr.bf16.mxu0 0
        %2099 = vmatpush1.bf16.msra.mxu0 %v1825
        %2100 = vmatprep.subr.bf16.mxu0 0
        %2101 = vmatpush1.bf16.msra.mxu0 %v1826
        %2102 = vmatprep.subr.bf16.mxu0 0
        %2103 = vmatpush1.bf16.msra.mxu0 %v1827
        %2104 = vmatprep.subr.bf16.mxu0 0
        %2105 = vmatpush1.bf16.msra.mxu0 %v1828
        %2106 = vmatprep.subr.bf16.mxu0 0
        %2107 = vmatpush1.bf16.msra.mxu0 %v1829
        %2108 = vmatprep.subr.bf16.mxu0 0
        %2109 = vmatpush1.bf16.msra.mxu0 %v1830
        %2110 = vmatprep.subr.bf16.mxu0 0
        %2111 = vmatpush1.bf16.msra.mxu0 %v1831
        %2112 = vmatprep.mubr.bf16.mxu0 %v1140
        %2113 = vmatmul.mubr.bf16.gmra.mrb[0].mxu0 %v1139
        %v2114 = vpop.f32.mrb[0].mxu0
        %v2115 = vadd.f32 %v2075, %v2114
        %v2116 = vpop.f32.mrb[0].mxu0
        %v2117 = vpop.f32.mrb[0].mxu0
        %v2118 = vpop.f32.mrb[0].mxu0
        %2119 = vdwg.mxu0
        %2120 = vmatprep.subr.bf16.mxu0 0
        %2121 = vmatpush1.bf16.msra.mxu0 %v1832
        %2122 = vmatprep.subr.bf16.mxu0 0
        %2123 = vmatpush1.bf16.msra.mxu0 %v1833
        %2124 = vmatprep.subr.bf16.mxu0 0
        %2125 = vmatpush1.bf16.msra.mxu0 %v1834
        %2126 = vmatprep.subr.bf16.mxu0 0
        %2127 = vmatpush1.bf16.msra.mxu0 %v1835
        %2128 = vmatprep.subr.bf16.mxu0 0
        %2129 = vmatpush1.bf16.msra.mxu0 %v1836
        %2130 = vmatprep.subr.bf16.mxu0 0
        %2131 = vmatpush1.bf16.msra.mxu0 %v1837
        %2132 = vmatprep.subr.bf16.mxu0 0
        %2133 = vmatpush1.bf16.msra.mxu0 %v1838
        %2134 = vmatprep.subr.bf16.mxu0 0
        %2135 = vmatpush1.bf16.msra.mxu0 %v1839
        %2136 = vmatprep.subr.bf16.mxu0 0
        %2137 = vmatpush1.bf16.msra.mxu0 %v1840
        %2138 = vmatprep.subr.bf16.mxu0 0
        %2139 = vmatpush1.bf16.msra.mxu0 %v1841
        %2140 = vmatprep.subr.bf16.mxu0 0
        %2141 = vmatpush1.bf16.msra.mxu0 %v1842
        %2142 = vmatprep.subr.bf16.mxu0 0
        %2143 = vmatpush1.bf16.msra.mxu0 %v1843
        %2144 = vmatprep.subr.bf16.mxu0 0
        %2145 = vmatpush1.bf16.msra.mxu0 %v1844
        %2146 = vmatprep.subr.bf16.mxu0 0
        %2147 = vmatpush1.bf16.msra.mxu0 %v1845
        %2148 = vmatprep.subr.bf16.mxu0 0
        %2149 = vmatpush1.bf16.msra.mxu0 %v1846
        %2150 = vmatprep.subr.bf16.mxu0 0
        %2151 = vmatpush1.bf16.msra.mxu0 %v1847
        %2152 = vmatprep.mubr.bf16.mxu0 %v1142
        %2153 = vmatmul.mubr.bf16.gmra.mrb[0].mxu0 %v1141
        %v2154 = vpop.f32.mrb[0].mxu0
        %v2155 = vadd.f32 %v2115, %v2154
        %v2156 = vpop.f32.mrb[0].mxu0
        %v2157 = vpop.f32.mrb[0].mxu0
        %v2158 = vpop.f32.mrb[0].mxu0
        %2159 = vdwg.mxu0
        %2160 = vmatprep.subr.bf16.mxu0 0
        %2161 = vmatpush1.bf16.msra.mxu0 %v1848
        %2162 = vmatprep.subr.bf16.mxu0 0
        %2163 = vmatpush1.bf16.msra.mxu0 %v1849
        %2164 = vmatprep.subr.bf16.mxu0 0
        %2165 = vmatpush1.bf16.msra.mxu0 %v1850
        %2166 = vmatprep.subr.bf16.mxu0 0
        %2167 = vmatpush1.bf16.msra.mxu0 %v1851
        %2168 = vmatprep.subr.bf16.mxu0 0
        %2169 = vmatpush1.bf16.msra.mxu0 %v1852
        %2170 = vmatprep.subr.bf16.mxu0 0
        %2171 = vmatpush1.bf16.msra.mxu0 %v1853
        %2172 = vmatprep.subr.bf16.mxu0 0
        %2173 = vmatpush1.bf16.msra.mxu0 %v1854
        %2174 = vmatprep.subr.bf16.mxu0 0
        %2175 = vmatpush1.bf16.msra.mxu0 %v1855
        %2176 = vmatprep.subr.bf16.mxu0 0
        %2177 = vmatpush1.bf16.msra.mxu0 %v1856
        %2178 = vmatprep.subr.bf16.mxu0 0
        %2179 = vmatpush1.bf16.msra.mxu0 %v1857
        %2180 = vmatprep.subr.bf16.mxu0 0
        %2181 = vmatpush1.bf16.msra.mxu0 %v1858
        %2182 = vmatprep.subr.bf16.mxu0 0
        %2183 = vmatpush1.bf16.msra.mxu0 %v1859
        %2184 = vmatprep.subr.bf16.mxu0 0
        %2185 = vmatpush1.bf16.msra.mxu0 %v1860
        %2186 = vmatprep.subr.bf16.mxu0 0
        %2187 = vmatpush1.bf16.msra.mxu0 %v1861
        %2188 = vmatprep.subr.bf16.mxu0 0
        %2189 = vmatpush1.bf16.msra.mxu0 %v1862
        %2190 = vmatprep.subr.bf16.mxu0 0
        %2191 = vmatpush1.bf16.msra.mxu0 %v1863
        %2192 = vmatprep.mubr.bf16.mxu0 %v1184
        %2193 = vmatmul.mubr.bf16.gmra.mrb[0].mxu0 %v1183
        %v2194 = vpop.f32.mrb[0].mxu0
        %v2195 = vadd.f32 %v2155, %v2194
        %v2196 = vpop.f32.mrb[0].mxu0
        %v2197 = vpop.f32.mrb[0].mxu0
        %v2198 = vpop.f32.mrb[0].mxu0
        %2199 = vdwg.mxu0
        %v2200 = vmax.f32 %v2195, 0.0
        %v2201 = vpack.c.bf16 %v2200, %v2200
        %v2203 = vshrl.u32 %v2201, 16
        %v2205 = vshll.u32 %v2201, 16
        %v2207 = vrot.slane %v2205, 1
        %v2208 = vor.u32 %v2203, %v2207
        %v2210 = vsel %vm1161, %v2208, 0
        %v2211 = vrot.slane %v2203, 7
        %v2212 = vor.u32 %v2211, %v2205
        %2213 = vrot.lane.b32.xlu0 %v2212, 96
        %v2214 = vpop.permute.xlu0 %2213
        %v2216 = vsel %vm1182, 0, %v2214
        %2218 = vrot.lane.b32.xlu0 %v2201, 32
        %v2219 = vpop.permute.xlu0 %2218
        %2221 = vrot.lane.b32.xlu0 %v2216, 96
        %v2222 = vpop.permute.xlu0 %2221
        %vm2223 = vcmask 261120
        %v2226 = vsel %vm2223, %v2210, %v2219
        %vm2227 = vcmask 785408
        %v2229 = vsel %vm2227, %v2226, %v2222
        %v2231 = vld [vmem:[%s7] sm:$0xf]
        %v2232 = vld [vmem:[%s7 + $0x4] sm:$0xf]
        %v2233 = vld [vmem:[%s7 + $0x8] sm:$0xf]
        %v2234 = vld [vmem:[%s7 + $0xc] sm:$0xf]
        %v2235 = vld [vmem:[%s7 + $0x10] sm:$0xf]
        %v2236 = vld [vmem:[%s7 + $0x14] sm:$0xf]
        %v2237 = vld [vmem:[%s7 + $0x18] sm:$0xf]
        %v2238 = vld [vmem:[%s7 + $0x1c] sm:$0xf]
        %v2239 = vld [vmem:[%s7 + $0x20] sm:$0xf]
        %v2240 = vld [vmem:[%s7 + $0x24] sm:$0xf]
        %v2241 = vld [vmem:[%s7 + $0x28] sm:$0xf]
        %v2242 = vld [vmem:[%s7 + $0x2c] sm:$0xf]
        %v2243 = vld [vmem:[%s7 + $0x30] sm:$0xf]
        %v2244 = vld [vmem:[%s7 + $0x34] sm:$0xf]
        %v2245 = vld [vmem:[%s7 + $0x38] sm:$0xf]
        %v2246 = vld [vmem:[%s7 + $0x3c] sm:$0xf]
        %v2247 = vld [vmem:[%s9] sm:$0x1]
        %v2249 = vlaneseq
        %v2250 = vshrl.u32 %v2249, 7
        %v2251 = vsub.s32 0, %v2250
        %v2252 = vrot.slane %v2247, %v2251
        %v2270 = vunpack.c.l.b16 %v2231
        %v2271 = vunpack.c.l.b16 %v2232
        %v2272 = vunpack.c.l.b16 %v2233
        %v2273 = vunpack.c.l.b16 %v2234
        %v2274 = vunpack.c.l.b16 %v2235
        %v2275 = vunpack.c.l.b16 %v2236
        %v2276 = vunpack.c.l.b16 %v2237
        %v2277 = vunpack.c.l.b16 %v2238
        %v2278 = vunpack.c.l.b16 %v2239
        %v2279 = vunpack.c.l.b16 %v2240
        %v2280 = vunpack.c.l.b16 %v2241
        %v2281 = vunpack.c.l.b16 %v2242
        %v2282 = vunpack.c.l.b16 %v2243
        %v2283 = vunpack.c.l.b16 %v2244
        %v2284 = vunpack.c.l.b16 %v2245
        %v2285 = vunpack.c.l.b16 %v2246
        %v2286 = vpack.c.b16 %v2271, %v2270
        %v2287 = vpack.c.b16 %v2273, %v2272
        %v2288 = vpack.c.b16 %v2275, %v2274
        %v2289 = vpack.c.b16 %v2277, %v2276
        %v2290 = vpack.c.b16 %v2279, %v2278
        %v2291 = vpack.c.b16 %v2281, %v2280
        %v2292 = vpack.c.b16 %v2283, %v2282
        %v2293 = vpack.c.b16 %v2285, %v2284
        %2302 = vmatprep.subr.bf16.mxu0 0
        %2303 = vmatpush1.bf16.msra.mxu0 %v2286
        %2304 = vmatprep.subr.bf16.mxu0 0
        %2305 = vmatpush1.bf16.msra.mxu0 %v2287
        %2306 = vmatprep.subr.bf16.mxu0 0
        %2307 = vmatpush1.bf16.msra.mxu0 %v2288
        %2308 = vmatprep.subr.bf16.mxu0 0
        %2309 = vmatpush1.bf16.msra.mxu0 %v2289
        %2310 = vmatprep.subr.bf16.mxu0 0
        %2311 = vmatpush1.bf16.msra.mxu0 %v2290
        %2312 = vmatprep.subr.bf16.mxu0 0
        %2313 = vmatpush1.bf16.msra.mxu0 %v2291
        %2314 = vmatprep.subr.bf16.mxu0 0
        %2315 = vmatpush1.bf16.msra.mxu0 %v2292
        %2316 = vmatprep.subr.bf16.mxu0 0
        %2317 = vmatpush1.bf16.msra.mxu0 %v2293
        %2318 = vmatprep.subr.bf16.mxu0 0
        %2319 = vmatpush1.bf16.msra.mxu0 0
        %2320 = vmatprep.subr.bf16.mxu0 0
        %2321 = vmatpush1.bf16.msra.mxu0 0
        %2322 = vmatprep.subr.bf16.mxu0 0
        %2323 = vmatpush1.bf16.msra.mxu0 0
        %2324 = vmatprep.subr.bf16.mxu0 0
        %2325 = vmatpush1.bf16.msra.mxu0 0
        %2326 = vmatprep.subr.bf16.mxu0 0
        %2327 = vmatpush1.bf16.msra.mxu0 0
        %2328 = vmatprep.subr.bf16.mxu0 0
        %2329 = vmatpush1.bf16.msra.mxu0 0
        %2330 = vmatprep.subr.bf16.mxu0 0
        %2331 = vmatpush1.bf16.msra.mxu0 0
        %2332 = vmatprep.subr.bf16.mxu0 0
        %2333 = vmatpush1.bf16.msra.mxu0 0
        %2334 = vmatprep.mubr.bf16.mxu0 0
        %2335 = vmatmul.mubr.bf16.gmra.mrb[0].mxu0 %v2229
        %v2336 = vpop.f32.mrb[0].mxu0
        %v2337 = vadd.f32 %v2252, %v2336
        %v2338 = vpop.f32.mrb[0].mxu0
        %v2339 = vpop.f32.mrb[0].mxu0
        %v2340 = vpop.f32.mrb[0].mxu0
        %2341 = vdwg.mxu0
        %v2342 = vmax.f32 %v2337, 0.0
        %v2343 = vpack.c.bf16 %v2342, %v2342
        %v2345 = vshrl.u32 %v2343, 16
        %v2347 = vshll.u32 %v2343, 16
        %v2349 = vrot.slane %v2347, 1
        %v2350 = vor.u32 %v2345, %v2349
        %v2352 = vsel %vm1161, %v2350, 0
        %v2353 = vrot.slane %v2345, 7
        %v2354 = vor.u32 %v2353, %v2347
        %v2356 = vsel %vm1182, 0, %v2354
        %2358 = vrot.lane.b32.xlu0 %v2343, 32
        %v2359 = vpop.permute.xlu0 %2358
        %2361 = vrot.lane.b32.xlu0 %v2356, 64
        %v2362 = vpop.permute.xlu0 %2361
        %v2365 = vsel %vm2223, %v2352, %v2359
        %vm2366 = vcmask 523264
        %v2368 = vsel %vm2366, %v2365, %v2362
        %v2369 = vld [vmem:[%s11] sm:$0xf]
        %v2370 = vld [vmem:[%s11 + $0x4] sm:$0xf]
        %v2371 = vld [vmem:[%s11 + $0x8] sm:$0xf]
        %v2372 = vld [vmem:[%s11 + $0xc] sm:$0xf]
        %v2373 = vld [vmem:[%s11 + $0x10] sm:$0xf]
        %v2374 = vld [vmem:[%s11 + $0x14] sm:$0xf]
        %v2375 = vld [vmem:[%s11 + $0x18] sm:$0xf]
        %v2376 = vld [vmem:[%s11 + $0x1c] sm:$0xf]
        %v2377 = vld [vmem:[%s11 + $0x20] sm:$0xf]
        %v2378 = vld [vmem:[%s11 + $0x24] sm:$0xf]
        %v2379 = vld [vmem:[%s11 + $0x28] sm:$0xf]
        %v2380 = vld [vmem:[%s11 + $0x2c] sm:$0xf]
        %v2381 = vld [vmem:[%s13] sm:$0x1]
        %v2383 = vlaneseq
        %v2384 = vshrl.u32 %v2383, 7
        %v2385 = vsub.s32 0, %v2384
        %v2386 = vrot.slane %v2381, %v2385
        %v2400 = vunpack.c.l.b16 %v2369
        %v2401 = vunpack.c.l.b16 %v2370
        %v2402 = vunpack.c.l.b16 %v2371
        %v2403 = vunpack.c.l.b16 %v2372
        %v2404 = vunpack.c.l.b16 %v2373
        %v2405 = vunpack.c.l.b16 %v2374
        %v2406 = vunpack.c.l.b16 %v2375
        %v2407 = vunpack.c.l.b16 %v2376
        %v2408 = vunpack.c.l.b16 %v2377
        %v2409 = vunpack.c.l.b16 %v2378
        %v2410 = vunpack.c.l.b16 %v2379
        %v2411 = vunpack.c.l.b16 %v2380
        %v2412 = vpack.c.b16 %v2401, %v2400
        %v2413 = vpack.c.b16 %v2403, %v2402
        %v2414 = vpack.c.b16 %v2405, %v2404
        %v2415 = vpack.c.b16 %v2407, %v2406
        %v2416 = vpack.c.b16 %v2409, %v2408
        %v2417 = vpack.c.b16 %v2411, %v2410
        %v2424 = vsel %vm2227, %v2368, 0
        %2426 = vmatprep.subr.bf16.mxu0 0
        %2427 = vmatpush1.bf16.msra.mxu0 %v2412
        %2428 = vmatprep.subr.bf16.mxu0 0
        %2429 = vmatpush1.bf16.msra.mxu0 %v2413
        %2430 = vmatprep.subr.bf16.mxu0 0
        %2431 = vmatpush1.bf16.msra.mxu0 %v2414
        %2432 = vmatprep.subr.bf16.mxu0 0
        %2433 = vmatpush1.bf16.msra.mxu0 %v2415
        %2434 = vmatprep.subr.bf16.mxu0 0
        %2435 = vmatpush1.bf16.msra.mxu0 %v2416
        %2436 = vmatprep.subr.bf16.mxu0 0
        %2437 = vmatpush1.bf16.msra.mxu0 %v2417
        %2438 = vmatprep.subr.bf16.mxu0 0
        %2439 = vmatpush1.bf16.msra.mxu0 0
        %2440 = vmatprep.subr.bf16.mxu0 0
        %2441 = vmatpush1.bf16.msra.mxu0 0
        %2442 = vmatprep.subr.bf16.mxu0 0
        %2443 = vmatpush1.bf16.msra.mxu0 0
        %2444 = vmatprep.subr.bf16.mxu0 0
        %2445 = vmatpush1.bf16.msra.mxu0 0
        %2446 = vmatprep.subr.bf16.mxu0 0
        %2447 = vmatpush1.bf16.msra.mxu0 0
        %2448 = vmatprep.subr.bf16.mxu0 0
        %2449 = vmatpush1.bf16.msra.mxu0 0
        %2450 = vmatprep.subr.bf16.mxu0 0
        %2451 = vmatpush1.bf16.msra.mxu0 0
        %2452 = vmatprep.subr.bf16.mxu0 0
        %2453 = vmatpush1.bf16.msra.mxu0 0
        %2454 = vmatprep.subr.bf16.mxu0 0
        %2455 = vmatpush1.bf16.msra.mxu0 0
        %2456 = vmatprep.subr.bf16.mxu0 0
        %2457 = vmatpush1.bf16.msra.mxu0 0
        %2458 = vmatprep.mubr.bf16.mxu0 0
        %2459 = vmatmul.mubr.bf16.gmra.mrb[0].mxu0 %v2424
        %v2460 = vpop.f32.mrb[0].mxu0
        %v2461 = vadd.f32 %v2386, %v2460
        %v2462 = vpop.f32.mrb[0].mxu0
        %v2463 = vpop.f32.mrb[0].mxu0
        %v2464 = vpop.f32.mrb[0].mxu0
        %2465 = vdwg.mxu0
        %v2466 = vmax.f32 %v2461, 0.0
        %v2467 = vmax.f32 %v2466, 0.0
        %v2468 = vpack.c.bf16 %v2467, %v2467
        %v2470 = vshrl.u32 %v2468, 16
        %v2472 = vshll.u32 %v2468, 16
        %v2474 = vrot.slane %v2472, 1
        %v2475 = vor.u32 %v2470, %v2474
        %v2477 = vsel %vm1161, %v2475, 0
        %v2478 = vrot.slane %v2470, 7
        %v2479 = vor.u32 %v2478, %v2472
        %v2481 = vsel %vm1182, 0, %v2479
        %2483 = vrot.lane.b32.xlu0 %v2468, 32
        %v2484 = vpop.permute.xlu0 %2483
        %2486 = vrot.lane.b32.xlu0 %v2481, 64
        %v2487 = vpop.permute.xlu0 %2486
        %v2490 = vsel %vm2223, %v2477, %v2484
        %v2492 = vsel %vm2366, %v2490, %v2487
        %v2493 = vld [vmem:[%s15] sm:$0xf]
        %v2494 = vld [vmem:[%s15 + $0x4] sm:$0xf]
        %v2495 = vld [vmem:[%s15 + $0x8] sm:$0xf]
        %v2496 = vld [vmem:[%s15 + $0xc] sm:$0xf]
        %v2497 = vld [vmem:[%s15 + $0x10] sm:$0xf]
        %v2498 = vld [vmem:[%s15 + $0x14] sm:$0xf]
        %v2499 = vld [vmem:[%s15 + $0x18] sm:$0xf]
        %v2500 = vld [vmem:[%s15 + $0x1c] sm:$0xf]
        %v2501 = vld [vmem:[%s15 + $0x20] sm:$0xf]
        %v2502 = vld [vmem:[%s15 + $0x24] sm:$0xf]
        %v2503 = vld [vmem:[%s15 + $0x28] sm:$0xf]
        %v2504 = vld [vmem:[%s15 + $0x2c] sm:$0xf]
        %v2505 = vld [vmem:[%s17] sm:$0x1]
        %v2507 = vlaneseq
        %v2508 = vshrl.u32 %v2507, 7
        %v2509 = vsub.s32 0, %v2508
        %v2510 = vrot.slane %v2505, %v2509
        %v2524 = vunpack.c.l.b16 %v2493
        %v2525 = vunpack.c.l.b16 %v2494
        %v2526 = vunpack.c.l.b16 %v2495
        %v2527 = vunpack.c.l.b16 %v2496
        %v2528 = vunpack.c.l.b16 %v2497
        %v2529 = vunpack.c.l.b16 %v2498
        %v2530 = vunpack.c.l.b16 %v2499
        %v2531 = vunpack.c.l.b16 %v2500
        %v2532 = vunpack.c.l.b16 %v2501
        %v2533 = vunpack.c.l.b16 %v2502
        %v2534 = vunpack.c.l.b16 %v2503
        %v2535 = vunpack.c.l.b16 %v2504
        %v2536 = vpack.c.b16 %v2525, %v2524
        %v2537 = vpack.c.b16 %v2527, %v2526
        %v2538 = vpack.c.b16 %v2529, %v2528
        %v2539 = vpack.c.b16 %v2531, %v2530
        %v2540 = vpack.c.b16 %v2533, %v2532
        %v2541 = vpack.c.b16 %v2535, %v2534
        %v2548 = vsel %vm2227, %v2492, 0
        %2550 = vmatprep.subr.bf16.mxu0 0
        %2551 = vmatpush1.bf16.msra.mxu0 %v2536
        %2552 = vmatprep.subr.bf16.mxu0 0
        %2553 = vmatpush1.bf16.msra.mxu0 %v2537
        %2554 = vmatprep.subr.bf16.mxu0 0
        %2555 = vmatpush1.bf16.msra.mxu0 %v2538
        %2556 = vmatprep.subr.bf16.mxu0 0
        %2557 = vmatpush1.bf16.msra.mxu0 %v2539
        %2558 = vmatprep.subr.bf16.mxu0 0
        %2559 = vmatpush1.bf16.msra.mxu0 %v2540
        %2560 = vmatprep.subr.bf16.mxu0 0
        %2561 = vmatpush1.bf16.msra.mxu0 %v2541
        %2562 = vmatprep.subr.bf16.mxu0 0
        %2563 = vmatpush1.bf16.msra.mxu0 0
        %2564 = vmatprep.subr.bf16.mxu0 0
        %2565 = vmatpush1.bf16.msra.mxu0 0
        %2566 = vmatprep.subr.bf16.mxu0 0
        %2567 = vmatpush1.bf16.msra.mxu0 0
        %2568 = vmatprep.subr.bf16.mxu0 0
        %2569 = vmatpush1.bf16.msra.mxu0 0
        %2570 = vmatprep.subr.bf16.mxu0 0
        %2571 = vmatpush1.bf16.msra.mxu0 0
        %2572 = vmatprep.subr.bf16.mxu0 0
        %2573 = vmatpush1.bf16.msra.mxu0 0
        %2574 = vmatprep.subr.bf16.mxu0 0
        %2575 = vmatpush1.bf16.msra.mxu0 0
        %2576 = vmatprep.subr.bf16.mxu0 0
        %2577 = vmatpush1.bf16.msra.mxu0 0
        %2578 = vmatprep.subr.bf16.mxu0 0
        %2579 = vmatpush1.bf16.msra.mxu0 0
        %2580 = vmatprep.subr.bf16.mxu0 0
        %2581 = vmatpush1.bf16.msra.mxu0 0
        %2582 = vmatprep.mubr.bf16.mxu0 0
        %2583 = vmatmul.mubr.bf16.gmra.mrb[0].mxu0 %v2548
        %v2584 = vpop.f32.mrb[0].mxu0
        %v2585 = vadd.f32 %v2510, %v2584
        %v2586 = vpop.f32.mrb[0].mxu0
        %v2587 = vpop.f32.mrb[0].mxu0
        %v2588 = vpop.f32.mrb[0].mxu0
        %2589 = vdwg.mxu0
        %v2590 = vmax.f32 %v2585, 0.0
        %v2591 = vpack.c.bf16 %v2590, %v2590
        %v2592 = vld [vmem:[%s19] sm:$0xf]
        %v2593 = vld [vmem:[%s21] sm:$0x1]
        %v2595 = vlaneseq
        %v2596 = vshrl.u32 %v2595, 7
        %v2597 = vsub.s32 0, %v2596
        %v2598 = vrot.slane %v2593, %v2597
        %vm2600 = vcmask 64512
        %v2602 = vsel %vm2600, %v2591, 0
        %vm2604 = vcmask 1043456
        %v2606 = vsel %vm2604, %v2592, 0
        %2608 = vmatprep.subr.bf16.mxu0 0
        %2609 = vmatpush1.bf16.msra.mxu0 %v2606
        %2610 = vmatprep.subr.bf16.mxu0 0
        %2611 = vmatpush1.bf16.msra.mxu0 0
        %2612 = vmatprep.subr.bf16.mxu0 0
        %2613 = vmatpush1.bf16.msra.mxu0 0
        %2614 = vmatprep.subr.bf16.mxu0 0
        %2615 = vmatpush1.bf16.msra.mxu0 0
        %2616 = vmatprep.subr.bf16.mxu0 0
        %2617 = vmatpush1.bf16.msra.mxu0 0
        %2618 = vmatprep.subr.bf16.mxu0 0
        %2619 = vmatpush1.bf16.msra.mxu0 0
        %2620 = vmatprep.subr.bf16.mxu0 0
        %2621 = vmatpush1.bf16.msra.mxu0 0
        %2622 = vmatprep.subr.bf16.mxu0 0
        %2623 = vmatpush1.bf16.msra.mxu0 0
        %2624 = vmatprep.subr.bf16.mxu0 0
        %2625 = vmatpush1.bf16.msra.mxu0 0
        %2626 = vmatprep.subr.bf16.mxu0 0
        %2627 = vmatpush1.bf16.msra.mxu0 0
        %2628 = vmatprep.subr.bf16.mxu0 0
        %2629 = vmatpush1.bf16.msra.mxu0 0
        %2630 = vmatprep.subr.bf16.mxu0 0
        %2631 = vmatpush1.bf16.msra.mxu0 0
        %2632 = vmatprep.subr.bf16.mxu0 0
        %2633 = vmatpush1.bf16.msra.mxu0 0
        %2634 = vmatprep.subr.bf16.mxu0 0
        %2635 = vmatpush1.bf16.msra.mxu0 0
        %2636 = vmatprep.subr.bf16.mxu0 0
        %2637 = vmatpush1.bf16.msra.mxu0 0
        %2638 = vmatprep.subr.bf16.mxu0 0
        %2639 = vmatpush1.bf16.msra.mxu0 0
        %2640 = vmatprep.mubr.bf16.mxu0 0
        %2641 = vmatmul.mubr.bf16.gmra.mrb[0].mxu0 %v2602
        %v2642 = vpop.f32.mrb[0].mxu0
        %v2643 = vadd.f32 %v2598, %v2642
        %v2644 = vpop.f32.mrb[0].mxu0
        %v2645 = vpop.f32.mrb[0].mxu0
        %v2646 = vpop.f32.mrb[0].mxu0
        %2647 = vdwg.mxu0
        %v2648 = vadd.f32 %v2466, %v2643
        %v2649 = vmax.f32 %v2648, 0.0
        %v2650 = vpack.c.bf16 %v2649, %v2649
        %v2652 = vshrl.u32 %v2650, 16
        %v2654 = vshll.u32 %v2650, 16
        %v2656 = vrot.slane %v2654, 1
        %v2657 = vor.u32 %v2652, %v2656
        %v2659 = vsel %vm1161, %v2657, 0
        %v2660 = vrot.slane %v2652, 7
        %v2661 = vor.u32 %v2660, %v2654
        %v2663 = vsel %vm1182, 0, %v2661
        %2665 = vrot.lane.b32.xlu0 %v2650, 32
        %v2666 = vpop.permute.xlu0 %2665
        %2668 = vrot.lane.b32.xlu0 %v2663, 64
        %v2669 = vpop.permute.xlu0 %2668
        %v2672 = vsel %vm2223, %v2659, %v2666
        %v2674 = vsel %vm2366, %v2672, %v2669
        %v2675 = vld [vmem:[%s23] sm:$0xf]
        %v2676 = vld [vmem:[%s23 + $0x4] sm:$0xf]
        %v2677 = vld [vmem:[%s23 + $0x8] sm:$0xf]
        %v2678 = vld [vmem:[%s23 + $0xc] sm:$0xf]
        %v2679 = vld [vmem:[%s23 + $0x10] sm:$0xf]
        %v2680 = vld [vmem:[%s23 + $0x14] sm:$0xf]
        %v2681 = vld [vmem:[%s23 + $0x18] sm:$0xf]
        %v2682 = vld [vmem:[%s23 + $0x1c] sm:$0xf]
        %v2683 = vld [vmem:[%s23 + $0x20] sm:$0xf]
        %v2684 = vld [vmem:[%s23 + $0x24] sm:$0xf]
        %v2685 = vld [vmem:[%s23 + $0x28] sm:$0xf]
        %v2686 = vld [vmem:[%s23 + $0x2c] sm:$0xf]
        %v2687 = vld [vmem:[%s25] sm:$0x1]
        %v2689 = vlaneseq
        %v2690 = vshrl.u32 %v2689, 7
        %v2691 = vsub.s32 0, %v2690
        %v2692 = vrot.slane %v2687, %v2691
        %v2706 = vunpack.c.l.b16 %v2675
        %v2707 = vunpack.c.l.b16 %v2676
        %v2708 = vunpack.c.l.b16 %v2677
        %v2709 = vunpack.c.l.b16 %v2678
        %v2710 = vunpack.c.l.b16 %v2679
        %v2711 = vunpack.c.l.b16 %v2680
        %v2712 = vunpack.c.l.b16 %v2681
        %v2713 = vunpack.c.l.b16 %v2682
        %v2714 = vunpack.c.l.b16 %v2683
        %v2715 = vunpack.c.l.b16 %v2684
        %v2716 = vunpack.c.l.b16 %v2685
        %v2717 = vunpack.c.l.b16 %v2686
        %v2718 = vpack.c.b16 %v2707, %v2706
        %v2719 = vpack.c.b16 %v2709, %v2708
        %v2720 = vpack.c.b16 %v2711, %v2710
        %v2721 = vpack.c.b16 %v2713, %v2712
        %v2722 = vpack.c.b16 %v2715, %v2714
        %v2723 = vpack.c.b16 %v2717, %v2716
        %v2730 = vsel %vm2227, %v2674, 0
        %2732 = vmatprep.subr.bf16.mxu0 0
        %2733 = vmatpush1.bf16.msra.mxu0 %v2718
        %2734 = vmatprep.subr.bf16.mxu0 0
        %2735 = vmatpush1.bf16.msra.mxu0 %v2719
        %2736 = vmatprep.subr.bf16.mxu0 0
        %2737 = vmatpush1.bf16.msra.mxu0 %v2720
        %2738 = vmatprep.subr.bf16.mxu0 0
        %2739 = vmatpush1.bf16.msra.mxu0 %v2721
        %2740 = vmatprep.subr.bf16.mxu0 0
        %2741 = vmatpush1.bf16.msra.mxu0 %v2722
        %2742 = vmatprep.subr.bf16.mxu0 0
        %2743 = vmatpush1.bf16.msra.mxu0 %v2723
        %2744 = vmatprep.subr.bf16.mxu0 0
        %2745 = vmatpush1.bf16.msra.mxu0 0
        %2746 = vmatprep.subr.bf16.mxu0 0
        %2747 = vmatpush1.bf16.msra.mxu0 0
        %2748 = vmatprep.subr.bf16.mxu0 0
        %2749 = vmatpush1.bf16.msra.mxu0 0
        %2750 = vmatprep.subr.bf16.mxu0 0
        %2751 = vmatpush1.bf16.msra.mxu0 0
        %2752 = vmatprep.subr.bf16.mxu0 0
        %2753 = vmatpush1.bf16.msra.mxu0 0
        %2754 = vmatprep.subr.bf16.mxu0 0
        %2755 = vmatpush1.bf16.msra.mxu0 0
        %2756 = vmatprep.subr.bf16.mxu0 0
        %2757 = vmatpush1.bf16.msra.mxu0 0
        %2758 = vmatprep.subr.bf16.mxu0 0
        %2759 = vmatpush1.bf16.msra.mxu0 0
        %2760 = vmatprep.subr.bf16.mxu0 0
        %2761 = vmatpush1.bf16.msra.mxu0 0
        %2762 = vmatprep.subr.bf16.mxu0 0
        %2763 = vmatpush1.bf16.msra.mxu0 0
        %2764 = vmatprep.mubr.bf16.mxu0 0
        %2765 = vmatmul.mubr.bf16.gmra.mrb[0].mxu0 %v2730
        %v2766 = vpop.f32.mrb[0].mxu0
        %v2767 = vadd.f32 %v2692, %v2766
        %v2768 = vpop.f32.mrb[0].mxu0
        %v2769 = vpop.f32.mrb[0].mxu0
        %v2770 = vpop.f32.mrb[0].mxu0
        %2771 = vdwg.mxu0
        %v2772 = vmax.f32 %v2767, 0.0
        %v2773 = vpack.c.bf16 %v2772, %v2772
        %v2774 = vld [vmem:[%s27] sm:$0xf]
        %v2775 = vld [vmem:[%s29] sm:$0x1]
        %v2777 = vlaneseq
        %v2778 = vshrl.u32 %v2777, 7
        %v2779 = vsub.s32 0, %v2778
        %v2780 = vrot.slane %v2775, %v2779
        %v2783 = vsel %vm2600, %v2773, 0
        %v2786 = vsel %vm2604, %v2774, 0
        %2788 = vmatprep.subr.bf16.mxu0 0
        %2789 = vmatpush1.bf16.msra.mxu0 %v2786
        %2790 = vmatprep.subr.bf16.mxu0 0
        %2791 = vmatpush1.bf16.msra.mxu0 0
        %2792 = vmatprep.subr.bf16.mxu0 0
        %2793 = vmatpush1.bf16.msra.mxu0 0
        %2794 = vmatprep.subr.bf16.mxu0 0
        %2795 = vmatpush1.bf16.msra.mxu0 0
        %2796 = vmatprep.subr.bf16.mxu0 0
        %2797 = vmatpush1.bf16.msra.mxu0 0
        %2798 = vmatprep.subr.bf16.mxu0 0
        %2799 = vmatpush1.bf16.msra.mxu0 0
        %2800 = vmatprep.subr.bf16.mxu0 0
        %2801 = vmatpush1.bf16.msra.mxu0 0
        %2802 = vmatprep.subr.bf16.mxu0 0
        %2803 = vmatpush1.bf16.msra.mxu0 0
        %2804 = vmatprep.subr.bf16.mxu0 0
        %2805 = vmatpush1.bf16.msra.mxu0 0
        %2806 = vmatprep.subr.bf16.mxu0 0
        %2807 = vmatpush1.bf16.msra.mxu0 0
        %2808 = vmatprep.subr.bf16.mxu0 0
        %2809 = vmatpush1.bf16.msra.mxu0 0
        %2810 = vmatprep.subr.bf16.mxu0 0
        %2811 = vmatpush1.bf16.msra.mxu0 0
        %2812 = vmatprep.subr.bf16.mxu0 0
        %2813 = vmatpush1.bf16.msra.mxu0 0
        %2814 = vmatprep.subr.bf16.mxu0 0
        %2815 = vmatpush1.bf16.msra.mxu0 0
        %2816 = vmatprep.subr.bf16.mxu0 0
        %2817 = vmatpush1.bf16.msra.mxu0 0
        %2818 = vmatprep.subr.bf16.mxu0 0
        %2819 = vmatpush1.bf16.msra.mxu0 0
        %2820 = vmatprep.mubr.bf16.mxu0 0
        %2821 = vmatmul.mubr.bf16.gmra.mrb[0].mxu0 %v2783
        %v2822 = vpop.f32.mrb[0].mxu0
        %v2823 = vadd.f32 %v2780, %v2822
        %v2824 = vpop.f32.mrb[0].mxu0
        %v2825 = vpop.f32.mrb[0].mxu0
        %v2826 = vpop.f32.mrb[0].mxu0
        %2827 = vdwg.mxu0
        %v2828 = vadd.f32 %v2648, %v2823
        %v2829 = vpack.c.bf16 %v2828, %v2828
        %v2830 = vld [vmem:[%s31] sm:$0xff]
        %v2831 = vld [vmem:[%s31 + $0x8] sm:$0xff]
        %v2832 = vld [vmem:[%s31 + $0x10] sm:$0xff]
        %v2833 = vld [vmem:[%s31 + $0x18] sm:$0xff]
        %v2834 = vld [vmem:[%s33] sm:$0x3]
        %v2836 = vlaneseq
        %v2837 = vshrl.u32 %v2836, 7
        %v2838 = vsub.s32 0, %v2837
        %v2839 = vrot.slane %v2834, %v2838
        %v2840 = vlaneseq
        %v2841 = vshrl.u32 %v2840, 7
        %v2842 = vsub.s32 1, %v2841
        %v2843 = vrot.slane %v2834, %v2842
        %v2850 = vunpack.c.l.b16 %v2830
        %v2851 = vunpack.c.h.b16 %v2830
        %v2852 = vunpack.c.l.b16 %v2831
        %v2853 = vunpack.c.h.b16 %v2831
        %v2854 = vunpack.c.l.b16 %v2832
        %v2855 = vunpack.c.h.b16 %v2832
        %v2856 = vunpack.c.l.b16 %v2833
        %v2857 = vunpack.c.h.b16 %v2833
        %v2858 = vpack.c.b16 %v2852, %v2850
        %v2859 = vpack.c.b16 %v2853, %v2851
        %v2860 = vpack.c.b16 %v2856, %v2854
        %v2861 = vpack.c.b16 %v2857, %v2855
        %v2867 = vsel %vm2223, %v2829, 0
        %2869 = vmatprep.subr.bf16.mxu0 %v2859
        %2870 = vmatpush1.bf16.msra.mxu0 %v2858
        %2871 = vmatprep.subr.bf16.mxu0 %v2861
        %2872 = vmatpush1.bf16.msra.mxu0 %v2860
        %2873 = vmatprep.subr.bf16.mxu0 0
        %2874 = vmatpush1.bf16.msra.mxu0 0
        %2875 = vmatprep.subr.bf16.mxu0 0
        %2876 = vmatpush1.bf16.msra.mxu0 0
        %2877 = vmatprep.subr.bf16.mxu0 0
        %2878 = vmatpush1.bf16.msra.mxu0 0
        %2879 = vmatprep.subr.bf16.mxu0 0
        %2880 = vmatpush1.bf16.msra.mxu0 0
        %2881 = vmatprep.subr.bf16.mxu0 0
        %2882 = vmatpush1.bf16.msra.mxu0 0
        %2883 = vmatprep.subr.bf16.mxu0 0
        %2884 = vmatpush1.bf16.msra.mxu0 0
        %2885 = vmatprep.subr.bf16.mxu0 0
        %2886 = vmatpush1.bf16.msra.mxu0 0
        %2887 = vmatprep.subr.bf16.mxu0 0
        %2888 = vmatpush1.bf16.msra.mxu0 0
        %2889 = vmatprep.subr.bf16.mxu0 0
        %2890 = vmatpush1.bf16.msra.mxu0 0
        %2891 = vmatprep.subr.bf16.mxu0 0
        %2892 = vmatpush1.bf16.msra.mxu0 0
        %2893 = vmatprep.subr.bf16.mxu0 0
        %2894 = vmatpush1.bf16.msra.mxu0 0
        %2895 = vmatprep.subr.bf16.mxu0 0
        %2896 = vmatpush1.bf16.msra.mxu0 0
        %2897 = vmatprep.subr.bf16.mxu0 0
        %2898 = vmatpush1.bf16.msra.mxu0 0
        %2899 = vmatprep.subr.bf16.mxu0 0
        %2900 = vmatpush1.bf16.msra.mxu0 0
        %2901 = vmatprep.mubr.bf16.mxu0 0
        %2902 = vmatmul.mubr.bf16.gmra.mrb[0].mxu0 %v2867
        %v2903 = vpop.f32.mrb[0].mxu0
        %v2904 = vadd.f32 %v2839, %v2903
        %v2905 = vpop.f32.mrb[0].mxu0
        %v2906 = vadd.f32 %v2843, %v2905
        %v2907 = vpop.f32.mrb[0].mxu0
        %v2908 = vpop.f32.mrb[0].mxu0
        %2909 = vdwg.mxu0
        %v2910 = vld [vmem:[%s63] sm:$0xff]
        %v2911 = vld [vmem:[%s63 + $0x8] sm:$0xff]
        %v2912 = vld [vmem:[%s63 + $0x10] sm:$0xff]
        %v2913 = vld [vmem:[%s63 + $0x18] sm:$0xff]
        %v2914 = vld [vmem:[%s63 + $0x20] sm:$0xff]
        %v2915 = vld [vmem:[%s63 + $0x28] sm:$0xff]
        %v2916 = vld [vmem:[%s63 + $0x30] sm:$0xff]
        %v2917 = vld [vmem:[%s63 + $0x38] sm:$0xff]
        %v2918 = vld [vmem:[%s63 + $0x40] sm:$0xff]
        %v2919 = vld [vmem:[%s63 + $0x48] sm:$0xff]
        %v2920 = vld [vmem:[%s63 + $0x50] sm:$0xff]
        %v2921 = vld [vmem:[%s63 + $0x58] sm:$0xff]
        %v2922 = vld [vmem:[%s63 + $0x60] sm:$0xff]
        %v2923 = vld [vmem:[%s63 + $0x68] sm:$0xff]
        %v2924 = vld [vmem:[%s63 + $0x70] sm:$0xff]
        %v2925 = vld [vmem:[%s63 + $0x78] sm:$0xff]
        %v2926 = vld [vmem:[%s65] sm:$0xff]
        %v2927 = vld [vmem:[%s65 + $0x8] sm:$0xff]
        %v2928 = vld [vmem:[%s65 + $0x10] sm:$0xff]
        %v2929 = vld [vmem:[%s65 + $0x18] sm:$0xff]
        %v2930 = vld [vmem:[%s65 + $0x20] sm:$0xff]
        %v2931 = vld [vmem:[%s65 + $0x28] sm:$0xff]
        %v2932 = vld [vmem:[%s65 + $0x30] sm:$0xff]
        %v2933 = vld [vmem:[%s65 + $0x38] sm:$0xff]
        %v2934 = vld [vmem:[%s65 + $0x40] sm:$0xff]
        %v2935 = vld [vmem:[%s65 + $0x48] sm:$0xff]
        %v2936 = vld [vmem:[%s65 + $0x50] sm:$0xff]
        %v2937 = vld [vmem:[%s65 + $0x58] sm:$0xff]
        %v2938 = vld [vmem:[%s65 + $0x60] sm:$0xff]
        %v2939 = vld [vmem:[%s65 + $0x68] sm:$0xff]
        %v2940 = vld [vmem:[%s65 + $0x70] sm:$0xff]
        %v2941 = vld [vmem:[%s65 + $0x78] sm:$0xff]
        %v2942 = vld [vmem:[%s65 + $0x80] sm:$0xff]
        %v2943 = vld [vmem:[%s65 + $0x88] sm:$0xff]
        %v2944 = vld [vmem:[%s65 + $0x90] sm:$0xff]
        %v2945 = vld [vmem:[%s65 + $0x98] sm:$0xff]
        %v2946 = vld [vmem:[%s65 + $0xa0] sm:$0xff]
        %v2947 = vld [vmem:[%s65 + $0xa8] sm:$0xff]
        %v2948 = vld [vmem:[%s65 + $0xb0] sm:$0xff]
        %v2949 = vld [vmem:[%s65 + $0xb8] sm:$0xff]
        %v2950 = vld [vmem:[%s65 + $0xc0] sm:$0xff]
        %v2951 = vld [vmem:[%s65 + $0xc8] sm:$0xff]
        %v2952 = vld [vmem:[%s65 + $0xd0] sm:$0xff]
        %v2953 = vld [vmem:[%s65 + $0xd8] sm:$0xff]
        %v2954 = vld [vmem:[%s65 + $0xe0] sm:$0xff]
        %v2955 = vld [vmem:[%s65 + $0xe8] sm:$0xff]
        %v2956 = vld [vmem:[%s65 + $0xf0] sm:$0xff]
        %v2957 = vld [vmem:[%s65 + $0xf8] sm:$0xff]
        %v2958 = vld [vmem:[%s65 + $0x100] sm:$0xff]
        %v2959 = vld [vmem:[%s65 + $0x108] sm:$0xff]
        %v2960 = vld [vmem:[%s65 + $0x110] sm:$0xff]
        %v2961 = vld [vmem:[%s65 + $0x118] sm:$0xff]
        %v2962 = vld [vmem:[%s65 + $0x120] sm:$0xff]
        %v2963 = vld [vmem:[%s65 + $0x128] sm:$0xff]
        %v2964 = vld [vmem:[%s65 + $0x130] sm:$0xff]
        %v2965 = vld [vmem:[%s65 + $0x138] sm:$0xff]
        %v2966 = vld [vmem:[%s65 + $0x140] sm:$0xff]
        %v2967 = vld [vmem:[%s65 + $0x148] sm:$0xff]
        %v2968 = vld [vmem:[%s65 + $0x150] sm:$0xff]
        %v2969 = vld [vmem:[%s65 + $0x158] sm:$0xff]
        %v2970 = vld [vmem:[%s65 + $0x160] sm:$0xff]
        %v2971 = vld [vmem:[%s65 + $0x168] sm:$0xff]
        %v2972 = vld [vmem:[%s65 + $0x170] sm:$0xff]
        %v2973 = vld [vmem:[%s65 + $0x178] sm:$0xff]
        %v2974 = vld [vmem:[%s65 + $0x180] sm:$0xff]
        %v2975 = vld [vmem:[%s65 + $0x188] sm:$0xff]
        %v2976 = vld [vmem:[%s65 + $0x190] sm:$0xff]
        %v2977 = vld [vmem:[%s65 + $0x198] sm:$0xff]
        %v2978 = vld [vmem:[%s65 + $0x1a0] sm:$0xff]
        %v2979 = vld [vmem:[%s65 + $0x1a8] sm:$0xff]
        %v2980 = vld [vmem:[%s65 + $0x1b0] sm:$0xff]
        %v2981 = vld [vmem:[%s65 + $0x1b8] sm:$0xff]
        %v2982 = vld [vmem:[%s65 + $0x1c0] sm:$0xff]
        %v2983 = vld [vmem:[%s65 + $0x1c8] sm:$0xff]
        %v2984 = vld [vmem:[%s65 + $0x1d0] sm:$0xff]
        %v2985 = vld [vmem:[%s65 + $0x1d8] sm:$0xff]
        %v2986 = vld [vmem:[%s65 + $0x1e0] sm:$0xff]
        %v2987 = vld [vmem:[%s65 + $0x1e8] sm:$0xff]
        %v2988 = vld [vmem:[%s65 + $0x1f0] sm:$0xff]
        %v2989 = vld [vmem:[%s65 + $0x1f8] sm:$0xff]
        %v2990 = vld [vmem:[%s67] sm:$0xf]
        %v2991 = vpack.c.bf16 %v2904, %v2904
        %v3008 = vunpack.c.l.b16 %v2910
        %v3009 = vunpack.c.h.b16 %v2910
        %v3010 = vunpack.c.l.b16 %v2911
        %v3011 = vunpack.c.h.b16 %v2911
        %v3012 = vunpack.c.l.b16 %v2912
        %v3013 = vunpack.c.h.b16 %v2912
        %v3014 = vunpack.c.l.b16 %v2913
        %v3015 = vunpack.c.h.b16 %v2913
        %v3016 = vunpack.c.l.b16 %v2914
        %v3017 = vunpack.c.h.b16 %v2914
        %v3018 = vunpack.c.l.b16 %v2915
        %v3019 = vunpack.c.h.b16 %v2915
        %v3020 = vunpack.c.l.b16 %v2916
        %v3021 = vunpack.c.h.b16 %v2916
        %v3022 = vunpack.c.l.b16 %v2917
        %v3023 = vunpack.c.h.b16 %v2917
        %v3024 = vunpack.c.l.b16 %v2918
        %v3025 = vunpack.c.h.b16 %v2918
        %v3026 = vunpack.c.l.b16 %v2919
        %v3027 = vunpack.c.h.b16 %v2919
        %v3028 = vunpack.c.l.b16 %v2920
        %v3029 = vunpack.c.h.b16 %v2920
        %v3030 = vunpack.c.l.b16 %v2921
        %v3031 = vunpack.c.h.b16 %v2921
        %v3032 = vunpack.c.l.b16 %v2922
        %v3033 = vunpack.c.h.b16 %v2922
        %v3034 = vunpack.c.l.b16 %v2923
        %v3035 = vunpack.c.h.b16 %v2923
        %v3036 = vunpack.c.l.b16 %v2924
        %v3037 = vunpack.c.h.b16 %v2924
        %v3038 = vunpack.c.l.b16 %v2925
        %v3039 = vunpack.c.h.b16 %v2925
        %v3040 = vpack.c.b16 %v3012, %v3008
        %v3041 = vpack.c.b16 %v3013, %v3009
        %v3042 = vpack.c.b16 %v3014, %v3010
        %v3043 = vpack.c.b16 %v3015, %v3011
        %v3044 = vpack.c.b16 %v3020, %v3016
        %v3045 = vpack.c.b16 %v3021, %v3017
        %v3046 = vpack.c.b16 %v3022, %v3018
        %v3047 = vpack.c.b16 %v3023, %v3019
        %v3048 = vpack.c.b16 %v3028, %v3024
        %v3049 = vpack.c.b16 %v3029, %v3025
        %v3050 = vpack.c.b16 %v3030, %v3026
        %v3051 = vpack.c.b16 %v3031, %v3027
        %v3052 = vpack.c.b16 %v3036, %v3032
        %v3053 = vpack.c.b16 %v3037, %v3033
        %v3054 = vpack.c.b16 %v3038, %v3034
        %v3055 = vpack.c.b16 %v3039, %v3035
        %v3073 = vsel %vm2366, %v2991, 0
        %3075 = vmatprep.subr.bf16.mxu0 %v3041
        %3076 = vmatpush1.bf16.msra.mxu0 %v3040
        %3077 = vmatprep.subr.bf16.mxu0 %v3045
        %3078 = vmatpush1.bf16.msra.mxu0 %v3044
        %3079 = vmatprep.subr.bf16.mxu0 %v3049
        %3080 = vmatpush1.bf16.msra.mxu0 %v3048
        %3081 = vmatprep.subr.bf16.mxu0 %v3053
        %3082 = vmatpush1.bf16.msra.mxu0 %v3052
        %3083 = vmatprep.subr.bf16.mxu0 0
        %3084 = vmatpush1.bf16.msra.mxu0 0
        %3085 = vmatprep.subr.bf16.mxu0 0
        %3086 = vmatpush1.bf16.msra.mxu0 0
        %3087 = vmatprep.subr.bf16.mxu0 0
        %3088 = vmatpush1.bf16.msra.mxu0 0
        %3089 = vmatprep.subr.bf16.mxu0 0
        %3090 = vmatpush1.bf16.msra.mxu0 0
        %3091 = vmatprep.subr.bf16.mxu0 0
        %3092 = vmatpush1.bf16.msra.mxu0 0
        %3093 = vmatprep.subr.bf16.mxu0 0
        %3094 = vmatpush1.bf16.msra.mxu0 0
        %3095 = vmatprep.subr.bf16.mxu0 0
        %3096 = vmatpush1.bf16.msra.mxu0 0
        %3097 = vmatprep.subr.bf16.mxu0 0
        %3098 = vmatpush1.bf16.msra.mxu0 0
        %3099 = vmatprep.subr.bf16.mxu0 0
        %3100 = vmatpush1.bf16.msra.mxu0 0
        %3101 = vmatprep.subr.bf16.mxu0 0
        %3102 = vmatpush1.bf16.msra.mxu0 0
        %3103 = vmatprep.subr.bf16.mxu0 0
        %3104 = vmatpush1.bf16.msra.mxu0 0
        %3105 = vmatprep.subr.bf16.mxu0 0
        %3106 = vmatpush1.bf16.msra.mxu0 0
        %3107 = vmatprep.mubr.bf16.mxu0 0
        %3108 = vmatmul.mubr.bf16.gmra.mrb[0].mxu0 %v3073
        %v3109 = vpop.f32.mrb[0].mxu0
        %v3110 = vadd.f32 0.0, %v3109
        %v3111 = vpop.f32.mrb[0].mxu0
        %v3112 = vadd.f32 0.0, %v3111
        %v3113 = vpop.f32.mrb[0].mxu0
        %v3114 = vpop.f32.mrb[0].mxu0
        %3115 = vdwg.mxu0
        %3116 = vmatprep.subr.bf16.mxu0 %v3043
        %3117 = vmatpush1.bf16.msra.mxu0 %v3042
        %3118 = vmatprep.subr.bf16.mxu0 %v3047
        %3119 = vmatpush1.bf16.msra.mxu0 %v3046
        %3120 = vmatprep.subr.bf16.mxu0 %v3051
        %3121 = vmatpush1.bf16.msra.mxu0 %v3050
        %3122 = vmatprep.subr.bf16.mxu0 %v3055
        %3123 = vmatpush1.bf16.msra.mxu0 %v3054
        %3124 = vmatprep.subr.bf16.mxu0 0
        %3125 = vmatpush1.bf16.msra.mxu0 0
        %3126 = vmatprep.subr.bf16.mxu0 0
        %3127 = vmatpush1.bf16.msra.mxu0 0
        %3128 = vmatprep.subr.bf16.mxu0 0
        %3129 = vmatpush1.bf16.msra.mxu0 0
        %3130 = vmatprep.subr.bf16.mxu0 0
        %3131 = vmatpush1.bf16.msra.mxu0 0
        %3132 = vmatprep.subr.bf16.mxu0 0
        %3133 = vmatpush1.bf16.msra.mxu0 0
        %3134 = vmatprep.subr.bf16.mxu0 0
        %3135 = vmatpush1.bf16.msra.mxu0 0
        %3136 = vmatprep.subr.bf16.mxu0 0
        %3137 = vmatpush1.bf16.msra.mxu0 0
        %3138 = vmatprep.subr.bf16.mxu0 0
        %3139 = vmatpush1.bf16.msra.mxu0 0
        %3140 = vmatprep.subr.bf16.mxu0 0
        %3141 = vmatpush1.bf16.msra.mxu0 0
        %3142 = vmatprep.subr.bf16.mxu0 0
        %3143 = vmatpush1.bf16.msra.mxu0 0
        %3144 = vmatprep.subr.bf16.mxu0 0
        %3145 = vmatpush1.bf16.msra.mxu0 0
        %3146 = vmatprep.subr.bf16.mxu0 0
        %3147 = vmatpush1.bf16.msra.mxu0 0
        %3148 = vmatprep.mubr.bf16.mxu0 0
        %3149 = vmatmul.mubr.bf16.gmra.mrb[0].mxu0 %v3073
        %v3150 = vpop.f32.mrb[0].mxu0
        %v3151 = vadd.f32 0.0, %v3150
        %v3152 = vpop.f32.mrb[0].mxu0
        %v3153 = vadd.f32 0.0, %v3152
        %v3154 = vpop.f32.mrb[0].mxu0
        %v3155 = vpop.f32.mrb[0].mxu0
        %3156 = vdwg.mxu0
        %v3157 = vmul.f32 %v2904, %v2904
        %vm3158 = vcmask 519168
        %v3159 = vsel %vm3158, %v3157, 0.0
        %3160 = vadd.xlane.f32.xlu0 %v3159
        %v3161 = vpop.xlane.xlu0 %3160
        %v3162 = vmul.f32 %v3110, 2.0
        %v3163 = vmul.f32 %v3112, 2.0
        %v3164 = vmul.f32 %v3151, 2.0
        %v3165 = vmul.f32 %v3153, 2.0
        %v3166 = vsub.f32 %v3161, %v3162
        %v3167 = vsub.f32 %v3161, %v3163
        %v3168 = vsub.f32 %v3161, %v3164
        %v3169 = vsub.f32 %v3161, %v3165
        %v3171 = vlaneseq
        %v3172 = vshrl.u32 %v3171, 7
        %v3173 = vsub.s32 0, %v3172
        %v3174 = vrot.slane %v2990, %v3173
        %v3175 = vlaneseq
        %v3176 = vshrl.u32 %v3175, 7
        %v3177 = vsub.s32 1, %v3176
        %v3178 = vrot.slane %v2990, %v3177
        %v3179 = vlaneseq
        %v3180 = vshrl.u32 %v3179, 7
        %v3181 = vsub.s32 2, %v3180
        %v3182 = vrot.slane %v2990, %v3181
        %v3183 = vlaneseq
        %v3184 = vshrl.u32 %v3183, 7
        %v3185 = vsub.s32 3, %v3184
        %v3186 = vrot.slane %v2990, %v3185
        %v3191 = vadd.f32 %v3166, %v3174
        %v3192 = vadd.f32 %v3167, %v3178
        %v3193 = vadd.f32 %v3168, %v3182
        %v3194 = vadd.f32 %v3169, %v3186
        %v3195 = vlaneseq
        %v3196 = vand.u32 %v3195, 127
        %v3197 = vadd.s32 %v3196, 128
        %v3198 = vadd.s32 %v3196, 256
        %v3199 = vadd.s32 %v3196, 384
        %v3200 = vsel %vm2604, %v3191, inf
        %v3201 = vsel %vm2604, %v3192, inf
        %v3202 = vsel %vm2604, %v3193, inf
        %v3203 = vsel %vm2604, %v3194, inf
        %v3204 = vmin.f32 %v3200, %v3201
        %v3205 = vmin.f32 %v3202, %v3203
        %v3206 = vmin.f32 %v3204, %v3205
        %3207 = vmin.xlane.f32.xlu0 %v3206
        %v3208 = vpop.xlane.xlu0 %3207
        %vm3209 = vcmp.eq.f32.partialorder %v3191, %v3208
        %vm3210 = vcmp.eq.f32.partialorder %v3192, %v3208
        %vm3211 = vcmp.eq.f32.partialorder %v3193, %v3208
        %vm3212 = vcmp.eq.f32.partialorder %v3194, %v3208
        %v3213 = vsel %vm3209, %v3196, 512
        %v3214 = vsel %vm3210, %v3197, 512
        %v3215 = vsel %vm3211, %v3198, 512
        %v3216 = vsel %vm3212, %v3199, 512
        %v3217 = vsel %vm2604, %v3213, 2147483647
        %v3218 = vsel %vm2604, %v3214, 2147483647
        %v3219 = vsel %vm2604, %v3215, 2147483647
        %v3220 = vsel %vm2604, %v3216, 2147483647
        %vm3221 = vcmp.lt.s32.totalorder %v3217, %v3218
        %v3222 = vsel %vm3221, %v3217, %v3218
        %vm3223 = vcmp.lt.s32.totalorder %v3219, %v3220
        %v3224 = vsel %vm3223, %v3219, %v3220
        %vm3225 = vcmp.lt.s32.totalorder %v3222, %v3224
        %v3226 = vsel %vm3225, %v3222, %v3224
        %v3227 = vand.u32 %v3226, 65535
        %v3228 = vshra.s32 %v3226, 16
        %v3229 = vcvt.s32.f32 %v3227
        %v3230 = vcvt.s32.f32 %v3228
        %3231 = vmin.xlane.f32.xlu0 %v3230
        %v3232 = vpop.xlane.xlu0 %3231
        %vm3233 = vcmp.eq.f32.partialorder %v3230, %v3232
        %v3234 = vsel %vm3233, %v3229, inf
        %3235 = vmin.xlane.f32.xlu0 %v3234
        %v3236 = vpop.xlane.xlu0 %3235
        %v3237 = vcvt.f32.s32 %v3236
        %v3238 = vcvt.f32.s32 %v3232
        %v3239 = vshll.u32 %v3238, 16
        %v3240 = vadd.s32 %v3239, %v3237
        %vm3241 = vcmp.eq.s32.totalorder %v3196, %v3240
        %vm3242 = vcmp.eq.s32.totalorder %v3197, %v3240
        %vm3243 = vcmp.eq.s32.totalorder %v3198, %v3240
        %vm3244 = vcmp.eq.s32.totalorder %v3199, %v3240
        %v3245 = vsel %vm3241, 1, 0
        %v3246 = vsel %vm3242, 1, 0
        %v3247 = vsel %vm3243, 1, 0
        %v3248 = vsel %vm3244, 1, 0
        %v3249 = vcvt.s32.f32 %v3245
        %v3250 = vcvt.s32.f32 %v3246
        %v3251 = vcvt.s32.f32 %v3247
        %v3252 = vcvt.s32.f32 %v3248
        %3253 = vmatprep.subr.mxu0 0.0
        %3254 = vmatpush1.msra.mxu0 %v2926
        %3255 = vmatprep.subr.mxu0 0.0
        %3256 = vmatpush1.msra.mxu0 %v2927
        %3257 = vmatprep.subr.mxu0 0.0
        %3258 = vmatpush1.msra.mxu0 %v2928
        %3259 = vmatprep.subr.mxu0 0.0
        %3260 = vmatpush1.msra.mxu0 %v2929
        %3261 = vmatprep.subr.mxu0 0.0
        %3262 = vmatpush1.msra.mxu0 %v2930
        %3263 = vmatprep.subr.mxu0 0.0
        %3264 = vmatpush1.msra.mxu0 %v2931
        %3265 = vmatprep.subr.mxu0 0.0
        %3266 = vmatpush1.msra.mxu0 %v2932
        %3267 = vmatprep.subr.mxu0 0.0
        %3268 = vmatpush1.msra.mxu0 %v2933
        %3269 = vmatprep.subr.mxu0 0.0
        %3270 = vmatpush1.msra.mxu0 %v2934
        %3271 = vmatprep.subr.mxu0 0.0
        %3272 = vmatpush1.msra.mxu0 %v2935
        %3273 = vmatprep.subr.mxu0 0.0
        %3274 = vmatpush1.msra.mxu0 %v2936
        %3275 = vmatprep.subr.mxu0 0.0
        %3276 = vmatpush1.msra.mxu0 %v2937
        %3277 = vmatprep.subr.mxu0 0.0
        %3278 = vmatpush1.msra.mxu0 %v2938
        %3279 = vmatprep.subr.mxu0 0.0
        %3280 = vmatpush1.msra.mxu0 %v2939
        %3281 = vmatprep.subr.mxu0 0.0
        %3282 = vmatpush1.msra.mxu0 %v2940
        %3283 = vmatprep.subr.mxu0 0.0
        %3284 = vmatpush1.msra.mxu0 %v2941
        %3285 = vmatprep.subr.mxu0 0.0
        %3286 = vmatpush1.msra.mxu0 %v2942
        %3287 = vmatprep.subr.mxu0 0.0
        %3288 = vmatpush1.msra.mxu0 %v2943
        %3289 = vmatprep.subr.mxu0 0.0
        %3290 = vmatpush1.msra.mxu0 %v2944
        %3291 = vmatprep.subr.mxu0 0.0
        %3292 = vmatpush1.msra.mxu0 %v2945
        %3293 = vmatprep.subr.mxu0 0.0
        %3294 = vmatpush1.msra.mxu0 %v2946
        %3295 = vmatprep.subr.mxu0 0.0
        %3296 = vmatpush1.msra.mxu0 %v2947
        %3297 = vmatprep.subr.mxu0 0.0
        %3298 = vmatpush1.msra.mxu0 %v2948
        %3299 = vmatprep.subr.mxu0 0.0
        %3300 = vmatpush1.msra.mxu0 %v2949
        %3301 = vmatprep.subr.mxu0 0.0
        %3302 = vmatpush1.msra.mxu0 %v2950
        %3303 = vmatprep.subr.mxu0 0.0
        %3304 = vmatpush1.msra.mxu0 %v2951
        %3305 = vmatprep.subr.mxu0 0.0
        %3306 = vmatpush1.msra.mxu0 %v2952
        %3307 = vmatprep.subr.mxu0 0.0
        %3308 = vmatpush1.msra.mxu0 %v2953
        %3309 = vmatprep.subr.mxu0 0.0
        %3310 = vmatpush1.msra.mxu0 %v2954
        %3311 = vmatprep.subr.mxu0 0.0
        %3312 = vmatpush1.msra.mxu0 %v2955
        %3313 = vmatprep.subr.mxu0 0.0
        %3314 = vmatpush1.msra.mxu0 %v2956
        %3315 = vmatprep.subr.mxu0 0.0
        %3316 = vmatpush1.msra.mxu0 %v2957
        %3317 = vmatprep.mubr.f32.mxu0 %v3250
        %3318 = vmatmul.mubr.f32.gmra.mrb[0].mxu0 %v3249
        %v3319 = vpop.f32.mrb[0].mxu0
        %v3320 = vadd.f32 0.0, %v3319
        %v3321 = vpop.f32.mrb[0].mxu0
        %3322 = vdwg.mxu0
        %3323 = vmatprep.subr.mxu0 0.0
        %3324 = vmatpush1.msra.mxu0 %v2958
        %3325 = vmatprep.subr.mxu0 0.0
        %3326 = vmatpush1.msra.mxu0 %v2959
        %3327 = vmatprep.subr.mxu0 0.0
        %3328 = vmatpush1.msra.mxu0 %v2960
        %3329 = vmatprep.subr.mxu0 0.0
        %3330 = vmatpush1.msra.mxu0 %v2961
        %3331 = vmatprep.subr.mxu0 0.0
        %3332 = vmatpush1.msra.mxu0 %v2962
        %3333 = vmatprep.subr.mxu0 0.0
        %3334 = vmatpush1.msra.mxu0 %v2963
        %3335 = vmatprep.subr.mxu0 0.0
        %3336 = vmatpush1.msra.mxu0 %v2964
        %3337 = vmatprep.subr.mxu0 0.0
        %3338 = vmatpush1.msra.mxu0 %v2965
        %3339 = vmatprep.subr.mxu0 0.0
        %3340 = vmatpush1.msra.mxu0 %v2966
        %3341 = vmatprep.subr.mxu0 0.0
        %3342 = vmatpush1.msra.mxu0 %v2967
        %3343 = vmatprep.subr.mxu0 0.0
        %3344 = vmatpush1.msra.mxu0 %v2968
        %3345 = vmatprep.subr.mxu0 0.0
        %3346 = vmatpush1.msra.mxu0 %v2969
        %3347 = vmatprep.subr.mxu0 0.0
        %3348 = vmatpush1.msra.mxu0 %v2970
        %3349 = vmatprep.subr.mxu0 0.0
        %3350 = vmatpush1.msra.mxu0 %v2971
        %3351 = vmatprep.subr.mxu0 0.0
        %3352 = vmatpush1.msra.mxu0 %v2972
        %3353 = vmatprep.subr.mxu0 0.0
        %3354 = vmatpush1.msra.mxu0 %v2973
        %3355 = vmatprep.subr.mxu0 0.0
        %3356 = vmatpush1.msra.mxu0 %v2974
        %3357 = vmatprep.subr.mxu0 0.0
        %3358 = vmatpush1.msra.mxu0 %v2975
        %3359 = vmatprep.subr.mxu0 0.0
        %3360 = vmatpush1.msra.mxu0 %v2976
        %3361 = vmatprep.subr.mxu0 0.0
        %3362 = vmatpush1.msra.mxu0 %v2977
        %3363 = vmatprep.subr.mxu0 0.0
        %3364 = vmatpush1.msra.mxu0 %v2978
        %3365 = vmatprep.subr.mxu0 0.0
        %3366 = vmatpush1.msra.mxu0 %v2979
        %3367 = vmatprep.subr.mxu0 0.0
        %3368 = vmatpush1.msra.mxu0 %v2980
        %3369 = vmatprep.subr.mxu0 0.0
        %3370 = vmatpush1.msra.mxu0 %v2981
        %3371 = vmatprep.subr.mxu0 0.0
        %3372 = vmatpush1.msra.mxu0 %v2982
        %3373 = vmatprep.subr.mxu0 0.0
        %3374 = vmatpush1.msra.mxu0 %v2983
        %3375 = vmatprep.subr.mxu0 0.0
        %3376 = vmatpush1.msra.mxu0 %v2984
        %3377 = vmatprep.subr.mxu0 0.0
        %3378 = vmatpush1.msra.mxu0 %v2985
        %3379 = vmatprep.subr.mxu0 0.0
        %3380 = vmatpush1.msra.mxu0 %v2986
        %3381 = vmatprep.subr.mxu0 0.0
        %3382 = vmatpush1.msra.mxu0 %v2987
        %3383 = vmatprep.subr.mxu0 0.0
        %3384 = vmatpush1.msra.mxu0 %v2988
        %3385 = vmatprep.subr.mxu0 0.0
        %3386 = vmatpush1.msra.mxu0 %v2989
        %3387 = vmatprep.mubr.f32.mxu0 %v3252
        %3388 = vmatmul.mubr.f32.gmra.mrb[0].mxu0 %v3251
        %v3389 = vpop.f32.mrb[0].mxu0
        %v3390 = vadd.f32 %v3320, %v3389
        %v3391 = vpop.f32.mrb[0].mxu0
        %3392 = vdwg.mxu0
        %v3393 = vsub.f32 %v3390, %v2904
        %v3394 = vmul.f32 %v3393, %v3393
        %v3395 = vsel %vm3158, %v3394, 0.0
        %3396 = vadd.xlane.f32.xlu0 %v3395
        %v3397 = vpop.xlane.xlu0 %3396
        %v3398 = vsel %vm2604, %v3397, 0.0
        %v3399 = vrot.slane %v3398, 4
        %v3400 = vadd.f32 %v3398, %v3399
        %v3401 = vrot.slane %v3400, 2
        %v3402 = vadd.f32 %v3400, %v3401
        %v3403 = vrot.slane %v3402, 1
        %v3404 = vadd.f32 %v3402, %v3403
        %v3405 = vadd.f32 %v3404, 0.0
        %3407 = vrot.lane.b32.xlu0 %v2991, 64
        %v3408 = vpop.permute.xlu0 %3407
        %v3410 = vsel %vm2366, %v3408, 0
        %3412 = vmatprep.subr.bf16.mxu0 %v3041
        %3413 = vmatpush1.bf16.msra.mxu0 %v3040
        %3414 = vmatprep.subr.bf16.mxu0 %v3045
        %3415 = vmatpush1.bf16.msra.mxu0 %v3044
        %3416 = vmatprep.subr.bf16.mxu0 %v3049
        %3417 = vmatpush1.bf16.msra.mxu0 %v3048
        %3418 = vmatprep.subr.bf16.mxu0 %v3053
        %3419 = vmatpush1.bf16.msra.mxu0 %v3052
        %3420 = vmatprep.subr.bf16.mxu0 0
        %3421 = vmatpush1.bf16.msra.mxu0 0
        %3422 = vmatprep.subr.bf16.mxu0 0
        %3423 = vmatpush1.bf16.msra.mxu0 0
        %3424 = vmatprep.subr.bf16.mxu0 0
        %3425 = vmatpush1.bf16.msra.mxu0 0
        %3426 = vmatprep.subr.bf16.mxu0 0
        %3427 = vmatpush1.bf16.msra.mxu0 0
        %3428 = vmatprep.subr.bf16.mxu0 0
        %3429 = vmatpush1.bf16.msra.mxu0 0
        %3430 = vmatprep.subr.bf16.mxu0 0
        %3431 = vmatpush1.bf16.msra.mxu0 0
        %3432 = vmatprep.subr.bf16.mxu0 0
        %3433 = vmatpush1.bf16.msra.mxu0 0
        %3434 = vmatprep.subr.bf16.mxu0 0
        %3435 = vmatpush1.bf16.msra.mxu0 0
        %3436 = vmatprep.subr.bf16.mxu0 0
        %3437 = vmatpush1.bf16.msra.mxu0 0
        %3438 = vmatprep.subr.bf16.mxu0 0
        %3439 = vmatpush1.bf16.msra.mxu0 0
        %3440 = vmatprep.subr.bf16.mxu0 0
        %3441 = vmatpush1.bf16.msra.mxu0 0
        %3442 = vmatprep.subr.bf16.mxu0 0
        %3443 = vmatpush1.bf16.msra.mxu0 0
        %3444 = vmatprep.mubr.bf16.mxu0 0
        %3445 = vmatmul.mubr.bf16.gmra.mrb[0].mxu0 %v3410
        %v3446 = vpop.f32.mrb[0].mxu0
        %v3447 = vadd.f32 0.0, %v3446
        %v3448 = vpop.f32.mrb[0].mxu0
        %v3449 = vadd.f32 0.0, %v3448
        %v3450 = vpop.f32.mrb[0].mxu0
        %v3451 = vpop.f32.mrb[0].mxu0
        %3452 = vdwg.mxu0
        %3453 = vmatprep.subr.bf16.mxu0 %v3043
        %3454 = vmatpush1.bf16.msra.mxu0 %v3042
        %3455 = vmatprep.subr.bf16.mxu0 %v3047
        %3456 = vmatpush1.bf16.msra.mxu0 %v3046
        %3457 = vmatprep.subr.bf16.mxu0 %v3051
        %3458 = vmatpush1.bf16.msra.mxu0 %v3050
        %3459 = vmatprep.subr.bf16.mxu0 %v3055
        %3460 = vmatpush1.bf16.msra.mxu0 %v3054
        %3461 = vmatprep.subr.bf16.mxu0 0
        %3462 = vmatpush1.bf16.msra.mxu0 0
        %3463 = vmatprep.subr.bf16.mxu0 0
        %3464 = vmatpush1.bf16.msra.mxu0 0
        %3465 = vmatprep.subr.bf16.mxu0 0
        %3466 = vmatpush1.bf16.msra.mxu0 0
        %3467 = vmatprep.subr.bf16.mxu0 0
        %3468 = vmatpush1.bf16.msra.mxu0 0
        %3469 = vmatprep.subr.bf16.mxu0 0
        %3470 = vmatpush1.bf16.msra.mxu0 0
        %3471 = vmatprep.subr.bf16.mxu0 0
        %3472 = vmatpush1.bf16.msra.mxu0 0
        %3473 = vmatprep.subr.bf16.mxu0 0
        %3474 = vmatpush1.bf16.msra.mxu0 0
        %3475 = vmatprep.subr.bf16.mxu0 0
        %3476 = vmatpush1.bf16.msra.mxu0 0
        %3477 = vmatprep.subr.bf16.mxu0 0
        %3478 = vmatpush1.bf16.msra.mxu0 0
        %3479 = vmatprep.subr.bf16.mxu0 0
        %3480 = vmatpush1.bf16.msra.mxu0 0
        %3481 = vmatprep.subr.bf16.mxu0 0
        %3482 = vmatpush1.bf16.msra.mxu0 0
        %3483 = vmatprep.subr.bf16.mxu0 0
        %3484 = vmatpush1.bf16.msra.mxu0 0
        %3485 = vmatprep.mubr.bf16.mxu0 0
        %3486 = vmatmul.mubr.bf16.gmra.mrb[0].mxu0 %v3410
        %v3487 = vpop.f32.mrb[0].mxu0
        %v3488 = vadd.f32 0.0, %v3487
        %v3489 = vpop.f32.mrb[0].mxu0
        %v3490 = vadd.f32 0.0, %v3489
        %v3491 = vpop.f32.mrb[0].mxu0
        %v3492 = vpop.f32.mrb[0].mxu0
        %3493 = vdwg.mxu0
        %3495 = vrot.lane.b32.xlu0 %v3157, 64
        %v3496 = vpop.permute.xlu0 %3495
        %v3498 = vsel %vm3158, %v3496, 0.0
        %3499 = vadd.xlane.f32.xlu0 %v3498
        %v3500 = vpop.xlane.xlu0 %3499
        %v3501 = vmul.f32 %v3447, 2.0
        %v3502 = vmul.f32 %v3449, 2.0
        %v3503 = vmul.f32 %v3488, 2.0
        %v3504 = vmul.f32 %v3490, 2.0
        %v3505 = vsub.f32 %v3500, %v3501
        %v3506 = vsub.f32 %v3500, %v3502
        %v3507 = vsub.f32 %v3500, %v3503
        %v3508 = vsub.f32 %v3500, %v3504
        %v3509 = vadd.f32 %v3505, %v3174
        %v3510 = vadd.f32 %v3506, %v3178
        %v3511 = vadd.f32 %v3507, %v3182
        %v3512 = vadd.f32 %v3508, %v3186
        %v3513 = vsel %vm2604, %v3509, inf
        %v3514 = vsel %vm2604, %v3510, inf
        %v3515 = vsel %vm2604, %v3511, inf
        %v3516 = vsel %vm2604, %v3512, inf
        %v3517 = vmin.f32 %v3513, %v3514
        %v3518 = vmin.f32 %v3515, %v3516
        %v3519 = vmin.f32 %v3517, %v3518
        %3520 = vmin.xlane.f32.xlu0 %v3519
        %v3521 = vpop.xlane.xlu0 %3520
        %vm3522 = vcmp.eq.f32.partialorder %v3509, %v3521
        %vm3523 = vcmp.eq.f32.partialorder %v3510, %v3521
        %vm3524 = vcmp.eq.f32.partialorder %v3511, %v3521
        %vm3525 = vcmp.eq.f32.partialorder %v3512, %v3521
        %v3526 = vsel %vm3522, %v3196, 512
        %v3527 = vsel %vm3523, %v3197, 512
        %v3528 = vsel %vm3524, %v3198, 512
        %v3529 = vsel %vm3525, %v3199, 512
        %v3530 = vsel %vm2604, %v3526, 2147483647
        %v3531 = vsel %vm2604, %v3527, 2147483647
        %v3532 = vsel %vm2604, %v3528, 2147483647
        %v3533 = vsel %vm2604, %v3529, 2147483647
        %vm3534 = vcmp.lt.s32.totalorder %v3530, %v3531
        %v3535 = vsel %vm3534, %v3530, %v3531
        %vm3536 = vcmp.lt.s32.totalorder %v3532, %v3533
        %v3537 = vsel %vm3536, %v3532, %v3533
        %vm3538 = vcmp.lt.s32.totalorder %v3535, %v3537
        %v3539 = vsel %vm3538, %v3535, %v3537
        %v3540 = vand.u32 %v3539, 65535
        %v3541 = vshra.s32 %v3539, 16
        %v3542 = vcvt.s32.f32 %v3540
        %v3543 = vcvt.s32.f32 %v3541
        %3544 = vmin.xlane.f32.xlu0 %v3543
        %v3545 = vpop.xlane.xlu0 %3544
        %vm3546 = vcmp.eq.f32.partialorder %v3543, %v3545
        %v3547 = vsel %vm3546, %v3542, inf
        %3548 = vmin.xlane.f32.xlu0 %v3547
        %v3549 = vpop.xlane.xlu0 %3548
        %v3550 = vcvt.f32.s32 %v3549
        %v3551 = vcvt.f32.s32 %v3545
        %v3552 = vshll.u32 %v3551, 16
        %v3553 = vadd.s32 %v3552, %v3550
        %vm3554 = vcmp.eq.s32.totalorder %v3196, %v3553
        %vm3555 = vcmp.eq.s32.totalorder %v3197, %v3553
        %vm3556 = vcmp.eq.s32.totalorder %v3198, %v3553
        %vm3557 = vcmp.eq.s32.totalorder %v3199, %v3553
        %v3558 = vsel %vm3554, 1, 0
        %v3559 = vsel %vm3555, 1, 0
        %v3560 = vsel %vm3556, 1, 0
        %v3561 = vsel %vm3557, 1, 0
        %v3562 = vcvt.s32.f32 %v3558
        %v3563 = vcvt.s32.f32 %v3559
        %v3564 = vcvt.s32.f32 %v3560
        %v3565 = vcvt.s32.f32 %v3561
        %3566 = vmatprep.subr.mxu0 0.0
        %3567 = vmatpush1.msra.mxu0 %v2926
        %3568 = vmatprep.subr.mxu0 0.0
        %3569 = vmatpush1.msra.mxu0 %v2927
        %3570 = vmatprep.subr.mxu0 0.0
        %3571 = vmatpush1.msra.mxu0 %v2928
        %3572 = vmatprep.subr.mxu0 0.0
        %3573 = vmatpush1.msra.mxu0 %v2929
        %3574 = vmatprep.subr.mxu0 0.0
        %3575 = vmatpush1.msra.mxu0 %v2930
        %3576 = vmatprep.subr.mxu0 0.0
        %3577 = vmatpush1.msra.mxu0 %v2931
        %3578 = vmatprep.subr.mxu0 0.0
        %3579 = vmatpush1.msra.mxu0 %v2932
        %3580 = vmatprep.subr.mxu0 0.0
        %3581 = vmatpush1.msra.mxu0 %v2933
        %3582 = vmatprep.subr.mxu0 0.0
        %3583 = vmatpush1.msra.mxu0 %v2934
        %3584 = vmatprep.subr.mxu0 0.0
        %3585 = vmatpush1.msra.mxu0 %v2935
        %3586 = vmatprep.subr.mxu0 0.0
        %3587 = vmatpush1.msra.mxu0 %v2936
        %3588 = vmatprep.subr.mxu0 0.0
        %3589 = vmatpush1.msra.mxu0 %v2937
        %3590 = vmatprep.subr.mxu0 0.0
        %3591 = vmatpush1.msra.mxu0 %v2938
        %3592 = vmatprep.subr.mxu0 0.0
        %3593 = vmatpush1.msra.mxu0 %v2939
        %3594 = vmatprep.subr.mxu0 0.0
        %3595 = vmatpush1.msra.mxu0 %v2940
        %3596 = vmatprep.subr.mxu0 0.0
        %3597 = vmatpush1.msra.mxu0 %v2941
        %3598 = vmatprep.subr.mxu0 0.0
        %3599 = vmatpush1.msra.mxu0 %v2942
        %3600 = vmatprep.subr.mxu0 0.0
        %3601 = vmatpush1.msra.mxu0 %v2943
        %3602 = vmatprep.subr.mxu0 0.0
        %3603 = vmatpush1.msra.mxu0 %v2944
        %3604 = vmatprep.subr.mxu0 0.0
        %3605 = vmatpush1.msra.mxu0 %v2945
        %3606 = vmatprep.subr.mxu0 0.0
        %3607 = vmatpush1.msra.mxu0 %v2946
        %3608 = vmatprep.subr.mxu0 0.0
        %3609 = vmatpush1.msra.mxu0 %v2947
        %3610 = vmatprep.subr.mxu0 0.0
        %3611 = vmatpush1.msra.mxu0 %v2948
        %3612 = vmatprep.subr.mxu0 0.0
        %3613 = vmatpush1.msra.mxu0 %v2949
        %3614 = vmatprep.subr.mxu0 0.0
        %3615 = vmatpush1.msra.mxu0 %v2950
        %3616 = vmatprep.subr.mxu0 0.0
        %3617 = vmatpush1.msra.mxu0 %v2951
        %3618 = vmatprep.subr.mxu0 0.0
        %3619 = vmatpush1.msra.mxu0 %v2952
        %3620 = vmatprep.subr.mxu0 0.0
        %3621 = vmatpush1.msra.mxu0 %v2953
        %3622 = vmatprep.subr.mxu0 0.0
        %3623 = vmatpush1.msra.mxu0 %v2954
        %3624 = vmatprep.subr.mxu0 0.0
        %3625 = vmatpush1.msra.mxu0 %v2955
        %3626 = vmatprep.subr.mxu0 0.0
        %3627 = vmatpush1.msra.mxu0 %v2956
        %3628 = vmatprep.subr.mxu0 0.0
        %3629 = vmatpush1.msra.mxu0 %v2957
        %3630 = vmatprep.mubr.f32.mxu0 %v3563
        %3631 = vmatmul.mubr.f32.gmra.mrb[0].mxu0 %v3562
        %v3632 = vpop.f32.mrb[0].mxu0
        %v3633 = vadd.f32 0.0, %v3632
        %v3634 = vpop.f32.mrb[0].mxu0
        %3635 = vdwg.mxu0
        %3636 = vmatprep.subr.mxu0 0.0
        %3637 = vmatpush1.msra.mxu0 %v2958
        %3638 = vmatprep.subr.mxu0 0.0
        %3639 = vmatpush1.msra.mxu0 %v2959
        %3640 = vmatprep.subr.mxu0 0.0
        %3641 = vmatpush1.msra.mxu0 %v2960
        %3642 = vmatprep.subr.mxu0 0.0
        %3643 = vmatpush1.msra.mxu0 %v2961
        %3644 = vmatprep.subr.mxu0 0.0
        %3645 = vmatpush1.msra.mxu0 %v2962
        %3646 = vmatprep.subr.mxu0 0.0
        %3647 = vmatpush1.msra.mxu0 %v2963
        %3648 = vmatprep.subr.mxu0 0.0
        %3649 = vmatpush1.msra.mxu0 %v2964
        %3650 = vmatprep.subr.mxu0 0.0
        %3651 = vmatpush1.msra.mxu0 %v2965
        %3652 = vmatprep.subr.mxu0 0.0
        %3653 = vmatpush1.msra.mxu0 %v2966
        %3654 = vmatprep.subr.mxu0 0.0
        %3655 = vmatpush1.msra.mxu0 %v2967
        %3656 = vmatprep.subr.mxu0 0.0
        %3657 = vmatpush1.msra.mxu0 %v2968
        %3658 = vmatprep.subr.mxu0 0.0
        %3659 = vmatpush1.msra.mxu0 %v2969
        %3660 = vmatprep.subr.mxu0 0.0
        %3661 = vmatpush1.msra.mxu0 %v2970
        %3662 = vmatprep.subr.mxu0 0.0
        %3663 = vmatpush1.msra.mxu0 %v2971
        %3664 = vmatprep.subr.mxu0 0.0
        %3665 = vmatpush1.msra.mxu0 %v2972
        %3666 = vmatprep.subr.mxu0 0.0
        %3667 = vmatpush1.msra.mxu0 %v2973
        %3668 = vmatprep.subr.mxu0 0.0
        %3669 = vmatpush1.msra.mxu0 %v2974
        %3670 = vmatprep.subr.mxu0 0.0
        %3671 = vmatpush1.msra.mxu0 %v2975
        %3672 = vmatprep.subr.mxu0 0.0
        %3673 = vmatpush1.msra.mxu0 %v2976
        %3674 = vmatprep.subr.mxu0 0.0
        %3675 = vmatpush1.msra.mxu0 %v2977
        %3676 = vmatprep.subr.mxu0 0.0
        %3677 = vmatpush1.msra.mxu0 %v2978
        %3678 = vmatprep.subr.mxu0 0.0
        %3679 = vmatpush1.msra.mxu0 %v2979
        %3680 = vmatprep.subr.mxu0 0.0
        %3681 = vmatpush1.msra.mxu0 %v2980
        %3682 = vmatprep.subr.mxu0 0.0
        %3683 = vmatpush1.msra.mxu0 %v2981
        %3684 = vmatprep.subr.mxu0 0.0
        %3685 = vmatpush1.msra.mxu0 %v2982
        %3686 = vmatprep.subr.mxu0 0.0
        %3687 = vmatpush1.msra.mxu0 %v2983
        %3688 = vmatprep.subr.mxu0 0.0
        %3689 = vmatpush1.msra.mxu0 %v2984
        %3690 = vmatprep.subr.mxu0 0.0
        %3691 = vmatpush1.msra.mxu0 %v2985
        %3692 = vmatprep.subr.mxu0 0.0
        %3693 = vmatpush1.msra.mxu0 %v2986
        %3694 = vmatprep.subr.mxu0 0.0
        %3695 = vmatpush1.msra.mxu0 %v2987
        %3696 = vmatprep.subr.mxu0 0.0
        %3697 = vmatpush1.msra.mxu0 %v2988
        %3698 = vmatprep.subr.mxu0 0.0
        %3699 = vmatpush1.msra.mxu0 %v2989
        %3700 = vmatprep.mubr.f32.mxu0 %v3565
        %3701 = vmatmul.mubr.f32.gmra.mrb[0].mxu0 %v3564
        %v3702 = vpop.f32.mrb[0].mxu0
        %v3703 = vadd.f32 %v3633, %v3702
        %v3704 = vpop.f32.mrb[0].mxu0
        %3705 = vdwg.mxu0
        %3707 = vrot.lane.b32.xlu0 %v2904, 64
        %v3708 = vpop.permute.xlu0 %3707
        %v3710 = vsub.f32 %v3703, %v3708
        %v3711 = vmul.f32 %v3710, %v3710
        %v3712 = vsel %vm3158, %v3711, 0.0
        %3713 = vadd.xlane.f32.xlu0 %v3712
        %v3714 = vpop.xlane.xlu0 %3713
        %v3715 = vsel %vm2604, %v3714, 0.0
        %v3716 = vrot.slane %v3715, 4
        %v3717 = vadd.f32 %v3715, %v3716
        %v3718 = vrot.slane %v3717, 2
        %v3719 = vadd.f32 %v3717, %v3718
        %v3720 = vrot.slane %v3719, 1
        %v3721 = vadd.f32 %v3719, %v3720
        %v3722 = vadd.f32 %v3405, %v3721
        %v3723 = vpack.c.bf16 %v2906, %v2906
        %v3725 = vsel %vm2366, %v3723, 0
        %3727 = vmatprep.subr.bf16.mxu0 %v3041
        %3728 = vmatpush1.bf16.msra.mxu0 %v3040
        %3729 = vmatprep.subr.bf16.mxu0 %v3045
        %3730 = vmatpush1.bf16.msra.mxu0 %v3044
        %3731 = vmatprep.subr.bf16.mxu0 %v3049
        %3732 = vmatpush1.bf16.msra.mxu0 %v3048
        %3733 = vmatprep.subr.bf16.mxu0 %v3053
        %3734 = vmatpush1.bf16.msra.mxu0 %v3052
        %3735 = vmatprep.subr.bf16.mxu0 0
        %3736 = vmatpush1.bf16.msra.mxu0 0
        %3737 = vmatprep.subr.bf16.mxu0 0
        %3738 = vmatpush1.bf16.msra.mxu0 0
        %3739 = vmatprep.subr.bf16.mxu0 0
        %3740 = vmatpush1.bf16.msra.mxu0 0
        %3741 = vmatprep.subr.bf16.mxu0 0
        %3742 = vmatpush1.bf16.msra.mxu0 0
        %3743 = vmatprep.subr.bf16.mxu0 0
        %3744 = vmatpush1.bf16.msra.mxu0 0
        %3745 = vmatprep.subr.bf16.mxu0 0
        %3746 = vmatpush1.bf16.msra.mxu0 0
        %3747 = vmatprep.subr.bf16.mxu0 0
        %3748 = vmatpush1.bf16.msra.mxu0 0
        %3749 = vmatprep.subr.bf16.mxu0 0
        %3750 = vmatpush1.bf16.msra.mxu0 0
        %3751 = vmatprep.subr.bf16.mxu0 0
        %3752 = vmatpush1.bf16.msra.mxu0 0
        %3753 = vmatprep.subr.bf16.mxu0 0
        %3754 = vmatpush1.bf16.msra.mxu0 0
        %3755 = vmatprep.subr.bf16.mxu0 0
        %3756 = vmatpush1.bf16.msra.mxu0 0
        %3757 = vmatprep.subr.bf16.mxu0 0
        %3758 = vmatpush1.bf16.msra.mxu0 0
        %3759 = vmatprep.mubr.bf16.mxu0 0
        %3760 = vmatmul.mubr.bf16.gmra.mrb[0].mxu0 %v3725
        %v3761 = vpop.f32.mrb[0].mxu0
        %v3762 = vadd.f32 0.0, %v3761
        %v3763 = vpop.f32.mrb[0].mxu0
        %v3764 = vadd.f32 0.0, %v3763
        %v3765 = vpop.f32.mrb[0].mxu0
        %v3766 = vpop.f32.mrb[0].mxu0
        %3767 = vdwg.mxu0
        %3768 = vmatprep.subr.bf16.mxu0 %v3043
        %3769 = vmatpush1.bf16.msra.mxu0 %v3042
        %3770 = vmatprep.subr.bf16.mxu0 %v3047
        %3771 = vmatpush1.bf16.msra.mxu0 %v3046
        %3772 = vmatprep.subr.bf16.mxu0 %v3051
        %3773 = vmatpush1.bf16.msra.mxu0 %v3050
        %3774 = vmatprep.subr.bf16.mxu0 %v3055
        %3775 = vmatpush1.bf16.msra.mxu0 %v3054
        %3776 = vmatprep.subr.bf16.mxu0 0
        %3777 = vmatpush1.bf16.msra.mxu0 0
        %3778 = vmatprep.subr.bf16.mxu0 0
        %3779 = vmatpush1.bf16.msra.mxu0 0
        %3780 = vmatprep.subr.bf16.mxu0 0
        %3781 = vmatpush1.bf16.msra.mxu0 0
        %3782 = vmatprep.subr.bf16.mxu0 0
        %3783 = vmatpush1.bf16.msra.mxu0 0
        %3784 = vmatprep.subr.bf16.mxu0 0
        %3785 = vmatpush1.bf16.msra.mxu0 0
        %3786 = vmatprep.subr.bf16.mxu0 0
        %3787 = vmatpush1.bf16.msra.mxu0 0
        %3788 = vmatprep.subr.bf16.mxu0 0
        %3789 = vmatpush1.bf16.msra.mxu0 0
        %3790 = vmatprep.subr.bf16.mxu0 0
        %3791 = vmatpush1.bf16.msra.mxu0 0
        %3792 = vmatprep.subr.bf16.mxu0 0
        %3793 = vmatpush1.bf16.msra.mxu0 0
        %3794 = vmatprep.subr.bf16.mxu0 0
        %3795 = vmatpush1.bf16.msra.mxu0 0
        %3796 = vmatprep.subr.bf16.mxu0 0
        %3797 = vmatpush1.bf16.msra.mxu0 0
        %3798 = vmatprep.subr.bf16.mxu0 0
        %3799 = vmatpush1.bf16.msra.mxu0 0
        %3800 = vmatprep.mubr.bf16.mxu0 0
        %3801 = vmatmul.mubr.bf16.gmra.mrb[0].mxu0 %v3725
        %v3802 = vpop.f32.mrb[0].mxu0
        %v3803 = vadd.f32 0.0, %v3802
        %v3804 = vpop.f32.mrb[0].mxu0
        %v3805 = vadd.f32 0.0, %v3804
        %v3806 = vpop.f32.mrb[0].mxu0
        %v3807 = vpop.f32.mrb[0].mxu0
        %3808 = vdwg.mxu0
        %v3809 = vmul.f32 %v2906, %v2906
        %v3810 = vsel %vm3158, %v3809, 0.0
        %3811 = vadd.xlane.f32.xlu0 %v3810
        %v3812 = vpop.xlane.xlu0 %3811
        %v3813 = vmul.f32 %v3762, 2.0
        %v3814 = vmul.f32 %v3764, 2.0
        %v3815 = vmul.f32 %v3803, 2.0
        %v3816 = vmul.f32 %v3805, 2.0
        %v3817 = vsub.f32 %v3812, %v3813
        %v3818 = vsub.f32 %v3812, %v3814
        %v3819 = vsub.f32 %v3812, %v3815
        %v3820 = vsub.f32 %v3812, %v3816
        %v3821 = vadd.f32 %v3817, %v3174
        %v3822 = vadd.f32 %v3818, %v3178
        %v3823 = vadd.f32 %v3819, %v3182
        %v3824 = vadd.f32 %v3820, %v3186
        %v3825 = vsel %vm2604, %v3821, inf
        %v3826 = vsel %vm2604, %v3822, inf
        %v3827 = vsel %vm2604, %v3823, inf
        %v3828 = vsel %vm2604, %v3824, inf
        %v3829 = vmin.f32 %v3825, %v3826
        %v3830 = vmin.f32 %v3827, %v3828
        %v3831 = vmin.f32 %v3829, %v3830
        %3832 = vmin.xlane.f32.xlu0 %v3831
        %v3833 = vpop.xlane.xlu0 %3832
        %vm3834 = vcmp.eq.f32.partialorder %v3821, %v3833
        %vm3835 = vcmp.eq.f32.partialorder %v3822, %v3833
        %vm3836 = vcmp.eq.f32.partialorder %v3823, %v3833
        %vm3837 = vcmp.eq.f32.partialorder %v3824, %v3833
        %v3838 = vsel %vm3834, %v3196, 512
        %v3839 = vsel %vm3835, %v3197, 512
        %v3840 = vsel %vm3836, %v3198, 512
        %v3841 = vsel %vm3837, %v3199, 512
        %v3842 = vsel %vm2604, %v3838, 2147483647
        %v3843 = vsel %vm2604, %v3839, 2147483647
        %v3844 = vsel %vm2604, %v3840, 2147483647
        %v3845 = vsel %vm2604, %v3841, 2147483647
        %vm3846 = vcmp.lt.s32.totalorder %v3842, %v3843
        %v3847 = vsel %vm3846, %v3842, %v3843
        %vm3848 = vcmp.lt.s32.totalorder %v3844, %v3845
        %v3849 = vsel %vm3848, %v3844, %v3845
        %vm3850 = vcmp.lt.s32.totalorder %v3847, %v3849
        %v3851 = vsel %vm3850, %v3847, %v3849
        %v3852 = vand.u32 %v3851, 65535
        %v3853 = vshra.s32 %v3851, 16
        %v3854 = vcvt.s32.f32 %v3852
        %v3855 = vcvt.s32.f32 %v3853
        %3856 = vmin.xlane.f32.xlu0 %v3855
        %v3857 = vpop.xlane.xlu0 %3856
        %vm3858 = vcmp.eq.f32.partialorder %v3855, %v3857
        %v3859 = vsel %vm3858, %v3854, inf
        %3860 = vmin.xlane.f32.xlu0 %v3859
        %v3861 = vpop.xlane.xlu0 %3860
        %v3862 = vcvt.f32.s32 %v3861
        %v3863 = vcvt.f32.s32 %v3857
        %v3864 = vshll.u32 %v3863, 16
        %v3865 = vadd.s32 %v3864, %v3862
        %vm3866 = vcmp.eq.s32.totalorder %v3196, %v3865
        %vm3867 = vcmp.eq.s32.totalorder %v3197, %v3865
        %vm3868 = vcmp.eq.s32.totalorder %v3198, %v3865
        %vm3869 = vcmp.eq.s32.totalorder %v3199, %v3865
        %v3870 = vsel %vm3866, 1, 0
        %v3871 = vsel %vm3867, 1, 0
        %v3872 = vsel %vm3868, 1, 0
        %v3873 = vsel %vm3869, 1, 0
        %v3874 = vcvt.s32.f32 %v3870
        %v3875 = vcvt.s32.f32 %v3871
        %v3876 = vcvt.s32.f32 %v3872
        %v3877 = vcvt.s32.f32 %v3873
        %3878 = vmatprep.subr.mxu0 0.0
        %3879 = vmatpush1.msra.mxu0 %v2926
        %3880 = vmatprep.subr.mxu0 0.0
        %3881 = vmatpush1.msra.mxu0 %v2927
        %3882 = vmatprep.subr.mxu0 0.0
        %3883 = vmatpush1.msra.mxu0 %v2928
        %3884 = vmatprep.subr.mxu0 0.0
        %3885 = vmatpush1.msra.mxu0 %v2929
        %3886 = vmatprep.subr.mxu0 0.0
        %3887 = vmatpush1.msra.mxu0 %v2930
        %3888 = vmatprep.subr.mxu0 0.0
        %3889 = vmatpush1.msra.mxu0 %v2931
        %3890 = vmatprep.subr.mxu0 0.0
        %3891 = vmatpush1.msra.mxu0 %v2932
        %3892 = vmatprep.subr.mxu0 0.0
        %3893 = vmatpush1.msra.mxu0 %v2933
        %3894 = vmatprep.subr.mxu0 0.0
        %3895 = vmatpush1.msra.mxu0 %v2934
        %3896 = vmatprep.subr.mxu0 0.0
        %3897 = vmatpush1.msra.mxu0 %v2935
        %3898 = vmatprep.subr.mxu0 0.0
        %3899 = vmatpush1.msra.mxu0 %v2936
        %3900 = vmatprep.subr.mxu0 0.0
        %3901 = vmatpush1.msra.mxu0 %v2937
        %3902 = vmatprep.subr.mxu0 0.0
        %3903 = vmatpush1.msra.mxu0 %v2938
        %3904 = vmatprep.subr.mxu0 0.0
        %3905 = vmatpush1.msra.mxu0 %v2939
        %3906 = vmatprep.subr.mxu0 0.0
        %3907 = vmatpush1.msra.mxu0 %v2940
        %3908 = vmatprep.subr.mxu0 0.0
        %3909 = vmatpush1.msra.mxu0 %v2941
        %3910 = vmatprep.subr.mxu0 0.0
        %3911 = vmatpush1.msra.mxu0 %v2942
        %3912 = vmatprep.subr.mxu0 0.0
        %3913 = vmatpush1.msra.mxu0 %v2943
        %3914 = vmatprep.subr.mxu0 0.0
        %3915 = vmatpush1.msra.mxu0 %v2944
        %3916 = vmatprep.subr.mxu0 0.0
        %3917 = vmatpush1.msra.mxu0 %v2945
        %3918 = vmatprep.subr.mxu0 0.0
        %3919 = vmatpush1.msra.mxu0 %v2946
        %3920 = vmatprep.subr.mxu0 0.0
        %3921 = vmatpush1.msra.mxu0 %v2947
        %3922 = vmatprep.subr.mxu0 0.0
        %3923 = vmatpush1.msra.mxu0 %v2948
        %3924 = vmatprep.subr.mxu0 0.0
        %3925 = vmatpush1.msra.mxu0 %v2949
        %3926 = vmatprep.subr.mxu0 0.0
        %3927 = vmatpush1.msra.mxu0 %v2950
        %3928 = vmatprep.subr.mxu0 0.0
        %3929 = vmatpush1.msra.mxu0 %v2951
        %3930 = vmatprep.subr.mxu0 0.0
        %3931 = vmatpush1.msra.mxu0 %v2952
        %3932 = vmatprep.subr.mxu0 0.0
        %3933 = vmatpush1.msra.mxu0 %v2953
        %3934 = vmatprep.subr.mxu0 0.0
        %3935 = vmatpush1.msra.mxu0 %v2954
        %3936 = vmatprep.subr.mxu0 0.0
        %3937 = vmatpush1.msra.mxu0 %v2955
        %3938 = vmatprep.subr.mxu0 0.0
        %3939 = vmatpush1.msra.mxu0 %v2956
        %3940 = vmatprep.subr.mxu0 0.0
        %3941 = vmatpush1.msra.mxu0 %v2957
        %3942 = vmatprep.mubr.f32.mxu0 %v3875
        %3943 = vmatmul.mubr.f32.gmra.mrb[0].mxu0 %v3874
        %v3944 = vpop.f32.mrb[0].mxu0
        %v3945 = vadd.f32 0.0, %v3944
        %v3946 = vpop.f32.mrb[0].mxu0
        %3947 = vdwg.mxu0
        %3948 = vmatprep.subr.mxu0 0.0
        %3949 = vmatpush1.msra.mxu0 %v2958
        %3950 = vmatprep.subr.mxu0 0.0
        %3951 = vmatpush1.msra.mxu0 %v2959
        %3952 = vmatprep.subr.mxu0 0.0
        %3953 = vmatpush1.msra.mxu0 %v2960
        %3954 = vmatprep.subr.mxu0 0.0
        %3955 = vmatpush1.msra.mxu0 %v2961
        %3956 = vmatprep.subr.mxu0 0.0
        %3957 = vmatpush1.msra.mxu0 %v2962
        %3958 = vmatprep.subr.mxu0 0.0
        %3959 = vmatpush1.msra.mxu0 %v2963
        %3960 = vmatprep.subr.mxu0 0.0
        %3961 = vmatpush1.msra.mxu0 %v2964
        %3962 = vmatprep.subr.mxu0 0.0
        %3963 = vmatpush1.msra.mxu0 %v2965
        %3964 = vmatprep.subr.mxu0 0.0
        %3965 = vmatpush1.msra.mxu0 %v2966
        %3966 = vmatprep.subr.mxu0 0.0
        %3967 = vmatpush1.msra.mxu0 %v2967
        %3968 = vmatprep.subr.mxu0 0.0
        %3969 = vmatpush1.msra.mxu0 %v2968
        %3970 = vmatprep.subr.mxu0 0.0
        %3971 = vmatpush1.msra.mxu0 %v2969
        %3972 = vmatprep.subr.mxu0 0.0
        %3973 = vmatpush1.msra.mxu0 %v2970
        %3974 = vmatprep.subr.mxu0 0.0
        %3975 = vmatpush1.msra.mxu0 %v2971
        %3976 = vmatprep.subr.mxu0 0.0
        %3977 = vmatpush1.msra.mxu0 %v2972
        %3978 = vmatprep.subr.mxu0 0.0
        %3979 = vmatpush1.msra.mxu0 %v2973
        %3980 = vmatprep.subr.mxu0 0.0
        %3981 = vmatpush1.msra.mxu0 %v2974
        %3982 = vmatprep.subr.mxu0 0.0
        %3983 = vmatpush1.msra.mxu0 %v2975
        %3984 = vmatprep.subr.mxu0 0.0
        %3985 = vmatpush1.msra.mxu0 %v2976
        %3986 = vmatprep.subr.mxu0 0.0
        %3987 = vmatpush1.msra.mxu0 %v2977
        %3988 = vmatprep.subr.mxu0 0.0
        %3989 = vmatpush1.msra.mxu0 %v2978
        %3990 = vmatprep.subr.mxu0 0.0
        %3991 = vmatpush1.msra.mxu0 %v2979
        %3992 = vmatprep.subr.mxu0 0.0
        %3993 = vmatpush1.msra.mxu0 %v2980
        %3994 = vmatprep.subr.mxu0 0.0
        %3995 = vmatpush1.msra.mxu0 %v2981
        %3996 = vmatprep.subr.mxu0 0.0
        %3997 = vmatpush1.msra.mxu0 %v2982
        %3998 = vmatprep.subr.mxu0 0.0
        %3999 = vmatpush1.msra.mxu0 %v2983
        %4000 = vmatprep.subr.mxu0 0.0
        %4001 = vmatpush1.msra.mxu0 %v2984
        %4002 = vmatprep.subr.mxu0 0.0
        %4003 = vmatpush1.msra.mxu0 %v2985
        %4004 = vmatprep.subr.mxu0 0.0
        %4005 = vmatpush1.msra.mxu0 %v2986
        %4006 = vmatprep.subr.mxu0 0.0
        %4007 = vmatpush1.msra.mxu0 %v2987
        %4008 = vmatprep.subr.mxu0 0.0
        %4009 = vmatpush1.msra.mxu0 %v2988
        %4010 = vmatprep.subr.mxu0 0.0
        %4011 = vmatpush1.msra.mxu0 %v2989
        %4012 = vmatprep.mubr.f32.mxu0 %v3877
        %4013 = vmatmul.mubr.f32.gmra.mrb[0].mxu0 %v3876
        %v4014 = vpop.f32.mrb[0].mxu0
        %v4015 = vadd.f32 %v3945, %v4014
        %v4016 = vpop.f32.mrb[0].mxu0
        %4017 = vdwg.mxu0
        %v4018 = vsub.f32 %v4015, %v2906
        %v4019 = vmul.f32 %v4018, %v4018
        %v4020 = vsel %vm3158, %v4019, 0.0
        %4021 = vadd.xlane.f32.xlu0 %v4020
        %v4022 = vpop.xlane.xlu0 %4021
        %v4023 = vsel %vm2604, %v4022, 0.0
        %v4024 = vrot.slane %v4023, 4
        %v4025 = vadd.f32 %v4023, %v4024
        %v4026 = vrot.slane %v4025, 2
        %v4027 = vadd.f32 %v4025, %v4026
        %v4028 = vrot.slane %v4027, 1
        %v4029 = vadd.f32 %v4027, %v4028
        %v4030 = vadd.f32 %v3722, %v4029
        %4032 = vrot.lane.b32.xlu0 %v3723, 64
        %v4033 = vpop.permute.xlu0 %4032
        %v4035 = vsel %vm2366, %v4033, 0
        %4037 = vmatprep.subr.bf16.mxu0 %v3041
        %4038 = vmatpush1.bf16.msra.mxu0 %v3040
        %4039 = vmatprep.subr.bf16.mxu0 %v3045
        %4040 = vmatpush1.bf16.msra.mxu0 %v3044
        %4041 = vmatprep.subr.bf16.mxu0 %v3049
        %4042 = vmatpush1.bf16.msra.mxu0 %v3048
        %4043 = vmatprep.subr.bf16.mxu0 %v3053
        %4044 = vmatpush1.bf16.msra.mxu0 %v3052
        %4045 = vmatprep.subr.bf16.mxu0 0
        %4046 = vmatpush1.bf16.msra.mxu0 0
        %4047 = vmatprep.subr.bf16.mxu0 0
        %4048 = vmatpush1.bf16.msra.mxu0 0
        %4049 = vmatprep.subr.bf16.mxu0 0
        %4050 = vmatpush1.bf16.msra.mxu0 0
        %4051 = vmatprep.subr.bf16.mxu0 0
        %4052 = vmatpush1.bf16.msra.mxu0 0
        %4053 = vmatprep.subr.bf16.mxu0 0
        %4054 = vmatpush1.bf16.msra.mxu0 0
        %4055 = vmatprep.subr.bf16.mxu0 0
        %4056 = vmatpush1.bf16.msra.mxu0 0
        %4057 = vmatprep.subr.bf16.mxu0 0
        %4058 = vmatpush1.bf16.msra.mxu0 0
        %4059 = vmatprep.subr.bf16.mxu0 0
        %4060 = vmatpush1.bf16.msra.mxu0 0
        %4061 = vmatprep.subr.bf16.mxu0 0
        %4062 = vmatpush1.bf16.msra.mxu0 0
        %4063 = vmatprep.subr.bf16.mxu0 0
        %4064 = vmatpush1.bf16.msra.mxu0 0
        %4065 = vmatprep.subr.bf16.mxu0 0
        %4066 = vmatpush1.bf16.msra.mxu0 0
        %4067 = vmatprep.subr.bf16.mxu0 0
        %4068 = vmatpush1.bf16.msra.mxu0 0
        %4069 = vmatprep.mubr.bf16.mxu0 0
        %4070 = vmatmul.mubr.bf16.gmra.mrb[0].mxu0 %v4035
        %v4071 = vpop.f32.mrb[0].mxu0
        %v4072 = vadd.f32 0.0, %v4071
        %v4073 = vpop.f32.mrb[0].mxu0
        %v4074 = vadd.f32 0.0, %v4073
        %v4075 = vpop.f32.mrb[0].mxu0
        %v4076 = vpop.f32.mrb[0].mxu0
        %4077 = vdwg.mxu0
        %4078 = vmatprep.subr.bf16.mxu0 %v3043
        %4079 = vmatpush1.bf16.msra.mxu0 %v3042
        %4080 = vmatprep.subr.bf16.mxu0 %v3047
        %4081 = vmatpush1.bf16.msra.mxu0 %v3046
        %4082 = vmatprep.subr.bf16.mxu0 %v3051
        %4083 = vmatpush1.bf16.msra.mxu0 %v3050
        %4084 = vmatprep.subr.bf16.mxu0 %v3055
        %4085 = vmatpush1.bf16.msra.mxu0 %v3054
        %4086 = vmatprep.subr.bf16.mxu0 0
        %4087 = vmatpush1.bf16.msra.mxu0 0
        %4088 = vmatprep.subr.bf16.mxu0 0
        %4089 = vmatpush1.bf16.msra.mxu0 0
        %4090 = vmatprep.subr.bf16.mxu0 0
        %4091 = vmatpush1.bf16.msra.mxu0 0
        %4092 = vmatprep.subr.bf16.mxu0 0
        %4093 = vmatpush1.bf16.msra.mxu0 0
        %4094 = vmatprep.subr.bf16.mxu0 0
        %4095 = vmatpush1.bf16.msra.mxu0 0
        %4096 = vmatprep.subr.bf16.mxu0 0
        %4097 = vmatpush1.bf16.msra.mxu0 0
        %4098 = vmatprep.subr.bf16.mxu0 0
        %4099 = vmatpush1.bf16.msra.mxu0 0
        %4100 = vmatprep.subr.bf16.mxu0 0
        %4101 = vmatpush1.bf16.msra.mxu0 0
        %4102 = vmatprep.subr.bf16.mxu0 0
        %4103 = vmatpush1.bf16.msra.mxu0 0
        %4104 = vmatprep.subr.bf16.mxu0 0
        %4105 = vmatpush1.bf16.msra.mxu0 0
        %4106 = vmatprep.subr.bf16.mxu0 0
        %4107 = vmatpush1.bf16.msra.mxu0 0
        %4108 = vmatprep.subr.bf16.mxu0 0
        %4109 = vmatpush1.bf16.msra.mxu0 0
        %4110 = vmatprep.mubr.bf16.mxu0 0
        %4111 = vmatmul.mubr.bf16.gmra.mrb[0].mxu0 %v4035
        %v4112 = vpop.f32.mrb[0].mxu0
        %v4113 = vadd.f32 0.0, %v4112
        %v4114 = vpop.f32.mrb[0].mxu0
        %v4115 = vadd.f32 0.0, %v4114
        %v4116 = vpop.f32.mrb[0].mxu0
        %v4117 = vpop.f32.mrb[0].mxu0
        %4118 = vdwg.mxu0
        %4120 = vrot.lane.b32.xlu0 %v3809, 64
        %v4121 = vpop.permute.xlu0 %4120
        %v4123 = vsel %vm3158, %v4121, 0.0
        %4124 = vadd.xlane.f32.xlu0 %v4123
        %v4125 = vpop.xlane.xlu0 %4124
        %v4126 = vmul.f32 %v4072, 2.0
        %v4127 = vmul.f32 %v4074, 2.0
        %v4128 = vmul.f32 %v4113, 2.0
        %v4129 = vmul.f32 %v4115, 2.0
        %v4130 = vsub.f32 %v4125, %v4126
        %v4131 = vsub.f32 %v4125, %v4127
        %v4132 = vsub.f32 %v4125, %v4128
        %v4133 = vsub.f32 %v4125, %v4129
        %v4134 = vadd.f32 %v4130, %v3174
        %v4135 = vadd.f32 %v4131, %v3178
        %v4136 = vadd.f32 %v4132, %v3182
        %v4137 = vadd.f32 %v4133, %v3186
        %v4138 = vsel %vm2604, %v4134, inf
        %v4139 = vsel %vm2604, %v4135, inf
        %v4140 = vsel %vm2604, %v4136, inf
        %v4141 = vsel %vm2604, %v4137, inf
        %v4142 = vmin.f32 %v4138, %v4139
        %v4143 = vmin.f32 %v4140, %v4141
        %v4144 = vmin.f32 %v4142, %v4143
        %4145 = vmin.xlane.f32.xlu0 %v4144
        %v4146 = vpop.xlane.xlu0 %4145
        %vm4147 = vcmp.eq.f32.partialorder %v4134, %v4146
        %vm4148 = vcmp.eq.f32.partialorder %v4135, %v4146
        %vm4149 = vcmp.eq.f32.partialorder %v4136, %v4146
        %vm4150 = vcmp.eq.f32.partialorder %v4137, %v4146
        %v4151 = vsel %vm4147, %v3196, 512
        %v4152 = vsel %vm4148, %v3197, 512
        %v4153 = vsel %vm4149, %v3198, 512
        %v4154 = vsel %vm4150, %v3199, 512
        %v4155 = vsel %vm2604, %v4151, 2147483647
        %v4156 = vsel %vm2604, %v4152, 2147483647
        %v4157 = vsel %vm2604, %v4153, 2147483647
        %v4158 = vsel %vm2604, %v4154, 2147483647
        %vm4159 = vcmp.lt.s32.totalorder %v4155, %v4156
        %v4160 = vsel %vm4159, %v4155, %v4156
        %vm4161 = vcmp.lt.s32.totalorder %v4157, %v4158
        %v4162 = vsel %vm4161, %v4157, %v4158
        %vm4163 = vcmp.lt.s32.totalorder %v4160, %v4162
        %v4164 = vsel %vm4163, %v4160, %v4162
        %v4165 = vand.u32 %v4164, 65535
        %v4166 = vshra.s32 %v4164, 16
        %v4167 = vcvt.s32.f32 %v4165
        %v4168 = vcvt.s32.f32 %v4166
        %4169 = vmin.xlane.f32.xlu0 %v4168
        %v4170 = vpop.xlane.xlu0 %4169
        %vm4171 = vcmp.eq.f32.partialorder %v4168, %v4170
        %v4172 = vsel %vm4171, %v4167, inf
        %4173 = vmin.xlane.f32.xlu0 %v4172
        %v4174 = vpop.xlane.xlu0 %4173
        %v4175 = vcvt.f32.s32 %v4174
        %v4176 = vcvt.f32.s32 %v4170
        %v4177 = vshll.u32 %v4176, 16
        %v4178 = vadd.s32 %v4177, %v4175
        %vm4179 = vcmp.eq.s32.totalorder %v3196, %v4178
        %vm4180 = vcmp.eq.s32.totalorder %v3197, %v4178
        %vm4181 = vcmp.eq.s32.totalorder %v3198, %v4178
        %vm4182 = vcmp.eq.s32.totalorder %v3199, %v4178
        %v4183 = vsel %vm4179, 1, 0
        %v4184 = vsel %vm4180, 1, 0
        %v4185 = vsel %vm4181, 1, 0
        %v4186 = vsel %vm4182, 1, 0
        %v4187 = vcvt.s32.f32 %v4183
        %v4188 = vcvt.s32.f32 %v4184
        %v4189 = vcvt.s32.f32 %v4185
        %v4190 = vcvt.s32.f32 %v4186
        %4191 = vmatprep.subr.mxu0 0.0
        %4192 = vmatpush1.msra.mxu0 %v2926
        %4193 = vmatprep.subr.mxu0 0.0
        %4194 = vmatpush1.msra.mxu0 %v2927
        %4195 = vmatprep.subr.mxu0 0.0
        %4196 = vmatpush1.msra.mxu0 %v2928
        %4197 = vmatprep.subr.mxu0 0.0
        %4198 = vmatpush1.msra.mxu0 %v2929
        %4199 = vmatprep.subr.mxu0 0.0
        %4200 = vmatpush1.msra.mxu0 %v2930
        %4201 = vmatprep.subr.mxu0 0.0
        %4202 = vmatpush1.msra.mxu0 %v2931
        %4203 = vmatprep.subr.mxu0 0.0
        %4204 = vmatpush1.msra.mxu0 %v2932
        %4205 = vmatprep.subr.mxu0 0.0
        %4206 = vmatpush1.msra.mxu0 %v2933
        %4207 = vmatprep.subr.mxu0 0.0
        %4208 = vmatpush1.msra.mxu0 %v2934
        %4209 = vmatprep.subr.mxu0 0.0
        %4210 = vmatpush1.msra.mxu0 %v2935
        %4211 = vmatprep.subr.mxu0 0.0
        %4212 = vmatpush1.msra.mxu0 %v2936
        %4213 = vmatprep.subr.mxu0 0.0
        %4214 = vmatpush1.msra.mxu0 %v2937
        %4215 = vmatprep.subr.mxu0 0.0
        %4216 = vmatpush1.msra.mxu0 %v2938
        %4217 = vmatprep.subr.mxu0 0.0
        %4218 = vmatpush1.msra.mxu0 %v2939
        %4219 = vmatprep.subr.mxu0 0.0
        %4220 = vmatpush1.msra.mxu0 %v2940
        %4221 = vmatprep.subr.mxu0 0.0
        %4222 = vmatpush1.msra.mxu0 %v2941
        %4223 = vmatprep.subr.mxu0 0.0
        %4224 = vmatpush1.msra.mxu0 %v2942
        %4225 = vmatprep.subr.mxu0 0.0
        %4226 = vmatpush1.msra.mxu0 %v2943
        %4227 = vmatprep.subr.mxu0 0.0
        %4228 = vmatpush1.msra.mxu0 %v2944
        %4229 = vmatprep.subr.mxu0 0.0
        %4230 = vmatpush1.msra.mxu0 %v2945
        %4231 = vmatprep.subr.mxu0 0.0
        %4232 = vmatpush1.msra.mxu0 %v2946
        %4233 = vmatprep.subr.mxu0 0.0
        %4234 = vmatpush1.msra.mxu0 %v2947
        %4235 = vmatprep.subr.mxu0 0.0
        %4236 = vmatpush1.msra.mxu0 %v2948
        %4237 = vmatprep.subr.mxu0 0.0
        %4238 = vmatpush1.msra.mxu0 %v2949
        %4239 = vmatprep.subr.mxu0 0.0
        %4240 = vmatpush1.msra.mxu0 %v2950
        %4241 = vmatprep.subr.mxu0 0.0
        %4242 = vmatpush1.msra.mxu0 %v2951
        %4243 = vmatprep.subr.mxu0 0.0
        %4244 = vmatpush1.msra.mxu0 %v2952
        %4245 = vmatprep.subr.mxu0 0.0
        %4246 = vmatpush1.msra.mxu0 %v2953
        %4247 = vmatprep.subr.mxu0 0.0
        %4248 = vmatpush1.msra.mxu0 %v2954
        %4249 = vmatprep.subr.mxu0 0.0
        %4250 = vmatpush1.msra.mxu0 %v2955
        %4251 = vmatprep.subr.mxu0 0.0
        %4252 = vmatpush1.msra.mxu0 %v2956
        %4253 = vmatprep.subr.mxu0 0.0
        %4254 = vmatpush1.msra.mxu0 %v2957
        %4255 = vmatprep.mubr.f32.mxu0 %v4188
        %4256 = vmatmul.mubr.f32.gmra.mrb[0].mxu0 %v4187
        %v4257 = vpop.f32.mrb[0].mxu0
        %v4258 = vadd.f32 0.0, %v4257
        %v4259 = vpop.f32.mrb[0].mxu0
        %4260 = vdwg.mxu0
        %4261 = vmatprep.subr.mxu0 0.0
        %4262 = vmatpush1.msra.mxu0 %v2958
        %4263 = vmatprep.subr.mxu0 0.0
        %4264 = vmatpush1.msra.mxu0 %v2959
        %4265 = vmatprep.subr.mxu0 0.0
        %4266 = vmatpush1.msra.mxu0 %v2960
        %4267 = vmatprep.subr.mxu0 0.0
        %4268 = vmatpush1.msra.mxu0 %v2961
        %4269 = vmatprep.subr.mxu0 0.0
        %4270 = vmatpush1.msra.mxu0 %v2962
        %4271 = vmatprep.subr.mxu0 0.0
        %4272 = vmatpush1.msra.mxu0 %v2963
        %4273 = vmatprep.subr.mxu0 0.0
        %4274 = vmatpush1.msra.mxu0 %v2964
        %4275 = vmatprep.subr.mxu0 0.0
        %4276 = vmatpush1.msra.mxu0 %v2965
        %4277 = vmatprep.subr.mxu0 0.0
        %4278 = vmatpush1.msra.mxu0 %v2966
        %4279 = vmatprep.subr.mxu0 0.0
        %4280 = vmatpush1.msra.mxu0 %v2967
        %4281 = vmatprep.subr.mxu0 0.0
        %4282 = vmatpush1.msra.mxu0 %v2968
        %4283 = vmatprep.subr.mxu0 0.0
        %4284 = vmatpush1.msra.mxu0 %v2969
        %4285 = vmatprep.subr.mxu0 0.0
        %4286 = vmatpush1.msra.mxu0 %v2970
        %4287 = vmatprep.subr.mxu0 0.0
        %4288 = vmatpush1.msra.mxu0 %v2971
        %4289 = vmatprep.subr.mxu0 0.0
        %4290 = vmatpush1.msra.mxu0 %v2972
        %4291 = vmatprep.subr.mxu0 0.0
        %4292 = vmatpush1.msra.mxu0 %v2973
        %4293 = vmatprep.subr.mxu0 0.0
        %4294 = vmatpush1.msra.mxu0 %v2974
        %4295 = vmatprep.subr.mxu0 0.0
        %4296 = vmatpush1.msra.mxu0 %v2975
        %4297 = vmatprep.subr.mxu0 0.0
        %4298 = vmatpush1.msra.mxu0 %v2976
        %4299 = vmatprep.subr.mxu0 0.0
        %4300 = vmatpush1.msra.mxu0 %v2977
        %4301 = vmatprep.subr.mxu0 0.0
        %4302 = vmatpush1.msra.mxu0 %v2978
        %4303 = vmatprep.subr.mxu0 0.0
        %4304 = vmatpush1.msra.mxu0 %v2979
        %4305 = vmatprep.subr.mxu0 0.0
        %4306 = vmatpush1.msra.mxu0 %v2980
        %4307 = vmatprep.subr.mxu0 0.0
        %4308 = vmatpush1.msra.mxu0 %v2981
        %4309 = vmatprep.subr.mxu0 0.0
        %4310 = vmatpush1.msra.mxu0 %v2982
        %4311 = vmatprep.subr.mxu0 0.0
        %4312 = vmatpush1.msra.mxu0 %v2983
        %4313 = vmatprep.subr.mxu0 0.0
        %4314 = vmatpush1.msra.mxu0 %v2984
        %4315 = vmatprep.subr.mxu0 0.0
        %4316 = vmatpush1.msra.mxu0 %v2985
        %4317 = vmatprep.subr.mxu0 0.0
        %4318 = vmatpush1.msra.mxu0 %v2986
        %4319 = vmatprep.subr.mxu0 0.0
        %4320 = vmatpush1.msra.mxu0 %v2987
        %4321 = vmatprep.subr.mxu0 0.0
        %4322 = vmatpush1.msra.mxu0 %v2988
        %4323 = vmatprep.subr.mxu0 0.0
        %4324 = vmatpush1.msra.mxu0 %v2989
        %4325 = vmatprep.mubr.f32.mxu0 %v4190
        %4326 = vmatmul.mubr.f32.gmra.mrb[0].mxu0 %v4189
        %v4327 = vpop.f32.mrb[0].mxu0
        %v4328 = vadd.f32 %v4258, %v4327
        %v4329 = vpop.f32.mrb[0].mxu0
        %4330 = vdwg.mxu0
        %4332 = vrot.lane.b32.xlu0 %v2906, 64
        %v4333 = vpop.permute.xlu0 %4332
        %v4335 = vsub.f32 %v4328, %v4333
        %v4336 = vmul.f32 %v4335, %v4335
        %v4337 = vsel %vm3158, %v4336, 0.0
        %4338 = vadd.xlane.f32.xlu0 %v4337
        %v4339 = vpop.xlane.xlu0 %4338
        %v4340 = vsel %vm2604, %v4339, 0.0
        %v4341 = vrot.slane %v4340, 4
        %v4342 = vadd.f32 %v4340, %v4341
        %v4343 = vrot.slane %v4342, 2
        %v4344 = vadd.f32 %v4342, %v4343
        %v4345 = vrot.slane %v4344, 1
        %v4346 = vadd.f32 %v4344, %v4345
        %v4347 = vadd.f32 %v4030, %v4346
        %4349 = vrot.lane.b32.xlu0 %v3703, 64
        %v4350 = vpop.permute.xlu0 %4349
        %4353 = vrot.lane.b32.xlu0 %v4328, 64
        %v4354 = vpop.permute.xlu0 %4353
        %v4356 = vsel %vm2366, %v3390, %v4350
        %v4357 = vsel %vm2366, %v4015, %v4354
        %vm4358 = vcmask 7168
        %v4359 = vsel %vm4358, %v3240, %v3553
        %vm4360 = vcmask 15360
        %v4361 = vsel %vm4360, %v4359, %v3865
        %vm4362 = vcmask 23552
        %v4363 = vsel %vm4362, %v4361, %v4178
        %vm4364 = vcmask 27648
        %4365 = vst.msk [vmem:[%s1099] sm:$0xf] %vm4364, %v4363
        %v4366 = vpack.c.bf16 %v4356, %v4356
        %v4367 = vpack.c.bf16 %v4357, %v4357
        %v4369 = vshrl.u32 %v4366, 16
        %v4371 = vshll.u32 %v4366, 16
        %v4373 = vrot.slane %v4371, 1
        %v4374 = vor.u32 %v4369, %v4373
        %v4376 = vshrl.u32 %v4367, 16
        %v4378 = vshll.u32 %v4367, 16
        %v4380 = vrot.slane %v4378, 1
        %v4381 = vor.u32 %v4376, %v4380
        %v4384 = vsel %vm1161, %v4374, 0
        %v4385 = vsel %vm1161, %v4381, 0
        %v4386 = vrot.slane %v4369, 7
        %v4387 = vor.u32 %v4386, %v4371
        %v4388 = vrot.slane %v4376, 7
        %v4389 = vor.u32 %v4388, %v4378
        %v4392 = vsel %vm1182, 0, %v4387
        %v4393 = vsel %vm1182, 0, %v4389
        %v4394 = vld [vmem:[%s35] sm:$0xf]
        %v4395 = vld [vmem:[%s35 + $0x4] sm:$0xf]
        %v4396 = vld [vmem:[%s35 + $0x8] sm:$0xf]
        %v4397 = vld [vmem:[%s35 + $0xc] sm:$0xf]
        %v4398 = vld [vmem:[%s35 + $0x10] sm:$0xf]
        %v4399 = vld [vmem:[%s35 + $0x14] sm:$0xf]
        %v4400 = vld [vmem:[%s35 + $0x18] sm:$0xf]
        %v4401 = vld [vmem:[%s35 + $0x1c] sm:$0xf]
        %v4402 = vld [vmem:[%s35 + $0x20] sm:$0xf]
        %v4403 = vld [vmem:[%s35 + $0x24] sm:$0xf]
        %v4404 = vld [vmem:[%s35 + $0x28] sm:$0xf]
        %v4405 = vld [vmem:[%s35 + $0x2c] sm:$0xf]
        %v4406 = vld [vmem:[%s35 + $0x30] sm:$0xf]
        %v4407 = vld [vmem:[%s35 + $0x34] sm:$0xf]
        %v4408 = vld [vmem:[%s35 + $0x38] sm:$0xf]
        %v4409 = vld [vmem:[%s35 + $0x3c] sm:$0xf]
        %v4410 = vld [vmem:[%s35 + $0x40] sm:$0xf]
        %v4411 = vld [vmem:[%s35 + $0x44] sm:$0xf]
        %v4412 = vld [vmem:[%s35 + $0x48] sm:$0xf]
        %v4413 = vld [vmem:[%s35 + $0x4c] sm:$0xf]
        %v4414 = vld [vmem:[%s35 + $0x50] sm:$0xf]
        %v4415 = vld [vmem:[%s35 + $0x54] sm:$0xf]
        %v4416 = vld [vmem:[%s35 + $0x58] sm:$0xf]
        %v4417 = vld [vmem:[%s35 + $0x5c] sm:$0xf]
        %v4418 = vld [vmem:[%s35 + $0x60] sm:$0xf]
        %v4419 = vld [vmem:[%s35 + $0x64] sm:$0xf]
        %v4420 = vld [vmem:[%s35 + $0x68] sm:$0xf]
        %v4421 = vld [vmem:[%s35 + $0x6c] sm:$0xf]
        %v4422 = vld [vmem:[%s35 + $0x70] sm:$0xf]
        %v4423 = vld [vmem:[%s35 + $0x74] sm:$0xf]
        %v4424 = vld [vmem:[%s35 + $0x78] sm:$0xf]
        %v4425 = vld [vmem:[%s35 + $0x7c] sm:$0xf]
        %v4426 = vld [vmem:[%s35 + $0x80] sm:$0xf]
        %v4427 = vld [vmem:[%s35 + $0x84] sm:$0xf]
        %v4428 = vld [vmem:[%s35 + $0x88] sm:$0xf]
        %v4429 = vld [vmem:[%s35 + $0x8c] sm:$0xf]
        %v4430 = vld [vmem:[%s35 + $0x90] sm:$0xf]
        %v4431 = vld [vmem:[%s35 + $0x94] sm:$0xf]
        %v4432 = vld [vmem:[%s35 + $0x98] sm:$0xf]
        %v4433 = vld [vmem:[%s35 + $0x9c] sm:$0xf]
        %v4434 = vld [vmem:[%s35 + $0xa0] sm:$0xf]
        %v4435 = vld [vmem:[%s35 + $0xa4] sm:$0xf]
        %v4436 = vld [vmem:[%s35 + $0xa8] sm:$0xf]
        %v4437 = vld [vmem:[%s35 + $0xac] sm:$0xf]
        %v4438 = vld [vmem:[%s35 + $0xb0] sm:$0xf]
        %v4439 = vld [vmem:[%s35 + $0xb4] sm:$0xf]
        %v4440 = vld [vmem:[%s35 + $0xb8] sm:$0xf]
        %v4441 = vld [vmem:[%s35 + $0xbc] sm:$0xf]
        %v4442 = vld [vmem:[%s35 + $0xc0] sm:$0xf]
        %v4443 = vld [vmem:[%s35 + $0xc4] sm:$0xf]
        %v4444 = vld [vmem:[%s35 + $0xc8] sm:$0xf]
        %v4445 = vld [vmem:[%s35 + $0xcc] sm:$0xf]
        %v4446 = vld [vmem:[%s35 + $0xd0] sm:$0xf]
        %v4447 = vld [vmem:[%s35 + $0xd4] sm:$0xf]
        %v4448 = vld [vmem:[%s35 + $0xd8] sm:$0xf]
        %v4449 = vld [vmem:[%s35 + $0xdc] sm:$0xf]
        %v4450 = vld [vmem:[%s35 + $0xe0] sm:$0xf]
        %v4451 = vld [vmem:[%s35 + $0xe4] sm:$0xf]
        %v4452 = vld [vmem:[%s35 + $0xe8] sm:$0xf]
        %v4453 = vld [vmem:[%s35 + $0xec] sm:$0xf]
        %v4454 = vld [vmem:[%s35 + $0xf0] sm:$0xf]
        %v4455 = vld [vmem:[%s35 + $0xf4] sm:$0xf]
        %v4456 = vld [vmem:[%s35 + $0xf8] sm:$0xf]
        %v4457 = vld [vmem:[%s35 + $0xfc] sm:$0xf]
        %v4458 = vld [vmem:[%s35 + $0x100] sm:$0xf]
        %v4459 = vld [vmem:[%s35 + $0x104] sm:$0xf]
        %v4460 = vld [vmem:[%s35 + $0x108] sm:$0xf]
        %v4461 = vld [vmem:[%s35 + $0x10c] sm:$0xf]
        %v4462 = vld [vmem:[%s35 + $0x110] sm:$0xf]
        %v4463 = vld [vmem:[%s35 + $0x114] sm:$0xf]
        %v4464 = vld [vmem:[%s35 + $0x118] sm:$0xf]
        %v4465 = vld [vmem:[%s35 + $0x11c] sm:$0xf]
        %v4466 = vld [vmem:[%s35 + $0x120] sm:$0xf]
        %v4467 = vld [vmem:[%s35 + $0x124] sm:$0xf]
        %v4468 = vld [vmem:[%s35 + $0x128] sm:$0xf]
        %v4469 = vld [vmem:[%s35 + $0x12c] sm:$0xf]
        %v4470 = vld [vmem:[%s35 + $0x130] sm:$0xf]
        %v4471 = vld [vmem:[%s35 + $0x134] sm:$0xf]
        %v4472 = vld [vmem:[%s35 + $0x138] sm:$0xf]
        %v4473 = vld [vmem:[%s35 + $0x13c] sm:$0xf]
        %v4474 = vld [vmem:[%s35 + $0x140] sm:$0xf]
        %v4475 = vld [vmem:[%s35 + $0x144] sm:$0xf]
        %v4476 = vld [vmem:[%s35 + $0x148] sm:$0xf]
        %v4477 = vld [vmem:[%s35 + $0x14c] sm:$0xf]
        %v4478 = vld [vmem:[%s35 + $0x150] sm:$0xf]
        %v4479 = vld [vmem:[%s35 + $0x154] sm:$0xf]
        %v4480 = vld [vmem:[%s35 + $0x158] sm:$0xf]
        %v4481 = vld [vmem:[%s35 + $0x15c] sm:$0xf]
        %v4482 = vld [vmem:[%s35 + $0x160] sm:$0xf]
        %v4483 = vld [vmem:[%s35 + $0x164] sm:$0xf]
        %v4484 = vld [vmem:[%s35 + $0x168] sm:$0xf]
        %v4485 = vld [vmem:[%s35 + $0x16c] sm:$0xf]
        %v4486 = vld [vmem:[%s35 + $0x170] sm:$0xf]
        %v4487 = vld [vmem:[%s35 + $0x174] sm:$0xf]
        %v4488 = vld [vmem:[%s35 + $0x178] sm:$0xf]
        %v4489 = vld [vmem:[%s35 + $0x17c] sm:$0xf]
        %v4490 = vld [vmem:[%s37] sm:$0x1]
        %v4492 = vlaneseq
        %v4493 = vshrl.u32 %v4492, 7
        %v4494 = vsub.s32 0, %v4493
        %v4495 = vrot.slane %v4490, %v4494
        %v4593 = vunpack.c.l.b16 %v4394
        %v4594 = vunpack.c.l.b16 %v4395
        %v4595 = vunpack.c.l.b16 %v4396
        %v4596 = vunpack.c.l.b16 %v4397
        %v4597 = vunpack.c.l.b16 %v4398
        %v4598 = vunpack.c.l.b16 %v4399
        %v4599 = vunpack.c.l.b16 %v4400
        %v4600 = vunpack.c.l.b16 %v4401
        %v4601 = vunpack.c.l.b16 %v4402
        %v4602 = vunpack.c.l.b16 %v4403
        %v4603 = vunpack.c.l.b16 %v4404
        %v4604 = vunpack.c.l.b16 %v4405
        %v4605 = vunpack.c.l.b16 %v4406
        %v4606 = vunpack.c.l.b16 %v4407
        %v4607 = vunpack.c.l.b16 %v4408
        %v4608 = vunpack.c.l.b16 %v4409
        %v4609 = vunpack.c.l.b16 %v4410
        %v4610 = vunpack.c.l.b16 %v4411
        %v4611 = vunpack.c.l.b16 %v4412
        %v4612 = vunpack.c.l.b16 %v4413
        %v4613 = vunpack.c.l.b16 %v4414
        %v4614 = vunpack.c.l.b16 %v4415
        %v4615 = vunpack.c.l.b16 %v4416
        %v4616 = vunpack.c.l.b16 %v4417
        %v4617 = vunpack.c.l.b16 %v4418
        %v4618 = vunpack.c.l.b16 %v4419
        %v4619 = vunpack.c.l.b16 %v4420
        %v4620 = vunpack.c.l.b16 %v4421
        %v4621 = vunpack.c.l.b16 %v4422
        %v4622 = vunpack.c.l.b16 %v4423
        %v4623 = vunpack.c.l.b16 %v4424
        %v4624 = vunpack.c.l.b16 %v4425
        %v4625 = vunpack.c.l.b16 %v4426
        %v4626 = vunpack.c.l.b16 %v4427
        %v4627 = vunpack.c.l.b16 %v4428
        %v4628 = vunpack.c.l.b16 %v4429
        %v4629 = vunpack.c.l.b16 %v4430
        %v4630 = vunpack.c.l.b16 %v4431
        %v4631 = vunpack.c.l.b16 %v4432
        %v4632 = vunpack.c.l.b16 %v4433
        %v4633 = vunpack.c.l.b16 %v4434
        %v4634 = vunpack.c.l.b16 %v4435
        %v4635 = vunpack.c.l.b16 %v4436
        %v4636 = vunpack.c.l.b16 %v4437
        %v4637 = vunpack.c.l.b16 %v4438
        %v4638 = vunpack.c.l.b16 %v4439
        %v4639 = vunpack.c.l.b16 %v4440
        %v4640 = vunpack.c.l.b16 %v4441
        %v4641 = vunpack.c.l.b16 %v4442
        %v4642 = vunpack.c.l.b16 %v4443
        %v4643 = vunpack.c.l.b16 %v4444
        %v4644 = vunpack.c.l.b16 %v4445
        %v4645 = vunpack.c.l.b16 %v4446
        %v4646 = vunpack.c.l.b16 %v4447
        %v4647 = vunpack.c.l.b16 %v4448
        %v4648 = vunpack.c.l.b16 %v4449
        %v4649 = vunpack.c.l.b16 %v4450
        %v4650 = vunpack.c.l.b16 %v4451
        %v4651 = vunpack.c.l.b16 %v4452
        %v4652 = vunpack.c.l.b16 %v4453
        %v4653 = vunpack.c.l.b16 %v4454
        %v4654 = vunpack.c.l.b16 %v4455
        %v4655 = vunpack.c.l.b16 %v4456
        %v4656 = vunpack.c.l.b16 %v4457
        %v4657 = vunpack.c.l.b16 %v4458
        %v4658 = vunpack.c.l.b16 %v4459
        %v4659 = vunpack.c.l.b16 %v4460
        %v4660 = vunpack.c.l.b16 %v4461
        %v4661 = vunpack.c.l.b16 %v4462
        %v4662 = vunpack.c.l.b16 %v4463
        %v4663 = vunpack.c.l.b16 %v4464
        %v4664 = vunpack.c.l.b16 %v4465
        %v4665 = vunpack.c.l.b16 %v4466
        %v4666 = vunpack.c.l.b16 %v4467
        %v4667 = vunpack.c.l.b16 %v4468
        %v4668 = vunpack.c.l.b16 %v4469
        %v4669 = vunpack.c.l.b16 %v4470
        %v4670 = vunpack.c.l.b16 %v4471
        %v4671 = vunpack.c.l.b16 %v4472
        %v4672 = vunpack.c.l.b16 %v4473
        %v4673 = vunpack.c.l.b16 %v4474
        %v4674 = vunpack.c.l.b16 %v4475
        %v4675 = vunpack.c.l.b16 %v4476
        %v4676 = vunpack.c.l.b16 %v4477
        %v4677 = vunpack.c.l.b16 %v4478
        %v4678 = vunpack.c.l.b16 %v4479
        %v4679 = vunpack.c.l.b16 %v4480
        %v4680 = vunpack.c.l.b16 %v4481
        %v4681 = vunpack.c.l.b16 %v4482
        %v4682 = vunpack.c.l.b16 %v4483
        %v4683 = vunpack.c.l.b16 %v4484
        %v4684 = vunpack.c.l.b16 %v4485
        %v4685 = vunpack.c.l.b16 %v4486
        %v4686 = vunpack.c.l.b16 %v4487
        %v4687 = vunpack.c.l.b16 %v4488
        %v4688 = vunpack.c.l.b16 %v4489
        %v4689 = vpack.c.b16 %v4594, %v4593
        %v4690 = vpack.c.b16 %v4596, %v4595
        %v4691 = vpack.c.b16 %v4598, %v4597
        %v4692 = vpack.c.b16 %v4600, %v4599
        %v4693 = vpack.c.b16 %v4602, %v4601
        %v4694 = vpack.c.b16 %v4604, %v4603
        %v4695 = vpack.c.b16 %v4606, %v4605
        %v4696 = vpack.c.b16 %v4608, %v4607
        %v4697 = vpack.c.b16 %v4610, %v4609
        %v4698 = vpack.c.b16 %v4612, %v4611
        %v4699 = vpack.c.b16 %v4614, %v4613
        %v4700 = vpack.c.b16 %v4616, %v4615
        %v4701 = vpack.c.b16 %v4618, %v4617
        %v4702 = vpack.c.b16 %v4620, %v4619
        %v4703 = vpack.c.b16 %v4622, %v4621
        %v4704 = vpack.c.b16 %v4624, %v4623
        %v4705 = vpack.c.b16 %v4626, %v4625
        %v4706 = vpack.c.b16 %v4628, %v4627
        %v4707 = vpack.c.b16 %v4630, %v4629
        %v4708 = vpack.c.b16 %v4632, %v4631
        %v4709 = vpack.c.b16 %v4634, %v4633
        %v4710 = vpack.c.b16 %v4636, %v4635
        %v4711 = vpack.c.b16 %v4638, %v4637
        %v4712 = vpack.c.b16 %v4640, %v4639
        %v4713 = vpack.c.b16 %v4642, %v4641
        %v4714 = vpack.c.b16 %v4644, %v4643
        %v4715 = vpack.c.b16 %v4646, %v4645
        %v4716 = vpack.c.b16 %v4648, %v4647
        %v4717 = vpack.c.b16 %v4650, %v4649
        %v4718 = vpack.c.b16 %v4652, %v4651
        %v4719 = vpack.c.b16 %v4654, %v4653
        %v4720 = vpack.c.b16 %v4656, %v4655
        %v4721 = vpack.c.b16 %v4658, %v4657
        %v4722 = vpack.c.b16 %v4660, %v4659
        %v4723 = vpack.c.b16 %v4662, %v4661
        %v4724 = vpack.c.b16 %v4664, %v4663
        %v4725 = vpack.c.b16 %v4666, %v4665
        %v4726 = vpack.c.b16 %v4668, %v4667
        %v4727 = vpack.c.b16 %v4670, %v4669
        %v4728 = vpack.c.b16 %v4672, %v4671
        %v4729 = vpack.c.b16 %v4674, %v4673
        %v4730 = vpack.c.b16 %v4676, %v4675
        %v4731 = vpack.c.b16 %v4678, %v4677
        %v4732 = vpack.c.b16 %v4680, %v4679
        %v4733 = vpack.c.b16 %v4682, %v4681
        %v4734 = vpack.c.b16 %v4684, %v4683
        %v4735 = vpack.c.b16 %v4686, %v4685
        %v4736 = vpack.c.b16 %v4688, %v4687
        %4785 = vmatprep.subr.bf16.mxu0 0
        %4786 = vmatpush1.bf16.msra.mxu0 %v4689
        %4787 = vmatprep.subr.bf16.mxu0 0
        %4788 = vmatpush1.bf16.msra.mxu0 %v4690
        %4789 = vmatprep.subr.bf16.mxu0 0
        %4790 = vmatpush1.bf16.msra.mxu0 %v4691
        %4791 = vmatprep.subr.bf16.mxu0 0
        %4792 = vmatpush1.bf16.msra.mxu0 %v4692
        %4793 = vmatprep.subr.bf16.mxu0 0
        %4794 = vmatpush1.bf16.msra.mxu0 %v4693
        %4795 = vmatprep.subr.bf16.mxu0 0
        %4796 = vmatpush1.bf16.msra.mxu0 %v4694
        %4797 = vmatprep.subr.bf16.mxu0 0
        %4798 = vmatpush1.bf16.msra.mxu0 %v4695
        %4799 = vmatprep.subr.bf16.mxu0 0
        %4800 = vmatpush1.bf16.msra.mxu0 %v4696
        %4801 = vmatprep.subr.bf16.mxu0 0
        %4802 = vmatpush1.bf16.msra.mxu0 %v4697
        %4803 = vmatprep.subr.bf16.mxu0 0
        %4804 = vmatpush1.bf16.msra.mxu0 %v4698
        %4805 = vmatprep.subr.bf16.mxu0 0
        %4806 = vmatpush1.bf16.msra.mxu0 %v4699
        %4807 = vmatprep.subr.bf16.mxu0 0
        %4808 = vmatpush1.bf16.msra.mxu0 %v4700
        %4809 = vmatprep.subr.bf16.mxu0 0
        %4810 = vmatpush1.bf16.msra.mxu0 %v4701
        %4811 = vmatprep.subr.bf16.mxu0 0
        %4812 = vmatpush1.bf16.msra.mxu0 %v4702
        %4813 = vmatprep.subr.bf16.mxu0 0
        %4814 = vmatpush1.bf16.msra.mxu0 %v4703
        %4815 = vmatprep.subr.bf16.mxu0 0
        %4816 = vmatpush1.bf16.msra.mxu0 %v4704
        %4817 = vmatprep.mubr.bf16.mxu0 %v4385
        %4818 = vmatmul.mubr.bf16.gmra.mrb[0].mxu0 %v4384
        %v4819 = vpop.f32.mrb[0].mxu0
        %v4820 = vadd.f32 %v4495, %v4819
        %v4821 = vpop.f32.mrb[0].mxu0
        %v4822 = vpop.f32.mrb[0].mxu0
        %v4823 = vpop.f32.mrb[0].mxu0
        %4824 = vdwg.mxu0
        %4825 = vmatprep.subr.bf16.mxu0 0
        %4826 = vmatpush1.bf16.msra.mxu0 %v4705
        %4827 = vmatprep.subr.bf16.mxu0 0
        %4828 = vmatpush1.bf16.msra.mxu0 %v4706
        %4829 = vmatprep.subr.bf16.mxu0 0
        %4830 = vmatpush1.bf16.msra.mxu0 %v4707
        %4831 = vmatprep.subr.bf16.mxu0 0
        %4832 = vmatpush1.bf16.msra.mxu0 %v4708
        %4833 = vmatprep.subr.bf16.mxu0 0
        %4834 = vmatpush1.bf16.msra.mxu0 %v4709
        %4835 = vmatprep.subr.bf16.mxu0 0
        %4836 = vmatpush1.bf16.msra.mxu0 %v4710
        %4837 = vmatprep.subr.bf16.mxu0 0
        %4838 = vmatpush1.bf16.msra.mxu0 %v4711
        %4839 = vmatprep.subr.bf16.mxu0 0
        %4840 = vmatpush1.bf16.msra.mxu0 %v4712
        %4841 = vmatprep.subr.bf16.mxu0 0
        %4842 = vmatpush1.bf16.msra.mxu0 %v4713
        %4843 = vmatprep.subr.bf16.mxu0 0
        %4844 = vmatpush1.bf16.msra.mxu0 %v4714
        %4845 = vmatprep.subr.bf16.mxu0 0
        %4846 = vmatpush1.bf16.msra.mxu0 %v4715
        %4847 = vmatprep.subr.bf16.mxu0 0
        %4848 = vmatpush1.bf16.msra.mxu0 %v4716
        %4849 = vmatprep.subr.bf16.mxu0 0
        %4850 = vmatpush1.bf16.msra.mxu0 %v4717
        %4851 = vmatprep.subr.bf16.mxu0 0
        %4852 = vmatpush1.bf16.msra.mxu0 %v4718
        %4853 = vmatprep.subr.bf16.mxu0 0
        %4854 = vmatpush1.bf16.msra.mxu0 %v4719
        %4855 = vmatprep.subr.bf16.mxu0 0
        %4856 = vmatpush1.bf16.msra.mxu0 %v4720
        %4857 = vmatprep.mubr.bf16.mxu0 %v4367
        %4858 = vmatmul.mubr.bf16.gmra.mrb[0].mxu0 %v4366
        %v4859 = vpop.f32.mrb[0].mxu0
        %v4860 = vadd.f32 %v4820, %v4859
        %v4861 = vpop.f32.mrb[0].mxu0
        %v4862 = vpop.f32.mrb[0].mxu0
        %v4863 = vpop.f32.mrb[0].mxu0
        %4864 = vdwg.mxu0
        %4865 = vmatprep.subr.bf16.mxu0 0
        %4866 = vmatpush1.bf16.msra.mxu0 %v4721
        %4867 = vmatprep.subr.bf16.mxu0 0
        %4868 = vmatpush1.bf16.msra.mxu0 %v4722
        %4869 = vmatprep.subr.bf16.mxu0 0
        %4870 = vmatpush1.bf16.msra.mxu0 %v4723
        %4871 = vmatprep.subr.bf16.mxu0 0
        %4872 = vmatpush1.bf16.msra.mxu0 %v4724
        %4873 = vmatprep.subr.bf16.mxu0 0
        %4874 = vmatpush1.bf16.msra.mxu0 %v4725
        %4875 = vmatprep.subr.bf16.mxu0 0
        %4876 = vmatpush1.bf16.msra.mxu0 %v4726
        %4877 = vmatprep.subr.bf16.mxu0 0
        %4878 = vmatpush1.bf16.msra.mxu0 %v4727
        %4879 = vmatprep.subr.bf16.mxu0 0
        %4880 = vmatpush1.bf16.msra.mxu0 %v4728
        %4881 = vmatprep.subr.bf16.mxu0 0
        %4882 = vmatpush1.bf16.msra.mxu0 %v4729
        %4883 = vmatprep.subr.bf16.mxu0 0
        %4884 = vmatpush1.bf16.msra.mxu0 %v4730
        %4885 = vmatprep.subr.bf16.mxu0 0
        %4886 = vmatpush1.bf16.msra.mxu0 %v4731
        %4887 = vmatprep.subr.bf16.mxu0 0
        %4888 = vmatpush1.bf16.msra.mxu0 %v4732
        %4889 = vmatprep.subr.bf16.mxu0 0
        %4890 = vmatpush1.bf16.msra.mxu0 %v4733
        %4891 = vmatprep.subr.bf16.mxu0 0
        %4892 = vmatpush1.bf16.msra.mxu0 %v4734
        %4893 = vmatprep.subr.bf16.mxu0 0
        %4894 = vmatpush1.bf16.msra.mxu0 %v4735
        %4895 = vmatprep.subr.bf16.mxu0 0
        %4896 = vmatpush1.bf16.msra.mxu0 %v4736
        %4897 = vmatprep.mubr.bf16.mxu0 %v4393
        %4898 = vmatmul.mubr.bf16.gmra.mrb[0].mxu0 %v4392
        %v4899 = vpop.f32.mrb[0].mxu0
        %v4900 = vadd.f32 %v4860, %v4899
        %v4901 = vpop.f32.mrb[0].mxu0
        %v4902 = vpop.f32.mrb[0].mxu0
        %v4903 = vpop.f32.mrb[0].mxu0
        %4904 = vdwg.mxu0
        %v4905 = vmax.f32 %v4900, 0.0
        %v4906 = vmax.f32 %v4905, 0.0
        %v4907 = vpack.c.bf16 %v4906, %v4906
        %v4909 = vshrl.u32 %v4907, 16
        %v4911 = vshll.u32 %v4907, 16
        %v4913 = vrot.slane %v4911, 1
        %v4914 = vor.u32 %v4909, %v4913
        %v4916 = vsel %vm1161, %v4914, 0
        %v4917 = vrot.slane %v4909, 7
        %v4918 = vor.u32 %v4917, %v4911
        %v4920 = vsel %vm1182, 0, %v4918
        %4922 = vrot.lane.b32.xlu0 %v4907, 32
        %v4923 = vpop.permute.xlu0 %4922
        %4925 = vrot.lane.b32.xlu0 %v4920, 64
        %v4926 = vpop.permute.xlu0 %4925
        %v4929 = vsel %vm2223, %v4916, %v4923
        %v4931 = vsel %vm2366, %v4929, %v4926
        %v4932 = vld [vmem:[%s39] sm:$0xf]
        %v4933 = vld [vmem:[%s39 + $0x4] sm:$0xf]
        %v4934 = vld [vmem:[%s39 + $0x8] sm:$0xf]
        %v4935 = vld [vmem:[%s39 + $0xc] sm:$0xf]
        %v4936 = vld [vmem:[%s39 + $0x10] sm:$0xf]
        %v4937 = vld [vmem:[%s39 + $0x14] sm:$0xf]
        %v4938 = vld [vmem:[%s39 + $0x18] sm:$0xf]
        %v4939 = vld [vmem:[%s39 + $0x1c] sm:$0xf]
        %v4940 = vld [vmem:[%s39 + $0x20] sm:$0xf]
        %v4941 = vld [vmem:[%s39 + $0x24] sm:$0xf]
        %v4942 = vld [vmem:[%s39 + $0x28] sm:$0xf]
        %v4943 = vld [vmem:[%s39 + $0x2c] sm:$0xf]
        %v4944 = vld [vmem:[%s41] sm:$0x1]
        %v4946 = vlaneseq
        %v4947 = vshrl.u32 %v4946, 7
        %v4948 = vsub.s32 0, %v4947
        %v4949 = vrot.slane %v4944, %v4948
        %v4963 = vunpack.c.l.b16 %v4932
        %v4964 = vunpack.c.l.b16 %v4933
        %v4965 = vunpack.c.l.b16 %v4934
        %v4966 = vunpack.c.l.b16 %v4935
        %v4967 = vunpack.c.l.b16 %v4936
        %v4968 = vunpack.c.l.b16 %v4937
        %v4969 = vunpack.c.l.b16 %v4938
        %v4970 = vunpack.c.l.b16 %v4939
        %v4971 = vunpack.c.l.b16 %v4940
        %v4972 = vunpack.c.l.b16 %v4941
        %v4973 = vunpack.c.l.b16 %v4942
        %v4974 = vunpack.c.l.b16 %v4943
        %v4975 = vpack.c.b16 %v4964, %v4963
        %v4976 = vpack.c.b16 %v4966, %v4965
        %v4977 = vpack.c.b16 %v4968, %v4967
        %v4978 = vpack.c.b16 %v4970, %v4969
        %v4979 = vpack.c.b16 %v4972, %v4971
        %v4980 = vpack.c.b16 %v4974, %v4973
        %v4987 = vsel %vm2227, %v4931, 0
        %4989 = vmatprep.subr.bf16.mxu0 0
        %4990 = vmatpush1.bf16.msra.mxu0 %v4975
        %4991 = vmatprep.subr.bf16.mxu0 0
        %4992 = vmatpush1.bf16.msra.mxu0 %v4976
        %4993 = vmatprep.subr.bf16.mxu0 0
        %4994 = vmatpush1.bf16.msra.mxu0 %v4977
        %4995 = vmatprep.subr.bf16.mxu0 0
        %4996 = vmatpush1.bf16.msra.mxu0 %v4978
        %4997 = vmatprep.subr.bf16.mxu0 0
        %4998 = vmatpush1.bf16.msra.mxu0 %v4979
        %4999 = vmatprep.subr.bf16.mxu0 0
        %5000 = vmatpush1.bf16.msra.mxu0 %v4980
        %5001 = vmatprep.subr.bf16.mxu0 0
        %5002 = vmatpush1.bf16.msra.mxu0 0
        %5003 = vmatprep.subr.bf16.mxu0 0
        %5004 = vmatpush1.bf16.msra.mxu0 0
        %5005 = vmatprep.subr.bf16.mxu0 0
        %5006 = vmatpush1.bf16.msra.mxu0 0
        %5007 = vmatprep.subr.bf16.mxu0 0
        %5008 = vmatpush1.bf16.msra.mxu0 0
        %5009 = vmatprep.subr.bf16.mxu0 0
        %5010 = vmatpush1.bf16.msra.mxu0 0
        %5011 = vmatprep.subr.bf16.mxu0 0
        %5012 = vmatpush1.bf16.msra.mxu0 0
        %5013 = vmatprep.subr.bf16.mxu0 0
        %5014 = vmatpush1.bf16.msra.mxu0 0
        %5015 = vmatprep.subr.bf16.mxu0 0
        %5016 = vmatpush1.bf16.msra.mxu0 0
        %5017 = vmatprep.subr.bf16.mxu0 0
        %5018 = vmatpush1.bf16.msra.mxu0 0
        %5019 = vmatprep.subr.bf16.mxu0 0
        %5020 = vmatpush1.bf16.msra.mxu0 0
        %5021 = vmatprep.mubr.bf16.mxu0 0
        %5022 = vmatmul.mubr.bf16.gmra.mrb[0].mxu0 %v4987
        %v5023 = vpop.f32.mrb[0].mxu0
        %v5024 = vadd.f32 %v4949, %v5023
        %v5025 = vpop.f32.mrb[0].mxu0
        %v5026 = vpop.f32.mrb[0].mxu0
        %v5027 = vpop.f32.mrb[0].mxu0
        %5028 = vdwg.mxu0
        %v5029 = vmax.f32 %v5024, 0.0
        %v5030 = vpack.c.bf16 %v5029, %v5029
        %v5031 = vld [vmem:[%s43] sm:$0xf]
        %v5032 = vld [vmem:[%s45] sm:$0x1]
        %v5034 = vlaneseq
        %v5035 = vshrl.u32 %v5034, 7
        %v5036 = vsub.s32 0, %v5035
        %v5037 = vrot.slane %v5032, %v5036
        %v5040 = vsel %vm2600, %v5030, 0
        %v5043 = vsel %vm2604, %v5031, 0
        %5045 = vmatprep.subr.bf16.mxu0 0
        %5046 = vmatpush1.bf16.msra.mxu0 %v5043
        %5047 = vmatprep.subr.bf16.mxu0 0
        %5048 = vmatpush1.bf16.msra.mxu0 0
        %5049 = vmatprep.subr.bf16.mxu0 0
        %5050 = vmatpush1.bf16.msra.mxu0 0
        %5051 = vmatprep.subr.bf16.mxu0 0
        %5052 = vmatpush1.bf16.msra.mxu0 0
        %5053 = vmatprep.subr.bf16.mxu0 0
        %5054 = vmatpush1.bf16.msra.mxu0 0
        %5055 = vmatprep.subr.bf16.mxu0 0
        %5056 = vmatpush1.bf16.msra.mxu0 0
        %5057 = vmatprep.subr.bf16.mxu0 0
        %5058 = vmatpush1.bf16.msra.mxu0 0
        %5059 = vmatprep.subr.bf16.mxu0 0
        %5060 = vmatpush1.bf16.msra.mxu0 0
        %5061 = vmatprep.subr.bf16.mxu0 0
        %5062 = vmatpush1.bf16.msra.mxu0 0
        %5063 = vmatprep.subr.bf16.mxu0 0
        %5064 = vmatpush1.bf16.msra.mxu0 0
        %5065 = vmatprep.subr.bf16.mxu0 0
        %5066 = vmatpush1.bf16.msra.mxu0 0
        %5067 = vmatprep.subr.bf16.mxu0 0
        %5068 = vmatpush1.bf16.msra.mxu0 0
        %5069 = vmatprep.subr.bf16.mxu0 0
        %5070 = vmatpush1.bf16.msra.mxu0 0
        %5071 = vmatprep.subr.bf16.mxu0 0
        %5072 = vmatpush1.bf16.msra.mxu0 0
        %5073 = vmatprep.subr.bf16.mxu0 0
        %5074 = vmatpush1.bf16.msra.mxu0 0
        %5075 = vmatprep.subr.bf16.mxu0 0
        %5076 = vmatpush1.bf16.msra.mxu0 0
        %5077 = vmatprep.mubr.bf16.mxu0 0
        %5078 = vmatmul.mubr.bf16.gmra.mrb[0].mxu0 %v5040
        %v5079 = vpop.f32.mrb[0].mxu0
        %v5080 = vadd.f32 %v5037, %v5079
        %v5081 = vpop.f32.mrb[0].mxu0
        %v5082 = vpop.f32.mrb[0].mxu0
        %v5083 = vpop.f32.mrb[0].mxu0
        %5084 = vdwg.mxu0
        %v5085 = vadd.f32 %v4905, %v5080
        %v5086 = vmax.f32 %v5085, 0.0
        %v5087 = vpack.c.bf16 %v5086, %v5086
        %v5089 = vshrl.u32 %v5087, 16
        %v5091 = vshll.u32 %v5087, 16
        %v5093 = vrot.slane %v5091, 1
        %v5094 = vor.u32 %v5089, %v5093
        %v5096 = vsel %vm1161, %v5094, 0
        %v5097 = vrot.slane %v5089, 7
        %v5098 = vor.u32 %v5097, %v5091
        %v5100 = vsel %vm1182, 0, %v5098
        %5102 = vrot.lane.b32.xlu0 %v5087, 32
        %v5103 = vpop.permute.xlu0 %5102
        %5105 = vrot.lane.b32.xlu0 %v5100, 64
        %v5106 = vpop.permute.xlu0 %5105
        %v5109 = vsel %vm2223, %v5096, %v5103
        %v5111 = vsel %vm2366, %v5109, %v5106
        %v5112 = vld [vmem:[%s47] sm:$0xf]
        %v5113 = vld [vmem:[%s47 + $0x4] sm:$0xf]
        %v5114 = vld [vmem:[%s47 + $0x8] sm:$0xf]
        %v5115 = vld [vmem:[%s47 + $0xc] sm:$0xf]
        %v5116 = vld [vmem:[%s47 + $0x10] sm:$0xf]
        %v5117 = vld [vmem:[%s47 + $0x14] sm:$0xf]
        %v5118 = vld [vmem:[%s47 + $0x18] sm:$0xf]
        %v5119 = vld [vmem:[%s47 + $0x1c] sm:$0xf]
        %v5120 = vld [vmem:[%s47 + $0x20] sm:$0xf]
        %v5121 = vld [vmem:[%s47 + $0x24] sm:$0xf]
        %v5122 = vld [vmem:[%s47 + $0x28] sm:$0xf]
        %v5123 = vld [vmem:[%s47 + $0x2c] sm:$0xf]
        %v5124 = vld [vmem:[%s49] sm:$0x1]
        %v5126 = vlaneseq
        %v5127 = vshrl.u32 %v5126, 7
        %v5128 = vsub.s32 0, %v5127
        %v5129 = vrot.slane %v5124, %v5128
        %v5143 = vunpack.c.l.b16 %v5112
        %v5144 = vunpack.c.l.b16 %v5113
        %v5145 = vunpack.c.l.b16 %v5114
        %v5146 = vunpack.c.l.b16 %v5115
        %v5147 = vunpack.c.l.b16 %v5116
        %v5148 = vunpack.c.l.b16 %v5117
        %v5149 = vunpack.c.l.b16 %v5118
        %v5150 = vunpack.c.l.b16 %v5119
        %v5151 = vunpack.c.l.b16 %v5120
        %v5152 = vunpack.c.l.b16 %v5121
        %v5153 = vunpack.c.l.b16 %v5122
        %v5154 = vunpack.c.l.b16 %v5123
        %v5155 = vpack.c.b16 %v5144, %v5143
        %v5156 = vpack.c.b16 %v5146, %v5145
        %v5157 = vpack.c.b16 %v5148, %v5147
        %v5158 = vpack.c.b16 %v5150, %v5149
        %v5159 = vpack.c.b16 %v5152, %v5151
        %v5160 = vpack.c.b16 %v5154, %v5153
        %v5167 = vsel %vm2227, %v5111, 0
        %5169 = vmatprep.subr.bf16.mxu0 0
        %5170 = vmatpush1.bf16.msra.mxu0 %v5155
        %5171 = vmatprep.subr.bf16.mxu0 0
        %5172 = vmatpush1.bf16.msra.mxu0 %v5156
        %5173 = vmatprep.subr.bf16.mxu0 0
        %5174 = vmatpush1.bf16.msra.mxu0 %v5157
        %5175 = vmatprep.subr.bf16.mxu0 0
        %5176 = vmatpush1.bf16.msra.mxu0 %v5158
        %5177 = vmatprep.subr.bf16.mxu0 0
        %5178 = vmatpush1.bf16.msra.mxu0 %v5159
        %5179 = vmatprep.subr.bf16.mxu0 0
        %5180 = vmatpush1.bf16.msra.mxu0 %v5160
        %5181 = vmatprep.subr.bf16.mxu0 0
        %5182 = vmatpush1.bf16.msra.mxu0 0
        %5183 = vmatprep.subr.bf16.mxu0 0
        %5184 = vmatpush1.bf16.msra.mxu0 0
        %5185 = vmatprep.subr.bf16.mxu0 0
        %5186 = vmatpush1.bf16.msra.mxu0 0
        %5187 = vmatprep.subr.bf16.mxu0 0
        %5188 = vmatpush1.bf16.msra.mxu0 0
        %5189 = vmatprep.subr.bf16.mxu0 0
        %5190 = vmatpush1.bf16.msra.mxu0 0
        %5191 = vmatprep.subr.bf16.mxu0 0
        %5192 = vmatpush1.bf16.msra.mxu0 0
        %5193 = vmatprep.subr.bf16.mxu0 0
        %5194 = vmatpush1.bf16.msra.mxu0 0
        %5195 = vmatprep.subr.bf16.mxu0 0
        %5196 = vmatpush1.bf16.msra.mxu0 0
        %5197 = vmatprep.subr.bf16.mxu0 0
        %5198 = vmatpush1.bf16.msra.mxu0 0
        %5199 = vmatprep.subr.bf16.mxu0 0
        %5200 = vmatpush1.bf16.msra.mxu0 0
        %5201 = vmatprep.mubr.bf16.mxu0 0
        %5202 = vmatmul.mubr.bf16.gmra.mrb[0].mxu0 %v5167
        %v5203 = vpop.f32.mrb[0].mxu0
        %v5204 = vadd.f32 %v5129, %v5203
        %v5205 = vpop.f32.mrb[0].mxu0
        %v5206 = vpop.f32.mrb[0].mxu0
        %v5207 = vpop.f32.mrb[0].mxu0
        %5208 = vdwg.mxu0
        %v5209 = vmax.f32 %v5204, 0.0
        %v5210 = vpack.c.bf16 %v5209, %v5209
        %v5211 = vld [vmem:[%s51] sm:$0xf]
        %v5212 = vld [vmem:[%s53] sm:$0x1]
        %v5214 = vlaneseq
        %v5215 = vshrl.u32 %v5214, 7
        %v5216 = vsub.s32 0, %v5215
        %v5217 = vrot.slane %v5212, %v5216
        %v5220 = vsel %vm2600, %v5210, 0
        %v5223 = vsel %vm2604, %v5211, 0
        %5225 = vmatprep.subr.bf16.mxu0 0
        %5226 = vmatpush1.bf16.msra.mxu0 %v5223
        %5227 = vmatprep.subr.bf16.mxu0 0
        %5228 = vmatpush1.bf16.msra.mxu0 0
        %5229 = vmatprep.subr.bf16.mxu0 0
        %5230 = vmatpush1.bf16.msra.mxu0 0
        %5231 = vmatprep.subr.bf16.mxu0 0
        %5232 = vmatpush1.bf16.msra.mxu0 0
        %5233 = vmatprep.subr.bf16.mxu0 0
        %5234 = vmatpush1.bf16.msra.mxu0 0
        %5235 = vmatprep.subr.bf16.mxu0 0
        %5236 = vmatpush1.bf16.msra.mxu0 0
        %5237 = vmatprep.subr.bf16.mxu0 0
        %5238 = vmatpush1.bf16.msra.mxu0 0
        %5239 = vmatprep.subr.bf16.mxu0 0
        %5240 = vmatpush1.bf16.msra.mxu0 0
        %5241 = vmatprep.subr.bf16.mxu0 0
        %5242 = vmatpush1.bf16.msra.mxu0 0
        %5243 = vmatprep.subr.bf16.mxu0 0
        %5244 = vmatpush1.bf16.msra.mxu0 0
        %5245 = vmatprep.subr.bf16.mxu0 0
        %5246 = vmatpush1.bf16.msra.mxu0 0
        %5247 = vmatprep.subr.bf16.mxu0 0
        %5248 = vmatpush1.bf16.msra.mxu0 0
        %5249 = vmatprep.subr.bf16.mxu0 0
        %5250 = vmatpush1.bf16.msra.mxu0 0
        %5251 = vmatprep.subr.bf16.mxu0 0
        %5252 = vmatpush1.bf16.msra.mxu0 0
        %5253 = vmatprep.subr.bf16.mxu0 0
        %5254 = vmatpush1.bf16.msra.mxu0 0
        %5255 = vmatprep.subr.bf16.mxu0 0
        %5256 = vmatpush1.bf16.msra.mxu0 0
        %5257 = vmatprep.mubr.bf16.mxu0 0
        %5258 = vmatmul.mubr.bf16.gmra.mrb[0].mxu0 %v5220
        %v5259 = vpop.f32.mrb[0].mxu0
        %v5260 = vadd.f32 %v5217, %v5259
        %v5261 = vpop.f32.mrb[0].mxu0
        %v5262 = vpop.f32.mrb[0].mxu0
        %v5263 = vpop.f32.mrb[0].mxu0
        %5264 = vdwg.mxu0
        %v5265 = vadd.f32 %v5085, %v5260
        %v5266 = vpack.c.bf16 %v5265, %v5265
        %v5268 = vshrl.u32 %v5266, 16
        %v5270 = vshll.u32 %v5266, 16
        %v5272 = vrot.slane %v5270, 1
        %v5273 = vor.u32 %v5268, %v5272
        %v5275 = vsel %vm1161, %v5273, 0
        %v5276 = vrot.slane %v5268, 7
        %v5277 = vor.u32 %v5276, %v5270
        %v5279 = vsel %vm1182, 0, %v5277
        %5281 = vrot.lane.b32.xlu0 %v5266, 32
        %v5282 = vpop.permute.xlu0 %5281
        %5284 = vrot.lane.b32.xlu0 %v5279, 64
        %v5285 = vpop.permute.xlu0 %5284
        %v5288 = vsel %vm2223, %v5275, %v5282
        %v5290 = vsel %vm2366, %v5288, %v5285
        %v5291 = vld [vmem:[%s55] sm:$0xf]
        %v5292 = vld [vmem:[%s55 + $0x4] sm:$0xf]
        %v5293 = vld [vmem:[%s55 + $0x8] sm:$0xf]
        %v5294 = vld [vmem:[%s55 + $0xc] sm:$0xf]
        %v5295 = vld [vmem:[%s55 + $0x10] sm:$0xf]
        %v5296 = vld [vmem:[%s55 + $0x14] sm:$0xf]
        %v5297 = vld [vmem:[%s55 + $0x18] sm:$0xf]
        %v5298 = vld [vmem:[%s55 + $0x1c] sm:$0xf]
        %v5299 = vld [vmem:[%s55 + $0x20] sm:$0xf]
        %v5300 = vld [vmem:[%s55 + $0x24] sm:$0xf]
        %v5301 = vld [vmem:[%s55 + $0x28] sm:$0xf]
        %v5302 = vld [vmem:[%s55 + $0x2c] sm:$0xf]
        %v5303 = vld [vmem:[%s57] sm:$0x1]
        %v5305 = vlaneseq
        %v5306 = vshrl.u32 %v5305, 7
        %v5307 = vsub.s32 0, %v5306
        %v5308 = vrot.slane %v5303, %v5307
        %v5322 = vunpack.c.l.b16 %v5291
        %v5323 = vunpack.c.l.b16 %v5292
        %v5324 = vunpack.c.l.b16 %v5293
        %v5325 = vunpack.c.l.b16 %v5294
        %v5326 = vunpack.c.l.b16 %v5295
        %v5327 = vunpack.c.l.b16 %v5296
        %v5328 = vunpack.c.l.b16 %v5297
        %v5329 = vunpack.c.l.b16 %v5298
        %v5330 = vunpack.c.l.b16 %v5299
        %v5331 = vunpack.c.l.b16 %v5300
        %v5332 = vunpack.c.l.b16 %v5301
        %v5333 = vunpack.c.l.b16 %v5302
        %v5334 = vpack.c.b16 %v5323, %v5322
        %v5335 = vpack.c.b16 %v5325, %v5324
        %v5336 = vpack.c.b16 %v5327, %v5326
        %v5337 = vpack.c.b16 %v5329, %v5328
        %v5338 = vpack.c.b16 %v5331, %v5330
        %v5339 = vpack.c.b16 %v5333, %v5332
        %v5346 = vsel %vm2227, %v5290, 0
        %5348 = vmatprep.subr.bf16.mxu0 0
        %5349 = vmatpush1.bf16.msra.mxu0 %v5334
        %5350 = vmatprep.subr.bf16.mxu0 0
        %5351 = vmatpush1.bf16.msra.mxu0 %v5335
        %5352 = vmatprep.subr.bf16.mxu0 0
        %5353 = vmatpush1.bf16.msra.mxu0 %v5336
        %5354 = vmatprep.subr.bf16.mxu0 0
        %5355 = vmatpush1.bf16.msra.mxu0 %v5337
        %5356 = vmatprep.subr.bf16.mxu0 0
        %5357 = vmatpush1.bf16.msra.mxu0 %v5338
        %5358 = vmatprep.subr.bf16.mxu0 0
        %5359 = vmatpush1.bf16.msra.mxu0 %v5339
        %5360 = vmatprep.subr.bf16.mxu0 0
        %5361 = vmatpush1.bf16.msra.mxu0 0
        %5362 = vmatprep.subr.bf16.mxu0 0
        %5363 = vmatpush1.bf16.msra.mxu0 0
        %5364 = vmatprep.subr.bf16.mxu0 0
        %5365 = vmatpush1.bf16.msra.mxu0 0
        %5366 = vmatprep.subr.bf16.mxu0 0
        %5367 = vmatpush1.bf16.msra.mxu0 0
        %5368 = vmatprep.subr.bf16.mxu0 0
        %5369 = vmatpush1.bf16.msra.mxu0 0
        %5370 = vmatprep.subr.bf16.mxu0 0
        %5371 = vmatpush1.bf16.msra.mxu0 0
        %5372 = vmatprep.subr.bf16.mxu0 0
        %5373 = vmatpush1.bf16.msra.mxu0 0
        %5374 = vmatprep.subr.bf16.mxu0 0
        %5375 = vmatpush1.bf16.msra.mxu0 0
        %5376 = vmatprep.subr.bf16.mxu0 0
        %5377 = vmatpush1.bf16.msra.mxu0 0
        %5378 = vmatprep.subr.bf16.mxu0 0
        %5379 = vmatpush1.bf16.msra.mxu0 0
        %5380 = vmatprep.mubr.bf16.mxu0 0
        %5381 = vmatmul.mubr.bf16.gmra.mrb[0].mxu0 %v5346
        %v5382 = vpop.f32.mrb[0].mxu0
        %v5383 = vadd.f32 %v5308, %v5382
        %v5384 = vpop.f32.mrb[0].mxu0
        %v5385 = vpop.f32.mrb[0].mxu0
        %v5386 = vpop.f32.mrb[0].mxu0
        %5387 = vdwg.mxu0
        %v5388 = vmax.f32 %v5383, 0.0
        %v5389 = vpack.c.bf16 %v5388, %v5388
        %v5391 = vshrl.u32 %v5389, 16
        %v5393 = vshll.u32 %v5389, 16
        %v5395 = vrot.slane %v5393, 1
        %v5396 = vor.u32 %v5391, %v5395
        %v5398 = vsel %vm1161, %v5396, 0
        %v5399 = vrot.slane %v5391, 7
        %v5400 = vor.u32 %v5399, %v5393
        %5401 = vrot.lane.b32.xlu0 %v5400, 96
        %v5402 = vpop.permute.xlu0 %5401
        %v5404 = vsel %vm1182, 0, %v5402
        %5406 = vrot.lane.b32.xlu0 %v5389, 32
        %v5407 = vpop.permute.xlu0 %5406
        %5409 = vrot.lane.b32.xlu0 %v5404, 96
        %v5410 = vpop.permute.xlu0 %5409
        %v5413 = vsel %vm2223, %v5398, %v5407
        %v5415 = vsel %vm2227, %v5413, %v5410
        %v5417 = vld [vmem:[%s59] sm:$0xff]
        %v5418 = vld [vmem:[%s59 + $0x8] sm:$0xff]
        %v5419 = vld [vmem:[%s59 + $0x10] sm:$0xff]
        %v5420 = vld [vmem:[%s59 + $0x18] sm:$0xff]
        %v5421 = vld [vmem:[%s59 + $0x20] sm:$0xff]
        %v5422 = vld [vmem:[%s59 + $0x28] sm:$0xff]
        %v5423 = vld [vmem:[%s59 + $0x30] sm:$0xff]
        %v5424 = vld [vmem:[%s59 + $0x38] sm:$0xff]
        %v5425 = vld [vmem:[%s59 + $0x40] sm:$0xff]
        %v5426 = vld [vmem:[%s59 + $0x48] sm:$0xff]
        %v5427 = vld [vmem:[%s59 + $0x50] sm:$0xff]
        %v5428 = vld [vmem:[%s59 + $0x58] sm:$0xff]
        %v5429 = vld [vmem:[%s59 + $0x60] sm:$0xff]
        %v5430 = vld [vmem:[%s59 + $0x68] sm:$0xff]
        %v5431 = vld [vmem:[%s59 + $0x70] sm:$0xff]
        %v5432 = vld [vmem:[%s59 + $0x78] sm:$0xff]
        %v5433 = vld [vmem:[%s59 + $0x80] sm:$0xff]
        %v5434 = vld [vmem:[%s59 + $0x88] sm:$0xff]
        %v5435 = vld [vmem:[%s59 + $0x90] sm:$0xff]
        %v5436 = vld [vmem:[%s59 + $0x98] sm:$0xff]
        %v5437 = vld [vmem:[%s59 + $0xa0] sm:$0xff]
        %v5438 = vld [vmem:[%s59 + $0xa8] sm:$0xff]
        %v5439 = vld [vmem:[%s59 + $0xb0] sm:$0xff]
        %v5440 = vld [vmem:[%s59 + $0xb8] sm:$0xff]
        %v5441 = vld [vmem:[%s59 + $0xc0] sm:$0xff]
        %v5442 = vld [vmem:[%s59 + $0xc8] sm:$0xff]
        %v5443 = vld [vmem:[%s59 + $0xd0] sm:$0xff]
        %v5444 = vld [vmem:[%s59 + $0xd8] sm:$0xff]
        %v5445 = vld [vmem:[%s59 + $0xe0] sm:$0xff]
        %v5446 = vld [vmem:[%s59 + $0xe8] sm:$0xff]
        %v5447 = vld [vmem:[%s59 + $0xf0] sm:$0xff]
        %v5448 = vld [vmem:[%s59 + $0xf8] sm:$0xff]
        %v5449 = vld [vmem:[%s59 + $0x100] sm:$0xff]
        %v5450 = vld [vmem:[%s59 + $0x108] sm:$0xff]
        %v5451 = vld [vmem:[%s59 + $0x110] sm:$0xff]
        %v5452 = vld [vmem:[%s59 + $0x118] sm:$0xff]
        %v5453 = vld [vmem:[%s59 + $0x120] sm:$0xff]
        %v5454 = vld [vmem:[%s59 + $0x128] sm:$0xff]
        %v5455 = vld [vmem:[%s59 + $0x130] sm:$0xff]
        %v5456 = vld [vmem:[%s59 + $0x138] sm:$0xff]
        %v5457 = vld [vmem:[%s59 + $0x140] sm:$0xff]
        %v5458 = vld [vmem:[%s59 + $0x148] sm:$0xff]
        %v5459 = vld [vmem:[%s59 + $0x150] sm:$0xff]
        %v5460 = vld [vmem:[%s59 + $0x158] sm:$0xff]
        %v5461 = vld [vmem:[%s59 + $0x160] sm:$0xff]
        %v5462 = vld [vmem:[%s59 + $0x168] sm:$0xff]
        %v5463 = vld [vmem:[%s59 + $0x170] sm:$0xff]
        %v5464 = vld [vmem:[%s59 + $0x178] sm:$0xff]
        %v5465 = vld [vmem:[%s59 + $0x180] sm:$0xff]
        %v5466 = vld [vmem:[%s59 + $0x188] sm:$0xff]
        %v5467 = vld [vmem:[%s59 + $0x190] sm:$0xff]
        %v5468 = vld [vmem:[%s59 + $0x198] sm:$0xff]
        %v5469 = vld [vmem:[%s59 + $0x1a0] sm:$0xff]
        %v5470 = vld [vmem:[%s59 + $0x1a8] sm:$0xff]
        %v5471 = vld [vmem:[%s59 + $0x1b0] sm:$0xff]
        %v5472 = vld [vmem:[%s59 + $0x1b8] sm:$0xff]
        %v5473 = vld [vmem:[%s59 + $0x1c0] sm:$0xff]
        %v5474 = vld [vmem:[%s59 + $0x1c8] sm:$0xff]
        %v5475 = vld [vmem:[%s59 + $0x1d0] sm:$0xff]
        %v5476 = vld [vmem:[%s59 + $0x1d8] sm:$0xff]
        %v5477 = vld [vmem:[%s59 + $0x1e0] sm:$0xff]
        %v5478 = vld [vmem:[%s59 + $0x1e8] sm:$0xff]
        %v5479 = vld [vmem:[%s59 + $0x1f0] sm:$0xff]
        %v5480 = vld [vmem:[%s59 + $0x1f8] sm:$0xff]
        %v5481 = vld [vmem:[%s61] sm:$0xff]
        %v5483 = vlaneseq
        %v5484 = vshrl.u32 %v5483, 7
        %v5485 = vsub.s32 0, %v5484
        %v5486 = vrot.slane %v5481, %v5485
        %v5487 = vlaneseq
        %v5488 = vshrl.u32 %v5487, 7
        %v5489 = vsub.s32 1, %v5488
        %v5490 = vrot.slane %v5481, %v5489
        %v5491 = vlaneseq
        %v5492 = vshrl.u32 %v5491, 7
        %v5493 = vsub.s32 2, %v5492
        %v5494 = vrot.slane %v5481, %v5493
        %v5495 = vlaneseq
        %v5496 = vshrl.u32 %v5495, 7
        %v5497 = vsub.s32 3, %v5496
        %v5498 = vrot.slane %v5481, %v5497
        %v5499 = vlaneseq
        %v5500 = vshrl.u32 %v5499, 7
        %v5501 = vsub.s32 4, %v5500
        %v5502 = vrot.slane %v5481, %v5501
        %v5503 = vlaneseq
        %v5504 = vshrl.u32 %v5503, 7
        %v5505 = vsub.s32 5, %v5504
        %v5506 = vrot.slane %v5481, %v5505
        %v5507 = vlaneseq
        %v5508 = vshrl.u32 %v5507, 7
        %v5509 = vsub.s32 6, %v5508
        %v5510 = vrot.slane %v5481, %v5509
        %v5511 = vlaneseq
        %v5512 = vshrl.u32 %v5511, 7
        %v5513 = vsub.s32 7, %v5512
        %v5514 = vrot.slane %v5481, %v5513
        %v5587 = vunpack.c.l.b16 %v5417
        %v5588 = vunpack.c.h.b16 %v5417
        %v5589 = vunpack.c.l.b16 %v5418
        %v5590 = vunpack.c.h.b16 %v5418
        %v5591 = vunpack.c.l.b16 %v5419
        %v5592 = vunpack.c.h.b16 %v5419
        %v5593 = vunpack.c.l.b16 %v5420
        %v5594 = vunpack.c.h.b16 %v5420
        %v5595 = vunpack.c.l.b16 %v5421
        %v5596 = vunpack.c.h.b16 %v5421
        %v5597 = vunpack.c.l.b16 %v5422
        %v5598 = vunpack.c.h.b16 %v5422
        %v5599 = vunpack.c.l.b16 %v5423
        %v5600 = vunpack.c.h.b16 %v5423
        %v5601 = vunpack.c.l.b16 %v5424
        %v5602 = vunpack.c.h.b16 %v5424
        %v5603 = vunpack.c.l.b16 %v5425
        %v5604 = vunpack.c.h.b16 %v5425
        %v5605 = vunpack.c.l.b16 %v5426
        %v5606 = vunpack.c.h.b16 %v5426
        %v5607 = vunpack.c.l.b16 %v5427
        %v5608 = vunpack.c.h.b16 %v5427
        %v5609 = vunpack.c.l.b16 %v5428
        %v5610 = vunpack.c.h.b16 %v5428
        %v5611 = vunpack.c.l.b16 %v5429
        %v5612 = vunpack.c.h.b16 %v5429
        %v5613 = vunpack.c.l.b16 %v5430
        %v5614 = vunpack.c.h.b16 %v5430
        %v5615 = vunpack.c.l.b16 %v5431
        %v5616 = vunpack.c.h.b16 %v5431
        %v5617 = vunpack.c.l.b16 %v5432
        %v5618 = vunpack.c.h.b16 %v5432
        %v5619 = vunpack.c.l.b16 %v5433
        %v5620 = vunpack.c.h.b16 %v5433
        %v5621 = vunpack.c.l.b16 %v5434
        %v5622 = vunpack.c.h.b16 %v5434
        %v5623 = vunpack.c.l.b16 %v5435
        %v5624 = vunpack.c.h.b16 %v5435
        %v5625 = vunpack.c.l.b16 %v5436
        %v5626 = vunpack.c.h.b16 %v5436
        %v5627 = vunpack.c.l.b16 %v5437
        %v5628 = vunpack.c.h.b16 %v5437
        %v5629 = vunpack.c.l.b16 %v5438
        %v5630 = vunpack.c.h.b16 %v5438
        %v5631 = vunpack.c.l.b16 %v5439
        %v5632 = vunpack.c.h.b16 %v5439
        %v5633 = vunpack.c.l.b16 %v5440
        %v5634 = vunpack.c.h.b16 %v5440
        %v5635 = vunpack.c.l.b16 %v5441
        %v5636 = vunpack.c.h.b16 %v5441
        %v5637 = vunpack.c.l.b16 %v5442
        %v5638 = vunpack.c.h.b16 %v5442
        %v5639 = vunpack.c.l.b16 %v5443
        %v5640 = vunpack.c.h.b16 %v5443
        %v5641 = vunpack.c.l.b16 %v5444
        %v5642 = vunpack.c.h.b16 %v5444
        %v5643 = vunpack.c.l.b16 %v5445
        %v5644 = vunpack.c.h.b16 %v5445
        %v5645 = vunpack.c.l.b16 %v5446
        %v5646 = vunpack.c.h.b16 %v5446
        %v5647 = vunpack.c.l.b16 %v5447
        %v5648 = vunpack.c.h.b16 %v5447
        %v5649 = vunpack.c.l.b16 %v5448
        %v5650 = vunpack.c.h.b16 %v5448
        %v5651 = vunpack.c.l.b16 %v5449
        %v5652 = vunpack.c.h.b16 %v5449
        %v5653 = vunpack.c.l.b16 %v5450
        %v5654 = vunpack.c.h.b16 %v5450
        %v5655 = vunpack.c.l.b16 %v5451
        %v5656 = vunpack.c.h.b16 %v5451
        %v5657 = vunpack.c.l.b16 %v5452
        %v5658 = vunpack.c.h.b16 %v5452
        %v5659 = vunpack.c.l.b16 %v5453
        %v5660 = vunpack.c.h.b16 %v5453
        %v5661 = vunpack.c.l.b16 %v5454
        %v5662 = vunpack.c.h.b16 %v5454
        %v5663 = vunpack.c.l.b16 %v5455
        %v5664 = vunpack.c.h.b16 %v5455
        %v5665 = vunpack.c.l.b16 %v5456
        %v5666 = vunpack.c.h.b16 %v5456
        %v5667 = vunpack.c.l.b16 %v5457
        %v5668 = vunpack.c.h.b16 %v5457
        %v5669 = vunpack.c.l.b16 %v5458
        %v5670 = vunpack.c.h.b16 %v5458
        %v5671 = vunpack.c.l.b16 %v5459
        %v5672 = vunpack.c.h.b16 %v5459
        %v5673 = vunpack.c.l.b16 %v5460
        %v5674 = vunpack.c.h.b16 %v5460
        %v5675 = vunpack.c.l.b16 %v5461
        %v5676 = vunpack.c.h.b16 %v5461
        %v5677 = vunpack.c.l.b16 %v5462
        %v5678 = vunpack.c.h.b16 %v5462
        %v5679 = vunpack.c.l.b16 %v5463
        %v5680 = vunpack.c.h.b16 %v5463
        %v5681 = vunpack.c.l.b16 %v5464
        %v5682 = vunpack.c.h.b16 %v5464
        %v5683 = vunpack.c.l.b16 %v5465
        %v5684 = vunpack.c.h.b16 %v5465
        %v5685 = vunpack.c.l.b16 %v5466
        %v5686 = vunpack.c.h.b16 %v5466
        %v5687 = vunpack.c.l.b16 %v5467
        %v5688 = vunpack.c.h.b16 %v5467
        %v5689 = vunpack.c.l.b16 %v5468
        %v5690 = vunpack.c.h.b16 %v5468
        %v5691 = vunpack.c.l.b16 %v5469
        %v5692 = vunpack.c.h.b16 %v5469
        %v5693 = vunpack.c.l.b16 %v5470
        %v5694 = vunpack.c.h.b16 %v5470
        %v5695 = vunpack.c.l.b16 %v5471
        %v5696 = vunpack.c.h.b16 %v5471
        %v5697 = vunpack.c.l.b16 %v5472
        %v5698 = vunpack.c.h.b16 %v5472
        %v5699 = vunpack.c.l.b16 %v5473
        %v5700 = vunpack.c.h.b16 %v5473
        %v5701 = vunpack.c.l.b16 %v5474
        %v5702 = vunpack.c.h.b16 %v5474
        %v5703 = vunpack.c.l.b16 %v5475
        %v5704 = vunpack.c.h.b16 %v5475
        %v5705 = vunpack.c.l.b16 %v5476
        %v5706 = vunpack.c.h.b16 %v5476
        %v5707 = vunpack.c.l.b16 %v5477
        %v5708 = vunpack.c.h.b16 %v5477
        %v5709 = vunpack.c.l.b16 %v5478
        %v5710 = vunpack.c.h.b16 %v5478
        %v5711 = vunpack.c.l.b16 %v5479
        %v5712 = vunpack.c.h.b16 %v5479
        %v5713 = vunpack.c.l.b16 %v5480
        %v5714 = vunpack.c.h.b16 %v5480
        %v5715 = vpack.c.b16 %v5595, %v5587
        %v5716 = vpack.c.b16 %v5596, %v5588
        %v5717 = vpack.c.b16 %v5597, %v5589
        %v5718 = vpack.c.b16 %v5598, %v5590
        %v5719 = vpack.c.b16 %v5599, %v5591
        %v5720 = vpack.c.b16 %v5600, %v5592
        %v5721 = vpack.c.b16 %v5601, %v5593
        %v5722 = vpack.c.b16 %v5602, %v5594
        %v5723 = vpack.c.b16 %v5611, %v5603
        %v5724 = vpack.c.b16 %v5612, %v5604
        %v5725 = vpack.c.b16 %v5613, %v5605
        %v5726 = vpack.c.b16 %v5614, %v5606
        %v5727 = vpack.c.b16 %v5615, %v5607
        %v5728 = vpack.c.b16 %v5616, %v5608
        %v5729 = vpack.c.b16 %v5617, %v5609
        %v5730 = vpack.c.b16 %v5618, %v5610
        %v5731 = vpack.c.b16 %v5627, %v5619
        %v5732 = vpack.c.b16 %v5628, %v5620
        %v5733 = vpack.c.b16 %v5629, %v5621
        %v5734 = vpack.c.b16 %v5630, %v5622
        %v5735 = vpack.c.b16 %v5631, %v5623
        %v5736 = vpack.c.b16 %v5632, %v5624
        %v5737 = vpack.c.b16 %v5633, %v5625
        %v5738 = vpack.c.b16 %v5634, %v5626
        %v5739 = vpack.c.b16 %v5643, %v5635
        %v5740 = vpack.c.b16 %v5644, %v5636
        %v5741 = vpack.c.b16 %v5645, %v5637
        %v5742 = vpack.c.b16 %v5646, %v5638
        %v5743 = vpack.c.b16 %v5647, %v5639
        %v5744 = vpack.c.b16 %v5648, %v5640
        %v5745 = vpack.c.b16 %v5649, %v5641
        %v5746 = vpack.c.b16 %v5650, %v5642
        %v5747 = vpack.c.b16 %v5659, %v5651
        %v5748 = vpack.c.b16 %v5660, %v5652
        %v5749 = vpack.c.b16 %v5661, %v5653
        %v5750 = vpack.c.b16 %v5662, %v5654
        %v5751 = vpack.c.b16 %v5663, %v5655
        %v5752 = vpack.c.b16 %v5664, %v5656
        %v5753 = vpack.c.b16 %v5665, %v5657
        %v5754 = vpack.c.b16 %v5666, %v5658
        %v5755 = vpack.c.b16 %v5675, %v5667
        %v5756 = vpack.c.b16 %v5676, %v5668
        %v5757 = vpack.c.b16 %v5677, %v5669
        %v5758 = vpack.c.b16 %v5678, %v5670
        %v5759 = vpack.c.b16 %v5679, %v5671
        %v5760 = vpack.c.b16 %v5680, %v5672
        %v5761 = vpack.c.b16 %v5681, %v5673
        %v5762 = vpack.c.b16 %v5682, %v5674
        %v5763 = vpack.c.b16 %v5691, %v5683
        %v5764 = vpack.c.b16 %v5692, %v5684
        %v5765 = vpack.c.b16 %v5693, %v5685
        %v5766 = vpack.c.b16 %v5694, %v5686
        %v5767 = vpack.c.b16 %v5695, %v5687
        %v5768 = vpack.c.b16 %v5696, %v5688
        %v5769 = vpack.c.b16 %v5697, %v5689
        %v5770 = vpack.c.b16 %v5698, %v5690
        %v5771 = vpack.c.b16 %v5707, %v5699
        %v5772 = vpack.c.b16 %v5708, %v5700
        %v5773 = vpack.c.b16 %v5709, %v5701
        %v5774 = vpack.c.b16 %v5710, %v5702
        %v5775 = vpack.c.b16 %v5711, %v5703
        %v5776 = vpack.c.b16 %v5712, %v5704
        %v5777 = vpack.c.b16 %v5713, %v5705
        %v5778 = vpack.c.b16 %v5714, %v5706
        %5843 = vmatprep.subr.bf16.mxu0 %v5716
        %5844 = vmatpush1.bf16.msra.mxu0 %v5715
        %5845 = vmatprep.subr.bf16.mxu0 %v5724
        %5846 = vmatpush1.bf16.msra.mxu0 %v5723
        %5847 = vmatprep.subr.bf16.mxu0 %v5732
        %5848 = vmatpush1.bf16.msra.mxu0 %v5731
        %5849 = vmatprep.subr.bf16.mxu0 %v5740
        %5850 = vmatpush1.bf16.msra.mxu0 %v5739
        %5851 = vmatprep.subr.bf16.mxu0 %v5748
        %5852 = vmatpush1.bf16.msra.mxu0 %v5747
        %5853 = vmatprep.subr.bf16.mxu0 %v5756
        %5854 = vmatpush1.bf16.msra.mxu0 %v5755
        %5855 = vmatprep.subr.bf16.mxu0 %v5764
        %5856 = vmatpush1.bf16.msra.mxu0 %v5763
        %5857 = vmatprep.subr.bf16.mxu0 %v5772
        %5858 = vmatpush1.bf16.msra.mxu0 %v5771
        %5859 = vmatprep.subr.bf16.mxu0 0
        %5860 = vmatpush1.bf16.msra.mxu0 0
        %5861 = vmatprep.subr.bf16.mxu0 0
        %5862 = vmatpush1.bf16.msra.mxu0 0
        %5863 = vmatprep.subr.bf16.mxu0 0
        %5864 = vmatpush1.bf16.msra.mxu0 0
        %5865 = vmatprep.subr.bf16.mxu0 0
        %5866 = vmatpush1.bf16.msra.mxu0 0
        %5867 = vmatprep.subr.bf16.mxu0 0
        %5868 = vmatpush1.bf16.msra.mxu0 0
        %5869 = vmatprep.subr.bf16.mxu0 0
        %5870 = vmatpush1.bf16.msra.mxu0 0
        %5871 = vmatprep.subr.bf16.mxu0 0
        %5872 = vmatpush1.bf16.msra.mxu0 0
        %5873 = vmatprep.subr.bf16.mxu0 0
        %5874 = vmatpush1.bf16.msra.mxu0 0
        %5875 = vmatprep.mubr.bf16.mxu0 0
        %5876 = vmatmul.mubr.bf16.gmra.mrb[0].mxu0 %v5415
        %v5877 = vpop.f32.mrb[0].mxu0
        %v5878 = vadd.f32 %v5486, %v5877
        %v5879 = vpop.f32.mrb[0].mxu0
        %v5880 = vadd.f32 %v5490, %v5879
        %v5881 = vpop.f32.mrb[0].mxu0
        %v5882 = vpop.f32.mrb[0].mxu0
        %5883 = vdwg.mxu0
        %5884 = vmatprep.subr.bf16.mxu0 %v5718
        %5885 = vmatpush1.bf16.msra.mxu0 %v5717
        %5886 = vmatprep.subr.bf16.mxu0 %v5726
        %5887 = vmatpush1.bf16.msra.mxu0 %v5725
        %5888 = vmatprep.subr.bf16.mxu0 %v5734
        %5889 = vmatpush1.bf16.msra.mxu0 %v5733
        %5890 = vmatprep.subr.bf16.mxu0 %v5742
        %5891 = vmatpush1.bf16.msra.mxu0 %v5741
        %5892 = vmatprep.subr.bf16.mxu0 %v5750
        %5893 = vmatpush1.bf16.msra.mxu0 %v5749
        %5894 = vmatprep.subr.bf16.mxu0 %v5758
        %5895 = vmatpush1.bf16.msra.mxu0 %v5757
        %5896 = vmatprep.subr.bf16.mxu0 %v5766
        %5897 = vmatpush1.bf16.msra.mxu0 %v5765
        %5898 = vmatprep.subr.bf16.mxu0 %v5774
        %5899 = vmatpush1.bf16.msra.mxu0 %v5773
        %5900 = vmatprep.subr.bf16.mxu0 0
        %5901 = vmatpush1.bf16.msra.mxu0 0
        %5902 = vmatprep.subr.bf16.mxu0 0
        %5903 = vmatpush1.bf16.msra.mxu0 0
        %5904 = vmatprep.subr.bf16.mxu0 0
        %5905 = vmatpush1.bf16.msra.mxu0 0
        %5906 = vmatprep.subr.bf16.mxu0 0
        %5907 = vmatpush1.bf16.msra.mxu0 0
        %5908 = vmatprep.subr.bf16.mxu0 0
        %5909 = vmatpush1.bf16.msra.mxu0 0
        %5910 = vmatprep.subr.bf16.mxu0 0
        %5911 = vmatpush1.bf16.msra.mxu0 0
        %5912 = vmatprep.subr.bf16.mxu0 0
        %5913 = vmatpush1.bf16.msra.mxu0 0
        %5914 = vmatprep.subr.bf16.mxu0 0
        %5915 = vmatpush1.bf16.msra.mxu0 0
        %5916 = vmatprep.mubr.bf16.mxu0 0
        %5917 = vmatmul.mubr.bf16.gmra.mrb[0].mxu0 %v5415
        %v5918 = vpop.f32.mrb[0].mxu0
        %v5919 = vadd.f32 %v5494, %v5918
        %v5920 = vpop.f32.mrb[0].mxu0
        %v5921 = vadd.f32 %v5498, %v5920
        %v5922 = vpop.f32.mrb[0].mxu0
        %v5923 = vpop.f32.mrb[0].mxu0
        %5924 = vdwg.mxu0
        %5925 = vmatprep.subr.bf16.mxu0 %v5720
        %5926 = vmatpush1.bf16.msra.mxu0 %v5719
        %5927 = vmatprep.subr.bf16.mxu0 %v5728
        %5928 = vmatpush1.bf16.msra.mxu0 %v5727
        %5929 = vmatprep.subr.bf16.mxu0 %v5736
        %5930 = vmatpush1.bf16.msra.mxu0 %v5735
        %5931 = vmatprep.subr.bf16.mxu0 %v5744
        %5932 = vmatpush1.bf16.msra.mxu0 %v5743
        %5933 = vmatprep.subr.bf16.mxu0 %v5752
        %5934 = vmatpush1.bf16.msra.mxu0 %v5751
        %5935 = vmatprep.subr.bf16.mxu0 %v5760
        %5936 = vmatpush1.bf16.msra.mxu0 %v5759
        %5937 = vmatprep.subr.bf16.mxu0 %v5768
        %5938 = vmatpush1.bf16.msra.mxu0 %v5767
        %5939 = vmatprep.subr.bf16.mxu0 %v5776
        %5940 = vmatpush1.bf16.msra.mxu0 %v5775
        %5941 = vmatprep.subr.bf16.mxu0 0
        %5942 = vmatpush1.bf16.msra.mxu0 0
        %5943 = vmatprep.subr.bf16.mxu0 0
        %5944 = vmatpush1.bf16.msra.mxu0 0
        %5945 = vmatprep.subr.bf16.mxu0 0
        %5946 = vmatpush1.bf16.msra.mxu0 0
        %5947 = vmatprep.subr.bf16.mxu0 0
        %5948 = vmatpush1.bf16.msra.mxu0 0
        %5949 = vmatprep.subr.bf16.mxu0 0
        %5950 = vmatpush1.bf16.msra.mxu0 0
        %5951 = vmatprep.subr.bf16.mxu0 0
        %5952 = vmatpush1.bf16.msra.mxu0 0
        %5953 = vmatprep.subr.bf16.mxu0 0
        %5954 = vmatpush1.bf16.msra.mxu0 0
        %5955 = vmatprep.subr.bf16.mxu0 0
        %5956 = vmatpush1.bf16.msra.mxu0 0
        %5957 = vmatprep.mubr.bf16.mxu0 0
        %5958 = vmatmul.mubr.bf16.gmra.mrb[0].mxu0 %v5415
        %v5959 = vpop.f32.mrb[0].mxu0
        %v5960 = vadd.f32 %v5502, %v5959
        %v5961 = vpop.f32.mrb[0].mxu0
        %v5962 = vadd.f32 %v5506, %v5961
        %v5963 = vpop.f32.mrb[0].mxu0
        %v5964 = vpop.f32.mrb[0].mxu0
        %5965 = vdwg.mxu0
        %5966 = vmatprep.subr.bf16.mxu0 %v5722
        %5967 = vmatpush1.bf16.msra.mxu0 %v5721
        %5968 = vmatprep.subr.bf16.mxu0 %v5730
        %5969 = vmatpush1.bf16.msra.mxu0 %v5729
        %5970 = vmatprep.subr.bf16.mxu0 %v5738
        %5971 = vmatpush1.bf16.msra.mxu0 %v5737
        %5972 = vmatprep.subr.bf16.mxu0 %v5746
        %5973 = vmatpush1.bf16.msra.mxu0 %v5745
        %5974 = vmatprep.subr.bf16.mxu0 %v5754
        %5975 = vmatpush1.bf16.msra.mxu0 %v5753
        %5976 = vmatprep.subr.bf16.mxu0 %v5762
        %5977 = vmatpush1.bf16.msra.mxu0 %v5761
        %5978 = vmatprep.subr.bf16.mxu0 %v5770
        %5979 = vmatpush1.bf16.msra.mxu0 %v5769
        %5980 = vmatprep.subr.bf16.mxu0 %v5778
        %5981 = vmatpush1.bf16.msra.mxu0 %v5777
        %5982 = vmatprep.subr.bf16.mxu0 0
        %5983 = vmatpush1.bf16.msra.mxu0 0
        %5984 = vmatprep.subr.bf16.mxu0 0
        %5985 = vmatpush1.bf16.msra.mxu0 0
        %5986 = vmatprep.subr.bf16.mxu0 0
        %5987 = vmatpush1.bf16.msra.mxu0 0
        %5988 = vmatprep.subr.bf16.mxu0 0
        %5989 = vmatpush1.bf16.msra.mxu0 0
        %5990 = vmatprep.subr.bf16.mxu0 0
        %5991 = vmatpush1.bf16.msra.mxu0 0
        %5992 = vmatprep.subr.bf16.mxu0 0
        %5993 = vmatpush1.bf16.msra.mxu0 0
        %5994 = vmatprep.subr.bf16.mxu0 0
        %5995 = vmatpush1.bf16.msra.mxu0 0
        %5996 = vmatprep.subr.bf16.mxu0 0
        %5997 = vmatpush1.bf16.msra.mxu0 0
        %5998 = vmatprep.mubr.bf16.mxu0 0
        %5999 = vmatmul.mubr.bf16.gmra.mrb[0].mxu0 %v5415
        %v6000 = vpop.f32.mrb[0].mxu0
        %v6001 = vadd.f32 %v5510, %v6000
        %v6002 = vpop.f32.mrb[0].mxu0
        %v6003 = vadd.f32 %v5514, %v6002
        %v6004 = vpop.f32.mrb[0].mxu0
        %v6005 = vpop.f32.mrb[0].mxu0
        %6006 = vdwg.mxu0
        %v6015 = vcombine.low %v5878, %v5880
        %v6016 = vcombine.low %v5919, %v5921
        %v6017 = vcombine.low %v5960, %v5962
        %v6018 = vcombine.low %v6001, %v6003
        %6023 = vst [vmem:[%s1114] sm:$0xff] %v6015
        %6024 = vst [vmem:[%s1114 + $0x8] sm:$0xff] %v6016
        %6025 = vst [vmem:[%s1114 + $0x10] sm:$0xff] %v6017
        %6026 = vst [vmem:[%s1114 + $0x18] sm:$0xff] %v6018
        %v6027 = vsub.f32 %v5878, %v1119
        %v6028 = vsub.f32 %v5880, %v1127
        %v6029 = vsub.f32 %v5919, %v1120
        %v6030 = vsub.f32 %v5921, %v1128
        %v6031 = vsub.f32 %v5960, %v1121
        %v6032 = vsub.f32 %v5962, %v1129
        %v6033 = vsub.f32 %v6001, %v1122
        %v6034 = vsub.f32 %v6003, %v1130
        %v6035 = vmul.f32 %v6027, %v6027
        %v6036 = vmul.f32 %v6028, %v6028
        %v6037 = vmul.f32 %v6029, %v6029
        %v6038 = vmul.f32 %v6030, %v6030
        %v6039 = vmul.f32 %v6031, %v6031
        %v6040 = vmul.f32 %v6032, %v6032
        %v6041 = vmul.f32 %v6033, %v6033
        %v6042 = vmul.f32 %v6034, %v6034
        %v6043 = vsel %vm2604, %v6035, 0.0
        %v6044 = vsel %vm2604, %v6036, 0.0
        %v6045 = vadd.f32 %v6043, %v6044
        %v6046 = vsel %vm2604, %v6037, 0.0
        %v6047 = vadd.f32 %v6045, %v6046
        %v6048 = vsel %vm2604, %v6038, 0.0
        %v6049 = vadd.f32 %v6047, %v6048
        %v6050 = vsel %vm2604, %v6039, 0.0
        %v6051 = vadd.f32 %v6049, %v6050
        %v6052 = vsel %vm2604, %v6040, 0.0
        %v6053 = vadd.f32 %v6051, %v6052
        %v6054 = vsel %vm2604, %v6041, 0.0
        %v6055 = vadd.f32 %v6053, %v6054
        %v6056 = vsel %vm2604, %v6042, 0.0
        %v6057 = vadd.f32 %v6055, %v6056
        %6058 = vadd.xlane.f32.xlu0 %v6057
        %v6059 = vpop.xlane.xlu0 %6058
        %v6060 = vsel %vm2604, %v6059, 0.0
        %v6061 = vrot.slane %v6060, 4
        %v6062 = vadd.f32 %v6060, %v6061
        %v6063 = vrot.slane %v6062, 2
        %v6064 = vadd.f32 %v6062, %v6063
        %v6065 = vrot.slane %v6064, 1
        %v6066 = vadd.f32 %v6064, %v6065
        %v6067 = vsel %vm4358, %v4347, %v6066
        %vm6068 = vcmask 8192
        %6069 = vst.msk [vmem:[%s1117] sm:$0x1] %vm6068, %v6067
        %p6070 = scmp.lt.s32.totalorder %s88, 1
        %s6071 = scalar_select %p6070, %s88, 1
        %s6072 = smul.addr %s6071, 8
        %s6073 = smul.addr %s6072, 4
        %s6074 = scalar_lea.vmem %s69, %s6073
        %s6075 = sand.u32 %s841, 1
        %s6076 = scalar_lea.sflag [#allocation3], %s6075
        %s6077 = sand.u32 %s841, 1
        %s6078 = smul.addr %s6077, 4
        %s6079 = scalar_lea.vmem [#allocation2], %s6078
        %p6080 = scmp.lt.s32.totalorder %s88, 1
        %s6081 = scalar_select %p6080, %s88, 1
        %s6082 = scalar_lea.vmem %s73, %s6081
        // Predicated region
        $region157: #{vqvae_forward.1} parent=155 // pred_check
          %p6083 = pneg %p825
        $region158: #{vqvae_forward.1} parent=155 // pred_check_branch
          %6085 = sbr.rel (%p6083) target = $region160
        $region159: #{vqvae_forward.1} parent=155 // pred_region
          _
        $region160: #{vqvae_forward.1} parent=155 // pred_fallthru
          _
        // Predicated region
        $region161: #{vqvae_forward.1} parent=155 // pred_check
          %p6086 = pneg %p851
        $region162: #{vqvae_forward.1} parent=155 // pred_check_branch
          %6088 = sbr.rel (%p6086) target = $region164
        $region163: #{vqvae_forward.1} parent=155 // pred_region
          %s6090 = ssub.s32 64, 64
          %6091 = vsyncadd %s6076, %s6090
          %s6092 = smul.addr %s88, 64
          %s6093 = scalar_lea.hbm %s71, %s6092
          %s6095 = sshll.u32 %s6079, 4
          %s6096 = int_to_ptr.vmem [resolvable:$true] %s6095
          %6098 = dma.vmem_to_hbm [thread:$0]  %s6096, 64, %s6093, %s6076
        $region164: #{vqvae_forward.1} parent=155 // pred_fallthru
          _
        // Predicated region
        $region165: #{vqvae_forward.1} parent=155 // pred_check
          %p6099 = pneg %p877
        $region166: #{vqvae_forward.1} parent=155 // pred_check_branch
          %6101 = sbr.rel (%p6099) target = $region168
        $region167: #{vqvae_forward.1} parent=155 // pred_region
          _
        $region168: #{vqvae_forward.1} parent=155 // pred_fallthru
          _
      $region156: #{vqvae_forward.1} parent=5 // pred_fallthru
        _
      %p6102 = scmp.le.s32.totalorder 2, %s83
      // Predicated region
      $region169: #{vqvae_forward.1} parent=5 // pred_check
        %p6103 = pneg %p6102
      $region170: #{vqvae_forward.1} parent=5 // pred_check_branch
        %6105 = sbr.rel (%p6103) target = $region172
      $region171: #{vqvae_forward.1} parent=5 // pred_region
        %s6106 = ssub.s32 %s83, 2
        // Predicated region
        $region173: #{vqvae_forward.1} parent=171 // pred_check
          %p6107 = pneg %p831
        $region174: #{vqvae_forward.1} parent=171 // pred_check_branch
          %6109 = sbr.rel (%p6107) target = $region176
        $region175: #{vqvae_forward.1} parent=171 // pred_region
          %p6110 = scmp.lt.s32.totalorder %s89, 1
          %s6111 = scalar_select %p6110, %s89, 1
          %s6112 = smul.addr %s6111, 8
          %s6113 = smul.addr %s6112, 4
          %s6114 = scalar_lea.vmem %s69, %s6113
        $region176: #{vqvae_forward.1} parent=171 // pred_fallthru
          _
        // Predicated region
        $region177: #{vqvae_forward.1} parent=171 // pred_check
          %p6115 = pneg %p857
        $region178: #{vqvae_forward.1} parent=171 // pred_check_branch
          %6117 = sbr.rel (%p6115) target = $region180
        $region179: #{vqvae_forward.1} parent=171 // pred_region
          %s6118 = sand.u32 %s842, 1
          %s6119 = scalar_lea.sflag [#allocation3], %s6118
          %s6120 = sand.u32 %s842, 1
          %s6121 = smul.addr %s6120, 4
          %s6122 = scalar_lea.vmem [#allocation2], %s6121
          %6123 = dma.done %s6119, 64
        $region180: #{vqvae_forward.1} parent=171 // pred_fallthru
          _
        // Predicated region
        $region181: #{vqvae_forward.1} parent=171 // pred_check
          %p6124 = pneg %p883
        $region182: #{vqvae_forward.1} parent=171 // pred_check_branch
          %6126 = sbr.rel (%p6124) target = $region184
        $region183: #{vqvae_forward.1} parent=171 // pred_region
          %p6127 = scmp.lt.s32.totalorder %s89, 1
          %s6128 = scalar_select %p6127, %s89, 1
          %s6129 = scalar_lea.vmem %s73, %s6128
        $region184: #{vqvae_forward.1} parent=171 // pred_fallthru
          _
      $region172: #{vqvae_forward.1} parent=5 // pred_fallthru
        _
    $region6: #{vqvae_forward.1} parent=1 // loop_footer
      %s87 = sadd.s32 1, %s83
    $region7: #{vqvae_forward.1} parent=1 // loop_footer_branch
      %82 = sbr.rel target = $region3
    $region8: #{vqvae_forward.1} parent=1 // loop_exit
      _
    %6130 = vsyncpa [#allocation3], 1
    %s6131 = scalar_lea.sflag [#allocation3], 1
    %6132 = vsyncpa %s6131, 1

</llo_original>
